<compile_context>
chip_gen: v5e
topology: v5e:2x2
jax: 0.10.0
libtpu: 0.0.40
codegen_flags: <defaults>
</compile_context>

<pallas_src>
import functools

import jax
import jax.numpy as jnp
from jax.experimental import pallas as pl
from jax.experimental.pallas import tpu as pltpu


def _round_up(x, m):
    return (x + m - 1) // m * m


def _vmem_limit(estimate_bytes):
    # Generation-aware scoped-VMEM limit: 2x the static tile-footprint estimate,
    # clamped to ~85% of the queried per-core capacity (v7x has only 64 MiB / TC).
    try:
        cap = int(getattr(pltpu.get_tpu_info(), "vmem_capacity_bytes", 64 * 2 ** 20))
    except Exception:  # conservative fallback valid on every generation
        cap = 64 * 2 ** 20
    hi = (cap * 85) // 100
    return int(min(max(2 * int(estimate_bytes), 16 * 2 ** 20), hi))


# ---------------------------------------------------------------------------
# Stage 1: node transform.  Z_eff (head-major, head_linear folded) + scores.
# ---------------------------------------------------------------------------
def gat_transform_kernel(x_ref, weff_ref, wscore_ref, z_ref, score_ref, *, heads):
    x = x_ref[...]                                                # (TM, F_in) bf16
    # Both attention scores from one small matmul (GAT lin folded with att vectors).
    score_ref[...] = jnp.dot(x, wscore_ref[...],
                             preferred_element_type=jnp.float32)  # (TM, 2H) f32
    # Z_eff_h = X @ (W_h @ Wh_h); written head-major so stage 2 consumes it directly.
    for h in range(heads):                                        # static unroll, H small
        z_ref[h] = jnp.dot(x, weff_ref[h],
                           preferred_element_type=jnp.float32).astype(z_ref.dtype)


def _gat_transform(x, w_eff, wscore, tm):
    n_pad, f_in = x.shape
    heads, _, c_out = w_eff.shape
    grid = (n_pad // tm,)
    est = (2 * tm * f_in * 2                        # x tiles (bf16, double-buffered)
           + 2 * heads * f_in * c_out * 2           # folded weights (resident)
           + 2 * f_in * 2 * heads * 2               # score weights
           + 2 * heads * tm * c_out * 2             # Z_eff output tiles (bf16)
           + 2 * tm * 2 * heads * 4                 # score output tiles
           + 4 * tm * max(c_out, 2 * heads) * 4)    # f32 matmul temporaries
    return pl.pallas_call(
        functools.partial(gat_transform_kernel, heads=heads),
        grid=grid,
        in_specs=[
            pl.BlockSpec((tm, f_in), lambda i: (i, 0)),               # X row-tile
            pl.BlockSpec((heads, f_in, c_out), lambda i: (0, 0, 0)),  # W_eff (resident)
            pl.BlockSpec((f_in, 2 * heads), lambda i: (0, 0)),        # [w_src | w_dst]
        ],
        out_specs=(
            pl.BlockSpec((heads, tm, c_out), lambda i: (0, i, 0)),    # head-major Z_eff
            pl.BlockSpec((tm, 2 * heads), lambda i: (i, 0)),          # [s_src | s_dst]
        ),
        out_shape=(
            jax.ShapeDtypeStruct((heads, n_pad, c_out), jnp.bfloat16),
            jax.ShapeDtypeStruct((n_pad, 2 * heads), jnp.float32),
        ),
        compiler_params=pltpu.CompilerParams(
            dimension_semantics=("parallel",),
            vmem_limit_bytes=_vmem_limit(est)),
    )(x, w_eff, wscore)


# ---------------------------------------------------------------------------
# Stage 2: masked multi-head attention, tiled over destination rows.
# ---------------------------------------------------------------------------
def gat_attention_kernel(mask_ref, sdst_ref, ssrc_ref, z_ref, bh_ref, out_ref,
                         *, heads, apply_relu):
    # Non-edge additive bias from the int8 mask, hoisted out of the head loop:
    # 0 on edges, -1e30 elsewhere.  The row max is then the max over edges, so no
    # per-head where()/select is needed (every row has a self-loop -> finite max).
    neg = (mask_ref[...].astype(jnp.float32) - 1.0) * jnp.float32(1e30)   # (TM, N)
    sdst = sdst_ref[...]                                                   # (TM, H) f32
    acc = jnp.zeros(out_ref.shape, jnp.float32)
    for h in range(heads):                        # static unroll over heads (H = 4)
        logits = sdst[:, h:h + 1] + ssrc_ref[h:h + 1, :]           # (TM, N)
        logits = jnp.where(logits > 0, logits, 0.2 * logits)       # LeakyReLU(0.2)
        logits = logits + neg                                      # mask non-edges
        m = jnp.max(logits, axis=-1, keepdims=True)
        p = jnp.exp(logits - m)
        denom = jnp.sum(p, axis=-1, keepdims=True)
        alpha = (p * pl.reciprocal(denom, approx=True)).astype(jnp.bfloat16)
        # head_linear already folded into Z_eff -> one MXU matmul per head.
        acc = acc + jnp.dot(alpha, z_ref[h], preferred_element_type=jnp.float32)
    res = acc + bh_ref[...]                       # GAT bias folded through head_linear
    if apply_relu:
        res = jnp.maximum(res, 0.0)
    out_ref[...] = res.astype(out_ref.dtype)      # bf16 inter-layer activations


def _gat_attention(mask, sdst, ssrc_t, z_eff, bh_eff, tm, *, apply_relu):
    n_pad = mask.shape[0]
    heads, _, c_out = z_eff.shape
    grid = (n_pad // tm,)
    est = (2 * tm * n_pad * 1                 # streamed int8 mask tiles (double-buffered)
           + 2 * tm * heads * 4               # s_dst tiles
           + 2 * heads * n_pad * 4            # resident s_src
           + 2 * heads * n_pad * c_out * 2    # resident Z_eff (bf16)
           + 2 * tm * c_out * 2               # output tiles (bf16)
           + 6 * tm * n_pad * 4)              # f32 softmax temporaries
    kern = functools.partial(gat_attention_kernel, heads=heads, apply_relu=apply_relu)
    return pl.pallas_call(
        kern,
        grid=grid,
        in_specs=[
            pl.BlockSpec((tm, n_pad), lambda i: (i, 0)),               # int8 mask tile
            pl.BlockSpec((tm, heads), lambda i: (i, 0)),               # s_dst tile
            pl.BlockSpec((heads, n_pad), lambda i: (0, 0)),            # s_src (resident)
            pl.BlockSpec((heads, n_pad, c_out), lambda i: (0, 0, 0)),  # Z_eff (resident)
            pl.BlockSpec((1, c_out), lambda i: (0, 0)),                # folded bias
        ],
        out_specs=pl.BlockSpec((tm, c_out), lambda i: (i, 0)),
        out_shape=jax.ShapeDtypeStruct((n_pad, c_out), jnp.bfloat16),
        compiler_params=pltpu.CompilerParams(
            dimension_semantics=("parallel",),
            vmem_limit_bytes=_vmem_limit(est)),
    )(mask, sdst, ssrc_t, z_eff, bh_eff)


# ---------------------------------------------------------------------------
# Stage 3: global_mean_pool (as P @ H) + two-layer MLP head.
# ---------------------------------------------------------------------------
def pool_mlp_kernel(p_ref, h_ref, wm1_ref, bm1_ref, wm2_ref, bm2_ref, out_ref):
    # f32 pool operand / f32 accumulation for the mean (tiny matmul, accuracy first).
    g = jnp.dot(p_ref[...], h_ref[...].astype(jnp.float32),
                preferred_element_type=jnp.float32)                       # (B, C)
    g = jnp.dot(g, wm1_ref[...], preferred_element_type=jnp.float32) + bm1_ref[...]
    g = jnp.maximum(g, 0.0)
    out_ref[...] = (jnp.dot(g, wm2_ref[...], preferred_element_type=jnp.float32)
                    + bm2_ref[...])


def _pool_mlp(pool_mat, h, wm1, bm1, wm2, bm2):
    b = pool_mat.shape[0]
    nout = wm2.shape[1]
    vmem = pl.BlockSpec(memory_space=pltpu.MemorySpace.VMEM)
    est = 4 * (pool_mat.size + h.size + wm1.size + wm2.size
               + b * (nout + wm1.shape[1]))
    return pl.pallas_call(
        pool_mlp_kernel,
        out_shape=jax.ShapeDtypeStruct((b, nout), jnp.float32),
        in_specs=[vmem] * 6,
        out_specs=vmem,
        compiler_params=pltpu.CompilerParams(vmem_limit_bytes=_vmem_limit(est)),
    )(pool_mat, h, wm1, bm1, wm2, bm2)


# ---------------------------------------------------------------------------
# Full encoder wrapper (padding, host-side parameter folding, orchestration).
# ---------------------------------------------------------------------------
def gat_encoder_pallas(x, adj_mask, pool_mat, gat_layers, mlp_params, *, tile_nodes=None):
    """gat_layers: list of (W, att_src, att_dst, gat_bias, W_head, b_head).
       mlp_params: (Wm1, bm1, Wm2, bm2). Returns (B, nout) float32."""
    wm1, bm1, wm2, bm2 = mlp_params
    n, f_in = x.shape
    b = pool_mat.shape[0]

    # Row tile: default 128 (feeds the MXU full-height rows and amortizes per-grid-step
    # overhead); pass tile_nodes=256 on parts with VMEM to spare.  Multiple of 32 keeps
    # int8 / bf16 tiling legal.
    if tile_nodes is None:
        tile_nodes = 128
    tm = max(32, _round_up(int(tile_nodes), 32))
    n_pad = _round_up(n, tm)

    # --- pad node dimension to a multiple of the row tile -------------------
    x_p = jnp.zeros((n_pad, f_in), jnp.bfloat16).at[:n, :].set(x.astype(jnp.bfloat16))
    mask_p = jnp.zeros((n_pad, n_pad), jnp.int8).at[:n, :n].set(adj_mask.astype(jnp.int8))
    ids = jnp.arange(n_pad)
    pad_self = (ids[:, None] == ids[None, :]) & (ids[:, None] >= n)
    # padded nodes get a self-loop only (keeps softmax finite; pooling drops them)
    mask_p = jnp.where(pad_self, jnp.int8(1), mask_p)
    pool_p = jnp.zeros((b, n_pad), jnp.float32).at[:, :n].set(pool_mat.astype(jnp.float32))

    h = x_p
    num_layers = len(gat_layers)
    for li, (w, att_src, att_dst, gat_b, wh, bh) in enumerate(gat_layers):
        heads, c = att_src.shape
        c_out = wh.shape[1]
        f_in_l = w.shape[0]
        # Host-side folding (cheap, O(params)):
        #   W_eff_h = W_h @ Wh_h ; wscore = [W_h @ att_src_h | W_h @ att_dst_h]
        #   bh_eff  = gat_bias @ Wh + bh
        w3 = w.reshape(f_in_l, heads, c).transpose(1, 0, 2)                # (H, F, C)
        wh3 = wh.reshape(heads, c, c_out)                                  # (H, C, C_out)
        w_eff = jnp.einsum('hfc,hco->hfo', w3, wh3).astype(jnp.bfloat16)   # (H, F, C_out)
        wscore = jnp.concatenate(
            [jnp.einsum('hfc,hc->fh', w3, att_src),
             jnp.einsum('hfc,hc->fh', w3, att_dst)], axis=1).astype(jnp.bfloat16)
        bh_eff = (gat_b @ wh + bh).astype(jnp.float32)                     # (1, C_out)

        z_eff, scores = _gat_transform(h, w_eff, wscore, tm)
        ssrc_t = jnp.transpose(scores[:, :heads])      # (H, N)  tiny layout glue
        sdst = scores[:, heads:]                        # (N, H)  tiny
        h = _gat_attention(mask_p, sdst, ssrc_t, z_eff, bh_eff, tm,
                           apply_relu=(li < num_layers - 1))

    return _pool_mlp(pool_p, h, wm1, bm1, wm2, bm2)


# ---------------------------------------------------------------------------
# Graph helpers + pure-JAX f32 reference.
# ---------------------------------------------------------------------------
def build_attention_mask(edge_index, num_nodes):
    """Dense mask M[d, s] = 1 iff edge s->d (message src->dst) or s == d."""
    src, dst = edge_index
    m = jnp.zeros((num_nodes, num_nodes), jnp.float32)
    m = m.at[dst, src].set(1.0)
    return jnp.maximum(m, jnp.eye(num_nodes, dtype=jnp.float32))


def build_pool_matrix(batch, num_graphs):
    onehot = (batch[None, :] == jnp.arange(num_graphs)[:, None]).astype(jnp.float32)
    counts = onehot.sum(axis=1, keepdims=True)
    return onehot / jnp.maximum(counts, 1.0)


def jax_reference(x, adj_mask, pool_mat, gat_layers, mlp_params):
    wm1, bm1, wm2, bm2 = mlp_params
    n = x.shape[0]
    h = x
    for li, (w, att_src, att_dst, gat_b, wh, bh) in enumerate(gat_layers):
        heads, c = att_src.shape
        z = h @ w
        z3 = z.reshape(n, heads, c)
        s_src = (z3 * att_src[None]).sum(-1)                  # (N, H)
        s_dst = (z3 * att_dst[None]).sum(-1)                  # (N, H)
        logits = s_dst[:, None, :] + s_src[None, :, :]        # (dst, src, H)
        e = jnp.where(logits > 0, logits, 0.2 * logits)
        e = jnp.where(adj_mask[:, :, None] > 0, e, -1e30)
        alpha = jax.nn.softmax(e, axis=1)
        out = jnp.einsum('dsh,shc->dhc', alpha, z3).reshape(n, heads * c) + gat_b
        h = out @ wh + bh
        if li < len(gat_layers) - 1:
            h = jnp.maximum(h, 0.0)
    g = pool_mat @ h
    g = jnp.maximum(g @ wm1 + bm1, 0.0)
    return g @ wm2 + bm2


if __name__ == "__main__":
    num_node_features = 8
    graph_hidden_channels = 32
    nheads = 4
    nhid = 32
    nout = 16
    nodes_per_graph = 128
    num_graphs = 2
    N = num_graphs * nodes_per_graph          # 256 nodes -> 2 row-tiles of 128

    keys = iter(jax.random.split(jax.random.PRNGKey(0), 32))

    def init(shape, scale=0.1):
        return scale * jax.random.normal(next(keys), shape, jnp.float32)

    x = jax.random.normal(next(keys), (N, num_node_features), jnp.float32)

    # two bidirectional ring graphs of 128 nodes each
    srcs, dsts = [], []
    for g in range(num_graphs):
        base = g * nodes_per_graph
        idx = jnp.arange(nodes_per_graph)
        srcs += [base + idx, base + (idx + 1) % nodes_per_graph]
        dsts += [base + (idx + 1) % nodes_per_graph, base + idx]
    edge_index = jnp.stack([jnp.concatenate(srcs), jnp.concatenate(dsts)])
    batch = jnp.repeat(jnp.arange(num_graphs, dtype=jnp.int32), nodes_per_graph)

    adj_mask = build_attention_mask(edge_index, N)
    pool_mat = build_pool_matrix(batch, num_graphs)

    hc = graph_hidden_channels * nheads
    gat_layers = []
    for f_in in (num_node_features, graph_hidden_channels, graph_hidden_channels):
        gat_layers.append((
            init((f_in, hc)),                          # GATConv lin weight (in, heads*C)
            init((nheads, graph_hidden_channels)),     # att_src
            init((nheads, graph_hidden_channels)),     # att_dst
            init((1, hc)),                             # GATConv bias (concat=True)
            init((hc, graph_hidden_channels)),         # head_linear weight
            init((1, graph_hidden_channels)),          # head_linear bias
        ))
    mlp_params = (init((graph_hidden_channels, nhid)), init((1, nhid)),
                  init((nhid, nout)), init((1, nout)))

    encoder = jax.jit(gat_encoder_pallas)   # default tile_nodes -> TM = 128
    out = jax.block_until_ready(encoder(x, adj_mask, pool_mat, gat_layers, mlp_params))

    ref = jax_reference(x, adj_mask, pool_mat, gat_layers, mlp_params)
    assert out.shape == (num_graphs, nout)
    assert bool(jnp.all(jnp.isfinite(out)))
    max_diff = float(jnp.max(jnp.abs(out - ref)))
    assert jnp.allclose(out, ref, atol=3e-2, rtol=3e-2), (
        f"mismatch vs f32 reference, max|diff|={max_diff}")
    print("KERNEL_OK")
</pallas_src>

<mosaic_0001>
module attributes {stable_mosaic.version = 11 : i64} {
  func.func @gat_transform_kernel(%arg0: i32, %arg1: memref<128x8xbf16, #tpu.memory_space<vmem>>, %arg2: memref<4x8x32xbf16, #tpu.memory_space<vmem>>, %arg3: memref<8x8xbf16, #tpu.memory_space<vmem>>, %arg4: memref<4x128x32xbf16, #tpu.memory_space<vmem>>, %arg5: memref<128x8xf32, #tpu.memory_space<vmem>>) attributes {dimension_semantics = [#tpu.dimension_semantics<parallel>], iteration_bounds = array<i64: 2>, scalar_prefetch = 0 : i64, scratch_operands = 0 : i64, tpu.core_type = #tpu.core_type<tc>, window_params = [{transform_indices = @transform_0, window_bounds = array<i64: 128, 8>}, {pipeline_mode = #tpu.pipeline_mode<synchronous>, transform_indices = @transform_1, window_bounds = array<i64: 4, 8, 32>}, {pipeline_mode = #tpu.pipeline_mode<synchronous>, transform_indices = @transform_2, window_bounds = array<i64: 8, 8>}, {transform_indices = @transform_3, window_bounds = array<i64: 4, 128, 32>}, {transform_indices = @transform_4, window_bounds = array<i64: 128, 8>}]} {
    %c0 = arith.constant 0 : index
    %c0_0 = arith.constant 0 : index
    %0 = vector.load %arg1[%c0, %c0_0] : memref<128x8xbf16, #tpu.memory_space<vmem>>, vector<128x8xbf16>
    %c0_1 = arith.constant 0 : index
    %c0_2 = arith.constant 0 : index
    %1 = vector.load %arg3[%c0_1, %c0_2] : memref<8x8xbf16, #tpu.memory_space<vmem>>, vector<8x8xbf16>
    %cst = arith.constant dense<0.000000e+00> : vector<128x8xf32>
    %2 = tpu.matmul %0, %1, %cst {dimension_numbers = #tpu.dot_dimension_numbers<[1], [0], [0], [1], [0, 0, 1, 1], [], []>} : vector<128x8xbf16>, vector<8x8xbf16>, vector<128x8xf32> -> vector<128x8xf32>
    %c0_3 = arith.constant 0 : index
    %c0_4 = arith.constant 0 : index
    %3 = vector.load %arg5[%c0_3, %c0_4] : memref<128x8xf32, #tpu.memory_space<vmem>>, vector<128x8xf32>
    tpu.vector_store %arg5[%c0_3, %c0_4], %2 {strides = array<i32>} : memref<128x8xf32, #tpu.memory_space<vmem>>, vector<128x8xf32>,
    %c0_5 = arith.constant 0 : index
    %c0_6 = arith.constant 0 : index
    %c0_7 = arith.constant 0 : index
    %4 = vector.load %arg2[%c0_5, %c0_6, %c0_7] : memref<4x8x32xbf16, #tpu.memory_space<vmem>>, vector<1x8x32xbf16>
    %5 = vector.shape_cast %4 : vector<1x8x32xbf16> to vector<8x32xbf16>
    %cst_8 = arith.constant dense<0.000000e+00> : vector<128x32xf32>
    %6 = tpu.matmul %0, %5, %cst_8 {dimension_numbers = #tpu.dot_dimension_numbers<[1], [0], [0], [1], [0, 0, 1, 1], [], []>} : vector<128x8xbf16>, vector<8x32xbf16>, vector<128x32xf32> -> vector<128x32xf32>
    %7 = arith.truncf %6 : vector<128x32xf32> to vector<128x32xbf16>
    %c0_9 = arith.constant 0 : index
    %c0_10 = arith.constant 0 : index
    %c0_11 = arith.constant 0 : index
    %8 = vector.load %arg4[%c0_9, %c0_10, %c0_11] : memref<4x128x32xbf16, #tpu.memory_space<vmem>>, vector<1x128x32xbf16>
    %9 = vector.shape_cast %8 : vector<1x128x32xbf16> to vector<128x32xbf16>
    %10 = vector.shape_cast %7 : vector<128x32xbf16> to vector<1x128x32xbf16>
    tpu.vector_store %arg4[%c0_9, %c0_10, %c0_11], %10 {strides = array<i32>} : memref<4x128x32xbf16, #tpu.memory_space<vmem>>, vector<1x128x32xbf16>,
    %c1 = arith.constant 1 : index
    %c0_12 = arith.constant 0 : index
    %c0_13 = arith.constant 0 : index
    %11 = vector.load %arg2[%c1, %c0_12, %c0_13] : memref<4x8x32xbf16, #tpu.memory_space<vmem>>, vector<1x8x32xbf16>
    %12 = vector.shape_cast %11 : vector<1x8x32xbf16> to vector<8x32xbf16>
    %cst_14 = arith.constant dense<0.000000e+00> : vector<128x32xf32>
    %13 = tpu.matmul %0, %12, %cst_14 {dimension_numbers = #tpu.dot_dimension_numbers<[1], [0], [0], [1], [0, 0, 1, 1], [], []>} : vector<128x8xbf16>, vector<8x32xbf16>, vector<128x32xf32> -> vector<128x32xf32>
    %14 = arith.truncf %13 : vector<128x32xf32> to vector<128x32xbf16>
    %c1_15 = arith.constant 1 : index
    %c0_16 = arith.constant 0 : index
    %c0_17 = arith.constant 0 : index
    %15 = vector.load %arg4[%c1_15, %c0_16, %c0_17] : memref<4x128x32xbf16, #tpu.memory_space<vmem>>, vector<1x128x32xbf16>
    %16 = vector.shape_cast %15 : vector<1x128x32xbf16> to vector<128x32xbf16>
    %17 = vector.shape_cast %14 : vector<128x32xbf16> to vector<1x128x32xbf16>
    tpu.vector_store %arg4[%c1_15, %c0_16, %c0_17], %17 {strides = array<i32>} : memref<4x128x32xbf16, #tpu.memory_space<vmem>>, vector<1x128x32xbf16>,
    %c2 = arith.constant 2 : index
    %c0_18 = arith.constant 0 : index
    %c0_19 = arith.constant 0 : index
    %18 = vector.load %arg2[%c2, %c0_18, %c0_19] : memref<4x8x32xbf16, #tpu.memory_space<vmem>>, vector<1x8x32xbf16>
    %19 = vector.shape_cast %18 : vector<1x8x32xbf16> to vector<8x32xbf16>
    %cst_20 = arith.constant dense<0.000000e+00> : vector<128x32xf32>
    %20 = tpu.matmul %0, %19, %cst_20 {dimension_numbers = #tpu.dot_dimension_numbers<[1], [0], [0], [1], [0, 0, 1, 1], [], []>} : vector<128x8xbf16>, vector<8x32xbf16>, vector<128x32xf32> -> vector<128x32xf32>
    %21 = arith.truncf %20 : vector<128x32xf32> to vector<128x32xbf16>
    %c2_21 = arith.constant 2 : index
    %c0_22 = arith.constant 0 : index
    %c0_23 = arith.constant 0 : index
    %22 = vector.load %arg4[%c2_21, %c0_22, %c0_23] : memref<4x128x32xbf16, #tpu.memory_space<vmem>>, vector<1x128x32xbf16>
    %23 = vector.shape_cast %22 : vector<1x128x32xbf16> to vector<128x32xbf16>
    %24 = vector.shape_cast %21 : vector<128x32xbf16> to vector<1x128x32xbf16>
    tpu.vector_store %arg4[%c2_21, %c0_22, %c0_23], %24 {strides = array<i32>} : memref<4x128x32xbf16, #tpu.memory_space<vmem>>, vector<1x128x32xbf16>,
    %c3 = arith.constant 3 : index
    %c0_24 = arith.constant 0 : index
    %c0_25 = arith.constant 0 : index
    %25 = vector.load %arg2[%c3, %c0_24, %c0_25] : memref<4x8x32xbf16, #tpu.memory_space<vmem>>, vector<1x8x32xbf16>
    %26 = vector.shape_cast %25 : vector<1x8x32xbf16> to vector<8x32xbf16>
    %cst_26 = arith.constant dense<0.000000e+00> : vector<128x32xf32>
    %27 = tpu.matmul %0, %26, %cst_26 {dimension_numbers = #tpu.dot_dimension_numbers<[1], [0], [0], [1], [0, 0, 1, 1], [], []>} : vector<128x8xbf16>, vector<8x32xbf16>, vector<128x32xf32> -> vector<128x32xf32>
    %28 = arith.truncf %27 : vector<128x32xf32> to vector<128x32xbf16>
    %c3_27 = arith.constant 3 : index
    %c0_28 = arith.constant 0 : index
    %c0_29 = arith.constant 0 : index
    %29 = vector.load %arg4[%c3_27, %c0_28, %c0_29] : memref<4x128x32xbf16, #tpu.memory_space<vmem>>, vector<1x128x32xbf16>
    %30 = vector.shape_cast %29 : vector<1x128x32xbf16> to vector<128x32xbf16>
    %31 = vector.shape_cast %28 : vector<128x32xbf16> to vector<1x128x32xbf16>
    tpu.vector_store %arg4[%c3_27, %c0_28, %c0_29], %31 {strides = array<i32>} : memref<4x128x32xbf16, #tpu.memory_space<vmem>>, vector<1x128x32xbf16>,
    return
  }
  func.func @transform_0(%arg0: i32) -> (i32, i32) {
    %c0_i32 = arith.constant 0 : i32
    %c0_i32_0 = arith.constant 0 : i32
    return %arg0, %c0_i32 : i32, i32
  }
  func.func @transform_1(%arg0: i32) -> (i32, i32, i32) {
    %c0_i32 = arith.constant 0 : i32
    %c0_i32_0 = arith.constant 0 : i32
    %c0_i32_1 = arith.constant 0 : i32
    %c0_i32_2 = arith.constant 0 : i32
    return %c0_i32, %c0_i32_0, %c0_i32_1 : i32, i32, i32
  }
  func.func @transform_2(%arg0: i32) -> (i32, i32) {
    %c0_i32 = arith.constant 0 : i32
    %c0_i32_0 = arith.constant 0 : i32
    %c0_i32_1 = arith.constant 0 : i32
    return %c0_i32, %c0_i32_0 : i32, i32
  }
  func.func @transform_3(%arg0: i32) -> (i32, i32, i32) {
    %c0_i32 = arith.constant 0 : i32
    %c0_i32_0 = arith.constant 0 : i32
    %c0_i32_1 = arith.constant 0 : i32
    return %c0_i32, %arg0, %c0_i32_0 : i32, i32, i32
  }
  func.func @transform_4(%arg0: i32) -> (i32, i32) {
    %c0_i32 = arith.constant 0 : i32
    %c0_i32_0 = arith.constant 0 : i32
    return %arg0, %c0_i32 : i32, i32
  }
}

module attributes {stable_mosaic.version = 11 : i64} {
  func.func @gat_attention_kernel(%arg0: i32, %arg1: memref<128x256xi8, #tpu.memory_space<vmem>>, %arg2: memref<128x4xf32, #tpu.memory_space<vmem>>, %arg3: memref<4x256xf32, #tpu.memory_space<vmem>>, %arg4: memref<4x256x32xbf16, #tpu.memory_space<vmem>>, %arg5: memref<1x32xf32, #tpu.memory_space<vmem>>, %arg6: memref<128x32xbf16, #tpu.memory_space<vmem>>) attributes {dimension_semantics = [#tpu.dimension_semantics<parallel>], iteration_bounds = array<i64: 2>, scalar_prefetch = 0 : i64, scratch_operands = 0 : i64, tpu.core_type = #tpu.core_type<tc>, window_params = [{transform_indices = @transform_0, window_bounds = array<i64: 128, 256>}, {transform_indices = @transform_1, window_bounds = array<i64: 128, 4>}, {pipeline_mode = #tpu.pipeline_mode<synchronous>, transform_indices = @transform_2, window_bounds = array<i64: 4, 256>}, {pipeline_mode = #tpu.pipeline_mode<synchronous>, transform_indices = @transform_3, window_bounds = array<i64: 4, 256, 32>}, {pipeline_mode = #tpu.pipeline_mode<synchronous>, transform_indices = @transform_4, window_bounds = array<i64: 1, 32>}, {transform_indices = @transform_5, window_bounds = array<i64: 128, 32>}]} {
    %c0 = arith.constant 0 : index
    %c0_0 = arith.constant 0 : index
    %0 = vector.load %arg1[%c0, %c0_0] : memref<128x256xi8, #tpu.memory_space<vmem>>, vector<128x256xi8>
    %1 = arith.sitofp %0 : vector<128x256xi8> to vector<128x256xf32>
    %cst = arith.constant 1.000000e+00 : f32
    %2 = vector.broadcast %cst : f32 to vector<128x256xf32>
    %3 = arith.subf %1, %2 : vector<128x256xf32>
    %cst_1 = arith.constant 1.000000e+30 : f32
    %4 = vector.broadcast %cst_1 : f32 to vector<128x256xf32>
    %5 = arith.mulf %3, %4 : vector<128x256xf32>
    %c0_2 = arith.constant 0 : index
    %c0_3 = arith.constant 0 : index
    %6 = vector.load %arg2[%c0_2, %c0_3] : memref<128x4xf32, #tpu.memory_space<vmem>>, vector<128x4xf32>
    %cst_4 = arith.constant 0.000000e+00 : f32
    %7 = vector.broadcast %cst_4 : f32 to vector<128x32xf32>
    %8 = vector.extract_strided_slice %6 {offsets = [0, 0], sizes = [128, 1], strides = [1, 1]} : vector<128x4xf32> to vector<128x1xf32>
    %c0_5 = arith.constant 0 : index
    %c0_6 = arith.constant 0 : index
    %9 = vector.load %arg3[%c0_5, %c0_6] : memref<4x256xf32, #tpu.memory_space<vmem>>, vector<1x256xf32>
    %10 = vector.broadcast %8 : vector<128x1xf32> to vector<128x256xf32>
    %11 = vector.broadcast %9 : vector<1x256xf32> to vector<128x256xf32>
    %12 = arith.addf %10, %11 : vector<128x256xf32>
    %cst_7 = arith.constant 0.000000e+00 : f32
    %13 = vector.broadcast %cst_7 : f32 to vector<128x256xf32>
    %14 = arith.cmpf ogt, %12, %13 : vector<128x256xf32>
    %cst_8 = arith.constant 2.000000e-01 : f32
    %15 = vector.broadcast %cst_8 : f32 to vector<128x256xf32>
    %16 = arith.mulf %15, %12 : vector<128x256xf32>
    %17 = arith.select %14, %12, %16 : vector<128x256xi1>, vector<128x256xf32>
    %18 = arith.addf %17, %5 : vector<128x256xf32>
    %cst_9 = arith.constant dense<0xFF800000> : vector<128xf32>
    %19 = vector.multi_reduction <maximumf>, %18, %cst_9 [1] : vector<128x256xf32> to vector<128xf32>
    %20 = vector.shape_cast %19 : vector<128xf32> to vector<128x1xf32>
    %21 = vector.broadcast %20 : vector<128x1xf32> to vector<128x256xf32>
    %22 = arith.subf %18, %21 : vector<128x256xf32>
    %23 = math.exp %22 : vector<128x256xf32>
    %cst_10 = arith.constant dense<0.000000e+00> : vector<128xf32>
    %24 = vector.multi_reduction <add>, %23, %cst_10 [1] : vector<128x256xf32> to vector<128xf32>
    %25 = vector.shape_cast %24 : vector<128xf32> to vector<128x1xf32>
    %26 = tpu.reciprocal %25 {approx = true} : vector<128x1xf32> -> vector<128x1xf32>
    %27 = vector.broadcast %26 : vector<128x1xf32> to vector<128x256xf32>
    %28 = arith.mulf %23, %27 : vector<128x256xf32>
    %29 = arith.truncf %28 : vector<128x256xf32> to vector<128x256xbf16>
    %c0_11 = arith.constant 0 : index
    %c0_12 = arith.constant 0 : index
    %c0_13 = arith.constant 0 : index
    %30 = vector.load %arg4[%c0_11, %c0_12, %c0_13] : memref<4x256x32xbf16, #tpu.memory_space<vmem>>, vector<1x256x32xbf16>
    %31 = vector.shape_cast %30 : vector<1x256x32xbf16> to vector<256x32xbf16>
    %cst_14 = arith.constant dense<0.000000e+00> : vector<128x32xf32>
    %32 = tpu.matmul %29, %31, %cst_14 {dimension_numbers = #tpu.dot_dimension_numbers<[1], [0], [0], [1], [0, 0, 1, 1], [], []>} : vector<128x256xbf16>, vector<256x32xbf16>, vector<128x32xf32> -> vector<128x32xf32>
    %33 = arith.addf %7, %32 : vector<128x32xf32>
    %34 = vector.extract_strided_slice %6 {offsets = [0, 1], sizes = [128, 1], strides = [1, 1]} : vector<128x4xf32> to vector<128x1xf32>
    %c1 = arith.constant 1 : index
    %c0_15 = arith.constant 0 : index
    %35 = vector.load %arg3[%c1, %c0_15] : memref<4x256xf32, #tpu.memory_space<vmem>>, vector<1x256xf32>
    %36 = vector.broadcast %34 : vector<128x1xf32> to vector<128x256xf32>
    %37 = vector.broadcast %35 : vector<1x256xf32> to vector<128x256xf32>
    %38 = arith.addf %36, %37 : vector<128x256xf32>
    %cst_16 = arith.constant 0.000000e+00 : f32
    %39 = vector.broadcast %cst_16 : f32 to vector<128x256xf32>
    %40 = arith.cmpf ogt, %38, %39 : vector<128x256xf32>
    %cst_17 = arith.constant 2.000000e-01 : f32
    %41 = vector.broadcast %cst_17 : f32 to vector<128x256xf32>
    %42 = arith.mulf %41, %38 : vector<128x256xf32>
    %43 = arith.select %40, %38, %42 : vector<128x256xi1>, vector<128x256xf32>
    %44 = arith.addf %43, %5 : vector<128x256xf32>
    %cst_18 = arith.constant dense<0xFF800000> : vector<128xf32>
    %45 = vector.multi_reduction <maximumf>, %44, %cst_18 [1] : vector<128x256xf32> to vector<128xf32>
    %46 = vector.shape_cast %45 : vector<128xf32> to vector<128x1xf32>
    %47 = vector.broadcast %46 : vector<128x1xf32> to vector<128x256xf32>
    %48 = arith.subf %44, %47 : vector<128x256xf32>
    %49 = math.exp %48 : vector<128x256xf32>
    %cst_19 = arith.constant dense<0.000000e+00> : vector<128xf32>
    %50 = vector.multi_reduction <add>, %49, %cst_19 [1] : vector<128x256xf32> to vector<128xf32>
    %51 = vector.shape_cast %50 : vector<128xf32> to vector<128x1xf32>
    %52 = tpu.reciprocal %51 {approx = true} : vector<128x1xf32> -> vector<128x1xf32>
    %53 = vector.broadcast %52 : vector<128x1xf32> to vector<128x256xf32>
    %54 = arith.mulf %49, %53 : vector<128x256xf32>
    %55 = arith.truncf %54 : vector<128x256xf32> to vector<128x256xbf16>
    %c1_20 = arith.constant 1 : index
    %c0_21 = arith.constant 0 : index
    %c0_22 = arith.constant 0 : index
    %56 = vector.load %arg4[%c1_20, %c0_21, %c0_22] : memref<4x256x32xbf16, #tpu.memory_space<vmem>>, vector<1x256x32xbf16>
    %57 = vector.shape_cast %56 : vector<1x256x32xbf16> to vector<256x32xbf16>
    %cst_23 = arith.constant dense<0.000000e+00> : vector<128x32xf32>
    %58 = tpu.matmul %55, %57, %cst_23 {dimension_numbers = #tpu.dot_dimension_numbers<[1], [0], [0], [1], [0, 0, 1, 1], [], []>} : vector<128x256xbf16>, vector<256x32xbf16>, vector<128x32xf32> -> vector<128x32xf32>
    %59 = arith.addf %33, %58 : vector<128x32xf32>
    %60 = vector.extract_strided_slice %6 {offsets = [0, 2], sizes = [128, 1], strides = [1, 1]} : vector<128x4xf32> to vector<128x1xf32>
    %c2 = arith.constant 2 : index
    %c0_24 = arith.constant 0 : index
    %61 = vector.load %arg3[%c2, %c0_24] : memref<4x256xf32, #tpu.memory_space<vmem>>, vector<1x256xf32>
    %62 = vector.broadcast %60 : vector<128x1xf32> to vector<128x256xf32>
    %63 = vector.broadcast %61 : vector<1x256xf32> to vector<128x256xf32>
    %64 = arith.addf %62, %63 : vector<128x256xf32>
    %cst_25 = arith.constant 0.000000e+00 : f32
    %65 = vector.broadcast %cst_25 : f32 to vector<128x256xf32>
    %66 = arith.cmpf ogt, %64, %65 : vector<128x256xf32>
    %cst_26 = arith.constant 2.000000e-01 : f32
    %67 = vector.broadcast %cst_26 : f32 to vector<128x256xf32>
    %68 = arith.mulf %67, %64 : vector<128x256xf32>
    %69 = arith.select %66, %64, %68 : vector<128x256xi1>, vector<128x256xf32>
    %70 = arith.addf %69, %5 : vector<128x256xf32>
    %cst_27 = arith.constant dense<0xFF800000> : vector<128xf32>
    %71 = vector.multi_reduction <maximumf>, %70, %cst_27 [1] : vector<128x256xf32> to vector<128xf32>
    %72 = vector.shape_cast %71 : vector<128xf32> to vector<128x1xf32>
    %73 = vector.broadcast %72 : vector<128x1xf32> to vector<128x256xf32>
    %74 = arith.subf %70, %73 : vector<128x256xf32>
    %75 = math.exp %74 : vector<128x256xf32>
    %cst_28 = arith.constant dense<0.000000e+00> : vector<128xf32>
    %76 = vector.multi_reduction <add>, %75, %cst_28 [1] : vector<128x256xf32> to vector<128xf32>
    %77 = vector.shape_cast %76 : vector<128xf32> to vector<128x1xf32>
    %78 = tpu.reciprocal %77 {approx = true} : vector<128x1xf32> -> vector<128x1xf32>
    %79 = vector.broadcast %78 : vector<128x1xf32> to vector<128x256xf32>
    %80 = arith.mulf %75, %79 : vector<128x256xf32>
    %81 = arith.truncf %80 : vector<128x256xf32> to vector<128x256xbf16>
    %c2_29 = arith.constant 2 : index
    %c0_30 = arith.constant 0 : index
    %c0_31 = arith.constant 0 : index
    %82 = vector.load %arg4[%c2_29, %c0_30, %c0_31] : memref<4x256x32xbf16, #tpu.memory_space<vmem>>, vector<1x256x32xbf16>
    %83 = vector.shape_cast %82 : vector<1x256x32xbf16> to vector<256x32xbf16>
    %cst_32 = arith.constant dense<0.000000e+00> : vector<128x32xf32>
    %84 = tpu.matmul %81, %83, %cst_32 {dimension_numbers = #tpu.dot_dimension_numbers<[1], [0], [0], [1], [0, 0, 1, 1], [], []>} : vector<128x256xbf16>, vector<256x32xbf16>, vector<128x32xf32> -> vector<128x32xf32>
    %85 = arith.addf %59, %84 : vector<128x32xf32>
    %86 = vector.extract_strided_slice %6 {offsets = [0, 3], sizes = [128, 1], strides = [1, 1]} : vector<128x4xf32> to vector<128x1xf32>
    %c3 = arith.constant 3 : index
    %c0_33 = arith.constant 0 : index
    %87 = vector.load %arg3[%c3, %c0_33] : memref<4x256xf32, #tpu.memory_space<vmem>>, vector<1x256xf32>
    %88 = vector.broadcast %86 : vector<128x1xf32> to vector<128x256xf32>
    %89 = vector.broadcast %87 : vector<1x256xf32> to vector<128x256xf32>
    %90 = arith.addf %88, %89 : vector<128x256xf32>
    %cst_34 = arith.constant 0.000000e+00 : f32
    %91 = vector.broadcast %cst_34 : f32 to vector<128x256xf32>
    %92 = arith.cmpf ogt, %90, %91 : vector<128x256xf32>
    %cst_35 = arith.constant 2.000000e-01 : f32
    %93 = vector.broadcast %cst_35 : f32 to vector<128x256xf32>
    %94 = arith.mulf %93, %90 : vector<128x256xf32>
    %95 = arith.select %92, %90, %94 : vector<128x256xi1>, vector<128x256xf32>
    %96 = arith.addf %95, %5 : vector<128x256xf32>
    %cst_36 = arith.constant dense<0xFF800000> : vector<128xf32>
    %97 = vector.multi_reduction <maximumf>, %96, %cst_36 [1] : vector<128x256xf32> to vector<128xf32>
    %98 = vector.shape_cast %97 : vector<128xf32> to vector<128x1xf32>
    %99 = vector.broadcast %98 : vector<128x1xf32> to vector<128x256xf32>
    %100 = arith.subf %96, %99 : vector<128x256xf32>
    %101 = math.exp %100 : vector<128x256xf32>
    %cst_37 = arith.constant dense<0.000000e+00> : vector<128xf32>
    %102 = vector.multi_reduction <add>, %101, %cst_37 [1] : vector<128x256xf32> to vector<128xf32>
    %103 = vector.shape_cast %102 : vector<128xf32> to vector<128x1xf32>
    %104 = tpu.reciprocal %103 {approx = true} : vector<128x1xf32> -> vector<128x1xf32>
    %105 = vector.broadcast %104 : vector<128x1xf32> to vector<128x256xf32>
    %106 = arith.mulf %101, %105 : vector<128x256xf32>
    %107 = arith.truncf %106 : vector<128x256xf32> to vector<128x256xbf16>
    %c3_38 = arith.constant 3 : index
    %c0_39 = arith.constant 0 : index
    %c0_40 = arith.constant 0 : index
    %108 = vector.load %arg4[%c3_38, %c0_39, %c0_40] : memref<4x256x32xbf16, #tpu.memory_space<vmem>>, vector<1x256x32xbf16>
    %109 = vector.shape_cast %108 : vector<1x256x32xbf16> to vector<256x32xbf16>
    %cst_41 = arith.constant dense<0.000000e+00> : vector<128x32xf32>
    %110 = tpu.matmul %107, %109, %cst_41 {dimension_numbers = #tpu.dot_dimension_numbers<[1], [0], [0], [1], [0, 0, 1, 1], [], []>} : vector<128x256xbf16>, vector<256x32xbf16>, vector<128x32xf32> -> vector<128x32xf32>
    %111 = arith.addf %85, %110 : vector<128x32xf32>
    %c0_42 = arith.constant 0 : index
    %c0_43 = arith.constant 0 : index
    %112 = vector.load %arg5[%c0_42, %c0_43] : memref<1x32xf32, #tpu.memory_space<vmem>>, vector<1x32xf32>
    %113 = vector.broadcast %112 : vector<1x32xf32> to vector<128x32xf32>
    %114 = arith.addf %111, %113 : vector<128x32xf32>
    %cst_44 = arith.constant 0.000000e+00 : f32
    %115 = vector.broadcast %cst_44 : f32 to vector<128x32xf32>
    %116 = arith.maximumf %114, %115 : vector<128x32xf32>
    %117 = arith.truncf %116 : vector<128x32xf32> to vector<128x32xbf16>
    %c0_45 = arith.constant 0 : index
    %c0_46 = arith.constant 0 : index
    %118 = vector.load %arg6[%c0_45, %c0_46] : memref<128x32xbf16, #tpu.memory_space<vmem>>, vector<128x32xbf16>
    tpu.vector_store %arg6[%c0_45, %c0_46], %117 {strides = array<i32>} : memref<128x32xbf16, #tpu.memory_space<vmem>>, vector<128x32xbf16>,
    return
  }
  func.func @transform_0(%arg0: i32) -> (i32, i32) {
    %c0_i32 = arith.constant 0 : i32
    %c0_i32_0 = arith.constant 0 : i32
    return %arg0, %c0_i32 : i32, i32
  }
  func.func @transform_1(%arg0: i32) -> (i32, i32) {
    %c0_i32 = arith.constant 0 : i32
    %c0_i32_0 = arith.constant 0 : i32
    return %arg0, %c0_i32 : i32, i32
  }
  func.func @transform_2(%arg0: i32) -> (i32, i32) {
    %c0_i32 = arith.constant 0 : i32
    %c0_i32_0 = arith.constant 0 : i32
    %c0_i32_1 = arith.constant 0 : i32
    return %c0_i32, %c0_i32_0 : i32, i32
  }
  func.func @transform_3(%arg0: i32) -> (i32, i32, i32) {
    %c0_i32 = arith.constant 0 : i32
    %c0_i32_0 = arith.constant 0 : i32
    %c0_i32_1 = arith.constant 0 : i32
    %c0_i32_2 = arith.constant 0 : i32
    return %c0_i32, %c0_i32_0, %c0_i32_1 : i32, i32, i32
  }
  func.func @transform_4(%arg0: i32) -> (i32, i32) {
    %c0_i32 = arith.constant 0 : i32
    %c0_i32_0 = arith.constant 0 : i32
    %c0_i32_1 = arith.constant 0 : i32
    return %c0_i32, %c0_i32_0 : i32, i32
  }
  func.func @transform_5(%arg0: i32) -> (i32, i32) {
    %c0_i32 = arith.constant 0 : i32
    %c0_i32_0 = arith.constant 0 : i32
    return %arg0, %c0_i32 : i32, i32
  }
}

module attributes {stable_mosaic.version = 11 : i64} {
  func.func @gat_transform_kernel(%arg0: i32, %arg1: memref<128x32xbf16, #tpu.memory_space<vmem>>, %arg2: memref<4x32x32xbf16, #tpu.memory_space<vmem>>, %arg3: memref<32x8xbf16, #tpu.memory_space<vmem>>, %arg4: memref<4x128x32xbf16, #tpu.memory_space<vmem>>, %arg5: memref<128x8xf32, #tpu.memory_space<vmem>>) attributes {dimension_semantics = [#tpu.dimension_semantics<parallel>], iteration_bounds = array<i64: 2>, scalar_prefetch = 0 : i64, scratch_operands = 0 : i64, tpu.core_type = #tpu.core_type<tc>, window_params = [{transform_indices = @transform_0, window_bounds = array<i64: 128, 32>}, {pipeline_mode = #tpu.pipeline_mode<synchronous>, transform_indices = @transform_1, window_bounds = array<i64: 4, 32, 32>}, {pipeline_mode = #tpu.pipeline_mode<synchronous>, transform_indices = @transform_2, window_bounds = array<i64: 32, 8>}, {transform_indices = @transform_3, window_bounds = array<i64: 4, 128, 32>}, {transform_indices = @transform_4, window_bounds = array<i64: 128, 8>}]} {
    %c0 = arith.constant 0 : index
    %c0_0 = arith.constant 0 : index
    %0 = vector.load %arg1[%c0, %c0_0] : memref<128x32xbf16, #tpu.memory_space<vmem>>, vector<128x32xbf16>
    %c0_1 = arith.constant 0 : index
    %c0_2 = arith.constant 0 : index
    %1 = vector.load %arg3[%c0_1, %c0_2] : memref<32x8xbf16, #tpu.memory_space<vmem>>, vector<32x8xbf16>
    %cst = arith.constant dense<0.000000e+00> : vector<128x8xf32>
    %2 = tpu.matmul %0, %1, %cst {dimension_numbers = #tpu.dot_dimension_numbers<[1], [0], [0], [1], [0, 0, 1, 1], [], []>} : vector<128x32xbf16>, vector<32x8xbf16>, vector<128x8xf32> -> vector<128x8xf32>
    %c0_3 = arith.constant 0 : index
    %c0_4 = arith.constant 0 : index
    %3 = vector.load %arg5[%c0_3, %c0_4] : memref<128x8xf32, #tpu.memory_space<vmem>>, vector<128x8xf32>
    tpu.vector_store %arg5[%c0_3, %c0_4], %2 {strides = array<i32>} : memref<128x8xf32, #tpu.memory_space<vmem>>, vector<128x8xf32>,
    %c0_5 = arith.constant 0 : index
    %c0_6 = arith.constant 0 : index
    %c0_7 = arith.constant 0 : index
    %4 = vector.load %arg2[%c0_5, %c0_6, %c0_7] : memref<4x32x32xbf16, #tpu.memory_space<vmem>>, vector<1x32x32xbf16>
    %5 = vector.shape_cast %4 : vector<1x32x32xbf16> to vector<32x32xbf16>
    %cst_8 = arith.constant dense<0.000000e+00> : vector<128x32xf32>
    %6 = tpu.matmul %0, %5, %cst_8 {dimension_numbers = #tpu.dot_dimension_numbers<[1], [0], [0], [1], [0, 0, 1, 1], [], []>} : vector<128x32xbf16>, vector<32x32xbf16>, vector<128x32xf32> -> vector<128x32xf32>
    %7 = arith.truncf %6 : vector<128x32xf32> to vector<128x32xbf16>
    %c0_9 = arith.constant 0 : index
    %c0_10 = arith.constant 0 : index
    %c0_11 = arith.constant 0 : index
    %8 = vector.load %arg4[%c0_9, %c0_10, %c0_11] : memref<4x128x32xbf16, #tpu.memory_space<vmem>>, vector<1x128x32xbf16>
    %9 = vector.shape_cast %8 : vector<1x128x32xbf16> to vector<128x32xbf16>
    %10 = vector.shape_cast %7 : vector<128x32xbf16> to vector<1x128x32xbf16>
    tpu.vector_store %arg4[%c0_9, %c0_10, %c0_11], %10 {strides = array<i32>} : memref<4x128x32xbf16, #tpu.memory_space<vmem>>, vector<1x128x32xbf16>,
    %c1 = arith.constant 1 : index
    %c0_12 = arith.constant 0 : index
    %c0_13 = arith.constant 0 : index
    %11 = vector.load %arg2[%c1, %c0_12, %c0_13] : memref<4x32x32xbf16, #tpu.memory_space<vmem>>, vector<1x32x32xbf16>
    %12 = vector.shape_cast %11 : vector<1x32x32xbf16> to vector<32x32xbf16>
    %cst_14 = arith.constant dense<0.000000e+00> : vector<128x32xf32>
    %13 = tpu.matmul %0, %12, %cst_14 {dimension_numbers = #tpu.dot_dimension_numbers<[1], [0], [0], [1], [0, 0, 1, 1], [], []>} : vector<128x32xbf16>, vector<32x32xbf16>, vector<128x32xf32> -> vector<128x32xf32>
    %14 = arith.truncf %13 : vector<128x32xf32> to vector<128x32xbf16>
    %c1_15 = arith.constant 1 : index
    %c0_16 = arith.constant 0 : index
    %c0_17 = arith.constant 0 : index
    %15 = vector.load %arg4[%c1_15, %c0_16, %c0_17] : memref<4x128x32xbf16, #tpu.memory_space<vmem>>, vector<1x128x32xbf16>
    %16 = vector.shape_cast %15 : vector<1x128x32xbf16> to vector<128x32xbf16>
    %17 = vector.shape_cast %14 : vector<128x32xbf16> to vector<1x128x32xbf16>
    tpu.vector_store %arg4[%c1_15, %c0_16, %c0_17], %17 {strides = array<i32>} : memref<4x128x32xbf16, #tpu.memory_space<vmem>>, vector<1x128x32xbf16>,
    %c2 = arith.constant 2 : index
    %c0_18 = arith.constant 0 : index
    %c0_19 = arith.constant 0 : index
    %18 = vector.load %arg2[%c2, %c0_18, %c0_19] : memref<4x32x32xbf16, #tpu.memory_space<vmem>>, vector<1x32x32xbf16>
    %19 = vector.shape_cast %18 : vector<1x32x32xbf16> to vector<32x32xbf16>
    %cst_20 = arith.constant dense<0.000000e+00> : vector<128x32xf32>
    %20 = tpu.matmul %0, %19, %cst_20 {dimension_numbers = #tpu.dot_dimension_numbers<[1], [0], [0], [1], [0, 0, 1, 1], [], []>} : vector<128x32xbf16>, vector<32x32xbf16>, vector<128x32xf32> -> vector<128x32xf32>
    %21 = arith.truncf %20 : vector<128x32xf32> to vector<128x32xbf16>
    %c2_21 = arith.constant 2 : index
    %c0_22 = arith.constant 0 : index
    %c0_23 = arith.constant 0 : index
    %22 = vector.load %arg4[%c2_21, %c0_22, %c0_23] : memref<4x128x32xbf16, #tpu.memory_space<vmem>>, vector<1x128x32xbf16>
    %23 = vector.shape_cast %22 : vector<1x128x32xbf16> to vector<128x32xbf16>
    %24 = vector.shape_cast %21 : vector<128x32xbf16> to vector<1x128x32xbf16>
    tpu.vector_store %arg4[%c2_21, %c0_22, %c0_23], %24 {strides = array<i32>} : memref<4x128x32xbf16, #tpu.memory_space<vmem>>, vector<1x128x32xbf16>,
    %c3 = arith.constant 3 : index
    %c0_24 = arith.constant 0 : index
    %c0_25 = arith.constant 0 : index
    %25 = vector.load %arg2[%c3, %c0_24, %c0_25] : memref<4x32x32xbf16, #tpu.memory_space<vmem>>, vector<1x32x32xbf16>
    %26 = vector.shape_cast %25 : vector<1x32x32xbf16> to vector<32x32xbf16>
    %cst_26 = arith.constant dense<0.000000e+00> : vector<128x32xf32>
    %27 = tpu.matmul %0, %26, %cst_26 {dimension_numbers = #tpu.dot_dimension_numbers<[1], [0], [0], [1], [0, 0, 1, 1], [], []>} : vector<128x32xbf16>, vector<32x32xbf16>, vector<128x32xf32> -> vector<128x32xf32>
    %28 = arith.truncf %27 : vector<128x32xf32> to vector<128x32xbf16>
    %c3_27 = arith.constant 3 : index
    %c0_28 = arith.constant 0 : index
    %c0_29 = arith.constant 0 : index
    %29 = vector.load %arg4[%c3_27, %c0_28, %c0_29] : memref<4x128x32xbf16, #tpu.memory_space<vmem>>, vector<1x128x32xbf16>
    %30 = vector.shape_cast %29 : vector<1x128x32xbf16> to vector<128x32xbf16>
    %31 = vector.shape_cast %28 : vector<128x32xbf16> to vector<1x128x32xbf16>
    tpu.vector_store %arg4[%c3_27, %c0_28, %c0_29], %31 {strides = array<i32>} : memref<4x128x32xbf16, #tpu.memory_space<vmem>>, vector<1x128x32xbf16>,
    return
  }
  func.func @transform_0(%arg0: i32) -> (i32, i32) {
    %c0_i32 = arith.constant 0 : i32
    %c0_i32_0 = arith.constant 0 : i32
    return %arg0, %c0_i32 : i32, i32
  }
  func.func @transform_1(%arg0: i32) -> (i32, i32, i32) {
    %c0_i32 = arith.constant 0 : i32
    %c0_i32_0 = arith.constant 0 : i32
    %c0_i32_1 = arith.constant 0 : i32
    %c0_i32_2 = arith.constant 0 : i32
    return %c0_i32, %c0_i32_0, %c0_i32_1 : i32, i32, i32
  }
  func.func @transform_2(%arg0: i32) -> (i32, i32) {
    %c0_i32 = arith.constant 0 : i32
    %c0_i32_0 = arith.constant 0 : i32
    %c0_i32_1 = arith.constant 0 : i32
    return %c0_i32, %c0_i32_0 : i32, i32
  }
  func.func @transform_3(%arg0: i32) -> (i32, i32, i32) {
    %c0_i32 = arith.constant 0 : i32
    %c0_i32_0 = arith.constant 0 : i32
    %c0_i32_1 = arith.constant 0 : i32
    return %c0_i32, %arg0, %c0_i32_0 : i32, i32, i32
  }
  func.func @transform_4(%arg0: i32) -> (i32, i32) {
    %c0_i32 = arith.constant 0 : i32
    %c0_i32_0 = arith.constant 0 : i32
    return %arg0, %c0_i32 : i32, i32
  }
}

module attributes {stable_mosaic.version = 11 : i64} {
  func.func @gat_attention_kernel(%arg0: i32, %arg1: memref<128x256xi8, #tpu.memory_space<vmem>>, %arg2: memref<128x4xf32, #tpu.memory_space<vmem>>, %arg3: memref<4x256xf32, #tpu.memory_space<vmem>>, %arg4: memref<4x256x32xbf16, #tpu.memory_space<vmem>>, %arg5: memref<1x32xf32, #tpu.memory_space<vmem>>, %arg6: memref<128x32xbf16, #tpu.memory_space<vmem>>) attributes {dimension_semantics = [#tpu.dimension_semantics<parallel>], iteration_bounds = array<i64: 2>, scalar_prefetch = 0 : i64, scratch_operands = 0 : i64, tpu.core_type = #tpu.core_type<tc>, window_params = [{transform_indices = @transform_0, window_bounds = array<i64: 128, 256>}, {transform_indices = @transform_1, window_bounds = array<i64: 128, 4>}, {pipeline_mode = #tpu.pipeline_mode<synchronous>, transform_indices = @transform_2, window_bounds = array<i64: 4, 256>}, {pipeline_mode = #tpu.pipeline_mode<synchronous>, transform_indices = @transform_3, window_bounds = array<i64: 4, 256, 32>}, {pipeline_mode = #tpu.pipeline_mode<synchronous>, transform_indices = @transform_4, window_bounds = array<i64: 1, 32>}, {transform_indices = @transform_5, window_bounds = array<i64: 128, 32>}]} {
    %c0 = arith.constant 0 : index
    %c0_0 = arith.constant 0 : index
    %0 = vector.load %arg1[%c0, %c0_0] : memref<128x256xi8, #tpu.memory_space<vmem>>, vector<128x256xi8>
    %1 = arith.sitofp %0 : vector<128x256xi8> to vector<128x256xf32>
    %cst = arith.constant 1.000000e+00 : f32
    %2 = vector.broadcast %cst : f32 to vector<128x256xf32>
    %3 = arith.subf %1, %2 : vector<128x256xf32>
    %cst_1 = arith.constant 1.000000e+30 : f32
    %4 = vector.broadcast %cst_1 : f32 to vector<128x256xf32>
    %5 = arith.mulf %3, %4 : vector<128x256xf32>
    %c0_2 = arith.constant 0 : index
    %c0_3 = arith.constant 0 : index
    %6 = vector.load %arg2[%c0_2, %c0_3] : memref<128x4xf32, #tpu.memory_space<vmem>>, vector<128x4xf32>
    %cst_4 = arith.constant 0.000000e+00 : f32
    %7 = vector.broadcast %cst_4 : f32 to vector<128x32xf32>
    %8 = vector.extract_strided_slice %6 {offsets = [0, 0], sizes = [128, 1], strides = [1, 1]} : vector<128x4xf32> to vector<128x1xf32>
    %c0_5 = arith.constant 0 : index
    %c0_6 = arith.constant 0 : index
    %9 = vector.load %arg3[%c0_5, %c0_6] : memref<4x256xf32, #tpu.memory_space<vmem>>, vector<1x256xf32>
    %10 = vector.broadcast %8 : vector<128x1xf32> to vector<128x256xf32>
    %11 = vector.broadcast %9 : vector<1x256xf32> to vector<128x256xf32>
    %12 = arith.addf %10, %11 : vector<128x256xf32>
    %cst_7 = arith.constant 0.000000e+00 : f32
    %13 = vector.broadcast %cst_7 : f32 to vector<128x256xf32>
    %14 = arith.cmpf ogt, %12, %13 : vector<128x256xf32>
    %cst_8 = arith.constant 2.000000e-01 : f32
    %15 = vector.broadcast %cst_8 : f32 to vector<128x256xf32>
    %16 = arith.mulf %15, %12 : vector<128x256xf32>
    %17 = arith.select %14, %12, %16 : vector<128x256xi1>, vector<128x256xf32>
    %18 = arith.addf %17, %5 : vector<128x256xf32>
    %cst_9 = arith.constant dense<0xFF800000> : vector<128xf32>
    %19 = vector.multi_reduction <maximumf>, %18, %cst_9 [1] : vector<128x256xf32> to vector<128xf32>
    %20 = vector.shape_cast %19 : vector<128xf32> to vector<128x1xf32>
    %21 = vector.broadcast %20 : vector<128x1xf32> to vector<128x256xf32>
    %22 = arith.subf %18, %21 : vector<128x256xf32>
    %23 = math.exp %22 : vector<128x256xf32>
    %cst_10 = arith.constant dense<0.000000e+00> : vector<128xf32>
    %24 = vector.multi_reduction <add>, %23, %cst_10 [1] : vector<128x256xf32> to vector<128xf32>
    %25 = vector.shape_cast %24 : vector<128xf32> to vector<128x1xf32>
    %26 = tpu.reciprocal %25 {approx = true} : vector<128x1xf32> -> vector<128x1xf32>
    %27 = vector.broadcast %26 : vector<128x1xf32> to vector<128x256xf32>
    %28 = arith.mulf %23, %27 : vector<128x256xf32>
    %29 = arith.truncf %28 : vector<128x256xf32> to vector<128x256xbf16>
    %c0_11 = arith.constant 0 : index
    %c0_12 = arith.constant 0 : index
    %c0_13 = arith.constant 0 : index
    %30 = vector.load %arg4[%c0_11, %c0_12, %c0_13] : memref<4x256x32xbf16, #tpu.memory_space<vmem>>, vector<1x256x32xbf16>
    %31 = vector.shape_cast %30 : vector<1x256x32xbf16> to vector<256x32xbf16>
    %cst_14 = arith.constant dense<0.000000e+00> : vector<128x32xf32>
    %32 = tpu.matmul %29, %31, %cst_14 {dimension_numbers = #tpu.dot_dimension_numbers<[1], [0], [0], [1], [0, 0, 1, 1], [], []>} : vector<128x256xbf16>, vector<256x32xbf16>, vector<128x32xf32> -> vector<128x32xf32>
    %33 = arith.addf %7, %32 : vector<128x32xf32>
    %34 = vector.extract_strided_slice %6 {offsets = [0, 1], sizes = [128, 1], strides = [1, 1]} : vector<128x4xf32> to vector<128x1xf32>
    %c1 = arith.constant 1 : index
    %c0_15 = arith.constant 0 : index
    %35 = vector.load %arg3[%c1, %c0_15] : memref<4x256xf32, #tpu.memory_space<vmem>>, vector<1x256xf32>
    %36 = vector.broadcast %34 : vector<128x1xf32> to vector<128x256xf32>
    %37 = vector.broadcast %35 : vector<1x256xf32> to vector<128x256xf32>
    %38 = arith.addf %36, %37 : vector<128x256xf32>
    %cst_16 = arith.constant 0.000000e+00 : f32
    %39 = vector.broadcast %cst_16 : f32 to vector<128x256xf32>
    %40 = arith.cmpf ogt, %38, %39 : vector<128x256xf32>
    %cst_17 = arith.constant 2.000000e-01 : f32
    %41 = vector.broadcast %cst_17 : f32 to vector<128x256xf32>
    %42 = arith.mulf %41, %38 : vector<128x256xf32>
    %43 = arith.select %40, %38, %42 : vector<128x256xi1>, vector<128x256xf32>
    %44 = arith.addf %43, %5 : vector<128x256xf32>
    %cst_18 = arith.constant dense<0xFF800000> : vector<128xf32>
    %45 = vector.multi_reduction <maximumf>, %44, %cst_18 [1] : vector<128x256xf32> to vector<128xf32>
    %46 = vector.shape_cast %45 : vector<128xf32> to vector<128x1xf32>
    %47 = vector.broadcast %46 : vector<128x1xf32> to vector<128x256xf32>
    %48 = arith.subf %44, %47 : vector<128x256xf32>
    %49 = math.exp %48 : vector<128x256xf32>
    %cst_19 = arith.constant dense<0.000000e+00> : vector<128xf32>
    %50 = vector.multi_reduction <add>, %49, %cst_19 [1] : vector<128x256xf32> to vector<128xf32>
    %51 = vector.shape_cast %50 : vector<128xf32> to vector<128x1xf32>
    %52 = tpu.reciprocal %51 {approx = true} : vector<128x1xf32> -> vector<128x1xf32>
    %53 = vector.broadcast %52 : vector<128x1xf32> to vector<128x256xf32>
    %54 = arith.mulf %49, %53 : vector<128x256xf32>
    %55 = arith.truncf %54 : vector<128x256xf32> to vector<128x256xbf16>
    %c1_20 = arith.constant 1 : index
    %c0_21 = arith.constant 0 : index
    %c0_22 = arith.constant 0 : index
    %56 = vector.load %arg4[%c1_20, %c0_21, %c0_22] : memref<4x256x32xbf16, #tpu.memory_space<vmem>>, vector<1x256x32xbf16>
    %57 = vector.shape_cast %56 : vector<1x256x32xbf16> to vector<256x32xbf16>
    %cst_23 = arith.constant dense<0.000000e+00> : vector<128x32xf32>
    %58 = tpu.matmul %55, %57, %cst_23 {dimension_numbers = #tpu.dot_dimension_numbers<[1], [0], [0], [1], [0, 0, 1, 1], [], []>} : vector<128x256xbf16>, vector<256x32xbf16>, vector<128x32xf32> -> vector<128x32xf32>
    %59 = arith.addf %33, %58 : vector<128x32xf32>
    %60 = vector.extract_strided_slice %6 {offsets = [0, 2], sizes = [128, 1], strides = [1, 1]} : vector<128x4xf32> to vector<128x1xf32>
    %c2 = arith.constant 2 : index
    %c0_24 = arith.constant 0 : index
    %61 = vector.load %arg3[%c2, %c0_24] : memref<4x256xf32, #tpu.memory_space<vmem>>, vector<1x256xf32>
    %62 = vector.broadcast %60 : vector<128x1xf32> to vector<128x256xf32>
    %63 = vector.broadcast %61 : vector<1x256xf32> to vector<128x256xf32>
    %64 = arith.addf %62, %63 : vector<128x256xf32>
    %cst_25 = arith.constant 0.000000e+00 : f32
    %65 = vector.broadcast %cst_25 : f32 to vector<128x256xf32>
    %66 = arith.cmpf ogt, %64, %65 : vector<128x256xf32>
    %cst_26 = arith.constant 2.000000e-01 : f32
    %67 = vector.broadcast %cst_26 : f32 to vector<128x256xf32>
    %68 = arith.mulf %67, %64 : vector<128x256xf32>
    %69 = arith.select %66, %64, %68 : vector<128x256xi1>, vector<128x256xf32>
    %70 = arith.addf %69, %5 : vector<128x256xf32>
    %cst_27 = arith.constant dense<0xFF800000> : vector<128xf32>
    %71 = vector.multi_reduction <maximumf>, %70, %cst_27 [1] : vector<128x256xf32> to vector<128xf32>
    %72 = vector.shape_cast %71 : vector<128xf32> to vector<128x1xf32>
    %73 = vector.broadcast %72 : vector<128x1xf32> to vector<128x256xf32>
    %74 = arith.subf %70, %73 : vector<128x256xf32>
    %75 = math.exp %74 : vector<128x256xf32>
    %cst_28 = arith.constant dense<0.000000e+00> : vector<128xf32>
    %76 = vector.multi_reduction <add>, %75, %cst_28 [1] : vector<128x256xf32> to vector<128xf32>
    %77 = vector.shape_cast %76 : vector<128xf32> to vector<128x1xf32>
    %78 = tpu.reciprocal %77 {approx = true} : vector<128x1xf32> -> vector<128x1xf32>
    %79 = vector.broadcast %78 : vector<128x1xf32> to vector<128x256xf32>
    %80 = arith.mulf %75, %79 : vector<128x256xf32>
    %81 = arith.truncf %80 : vector<128x256xf32> to vector<128x256xbf16>
    %c2_29 = arith.constant 2 : index
    %c0_30 = arith.constant 0 : index
    %c0_31 = arith.constant 0 : index
    %82 = vector.load %arg4[%c2_29, %c0_30, %c0_31] : memref<4x256x32xbf16, #tpu.memory_space<vmem>>, vector<1x256x32xbf16>
    %83 = vector.shape_cast %82 : vector<1x256x32xbf16> to vector<256x32xbf16>
    %cst_32 = arith.constant dense<0.000000e+00> : vector<128x32xf32>
    %84 = tpu.matmul %81, %83, %cst_32 {dimension_numbers = #tpu.dot_dimension_numbers<[1], [0], [0], [1], [0, 0, 1, 1], [], []>} : vector<128x256xbf16>, vector<256x32xbf16>, vector<128x32xf32> -> vector<128x32xf32>
    %85 = arith.addf %59, %84 : vector<128x32xf32>
    %86 = vector.extract_strided_slice %6 {offsets = [0, 3], sizes = [128, 1], strides = [1, 1]} : vector<128x4xf32> to vector<128x1xf32>
    %c3 = arith.constant 3 : index
    %c0_33 = arith.constant 0 : index
    %87 = vector.load %arg3[%c3, %c0_33] : memref<4x256xf32, #tpu.memory_space<vmem>>, vector<1x256xf32>
    %88 = vector.broadcast %86 : vector<128x1xf32> to vector<128x256xf32>
    %89 = vector.broadcast %87 : vector<1x256xf32> to vector<128x256xf32>
    %90 = arith.addf %88, %89 : vector<128x256xf32>
    %cst_34 = arith.constant 0.000000e+00 : f32
    %91 = vector.broadcast %cst_34 : f32 to vector<128x256xf32>
    %92 = arith.cmpf ogt, %90, %91 : vector<128x256xf32>
    %cst_35 = arith.constant 2.000000e-01 : f32
    %93 = vector.broadcast %cst_35 : f32 to vector<128x256xf32>
    %94 = arith.mulf %93, %90 : vector<128x256xf32>
    %95 = arith.select %92, %90, %94 : vector<128x256xi1>, vector<128x256xf32>
    %96 = arith.addf %95, %5 : vector<128x256xf32>
    %cst_36 = arith.constant dense<0xFF800000> : vector<128xf32>
    %97 = vector.multi_reduction <maximumf>, %96, %cst_36 [1] : vector<128x256xf32> to vector<128xf32>
    %98 = vector.shape_cast %97 : vector<128xf32> to vector<128x1xf32>
    %99 = vector.broadcast %98 : vector<128x1xf32> to vector<128x256xf32>
    %100 = arith.subf %96, %99 : vector<128x256xf32>
    %101 = math.exp %100 : vector<128x256xf32>
    %cst_37 = arith.constant dense<0.000000e+00> : vector<128xf32>
    %102 = vector.multi_reduction <add>, %101, %cst_37 [1] : vector<128x256xf32> to vector<128xf32>
    %103 = vector.shape_cast %102 : vector<128xf32> to vector<128x1xf32>
    %104 = tpu.reciprocal %103 {approx = true} : vector<128x1xf32> -> vector<128x1xf32>
    %105 = vector.broadcast %104 : vector<128x1xf32> to vector<128x256xf32>
    %106 = arith.mulf %101, %105 : vector<128x256xf32>
    %107 = arith.truncf %106 : vector<128x256xf32> to vector<128x256xbf16>
    %c3_38 = arith.constant 3 : index
    %c0_39 = arith.constant 0 : index
    %c0_40 = arith.constant 0 : index
    %108 = vector.load %arg4[%c3_38, %c0_39, %c0_40] : memref<4x256x32xbf16, #tpu.memory_space<vmem>>, vector<1x256x32xbf16>
    %109 = vector.shape_cast %108 : vector<1x256x32xbf16> to vector<256x32xbf16>
    %cst_41 = arith.constant dense<0.000000e+00> : vector<128x32xf32>
    %110 = tpu.matmul %107, %109, %cst_41 {dimension_numbers = #tpu.dot_dimension_numbers<[1], [0], [0], [1], [0, 0, 1, 1], [], []>} : vector<128x256xbf16>, vector<256x32xbf16>, vector<128x32xf32> -> vector<128x32xf32>
    %111 = arith.addf %85, %110 : vector<128x32xf32>
    %c0_42 = arith.constant 0 : index
    %c0_43 = arith.constant 0 : index
    %112 = vector.load %arg5[%c0_42, %c0_43] : memref<1x32xf32, #tpu.memory_space<vmem>>, vector<1x32xf32>
    %113 = vector.broadcast %112 : vector<1x32xf32> to vector<128x32xf32>
    %114 = arith.addf %111, %113 : vector<128x32xf32>
    %115 = arith.truncf %114 : vector<128x32xf32> to vector<128x32xbf16>
    %c0_44 = arith.constant 0 : index
    %c0_45 = arith.constant 0 : index
    %116 = vector.load %arg6[%c0_44, %c0_45] : memref<128x32xbf16, #tpu.memory_space<vmem>>, vector<128x32xbf16>
    tpu.vector_store %arg6[%c0_44, %c0_45], %115 {strides = array<i32>} : memref<128x32xbf16, #tpu.memory_space<vmem>>, vector<128x32xbf16>,
    return
  }
  func.func @transform_0(%arg0: i32) -> (i32, i32) {
    %c0_i32 = arith.constant 0 : i32
    %c0_i32_0 = arith.constant 0 : i32
    return %arg0, %c0_i32 : i32, i32
  }
  func.func @transform_1(%arg0: i32) -> (i32, i32) {
    %c0_i32 = arith.constant 0 : i32
    %c0_i32_0 = arith.constant 0 : i32
    return %arg0, %c0_i32 : i32, i32
  }
  func.func @transform_2(%arg0: i32) -> (i32, i32) {
    %c0_i32 = arith.constant 0 : i32
    %c0_i32_0 = arith.constant 0 : i32
    %c0_i32_1 = arith.constant 0 : i32
    return %c0_i32, %c0_i32_0 : i32, i32
  }
  func.func @transform_3(%arg0: i32) -> (i32, i32, i32) {
    %c0_i32 = arith.constant 0 : i32
    %c0_i32_0 = arith.constant 0 : i32
    %c0_i32_1 = arith.constant 0 : i32
    %c0_i32_2 = arith.constant 0 : i32
    return %c0_i32, %c0_i32_0, %c0_i32_1 : i32, i32, i32
  }
  func.func @transform_4(%arg0: i32) -> (i32, i32) {
    %c0_i32 = arith.constant 0 : i32
    %c0_i32_0 = arith.constant 0 : i32
    %c0_i32_1 = arith.constant 0 : i32
    return %c0_i32, %c0_i32_0 : i32, i32
  }
  func.func @transform_5(%arg0: i32) -> (i32, i32) {
    %c0_i32 = arith.constant 0 : i32
    %c0_i32_0 = arith.constant 0 : i32
    return %arg0, %c0_i32 : i32, i32
  }
}

module attributes {stable_mosaic.version = 11 : i64} {
  func.func @pool_mlp_kernel(%arg0: memref<2x256xf32, #tpu.memory_space<vmem>>, %arg1: memref<256x32xbf16, #tpu.memory_space<vmem>>, %arg2: memref<32x32xf32, #tpu.memory_space<vmem>>, %arg3: memref<1x32xf32, #tpu.memory_space<vmem>>, %arg4: memref<32x16xf32, #tpu.memory_space<vmem>>, %arg5: memref<1x16xf32, #tpu.memory_space<vmem>>, %arg6: memref<2x16xf32, #tpu.memory_space<vmem>>) attributes {dimension_semantics = [], scalar_prefetch = 0 : i64, scratch_operands = 0 : i64, tpu.core_type = #tpu.core_type<tc>} {
    %c0 = arith.constant 0 : index
    %c0_0 = arith.constant 0 : index
    %0 = vector.load %arg0[%c0, %c0_0] : memref<2x256xf32, #tpu.memory_space<vmem>>, vector<2x256xf32>
    %c0_1 = arith.constant 0 : index
    %c0_2 = arith.constant 0 : index
    %1 = vector.load %arg1[%c0_1, %c0_2] : memref<256x32xbf16, #tpu.memory_space<vmem>>, vector<256x32xbf16>
    %2 = arith.extf %1 : vector<256x32xbf16> to vector<256x32xf32>
    %cst = arith.constant dense<0.000000e+00> : vector<2x32xf32>
    %3 = tpu.matmul %0, %2, %cst {dimension_numbers = #tpu.dot_dimension_numbers<[1], [0], [0], [1], [0, 0, 1, 1], [], []>} : vector<2x256xf32>, vector<256x32xf32>, vector<2x32xf32> -> vector<2x32xf32>
    %c0_3 = arith.constant 0 : index
    %c0_4 = arith.constant 0 : index
    %4 = vector.load %arg2[%c0_3, %c0_4] : memref<32x32xf32, #tpu.memory_space<vmem>>, vector<32x32xf32>
    %cst_5 = arith.constant dense<0.000000e+00> : vector<2x32xf32>
    %5 = tpu.matmul %3, %4, %cst_5 {dimension_numbers = #tpu.dot_dimension_numbers<[1], [0], [0], [1], [0, 0, 1, 1], [], []>} : vector<2x32xf32>, vector<32x32xf32>, vector<2x32xf32> -> vector<2x32xf32>
    %c0_6 = arith.constant 0 : index
    %c0_7 = arith.constant 0 : index
    %6 = vector.load %arg3[%c0_6, %c0_7] : memref<1x32xf32, #tpu.memory_space<vmem>>, vector<1x32xf32>
    %7 = vector.broadcast %6 : vector<1x32xf32> to vector<2x32xf32>
    %8 = arith.addf %5, %7 : vector<2x32xf32>
    %cst_8 = arith.constant 0.000000e+00 : f32
    %9 = vector.broadcast %cst_8 : f32 to vector<2x32xf32>
    %10 = arith.maximumf %8, %9 : vector<2x32xf32>
    %c0_9 = arith.constant 0 : index
    %c0_10 = arith.constant 0 : index
    %11 = vector.load %arg4[%c0_9, %c0_10] : memref<32x16xf32, #tpu.memory_space<vmem>>, vector<32x16xf32>
    %cst_11 = arith.constant dense<0.000000e+00> : vector<2x16xf32>
    %12 = tpu.matmul %10, %11, %cst_11 {dimension_numbers = #tpu.dot_dimension_numbers<[1], [0], [0], [1], [0, 0, 1, 1], [], []>} : vector<2x32xf32>, vector<32x16xf32>, vector<2x16xf32> -> vector<2x16xf32>
    %c0_12 = arith.constant 0 : index
    %c0_13 = arith.constant 0 : index
    %13 = vector.load %arg5[%c0_12, %c0_13] : memref<1x16xf32, #tpu.memory_space<vmem>>, vector<1x16xf32>
    %14 = vector.broadcast %13 : vector<1x16xf32> to vector<2x16xf32>
    %15 = arith.addf %12, %14 : vector<2x16xf32>
    %c0_14 = arith.constant 0 : index
    %c0_15 = arith.constant 0 : index
    %16 = vector.load %arg6[%c0_14, %c0_15] : memref<2x16xf32, #tpu.memory_space<vmem>>, vector<2x16xf32>
    tpu.vector_store %arg6[%c0_14, %c0_15], %15 {strides = array<i32>} : memref<2x16xf32, #tpu.memory_space<vmem>>, vector<2x16xf32>,
    return
  }
}

</mosaic_0001>

<llo_original>
// kernel: gat_encoder_pallas.7
$region0: #{gat_encoder_pallas.7}
  #allocation0 [shape = 'u32[]', space=smem, size = 0x4, offset = 0x4, fixed_abs, tag = 'smem constant byte address 0x4 - core index']
  #allocation1 [shape = 'u32[72,128]{1,0:T(1,128)}', space=vmem, size = 0x9000, scoped, tag = 'internal scratch']
  %s0 = inlined_call_operand.vmem [shape: bf16[256,8], index: 0, kind: input, shape index: {}]
  %s1 = inlined_call_operand.vmem [shape: bf16[4,8,32], index: 1, kind: input, shape index: {}]
  %s2 = inlined_call_operand.vmem [shape: bf16[8,8], index: 2, kind: input, shape index: {}]
  %s3 = inlined_call_operand.vmem [shape: bf16[4,256,32], index: 3, kind: output, shape index: {0}]
  %s4 = inlined_call_operand.vmem [shape: f32[256,8], index: 4, kind: output, shape index: {1}]
  %5 = xla_tuple %s3, %s4
  %s6 = sld [smem:[#allocation0]]
  $region90: #{gat_encoder_pallas.7} parent=0
    _
  %s8 = ssub.s32 1, %s6
  %s9 = scalar_select 0, %s8, %s6
  $region1: #{gat_encoder_pallas.7} parent=0
    #allocation2 [shape = 'u8[262144]{0}', space=vmem, size = 0x40000, scoped, tag = 'output window, operand 0']
    loop: start=0, step=1, limit=4
    $region2: #{gat_encoder_pallas.7} parent=1 // loop_pre_header
      _
    $region3: #{gat_encoder_pallas.7} parent=1 // loop_header
      %s11 = sphi 0, %s15
      %p12 = scmp.ge.s32.totalorder %s11, 4
      %s21 = sphi 0, %s23
      %s24 = sphi 0, %s21
      %s25 = sphi 0, %s24
      %s41 = sphi 0, %s25
      %s45 = sphi 0, %s45
      %s47 = sphi 0, %s45
      %s48 = sphi 0, %s47
      %s62 = sphi 0, %s48
      %s66 = sphi 0, %s66
      %s68 = sphi 0, %s66
      %s69 = sphi 0, %s68
      %s83 = sphi 0, %s69
      %s89 = sphi 0, %s91
      %s92 = sphi 0, %s89
      %s93 = sphi 0, %s92
      %s109 = sphi 0, %s93
      %s115 = sphi 0, %s117
      %s118 = sphi 0, %s115
      %s119 = sphi 0, %s118
      %s135 = sphi 0, %s119
    $region4: #{gat_encoder_pallas.7} parent=1 // loop_header_branch
      %14 = sbr.rel (%p12) target = $region8
    $region5: #{gat_encoder_pallas.7} parent=1 // loop_body
      %s16 = ssub.s32 %s11, 1
      %s17 = ssub.s32 %s11, 2
      %s18 = sadd.s32 %s11, 1
      %s19 = ssub.s32 %s11, %s18
      %p20 = scmp.eq.s32.totalorder %s19, 0
      %s22 = sadd.s32 %s21, 1
      %s23 = scalar_select %p20, %s21, %s22
      %p26 = pneg %p20
      %p27 = scmp.eq.s32.totalorder %s11, 1
      %p28 = por %p26, %p27
      %p29 = scmp.ne.s32.totalorder %s21, %s24
      %p30 = scmp.eq.s32.totalorder %s11, 0
      %p31 = por %p29, %p30
      %p32 = scmp.ne.s32.totalorder %s21, %s24
      %p33 = scmp.eq.s32.totalorder %s16, 1
      %p34 = por %p32, %p33
      %p35 = scmp.ne.s32.totalorder %s24, %s25
      %p36 = scmp.eq.s32.totalorder %s16, 0
      %p37 = por %p35, %p36
      %p38 = scmp.ne.s32.totalorder %s24, %s25
      %p39 = scmp.eq.s32.totalorder %s17, 1
      %p40 = por %p38, %p39
      %p42 = scmp.ne.s32.totalorder %s25, %s41
      %p43 = scmp.eq.s32.totalorder %s17, 0
      %p44 = por %p42, %p43
      %s46 = sadd.s32 %s45, 1
      %p49 = scmp.eq.s32.totalorder %s11, 1
      %p50 = scmp.ne.s32.totalorder %s45, %s47
      %p51 = scmp.eq.s32.totalorder %s11, 0
      %p52 = por %p50, %p51
      %p53 = scmp.ne.s32.totalorder %s45, %s47
      %p54 = scmp.eq.s32.totalorder %s16, 1
      %p55 = por %p53, %p54
      %p56 = scmp.ne.s32.totalorder %s47, %s48
      %p57 = scmp.eq.s32.totalorder %s16, 0
      %p58 = por %p56, %p57
      %p59 = scmp.ne.s32.totalorder %s47, %s48
      %p60 = scmp.eq.s32.totalorder %s17, 1
      %p61 = por %p59, %p60
      %p63 = scmp.ne.s32.totalorder %s48, %s62
      %p64 = scmp.eq.s32.totalorder %s17, 0
      %p65 = por %p63, %p64
      %s67 = sadd.s32 %s66, 1
      %p70 = scmp.eq.s32.totalorder %s11, 1
      %p71 = scmp.ne.s32.totalorder %s66, %s68
      %p72 = scmp.eq.s32.totalorder %s11, 0
      %p73 = por %p71, %p72
      %p74 = scmp.ne.s32.totalorder %s66, %s68
      %p75 = scmp.eq.s32.totalorder %s16, 1
      %p76 = por %p74, %p75
      %p77 = scmp.ne.s32.totalorder %s68, %s69
      %p78 = scmp.eq.s32.totalorder %s16, 0
      %p79 = por %p77, %p78
      %p80 = scmp.ne.s32.totalorder %s68, %s69
      %p81 = scmp.eq.s32.totalorder %s17, 1
      %p82 = por %p80, %p81
      %p84 = scmp.ne.s32.totalorder %s69, %s83
      %p85 = scmp.eq.s32.totalorder %s17, 0
      %p86 = por %p84, %p85
      %s87 = ssub.s32 %s11, %s18
      %p88 = scmp.eq.s32.totalorder %s87, 0
      %s90 = sadd.s32 %s89, 1
      %s91 = scalar_select %p88, %s89, %s90
      %p94 = pneg %p88
      %p95 = scmp.eq.s32.totalorder %s11, 1
      %p96 = por %p94, %p95
      %p97 = scmp.ne.s32.totalorder %s89, %s92
      %p98 = scmp.eq.s32.totalorder %s11, 0
      %p99 = por %p97, %p98
      %p100 = scmp.ne.s32.totalorder %s89, %s92
      %p101 = scmp.eq.s32.totalorder %s16, 1
      %p102 = por %p100, %p101
      %p103 = scmp.ne.s32.totalorder %s92, %s93
      %p104 = scmp.eq.s32.totalorder %s16, 0
      %p105 = por %p103, %p104
      %p106 = scmp.ne.s32.totalorder %s92, %s93
      %p107 = scmp.eq.s32.totalorder %s17, 1
      %p108 = por %p106, %p107
      %p110 = scmp.ne.s32.totalorder %s93, %s109
      %p111 = scmp.eq.s32.totalorder %s17, 0
      %p112 = por %p110, %p111
      %s113 = ssub.s32 %s11, %s18
      %p114 = scmp.eq.s32.totalorder %s113, 0
      %s116 = sadd.s32 %s115, 1
      %s117 = scalar_select %p114, %s115, %s116
      %p120 = pneg %p114
      %p121 = scmp.eq.s32.totalorder %s11, 1
      %p122 = por %p120, %p121
      %p123 = scmp.ne.s32.totalorder %s115, %s118
      %p124 = scmp.eq.s32.totalorder %s11, 0
      %p125 = por %p123, %p124
      %p126 = scmp.ne.s32.totalorder %s115, %s118
      %p127 = scmp.eq.s32.totalorder %s16, 1
      %p128 = por %p126, %p127
      %p129 = scmp.ne.s32.totalorder %s118, %s119
      %p130 = scmp.eq.s32.totalorder %s16, 0
      %p131 = por %p129, %p130
      %p132 = scmp.ne.s32.totalorder %s118, %s119
      %p133 = scmp.eq.s32.totalorder %s17, 1
      %p134 = por %p132, %p133
      %p136 = scmp.ne.s32.totalorder %s119, %s135
      %p137 = scmp.eq.s32.totalorder %s17, 0
      %p138 = por %p136, %p137
      %p139 = scmp.le.s32.totalorder 1, %s11
      %p140 = scmp.lt.s32.totalorder %s11, 3
      %p141 = pnand %p139, %p140
      %p142 = pneg %p141
      // Predicated region
      $region9: #{gat_encoder_pallas.7} parent=5 // pred_check
        _
      $region10: #{gat_encoder_pallas.7} parent=5 // pred_check_branch
        %144 = sbr.rel (%p141) target = $region12
      $region11: #{gat_encoder_pallas.7} parent=5 // pred_region
        %s145 = ssub.s32 %s11, 1
        // Predicated region
        $region13: #{gat_encoder_pallas.7} parent=11 // pred_check
          %p146 = pneg %p58
        $region14: #{gat_encoder_pallas.7} parent=11 // pred_check_branch
          %148 = sbr.rel (%p146) target = $region16
        $region15: #{gat_encoder_pallas.7} parent=11 // pred_region
          _
        $region16: #{gat_encoder_pallas.7} parent=11 // pred_fallthru
          _
        // Predicated region
        $region17: #{gat_encoder_pallas.7} parent=11 // pred_check
          %p149 = pneg %p79
        $region18: #{gat_encoder_pallas.7} parent=11 // pred_check_branch
          %151 = sbr.rel (%p149) target = $region20
        $region19: #{gat_encoder_pallas.7} parent=11 // pred_region
          _
        $region20: #{gat_encoder_pallas.7} parent=11 // pred_fallthru
          _
      $region12: #{gat_encoder_pallas.7} parent=5 // pred_fallthru
        _
      %p152 = scmp.lt.s32.totalorder %s11, 2
      // Predicated region
      $region21: #{gat_encoder_pallas.7} parent=5 // pred_check
        %p153 = pneg %p152
      $region22: #{gat_encoder_pallas.7} parent=5 // pred_check_branch
        %155 = sbr.rel (%p153) target = $region24
      $region23: #{gat_encoder_pallas.7} parent=5 // pred_region
        // Predicated region
        $region25: #{gat_encoder_pallas.7} parent=23 // pred_check
          %p156 = pneg %p31
        $region26: #{gat_encoder_pallas.7} parent=23 // pred_check_branch
          %158 = sbr.rel (%p156) target = $region28
        $region27: #{gat_encoder_pallas.7} parent=23 // pred_region
          %s159 = smul.u32 16, %s11
          %p160 = scmp.lt.s32.totalorder %s159, 31
          %s161 = scalar_select %p160, %s159, 31
          %s162 = smul.addr %s161, 4
          %s163 = scalar_lea.vmem %s0, %s162
          %s164 = smul.u32 16, %s11
        $region28: #{gat_encoder_pallas.7} parent=23 // pred_fallthru
          _
      $region24: #{gat_encoder_pallas.7} parent=5 // pred_fallthru
        _
      %p165 = scmp.le.s32.totalorder 1, %s11
      %p166 = scmp.lt.s32.totalorder %s11, 3
      %p167 = pnand %p165, %p166
      %p168 = pneg %p167
      // Predicated region
      $region29: #{gat_encoder_pallas.7} parent=5 // pred_check
        _
      $region30: #{gat_encoder_pallas.7} parent=5 // pred_check_branch
        %170 = sbr.rel (%p167) target = $region32
      $region31: #{gat_encoder_pallas.7} parent=5 // pred_region
        %s171 = ssub.s32 %s11, 1
        %s172 = smul.u32 16, %s16
        %p173 = scmp.lt.s32.totalorder %s172, 31
        %s174 = scalar_select %p173, %s172, 31
        %s175 = smul.addr %s174, 4
        %s176 = scalar_lea.vmem %s0, %s175
        %p177 = pneg %p37
        %p178 = pneg %p34
        %p179 = pneg %p58
        %p180 = pneg %p55
        %p181 = pneg %p79
        %p182 = pneg %p76
        %p183 = pneg %p105
        %p184 = pneg %p102
        %s185 = sand.u32 %s92, 1
        %s186 = sand.u32 %s92, 1
        %s187 = smul.addr %s186, 256
        %s188 = scalar_lea.vmem [#allocation2], %s187
        %p189 = pneg %p131
        %p190 = pneg %p128
        %s191 = smul.u32 16, %s16
        %p192 = scmp.lt.s32.totalorder %s191, 31
        %s193 = scalar_select %p192, %s191, 31
        %s194 = smul.addr %s193, 8
        %s195 = scalar_lea.vmem %s4, %s194
        %s196 = smul.u32 16, %s16
        %p197 = scmp.lt.s32.totalorder %s196, 31
        %s198 = scalar_select %p197, %s196, 31
        %s199 = smul.addr %s198, 4
        %s200 = scalar_lea.vmem %s0, %s199
        %s201 = smul.u32 16, %s16
        %s202 = smul.u32 16, %s16
        %s203 = smul.u32 16, %s16
        %p204 = scmp.lt.s32.totalorder %s203, 31
        %s205 = scalar_select %p204, %s203, 31
        %s206 = smul.addr %s205, 8
        %s207 = scalar_lea.vmem %s4, %s206
        %s208 = smul.u32 16, %s16
        %v210 = vld [vmem:[%s200] sm:$0xf]
        %v211 = vld [vmem:[%s200 + $0x4] sm:$0xf]
        %v212 = vld [vmem:[%s200 + $0x8] sm:$0xf]
        %v213 = vld [vmem:[%s200 + $0xc] sm:$0xf]
        %v214 = vld [vmem:[%s200 + $0x10] sm:$0xf]
        %v215 = vld [vmem:[%s200 + $0x14] sm:$0xf]
        %v216 = vld [vmem:[%s200 + $0x18] sm:$0xf]
        %v217 = vld [vmem:[%s200 + $0x1c] sm:$0xf]
        %v218 = vld [vmem:[%s200 + $0x20] sm:$0xf]
        %v219 = vld [vmem:[%s200 + $0x24] sm:$0xf]
        %v220 = vld [vmem:[%s200 + $0x28] sm:$0xf]
        %v221 = vld [vmem:[%s200 + $0x2c] sm:$0xf]
        %v222 = vld [vmem:[%s200 + $0x30] sm:$0xf]
        %v223 = vld [vmem:[%s200 + $0x34] sm:$0xf]
        %v224 = vld [vmem:[%s200 + $0x38] sm:$0xf]
        %v225 = vld [vmem:[%s200 + $0x3c] sm:$0xf]
        %v226 = vld [vmem:[%s2] sm:$0xf]
        %v243 = vunpack.c.l.b16 %v210
        %v244 = vunpack.c.l.b16 %v211
        %v245 = vunpack.c.l.b16 %v212
        %v246 = vunpack.c.l.b16 %v213
        %v247 = vunpack.c.l.b16 %v214
        %v248 = vunpack.c.l.b16 %v215
        %v249 = vunpack.c.l.b16 %v216
        %v250 = vunpack.c.l.b16 %v217
        %v251 = vunpack.c.l.b16 %v218
        %v252 = vunpack.c.l.b16 %v219
        %v253 = vunpack.c.l.b16 %v220
        %v254 = vunpack.c.l.b16 %v221
        %v255 = vunpack.c.l.b16 %v222
        %v256 = vunpack.c.l.b16 %v223
        %v257 = vunpack.c.l.b16 %v224
        %v258 = vunpack.c.l.b16 %v225
        %v259 = vpack.c.b16 %v244, %v243
        %v260 = vpack.c.b16 %v246, %v245
        %v261 = vpack.c.b16 %v248, %v247
        %v262 = vpack.c.b16 %v250, %v249
        %v263 = vpack.c.b16 %v252, %v251
        %v264 = vpack.c.b16 %v254, %v253
        %v265 = vpack.c.b16 %v256, %v255
        %v266 = vpack.c.b16 %v258, %v257
        %vm267 = vcmask 64512
        %v269 = vsel %vm267, %v259, 0
        %v272 = vsel %vm267, %v260, 0
        %v275 = vsel %vm267, %v261, 0
        %v278 = vsel %vm267, %v262, 0
        %v281 = vsel %vm267, %v263, 0
        %v284 = vsel %vm267, %v264, 0
        %v287 = vsel %vm267, %v265, 0
        %v290 = vsel %vm267, %v266, 0
        %vm292 = vcmask 1043456
        %v294 = vsel %vm292, %v226, 0
        %296 = vmatpush.bf16.msra.mxu0 0
        %297 = vmatpush.bf16.msra.mxu0 0
        %298 = vmatpush.bf16.msra.mxu0 0
        %299 = vmatpush.bf16.msra.mxu0 0
        %300 = vmatpush.bf16.msra.mxu0 0
        %301 = vmatpush.bf16.msra.mxu0 0
        %302 = vmatpush.bf16.msra.mxu0 0
        %303 = vmatpush.bf16.msra.mxu0 %v294
        %304 = vmatmul.bf16.gmra.mxu0 %v269
        %v305 = vpop.f32.mrf.mxu0
        %v306 = vadd.f32 0.0, %v305
        %v307 = vpop.f32.mrf.mxu0
        %v308 = vadd.f32 0.0, %v307
        %309 = vmatmul.bf16.gmra.mxu0 %v272
        %v310 = vpop.f32.mrf.mxu0
        %v311 = vadd.f32 0.0, %v310
        %v312 = vpop.f32.mrf.mxu0
        %v313 = vadd.f32 0.0, %v312
        %314 = vmatmul.bf16.gmra.mxu0 %v275
        %v315 = vpop.f32.mrf.mxu0
        %v316 = vadd.f32 0.0, %v315
        %v317 = vpop.f32.mrf.mxu0
        %v318 = vadd.f32 0.0, %v317
        %319 = vmatmul.bf16.gmra.mxu0 %v278
        %v320 = vpop.f32.mrf.mxu0
        %v321 = vadd.f32 0.0, %v320
        %v322 = vpop.f32.mrf.mxu0
        %v323 = vadd.f32 0.0, %v322
        %324 = vmatmul.bf16.gmra.mxu0 %v281
        %v325 = vpop.f32.mrf.mxu0
        %v326 = vadd.f32 0.0, %v325
        %v327 = vpop.f32.mrf.mxu0
        %v328 = vadd.f32 0.0, %v327
        %329 = vmatmul.bf16.gmra.mxu0 %v284
        %v330 = vpop.f32.mrf.mxu0
        %v331 = vadd.f32 0.0, %v330
        %v332 = vpop.f32.mrf.mxu0
        %v333 = vadd.f32 0.0, %v332
        %334 = vmatmul.bf16.gmra.mxu0 %v287
        %v335 = vpop.f32.mrf.mxu0
        %v336 = vadd.f32 0.0, %v335
        %v337 = vpop.f32.mrf.mxu0
        %v338 = vadd.f32 0.0, %v337
        %339 = vmatmul.bf16.gmra.mxu0 %v290
        %v340 = vpop.f32.mrf.mxu0
        %v341 = vadd.f32 0.0, %v340
        %v342 = vpop.f32.mrf.mxu0
        %v343 = vadd.f32 0.0, %v342
        %344 = vdwg.mxu0
        %345 = vst.msk [vmem:[%s207] sm:$0xff] %vm267, %v306
        %346 = vst.msk [vmem:[%s207 + $0x8] sm:$0xff] %vm267, %v308
        %347 = vst.msk [vmem:[%s207 + $0x10] sm:$0xff] %vm267, %v311
        %348 = vst.msk [vmem:[%s207 + $0x18] sm:$0xff] %vm267, %v313
        %349 = vst.msk [vmem:[%s207 + $0x20] sm:$0xff] %vm267, %v316
        %350 = vst.msk [vmem:[%s207 + $0x28] sm:$0xff] %vm267, %v318
        %351 = vst.msk [vmem:[%s207 + $0x30] sm:$0xff] %vm267, %v321
        %352 = vst.msk [vmem:[%s207 + $0x38] sm:$0xff] %vm267, %v323
        %353 = vst.msk [vmem:[%s207 + $0x40] sm:$0xff] %vm267, %v326
        %354 = vst.msk [vmem:[%s207 + $0x48] sm:$0xff] %vm267, %v328
        %355 = vst.msk [vmem:[%s207 + $0x50] sm:$0xff] %vm267, %v331
        %356 = vst.msk [vmem:[%s207 + $0x58] sm:$0xff] %vm267, %v333
        %357 = vst.msk [vmem:[%s207 + $0x60] sm:$0xff] %vm267, %v336
        %358 = vst.msk [vmem:[%s207 + $0x68] sm:$0xff] %vm267, %v338
        %359 = vst.msk [vmem:[%s207 + $0x70] sm:$0xff] %vm267, %v341
        %360 = vst.msk [vmem:[%s207 + $0x78] sm:$0xff] %vm267, %v343
        %v361 = vld [vmem:[%s1] sm:$0xf]
        %v363 = vsel %vm292, %v361, 0
        %365 = vmatpush.bf16.msra.mxu0 0
        %366 = vmatpush.bf16.msra.mxu0 0
        %367 = vmatpush.bf16.msra.mxu0 0
        %368 = vmatpush.bf16.msra.mxu0 0
        %369 = vmatpush.bf16.msra.mxu0 0
        %370 = vmatpush.bf16.msra.mxu0 0
        %371 = vmatpush.bf16.msra.mxu0 0
        %372 = vmatpush.bf16.msra.mxu0 %v363
        %373 = vmatmul.bf16.gmra.mxu0 %v269
        %v374 = vpop.f32.mrf.mxu0
        %v375 = vadd.f32 0.0, %v374
        %v376 = vpop.f32.mrf.mxu0
        %v377 = vadd.f32 0.0, %v376
        %378 = vmatmul.bf16.gmra.mxu0 %v272
        %v379 = vpop.f32.mrf.mxu0
        %v380 = vadd.f32 0.0, %v379
        %v381 = vpop.f32.mrf.mxu0
        %v382 = vadd.f32 0.0, %v381
        %383 = vmatmul.bf16.gmra.mxu0 %v275
        %v384 = vpop.f32.mrf.mxu0
        %v385 = vadd.f32 0.0, %v384
        %v386 = vpop.f32.mrf.mxu0
        %v387 = vadd.f32 0.0, %v386
        %388 = vmatmul.bf16.gmra.mxu0 %v278
        %v389 = vpop.f32.mrf.mxu0
        %v390 = vadd.f32 0.0, %v389
        %v391 = vpop.f32.mrf.mxu0
        %v392 = vadd.f32 0.0, %v391
        %393 = vmatmul.bf16.gmra.mxu0 %v281
        %v394 = vpop.f32.mrf.mxu0
        %v395 = vadd.f32 0.0, %v394
        %v396 = vpop.f32.mrf.mxu0
        %v397 = vadd.f32 0.0, %v396
        %398 = vmatmul.bf16.gmra.mxu0 %v284
        %v399 = vpop.f32.mrf.mxu0
        %v400 = vadd.f32 0.0, %v399
        %v401 = vpop.f32.mrf.mxu0
        %v402 = vadd.f32 0.0, %v401
        %403 = vmatmul.bf16.gmra.mxu0 %v287
        %v404 = vpop.f32.mrf.mxu0
        %v405 = vadd.f32 0.0, %v404
        %v406 = vpop.f32.mrf.mxu0
        %v407 = vadd.f32 0.0, %v406
        %408 = vmatmul.bf16.gmra.mxu0 %v290
        %v409 = vpop.f32.mrf.mxu0
        %v410 = vadd.f32 0.0, %v409
        %v411 = vpop.f32.mrf.mxu0
        %v412 = vadd.f32 0.0, %v411
        %413 = vdwg.mxu0
        %v414 = vpack.c.bf16 %v375, %v375
        %v415 = vpack.c.bf16 %v377, %v377
        %v416 = vpack.c.bf16 %v380, %v380
        %v417 = vpack.c.bf16 %v382, %v382
        %v418 = vpack.c.bf16 %v385, %v385
        %v419 = vpack.c.bf16 %v387, %v387
        %v420 = vpack.c.bf16 %v390, %v390
        %v421 = vpack.c.bf16 %v392, %v392
        %v422 = vpack.c.bf16 %v395, %v395
        %v423 = vpack.c.bf16 %v397, %v397
        %v424 = vpack.c.bf16 %v400, %v400
        %v425 = vpack.c.bf16 %v402, %v402
        %v426 = vpack.c.bf16 %v405, %v405
        %v427 = vpack.c.bf16 %v407, %v407
        %v428 = vpack.c.bf16 %v410, %v410
        %v429 = vpack.c.bf16 %v412, %v412
        %vm430 = vcmask 257024
        %431 = vst.msk [vmem:[%s188] sm:$0xf] %vm430, %v414
        %432 = vst.msk [vmem:[%s188 + $0x4] sm:$0xf] %vm430, %v415
        %433 = vst.msk [vmem:[%s188 + $0x8] sm:$0xf] %vm430, %v416
        %434 = vst.msk [vmem:[%s188 + $0xc] sm:$0xf] %vm430, %v417
        %435 = vst.msk [vmem:[%s188 + $0x10] sm:$0xf] %vm430, %v418
        %436 = vst.msk [vmem:[%s188 + $0x14] sm:$0xf] %vm430, %v419
        %437 = vst.msk [vmem:[%s188 + $0x18] sm:$0xf] %vm430, %v420
        %438 = vst.msk [vmem:[%s188 + $0x1c] sm:$0xf] %vm430, %v421
        %439 = vst.msk [vmem:[%s188 + $0x20] sm:$0xf] %vm430, %v422
        %440 = vst.msk [vmem:[%s188 + $0x24] sm:$0xf] %vm430, %v423
        %441 = vst.msk [vmem:[%s188 + $0x28] sm:$0xf] %vm430, %v424
        %442 = vst.msk [vmem:[%s188 + $0x2c] sm:$0xf] %vm430, %v425
        %443 = vst.msk [vmem:[%s188 + $0x30] sm:$0xf] %vm430, %v426
        %444 = vst.msk [vmem:[%s188 + $0x34] sm:$0xf] %vm430, %v427
        %445 = vst.msk [vmem:[%s188 + $0x38] sm:$0xf] %vm430, %v428
        %446 = vst.msk [vmem:[%s188 + $0x3c] sm:$0xf] %vm430, %v429
        %s447 = scalar_lea.vmem %s1, 4
        %v448 = vld [vmem:[%s447] sm:$0xf]
        %v450 = vsel %vm292, %v448, 0
        %452 = vmatpush.bf16.msra.mxu0 0
        %453 = vmatpush.bf16.msra.mxu0 0
        %454 = vmatpush.bf16.msra.mxu0 0
        %455 = vmatpush.bf16.msra.mxu0 0
        %456 = vmatpush.bf16.msra.mxu0 0
        %457 = vmatpush.bf16.msra.mxu0 0
        %458 = vmatpush.bf16.msra.mxu0 0
        %459 = vmatpush.bf16.msra.mxu0 %v450
        %460 = vmatmul.bf16.gmra.mxu0 %v269
        %v461 = vpop.f32.mrf.mxu0
        %v462 = vadd.f32 0.0, %v461
        %v463 = vpop.f32.mrf.mxu0
        %v464 = vadd.f32 0.0, %v463
        %465 = vmatmul.bf16.gmra.mxu0 %v272
        %v466 = vpop.f32.mrf.mxu0
        %v467 = vadd.f32 0.0, %v466
        %v468 = vpop.f32.mrf.mxu0
        %v469 = vadd.f32 0.0, %v468
        %470 = vmatmul.bf16.gmra.mxu0 %v275
        %v471 = vpop.f32.mrf.mxu0
        %v472 = vadd.f32 0.0, %v471
        %v473 = vpop.f32.mrf.mxu0
        %v474 = vadd.f32 0.0, %v473
        %475 = vmatmul.bf16.gmra.mxu0 %v278
        %v476 = vpop.f32.mrf.mxu0
        %v477 = vadd.f32 0.0, %v476
        %v478 = vpop.f32.mrf.mxu0
        %v479 = vadd.f32 0.0, %v478
        %480 = vmatmul.bf16.gmra.mxu0 %v281
        %v481 = vpop.f32.mrf.mxu0
        %v482 = vadd.f32 0.0, %v481
        %v483 = vpop.f32.mrf.mxu0
        %v484 = vadd.f32 0.0, %v483
        %485 = vmatmul.bf16.gmra.mxu0 %v284
        %v486 = vpop.f32.mrf.mxu0
        %v487 = vadd.f32 0.0, %v486
        %v488 = vpop.f32.mrf.mxu0
        %v489 = vadd.f32 0.0, %v488
        %490 = vmatmul.bf16.gmra.mxu0 %v287
        %v491 = vpop.f32.mrf.mxu0
        %v492 = vadd.f32 0.0, %v491
        %v493 = vpop.f32.mrf.mxu0
        %v494 = vadd.f32 0.0, %v493
        %495 = vmatmul.bf16.gmra.mxu0 %v290
        %v496 = vpop.f32.mrf.mxu0
        %v497 = vadd.f32 0.0, %v496
        %v498 = vpop.f32.mrf.mxu0
        %v499 = vadd.f32 0.0, %v498
        %500 = vdwg.mxu0
        %v501 = vpack.c.bf16 %v462, %v462
        %v502 = vpack.c.bf16 %v464, %v464
        %v503 = vpack.c.bf16 %v467, %v467
        %v504 = vpack.c.bf16 %v469, %v469
        %v505 = vpack.c.bf16 %v472, %v472
        %v506 = vpack.c.bf16 %v474, %v474
        %v507 = vpack.c.bf16 %v477, %v477
        %v508 = vpack.c.bf16 %v479, %v479
        %v509 = vpack.c.bf16 %v482, %v482
        %v510 = vpack.c.bf16 %v484, %v484
        %v511 = vpack.c.bf16 %v487, %v487
        %v512 = vpack.c.bf16 %v489, %v489
        %v513 = vpack.c.bf16 %v492, %v492
        %v514 = vpack.c.bf16 %v494, %v494
        %v515 = vpack.c.bf16 %v497, %v497
        %v516 = vpack.c.bf16 %v499, %v499
        %s517 = scalar_lea.vmem %s188, 64 [#allocation2]
        %518 = vst.msk [vmem:[%s517] sm:$0xf] %vm430, %v501
        %519 = vst.msk [vmem:[%s517 + $0x4] sm:$0xf] %vm430, %v502
        %520 = vst.msk [vmem:[%s517 + $0x8] sm:$0xf] %vm430, %v503
        %521 = vst.msk [vmem:[%s517 + $0xc] sm:$0xf] %vm430, %v504
        %522 = vst.msk [vmem:[%s517 + $0x10] sm:$0xf] %vm430, %v505
        %523 = vst.msk [vmem:[%s517 + $0x14] sm:$0xf] %vm430, %v506
        %524 = vst.msk [vmem:[%s517 + $0x18] sm:$0xf] %vm430, %v507
        %525 = vst.msk [vmem:[%s517 + $0x1c] sm:$0xf] %vm430, %v508
        %526 = vst.msk [vmem:[%s517 + $0x20] sm:$0xf] %vm430, %v509
        %527 = vst.msk [vmem:[%s517 + $0x24] sm:$0xf] %vm430, %v510
        %528 = vst.msk [vmem:[%s517 + $0x28] sm:$0xf] %vm430, %v511
        %529 = vst.msk [vmem:[%s517 + $0x2c] sm:$0xf] %vm430, %v512
        %530 = vst.msk [vmem:[%s517 + $0x30] sm:$0xf] %vm430, %v513
        %531 = vst.msk [vmem:[%s517 + $0x34] sm:$0xf] %vm430, %v514
        %532 = vst.msk [vmem:[%s517 + $0x38] sm:$0xf] %vm430, %v515
        %533 = vst.msk [vmem:[%s517 + $0x3c] sm:$0xf] %vm430, %v516
        %s534 = scalar_lea.vmem %s1, 8
        %v535 = vld [vmem:[%s534] sm:$0xf]
        %v537 = vsel %vm292, %v535, 0
        %539 = vmatpush.bf16.msra.mxu0 0
        %540 = vmatpush.bf16.msra.mxu0 0
        %541 = vmatpush.bf16.msra.mxu0 0
        %542 = vmatpush.bf16.msra.mxu0 0
        %543 = vmatpush.bf16.msra.mxu0 0
        %544 = vmatpush.bf16.msra.mxu0 0
        %545 = vmatpush.bf16.msra.mxu0 0
        %546 = vmatpush.bf16.msra.mxu0 %v537
        %547 = vmatmul.bf16.gmra.mxu0 %v269
        %v548 = vpop.f32.mrf.mxu0
        %v549 = vadd.f32 0.0, %v548
        %v550 = vpop.f32.mrf.mxu0
        %v551 = vadd.f32 0.0, %v550
        %552 = vmatmul.bf16.gmra.mxu0 %v272
        %v553 = vpop.f32.mrf.mxu0
        %v554 = vadd.f32 0.0, %v553
        %v555 = vpop.f32.mrf.mxu0
        %v556 = vadd.f32 0.0, %v555
        %557 = vmatmul.bf16.gmra.mxu0 %v275
        %v558 = vpop.f32.mrf.mxu0
        %v559 = vadd.f32 0.0, %v558
        %v560 = vpop.f32.mrf.mxu0
        %v561 = vadd.f32 0.0, %v560
        %562 = vmatmul.bf16.gmra.mxu0 %v278
        %v563 = vpop.f32.mrf.mxu0
        %v564 = vadd.f32 0.0, %v563
        %v565 = vpop.f32.mrf.mxu0
        %v566 = vadd.f32 0.0, %v565
        %567 = vmatmul.bf16.gmra.mxu0 %v281
        %v568 = vpop.f32.mrf.mxu0
        %v569 = vadd.f32 0.0, %v568
        %v570 = vpop.f32.mrf.mxu0
        %v571 = vadd.f32 0.0, %v570
        %572 = vmatmul.bf16.gmra.mxu0 %v284
        %v573 = vpop.f32.mrf.mxu0
        %v574 = vadd.f32 0.0, %v573
        %v575 = vpop.f32.mrf.mxu0
        %v576 = vadd.f32 0.0, %v575
        %577 = vmatmul.bf16.gmra.mxu0 %v287
        %v578 = vpop.f32.mrf.mxu0
        %v579 = vadd.f32 0.0, %v578
        %v580 = vpop.f32.mrf.mxu0
        %v581 = vadd.f32 0.0, %v580
        %582 = vmatmul.bf16.gmra.mxu0 %v290
        %v583 = vpop.f32.mrf.mxu0
        %v584 = vadd.f32 0.0, %v583
        %v585 = vpop.f32.mrf.mxu0
        %v586 = vadd.f32 0.0, %v585
        %587 = vdwg.mxu0
        %v588 = vpack.c.bf16 %v549, %v549
        %v589 = vpack.c.bf16 %v551, %v551
        %v590 = vpack.c.bf16 %v554, %v554
        %v591 = vpack.c.bf16 %v556, %v556
        %v592 = vpack.c.bf16 %v559, %v559
        %v593 = vpack.c.bf16 %v561, %v561
        %v594 = vpack.c.bf16 %v564, %v564
        %v595 = vpack.c.bf16 %v566, %v566
        %v596 = vpack.c.bf16 %v569, %v569
        %v597 = vpack.c.bf16 %v571, %v571
        %v598 = vpack.c.bf16 %v574, %v574
        %v599 = vpack.c.bf16 %v576, %v576
        %v600 = vpack.c.bf16 %v579, %v579
        %v601 = vpack.c.bf16 %v581, %v581
        %v602 = vpack.c.bf16 %v584, %v584
        %v603 = vpack.c.bf16 %v586, %v586
        %s604 = scalar_lea.vmem %s188, 128 [#allocation2]
        %605 = vst.msk [vmem:[%s604] sm:$0xf] %vm430, %v588
        %606 = vst.msk [vmem:[%s604 + $0x4] sm:$0xf] %vm430, %v589
        %607 = vst.msk [vmem:[%s604 + $0x8] sm:$0xf] %vm430, %v590
        %608 = vst.msk [vmem:[%s604 + $0xc] sm:$0xf] %vm430, %v591
        %609 = vst.msk [vmem:[%s604 + $0x10] sm:$0xf] %vm430, %v592
        %610 = vst.msk [vmem:[%s604 + $0x14] sm:$0xf] %vm430, %v593
        %611 = vst.msk [vmem:[%s604 + $0x18] sm:$0xf] %vm430, %v594
        %612 = vst.msk [vmem:[%s604 + $0x1c] sm:$0xf] %vm430, %v595
        %613 = vst.msk [vmem:[%s604 + $0x20] sm:$0xf] %vm430, %v596
        %614 = vst.msk [vmem:[%s604 + $0x24] sm:$0xf] %vm430, %v597
        %615 = vst.msk [vmem:[%s604 + $0x28] sm:$0xf] %vm430, %v598
        %616 = vst.msk [vmem:[%s604 + $0x2c] sm:$0xf] %vm430, %v599
        %617 = vst.msk [vmem:[%s604 + $0x30] sm:$0xf] %vm430, %v600
        %618 = vst.msk [vmem:[%s604 + $0x34] sm:$0xf] %vm430, %v601
        %619 = vst.msk [vmem:[%s604 + $0x38] sm:$0xf] %vm430, %v602
        %620 = vst.msk [vmem:[%s604 + $0x3c] sm:$0xf] %vm430, %v603
        %s621 = scalar_lea.vmem %s1, 12
        %v622 = vld [vmem:[%s621] sm:$0xf]
        %v624 = vsel %vm292, %v622, 0
        %626 = vmatpush.bf16.msra.mxu0 0
        %627 = vmatpush.bf16.msra.mxu0 0
        %628 = vmatpush.bf16.msra.mxu0 0
        %629 = vmatpush.bf16.msra.mxu0 0
        %630 = vmatpush.bf16.msra.mxu0 0
        %631 = vmatpush.bf16.msra.mxu0 0
        %632 = vmatpush.bf16.msra.mxu0 0
        %633 = vmatpush.bf16.msra.mxu0 %v624
        %634 = vmatmul.bf16.gmra.mxu0 %v269
        %v635 = vpop.f32.mrf.mxu0
        %v636 = vadd.f32 0.0, %v635
        %v637 = vpop.f32.mrf.mxu0
        %v638 = vadd.f32 0.0, %v637
        %639 = vmatmul.bf16.gmra.mxu0 %v272
        %v640 = vpop.f32.mrf.mxu0
        %v641 = vadd.f32 0.0, %v640
        %v642 = vpop.f32.mrf.mxu0
        %v643 = vadd.f32 0.0, %v642
        %644 = vmatmul.bf16.gmra.mxu0 %v275
        %v645 = vpop.f32.mrf.mxu0
        %v646 = vadd.f32 0.0, %v645
        %v647 = vpop.f32.mrf.mxu0
        %v648 = vadd.f32 0.0, %v647
        %649 = vmatmul.bf16.gmra.mxu0 %v278
        %v650 = vpop.f32.mrf.mxu0
        %v651 = vadd.f32 0.0, %v650
        %v652 = vpop.f32.mrf.mxu0
        %v653 = vadd.f32 0.0, %v652
        %654 = vmatmul.bf16.gmra.mxu0 %v281
        %v655 = vpop.f32.mrf.mxu0
        %v656 = vadd.f32 0.0, %v655
        %v657 = vpop.f32.mrf.mxu0
        %v658 = vadd.f32 0.0, %v657
        %659 = vmatmul.bf16.gmra.mxu0 %v284
        %v660 = vpop.f32.mrf.mxu0
        %v661 = vadd.f32 0.0, %v660
        %v662 = vpop.f32.mrf.mxu0
        %v663 = vadd.f32 0.0, %v662
        %664 = vmatmul.bf16.gmra.mxu0 %v287
        %v665 = vpop.f32.mrf.mxu0
        %v666 = vadd.f32 0.0, %v665
        %v667 = vpop.f32.mrf.mxu0
        %v668 = vadd.f32 0.0, %v667
        %669 = vmatmul.bf16.gmra.mxu0 %v290
        %v670 = vpop.f32.mrf.mxu0
        %v671 = vadd.f32 0.0, %v670
        %v672 = vpop.f32.mrf.mxu0
        %v673 = vadd.f32 0.0, %v672
        %674 = vdwg.mxu0
        %v675 = vpack.c.bf16 %v636, %v636
        %v676 = vpack.c.bf16 %v638, %v638
        %v677 = vpack.c.bf16 %v641, %v641
        %v678 = vpack.c.bf16 %v643, %v643
        %v679 = vpack.c.bf16 %v646, %v646
        %v680 = vpack.c.bf16 %v648, %v648
        %v681 = vpack.c.bf16 %v651, %v651
        %v682 = vpack.c.bf16 %v653, %v653
        %v683 = vpack.c.bf16 %v656, %v656
        %v684 = vpack.c.bf16 %v658, %v658
        %v685 = vpack.c.bf16 %v661, %v661
        %v686 = vpack.c.bf16 %v663, %v663
        %v687 = vpack.c.bf16 %v666, %v666
        %v688 = vpack.c.bf16 %v668, %v668
        %v689 = vpack.c.bf16 %v671, %v671
        %v690 = vpack.c.bf16 %v673, %v673
        %s691 = scalar_lea.vmem %s188, 192 [#allocation2]
        %692 = vst.msk [vmem:[%s691] sm:$0xf] %vm430, %v675
        %693 = vst.msk [vmem:[%s691 + $0x4] sm:$0xf] %vm430, %v676
        %694 = vst.msk [vmem:[%s691 + $0x8] sm:$0xf] %vm430, %v677
        %695 = vst.msk [vmem:[%s691 + $0xc] sm:$0xf] %vm430, %v678
        %696 = vst.msk [vmem:[%s691 + $0x10] sm:$0xf] %vm430, %v679
        %697 = vst.msk [vmem:[%s691 + $0x14] sm:$0xf] %vm430, %v680
        %698 = vst.msk [vmem:[%s691 + $0x18] sm:$0xf] %vm430, %v681
        %699 = vst.msk [vmem:[%s691 + $0x1c] sm:$0xf] %vm430, %v682
        %700 = vst.msk [vmem:[%s691 + $0x20] sm:$0xf] %vm430, %v683
        %701 = vst.msk [vmem:[%s691 + $0x24] sm:$0xf] %vm430, %v684
        %702 = vst.msk [vmem:[%s691 + $0x28] sm:$0xf] %vm430, %v685
        %703 = vst.msk [vmem:[%s691 + $0x2c] sm:$0xf] %vm430, %v686
        %704 = vst.msk [vmem:[%s691 + $0x30] sm:$0xf] %vm430, %v687
        %705 = vst.msk [vmem:[%s691 + $0x34] sm:$0xf] %vm430, %v688
        %706 = vst.msk [vmem:[%s691 + $0x38] sm:$0xf] %vm430, %v689
        %707 = vst.msk [vmem:[%s691 + $0x3c] sm:$0xf] %vm430, %v690
        %s708 = sand.u32 %s92, 1
        %s709 = sand.u32 %s92, 1
        %s710 = smul.addr %s709, 256
        %s711 = scalar_lea.vmem [#allocation2], %s710
        %s712 = smul.u32 16, %s16
        %p713 = scmp.lt.s32.totalorder %s712, 31
        %s714 = scalar_select %p713, %s712, 31
        %s715 = smul.addr %s714, 8
        %s716 = scalar_lea.vmem %s4, %s715
        // Predicated region
        $region33: #{gat_encoder_pallas.7} parent=31 // pred_check
          %p717 = pneg %p102
        $region34: #{gat_encoder_pallas.7} parent=31 // pred_check_branch
          %719 = sbr.rel (%p717) target = $region36
        $region35: #{gat_encoder_pallas.7} parent=31 // pred_region
          %s720 = smul.u32 16, %s16
          %s721 = smul.addr %s720, 4
          %s722 = scalar_lea.vmem %s3, %s721
          // Predicated region
          $region37: #{gat_encoder_pallas.7} parent=35 // pred_check
            _
          $region38: #{gat_encoder_pallas.7} parent=35 // pred_check_branch
            %724 = sbr.rel (0) target = $region40
          $region39: #{gat_encoder_pallas.7} parent=35 // pred_region
            // Predicated region
            $region41: #{gat_encoder_pallas.7} parent=39 // pred_check
              _
            $region42: #{gat_encoder_pallas.7} parent=39 // pred_check_branch
              %726 = sbr.rel target = $region44
            $region43: #{gat_encoder_pallas.7} parent=39 // pred_region
              // Predicated region
              $region56: #{gat_encoder_pallas.7} parent=43 // pred_check
                _
              $region57: #{gat_encoder_pallas.7} parent=43 // pred_check_branch
                %868 = sbr.rel (0) target = $region59
              $region58: #{gat_encoder_pallas.7} parent=43 // pred_region
                loop: start=0, step=1, limit=1
                $region60: #{gat_encoder_pallas.7} parent=58 // loop_pre_header
                  _
                $region61: #{gat_encoder_pallas.7} parent=58 // loop_header
                  %s870 = sphi 0, %s874
                  %p871 = scmp.ge.s32.totalorder %s870, 1
                  %s875 = sphi %s711, %s711
                  %s876 = sphi %s722, %s722
                $region62: #{gat_encoder_pallas.7} parent=58 // loop_header_branch
                  %873 = sbr.rel (%p871) target = $region66
                $region63: #{gat_encoder_pallas.7} parent=58 // loop_body
                  _
                $region64: #{gat_encoder_pallas.7} parent=58 // loop_footer
                  %s874 = sadd.s32 1, %s870
                $region65: #{gat_encoder_pallas.7} parent=58 // loop_footer_branch
                  %869 = sbr.rel target = $region61
                $region66: #{gat_encoder_pallas.7} parent=58 // loop_exit
                  _
                %s878 = ssub.s32 16, 1
                loop: start=0, step=1, limit=1
                $region67: #{gat_encoder_pallas.7} parent=58 // loop_pre_header
                  _
                $region68: #{gat_encoder_pallas.7} parent=58 // loop_header
                  %s880 = sphi 0, %s884
                  %p881 = scmp.ge.s32.totalorder %s880, 1
                  %s885 = sphi %s711, %s711
                  %s886 = sphi %s722, %s722
                $region69: #{gat_encoder_pallas.7} parent=58 // loop_header_branch
                  %883 = sbr.rel (%p881) target = $region73
                $region70: #{gat_encoder_pallas.7} parent=58 // loop_body
                  %v887 = vld [vmem:[%s885] sm:%s878]
                  %888 = vst [vmem:[%s886] sm:%s878] %v887
                  %v889 = vld [vmem:[%s885 + $0x4] sm:%s878]
                  %890 = vst [vmem:[%s886 + $0x4] sm:%s878] %v889
                  %v891 = vld [vmem:[%s885 + $0x8] sm:%s878]
                  %892 = vst [vmem:[%s886 + $0x8] sm:%s878] %v891
                  %v893 = vld [vmem:[%s885 + $0xc] sm:%s878]
                  %894 = vst [vmem:[%s886 + $0xc] sm:%s878] %v893
                  %v895 = vld [vmem:[%s885 + $0x10] sm:%s878]
                  %896 = vst [vmem:[%s886 + $0x10] sm:%s878] %v895
                  %v897 = vld [vmem:[%s885 + $0x14] sm:%s878]
                  %898 = vst [vmem:[%s886 + $0x14] sm:%s878] %v897
                  %v899 = vld [vmem:[%s885 + $0x18] sm:%s878]
                  %900 = vst [vmem:[%s886 + $0x18] sm:%s878] %v899
                  %v901 = vld [vmem:[%s885 + $0x1c] sm:%s878]
                  %902 = vst [vmem:[%s886 + $0x1c] sm:%s878] %v901
                  %v903 = vld [vmem:[%s885 + $0x20] sm:%s878]
                  %904 = vst [vmem:[%s886 + $0x20] sm:%s878] %v903
                  %v905 = vld [vmem:[%s885 + $0x24] sm:%s878]
                  %906 = vst [vmem:[%s886 + $0x24] sm:%s878] %v905
                  %v907 = vld [vmem:[%s885 + $0x28] sm:%s878]
                  %908 = vst [vmem:[%s886 + $0x28] sm:%s878] %v907
                  %v909 = vld [vmem:[%s885 + $0x2c] sm:%s878]
                  %910 = vst [vmem:[%s886 + $0x2c] sm:%s878] %v909
                  %v911 = vld [vmem:[%s885 + $0x30] sm:%s878]
                  %912 = vst [vmem:[%s886 + $0x30] sm:%s878] %v911
                  %v913 = vld [vmem:[%s885 + $0x34] sm:%s878]
                  %914 = vst [vmem:[%s886 + $0x34] sm:%s878] %v913
                  %v915 = vld [vmem:[%s885 + $0x38] sm:%s878]
                  %916 = vst [vmem:[%s886 + $0x38] sm:%s878] %v915
                  %v917 = vld [vmem:[%s885 + $0x3c] sm:%s878]
                  %918 = vst [vmem:[%s886 + $0x3c] sm:%s878] %v917
                  %v919 = vld [vmem:[%s885 + $0x40] sm:%s878]
                  %920 = vst [vmem:[%s886 + $0x80] sm:%s878] %v919
                  %v921 = vld [vmem:[%s885 + $0x44] sm:%s878]
                  %922 = vst [vmem:[%s886 + $0x84] sm:%s878] %v921
                  %v923 = vld [vmem:[%s885 + $0x48] sm:%s878]
                  %924 = vst [vmem:[%s886 + $0x88] sm:%s878] %v923
                  %v925 = vld [vmem:[%s885 + $0x4c] sm:%s878]
                  %926 = vst [vmem:[%s886 + $0x8c] sm:%s878] %v925
                  %v927 = vld [vmem:[%s885 + $0x50] sm:%s878]
                  %928 = vst [vmem:[%s886 + $0x90] sm:%s878] %v927
                  %v929 = vld [vmem:[%s885 + $0x54] sm:%s878]
                  %930 = vst [vmem:[%s886 + $0x94] sm:%s878] %v929
                  %v931 = vld [vmem:[%s885 + $0x58] sm:%s878]
                  %932 = vst [vmem:[%s886 + $0x98] sm:%s878] %v931
                  %v933 = vld [vmem:[%s885 + $0x5c] sm:%s878]
                  %934 = vst [vmem:[%s886 + $0x9c] sm:%s878] %v933
                  %v935 = vld [vmem:[%s885 + $0x60] sm:%s878]
                  %936 = vst [vmem:[%s886 + $0xa0] sm:%s878] %v935
                  %v937 = vld [vmem:[%s885 + $0x64] sm:%s878]
                  %938 = vst [vmem:[%s886 + $0xa4] sm:%s878] %v937
                  %v939 = vld [vmem:[%s885 + $0x68] sm:%s878]
                  %940 = vst [vmem:[%s886 + $0xa8] sm:%s878] %v939
                  %v941 = vld [vmem:[%s885 + $0x6c] sm:%s878]
                  %942 = vst [vmem:[%s886 + $0xac] sm:%s878] %v941
                  %v943 = vld [vmem:[%s885 + $0x70] sm:%s878]
                  %944 = vst [vmem:[%s886 + $0xb0] sm:%s878] %v943
                  %v945 = vld [vmem:[%s885 + $0x74] sm:%s878]
                  %946 = vst [vmem:[%s886 + $0xb4] sm:%s878] %v945
                  %v947 = vld [vmem:[%s885 + $0x78] sm:%s878]
                  %948 = vst [vmem:[%s886 + $0xb8] sm:%s878] %v947
                  %v949 = vld [vmem:[%s885 + $0x7c] sm:%s878]
                  %950 = vst [vmem:[%s886 + $0xbc] sm:%s878] %v949
                  %v951 = vld [vmem:[%s885 + $0x80] sm:%s878]
                  %952 = vst [vmem:[%s886 + $0x100] sm:%s878] %v951
                  %v953 = vld [vmem:[%s885 + $0x84] sm:%s878]
                  %954 = vst [vmem:[%s886 + $0x104] sm:%s878] %v953
                  %v955 = vld [vmem:[%s885 + $0x88] sm:%s878]
                  %956 = vst [vmem:[%s886 + $0x108] sm:%s878] %v955
                  %v957 = vld [vmem:[%s885 + $0x8c] sm:%s878]
                  %958 = vst [vmem:[%s886 + $0x10c] sm:%s878] %v957
                  %v959 = vld [vmem:[%s885 + $0x90] sm:%s878]
                  %960 = vst [vmem:[%s886 + $0x110] sm:%s878] %v959
                  %v961 = vld [vmem:[%s885 + $0x94] sm:%s878]
                  %962 = vst [vmem:[%s886 + $0x114] sm:%s878] %v961
                  %v963 = vld [vmem:[%s885 + $0x98] sm:%s878]
                  %964 = vst [vmem:[%s886 + $0x118] sm:%s878] %v963
                  %v965 = vld [vmem:[%s885 + $0x9c] sm:%s878]
                  %966 = vst [vmem:[%s886 + $0x11c] sm:%s878] %v965
                  %v967 = vld [vmem:[%s885 + $0xa0] sm:%s878]
                  %968 = vst [vmem:[%s886 + $0x120] sm:%s878] %v967
                  %v969 = vld [vmem:[%s885 + $0xa4] sm:%s878]
                  %970 = vst [vmem:[%s886 + $0x124] sm:%s878] %v969
                  %v971 = vld [vmem:[%s885 + $0xa8] sm:%s878]
                  %972 = vst [vmem:[%s886 + $0x128] sm:%s878] %v971
                  %v973 = vld [vmem:[%s885 + $0xac] sm:%s878]
                  %974 = vst [vmem:[%s886 + $0x12c] sm:%s878] %v973
                  %v975 = vld [vmem:[%s885 + $0xb0] sm:%s878]
                  %976 = vst [vmem:[%s886 + $0x130] sm:%s878] %v975
                  %v977 = vld [vmem:[%s885 + $0xb4] sm:%s878]
                  %978 = vst [vmem:[%s886 + $0x134] sm:%s878] %v977
                  %v979 = vld [vmem:[%s885 + $0xb8] sm:%s878]
                  %980 = vst [vmem:[%s886 + $0x138] sm:%s878] %v979
                  %v981 = vld [vmem:[%s885 + $0xbc] sm:%s878]
                  %982 = vst [vmem:[%s886 + $0x13c] sm:%s878] %v981
                  %v983 = vld [vmem:[%s885 + $0xc0] sm:%s878]
                  %984 = vst [vmem:[%s886 + $0x180] sm:%s878] %v983
                  %v985 = vld [vmem:[%s885 + $0xc4] sm:%s878]
                  %986 = vst [vmem:[%s886 + $0x184] sm:%s878] %v985
                  %v987 = vld [vmem:[%s885 + $0xc8] sm:%s878]
                  %988 = vst [vmem:[%s886 + $0x188] sm:%s878] %v987
                  %v989 = vld [vmem:[%s885 + $0xcc] sm:%s878]
                  %990 = vst [vmem:[%s886 + $0x18c] sm:%s878] %v989
                  %v991 = vld [vmem:[%s885 + $0xd0] sm:%s878]
                  %992 = vst [vmem:[%s886 + $0x190] sm:%s878] %v991
                  %v993 = vld [vmem:[%s885 + $0xd4] sm:%s878]
                  %994 = vst [vmem:[%s886 + $0x194] sm:%s878] %v993
                  %v995 = vld [vmem:[%s885 + $0xd8] sm:%s878]
                  %996 = vst [vmem:[%s886 + $0x198] sm:%s878] %v995
                  %v997 = vld [vmem:[%s885 + $0xdc] sm:%s878]
                  %998 = vst [vmem:[%s886 + $0x19c] sm:%s878] %v997
                  %v999 = vld [vmem:[%s885 + $0xe0] sm:%s878]
                  %1000 = vst [vmem:[%s886 + $0x1a0] sm:%s878] %v999
                  %v1001 = vld [vmem:[%s885 + $0xe4] sm:%s878]
                  %1002 = vst [vmem:[%s886 + $0x1a4] sm:%s878] %v1001
                  %v1003 = vld [vmem:[%s885 + $0xe8] sm:%s878]
                  %1004 = vst [vmem:[%s886 + $0x1a8] sm:%s878] %v1003
                  %v1005 = vld [vmem:[%s885 + $0xec] sm:%s878]
                  %1006 = vst [vmem:[%s886 + $0x1ac] sm:%s878] %v1005
                  %v1007 = vld [vmem:[%s885 + $0xf0] sm:%s878]
                  %1008 = vst [vmem:[%s886 + $0x1b0] sm:%s878] %v1007
                  %v1009 = vld [vmem:[%s885 + $0xf4] sm:%s878]
                  %1010 = vst [vmem:[%s886 + $0x1b4] sm:%s878] %v1009
                  %v1011 = vld [vmem:[%s885 + $0xf8] sm:%s878]
                  %1012 = vst [vmem:[%s886 + $0x1b8] sm:%s878] %v1011
                  %v1013 = vld [vmem:[%s885 + $0xfc] sm:%s878]
                  %1014 = vst [vmem:[%s886 + $0x1bc] sm:%s878] %v1013
                $region71: #{gat_encoder_pallas.7} parent=58 // loop_footer
                  %s884 = sadd.s32 1, %s880
                $region72: #{gat_encoder_pallas.7} parent=58 // loop_footer_branch
                  %879 = sbr.rel target = $region68
                $region73: #{gat_encoder_pallas.7} parent=58 // loop_exit
                  _
              $region59: #{gat_encoder_pallas.7} parent=43 // pred_fallthru
                _
            $region44: #{gat_encoder_pallas.7} parent=39 // pred_fallthru
              _
            // Predicated region
            $region45: #{gat_encoder_pallas.7} parent=39 // pred_check
              _
            $region46: #{gat_encoder_pallas.7} parent=39 // pred_check_branch
              %728 = sbr.rel (0) target = $region48
            $region47: #{gat_encoder_pallas.7} parent=39 // pred_region
              %s730 = ssub.s32 16, 1
              loop: start=0, step=1, limit=1
              $region49: #{gat_encoder_pallas.7} parent=47 // loop_pre_header
                _
              $region50: #{gat_encoder_pallas.7} parent=47 // loop_header
                %s732 = sphi 0, %s736
                %p733 = scmp.ge.s32.totalorder %s732, 1
                %s737 = sphi %s711, %s711
                %s738 = sphi %s722, %s722
              $region51: #{gat_encoder_pallas.7} parent=47 // loop_header_branch
                %735 = sbr.rel (%p733) target = $region55
              $region52: #{gat_encoder_pallas.7} parent=47 // loop_body
                %v739 = vld [vmem:[%s737] sm:%s730]
                %740 = vst [vmem:[%s738] sm:%s730] %v739
                %v741 = vld [vmem:[%s737 + $0x4] sm:%s730]
                %742 = vst [vmem:[%s738 + $0x4] sm:%s730] %v741
                %v743 = vld [vmem:[%s737 + $0x8] sm:%s730]
                %744 = vst [vmem:[%s738 + $0x8] sm:%s730] %v743
                %v745 = vld [vmem:[%s737 + $0xc] sm:%s730]
                %746 = vst [vmem:[%s738 + $0xc] sm:%s730] %v745
                %v747 = vld [vmem:[%s737 + $0x10] sm:%s730]
                %748 = vst [vmem:[%s738 + $0x10] sm:%s730] %v747
                %v749 = vld [vmem:[%s737 + $0x14] sm:%s730]
                %750 = vst [vmem:[%s738 + $0x14] sm:%s730] %v749
                %v751 = vld [vmem:[%s737 + $0x18] sm:%s730]
                %752 = vst [vmem:[%s738 + $0x18] sm:%s730] %v751
                %v753 = vld [vmem:[%s737 + $0x1c] sm:%s730]
                %754 = vst [vmem:[%s738 + $0x1c] sm:%s730] %v753
                %v755 = vld [vmem:[%s737 + $0x20] sm:%s730]
                %756 = vst [vmem:[%s738 + $0x20] sm:%s730] %v755
                %v757 = vld [vmem:[%s737 + $0x24] sm:%s730]
                %758 = vst [vmem:[%s738 + $0x24] sm:%s730] %v757
                %v759 = vld [vmem:[%s737 + $0x28] sm:%s730]
                %760 = vst [vmem:[%s738 + $0x28] sm:%s730] %v759
                %v761 = vld [vmem:[%s737 + $0x2c] sm:%s730]
                %762 = vst [vmem:[%s738 + $0x2c] sm:%s730] %v761
                %v763 = vld [vmem:[%s737 + $0x30] sm:%s730]
                %764 = vst [vmem:[%s738 + $0x30] sm:%s730] %v763
                %v765 = vld [vmem:[%s737 + $0x34] sm:%s730]
                %766 = vst [vmem:[%s738 + $0x34] sm:%s730] %v765
                %v767 = vld [vmem:[%s737 + $0x38] sm:%s730]
                %768 = vst [vmem:[%s738 + $0x38] sm:%s730] %v767
                %v769 = vld [vmem:[%s737 + $0x3c] sm:%s730]
                %770 = vst [vmem:[%s738 + $0x3c] sm:%s730] %v769
                %v771 = vld [vmem:[%s737 + $0x40] sm:%s730]
                %772 = vst [vmem:[%s738 + $0x80] sm:%s730] %v771
                %v773 = vld [vmem:[%s737 + $0x44] sm:%s730]
                %774 = vst [vmem:[%s738 + $0x84] sm:%s730] %v773
                %v775 = vld [vmem:[%s737 + $0x48] sm:%s730]
                %776 = vst [vmem:[%s738 + $0x88] sm:%s730] %v775
                %v777 = vld [vmem:[%s737 + $0x4c] sm:%s730]
                %778 = vst [vmem:[%s738 + $0x8c] sm:%s730] %v777
                %v779 = vld [vmem:[%s737 + $0x50] sm:%s730]
                %780 = vst [vmem:[%s738 + $0x90] sm:%s730] %v779
                %v781 = vld [vmem:[%s737 + $0x54] sm:%s730]
                %782 = vst [vmem:[%s738 + $0x94] sm:%s730] %v781
                %v783 = vld [vmem:[%s737 + $0x58] sm:%s730]
                %784 = vst [vmem:[%s738 + $0x98] sm:%s730] %v783
                %v785 = vld [vmem:[%s737 + $0x5c] sm:%s730]
                %786 = vst [vmem:[%s738 + $0x9c] sm:%s730] %v785
                %v787 = vld [vmem:[%s737 + $0x60] sm:%s730]
                %788 = vst [vmem:[%s738 + $0xa0] sm:%s730] %v787
                %v789 = vld [vmem:[%s737 + $0x64] sm:%s730]
                %790 = vst [vmem:[%s738 + $0xa4] sm:%s730] %v789
                %v791 = vld [vmem:[%s737 + $0x68] sm:%s730]
                %792 = vst [vmem:[%s738 + $0xa8] sm:%s730] %v791
                %v793 = vld [vmem:[%s737 + $0x6c] sm:%s730]
                %794 = vst [vmem:[%s738 + $0xac] sm:%s730] %v793
                %v795 = vld [vmem:[%s737 + $0x70] sm:%s730]
                %796 = vst [vmem:[%s738 + $0xb0] sm:%s730] %v795
                %v797 = vld [vmem:[%s737 + $0x74] sm:%s730]
                %798 = vst [vmem:[%s738 + $0xb4] sm:%s730] %v797
                %v799 = vld [vmem:[%s737 + $0x78] sm:%s730]
                %800 = vst [vmem:[%s738 + $0xb8] sm:%s730] %v799
                %v801 = vld [vmem:[%s737 + $0x7c] sm:%s730]
                %802 = vst [vmem:[%s738 + $0xbc] sm:%s730] %v801
                %v803 = vld [vmem:[%s737 + $0x80] sm:%s730]
                %804 = vst [vmem:[%s738 + $0x100] sm:%s730] %v803
                %v805 = vld [vmem:[%s737 + $0x84] sm:%s730]
                %806 = vst [vmem:[%s738 + $0x104] sm:%s730] %v805
                %v807 = vld [vmem:[%s737 + $0x88] sm:%s730]
                %808 = vst [vmem:[%s738 + $0x108] sm:%s730] %v807
                %v809 = vld [vmem:[%s737 + $0x8c] sm:%s730]
                %810 = vst [vmem:[%s738 + $0x10c] sm:%s730] %v809
                %v811 = vld [vmem:[%s737 + $0x90] sm:%s730]
                %812 = vst [vmem:[%s738 + $0x110] sm:%s730] %v811
                %v813 = vld [vmem:[%s737 + $0x94] sm:%s730]
                %814 = vst [vmem:[%s738 + $0x114] sm:%s730] %v813
                %v815 = vld [vmem:[%s737 + $0x98] sm:%s730]
                %816 = vst [vmem:[%s738 + $0x118] sm:%s730] %v815
                %v817 = vld [vmem:[%s737 + $0x9c] sm:%s730]
                %818 = vst [vmem:[%s738 + $0x11c] sm:%s730] %v817
                %v819 = vld [vmem:[%s737 + $0xa0] sm:%s730]
                %820 = vst [vmem:[%s738 + $0x120] sm:%s730] %v819
                %v821 = vld [vmem:[%s737 + $0xa4] sm:%s730]
                %822 = vst [vmem:[%s738 + $0x124] sm:%s730] %v821
                %v823 = vld [vmem:[%s737 + $0xa8] sm:%s730]
                %824 = vst [vmem:[%s738 + $0x128] sm:%s730] %v823
                %v825 = vld [vmem:[%s737 + $0xac] sm:%s730]
                %826 = vst [vmem:[%s738 + $0x12c] sm:%s730] %v825
                %v827 = vld [vmem:[%s737 + $0xb0] sm:%s730]
                %828 = vst [vmem:[%s738 + $0x130] sm:%s730] %v827
                %v829 = vld [vmem:[%s737 + $0xb4] sm:%s730]
                %830 = vst [vmem:[%s738 + $0x134] sm:%s730] %v829
                %v831 = vld [vmem:[%s737 + $0xb8] sm:%s730]
                %832 = vst [vmem:[%s738 + $0x138] sm:%s730] %v831
                %v833 = vld [vmem:[%s737 + $0xbc] sm:%s730]
                %834 = vst [vmem:[%s738 + $0x13c] sm:%s730] %v833
                %v835 = vld [vmem:[%s737 + $0xc0] sm:%s730]
                %836 = vst [vmem:[%s738 + $0x180] sm:%s730] %v835
                %v837 = vld [vmem:[%s737 + $0xc4] sm:%s730]
                %838 = vst [vmem:[%s738 + $0x184] sm:%s730] %v837
                %v839 = vld [vmem:[%s737 + $0xc8] sm:%s730]
                %840 = vst [vmem:[%s738 + $0x188] sm:%s730] %v839
                %v841 = vld [vmem:[%s737 + $0xcc] sm:%s730]
                %842 = vst [vmem:[%s738 + $0x18c] sm:%s730] %v841
                %v843 = vld [vmem:[%s737 + $0xd0] sm:%s730]
                %844 = vst [vmem:[%s738 + $0x190] sm:%s730] %v843
                %v845 = vld [vmem:[%s737 + $0xd4] sm:%s730]
                %846 = vst [vmem:[%s738 + $0x194] sm:%s730] %v845
                %v847 = vld [vmem:[%s737 + $0xd8] sm:%s730]
                %848 = vst [vmem:[%s738 + $0x198] sm:%s730] %v847
                %v849 = vld [vmem:[%s737 + $0xdc] sm:%s730]
                %850 = vst [vmem:[%s738 + $0x19c] sm:%s730] %v849
                %v851 = vld [vmem:[%s737 + $0xe0] sm:%s730]
                %852 = vst [vmem:[%s738 + $0x1a0] sm:%s730] %v851
                %v853 = vld [vmem:[%s737 + $0xe4] sm:%s730]
                %854 = vst [vmem:[%s738 + $0x1a4] sm:%s730] %v853
                %v855 = vld [vmem:[%s737 + $0xe8] sm:%s730]
                %856 = vst [vmem:[%s738 + $0x1a8] sm:%s730] %v855
                %v857 = vld [vmem:[%s737 + $0xec] sm:%s730]
                %858 = vst [vmem:[%s738 + $0x1ac] sm:%s730] %v857
                %v859 = vld [vmem:[%s737 + $0xf0] sm:%s730]
                %860 = vst [vmem:[%s738 + $0x1b0] sm:%s730] %v859
                %v861 = vld [vmem:[%s737 + $0xf4] sm:%s730]
                %862 = vst [vmem:[%s738 + $0x1b4] sm:%s730] %v861
                %v863 = vld [vmem:[%s737 + $0xf8] sm:%s730]
                %864 = vst [vmem:[%s738 + $0x1b8] sm:%s730] %v863
                %v865 = vld [vmem:[%s737 + $0xfc] sm:%s730]
                %866 = vst [vmem:[%s738 + $0x1bc] sm:%s730] %v865
              $region53: #{gat_encoder_pallas.7} parent=47 // loop_footer
                %s736 = sadd.s32 1, %s732
              $region54: #{gat_encoder_pallas.7} parent=47 // loop_footer_branch
                %731 = sbr.rel target = $region50
              $region55: #{gat_encoder_pallas.7} parent=47 // loop_exit
                _
            $region48: #{gat_encoder_pallas.7} parent=39 // pred_fallthru
              _
          $region40: #{gat_encoder_pallas.7} parent=35 // pred_fallthru
            _
          %1015 = vnop
        $region36: #{gat_encoder_pallas.7} parent=31 // pred_fallthru
          _
        // Predicated region
        $region74: #{gat_encoder_pallas.7} parent=31 // pred_check
          %p1016 = pneg %p128
        $region75: #{gat_encoder_pallas.7} parent=31 // pred_check_branch
          %1018 = sbr.rel (%p1016) target = $region77
        $region76: #{gat_encoder_pallas.7} parent=31 // pred_region
          %s1019 = smul.u32 16, %s16
        $region77: #{gat_encoder_pallas.7} parent=31 // pred_fallthru
          _
      $region32: #{gat_encoder_pallas.7} parent=5 // pred_fallthru
        _
      %p1020 = scmp.le.s32.totalorder 2, %s11
      // Predicated region
      $region78: #{gat_encoder_pallas.7} parent=5 // pred_check
        %p1021 = pneg %p1020
      $region79: #{gat_encoder_pallas.7} parent=5 // pred_check_branch
        %1023 = sbr.rel (%p1021) target = $region81
      $region80: #{gat_encoder_pallas.7} parent=5 // pred_region
        %s1024 = ssub.s32 %s11, 2
        // Predicated region
        $region82: #{gat_encoder_pallas.7} parent=80 // pred_check
          %p1025 = pneg %p108
        $region83: #{gat_encoder_pallas.7} parent=80 // pred_check_branch
          %1027 = sbr.rel (%p1025) target = $region85
        $region84: #{gat_encoder_pallas.7} parent=80 // pred_region
          %s1028 = sand.u32 %s93, 1
          %s1029 = sand.u32 %s93, 1
          %s1030 = smul.addr %s1029, 256
          %s1031 = scalar_lea.vmem [#allocation2], %s1030
        $region85: #{gat_encoder_pallas.7} parent=80 // pred_fallthru
          _
        // Predicated region
        $region86: #{gat_encoder_pallas.7} parent=80 // pred_check
          %p1032 = pneg %p134
        $region87: #{gat_encoder_pallas.7} parent=80 // pred_check_branch
          %1034 = sbr.rel (%p1032) target = $region89
        $region88: #{gat_encoder_pallas.7} parent=80 // pred_region
          %s1035 = smul.u32 16, %s17
          %p1036 = scmp.lt.s32.totalorder %s1035, 31
          %s1037 = scalar_select %p1036, %s1035, 31
          %s1038 = smul.addr %s1037, 8
          %s1039 = scalar_lea.vmem %s4, %s1038
        $region89: #{gat_encoder_pallas.7} parent=80 // pred_fallthru
          _
      $region81: #{gat_encoder_pallas.7} parent=5 // pred_fallthru
        _
    $region6: #{gat_encoder_pallas.7} parent=1 // loop_footer
      %s15 = sadd.s32 1, %s11
    $region7: #{gat_encoder_pallas.7} parent=1 // loop_footer_branch
      %10 = sbr.rel target = $region3
    $region8: #{gat_encoder_pallas.7} parent=1 // loop_exit
      _

// kernel: gat_encoder_pallas.9
$region0: #{gat_encoder_pallas.9}
  #allocation0 [shape = 'u32[]', space=smem, size = 0x4, offset = 0x4, fixed_abs, tag = 'smem constant byte address 0x4 - core index']
  #allocation1 [shape = 'u32[72,128]{1,0:T(1,128)}', space=vmem, size = 0x9000, scoped, tag = 'internal scratch']
  %s0 = inlined_call_operand.vmem [shape: bf16[256,32], index: 0, kind: input, shape index: {}]
  %s1 = inlined_call_operand.vmem [shape: bf16[4,32,32], index: 1, kind: input, shape index: {}]
  %s2 = inlined_call_operand.vmem [shape: bf16[32,8], index: 2, kind: input, shape index: {}]
  %s3 = inlined_call_operand.vmem [shape: bf16[4,256,32], index: 3, kind: output, shape index: {0}]
  %s4 = inlined_call_operand.vmem [shape: f32[256,8], index: 4, kind: output, shape index: {1}]
  %5 = xla_tuple %s3, %s4
  %s6 = sld [smem:[#allocation0]]
  $region90: #{gat_encoder_pallas.9} parent=0
    _
  %s8 = ssub.s32 1, %s6
  %s9 = scalar_select 0, %s8, %s6
  $region1: #{gat_encoder_pallas.9} parent=0
    #allocation2 [shape = 'u8[262144]{0}', space=vmem, size = 0x40000, scoped, tag = 'output window, operand 0']
    loop: start=0, step=1, limit=4
    $region2: #{gat_encoder_pallas.9} parent=1 // loop_pre_header
      _
    $region3: #{gat_encoder_pallas.9} parent=1 // loop_header
      %s11 = sphi 0, %s15
      %p12 = scmp.ge.s32.totalorder %s11, 4
      %s21 = sphi 0, %s23
      %s24 = sphi 0, %s21
      %s25 = sphi 0, %s24
      %s41 = sphi 0, %s25
      %s45 = sphi 0, %s45
      %s47 = sphi 0, %s45
      %s48 = sphi 0, %s47
      %s62 = sphi 0, %s48
      %s66 = sphi 0, %s66
      %s68 = sphi 0, %s66
      %s69 = sphi 0, %s68
      %s83 = sphi 0, %s69
      %s89 = sphi 0, %s91
      %s92 = sphi 0, %s89
      %s93 = sphi 0, %s92
      %s109 = sphi 0, %s93
      %s115 = sphi 0, %s117
      %s118 = sphi 0, %s115
      %s119 = sphi 0, %s118
      %s135 = sphi 0, %s119
    $region4: #{gat_encoder_pallas.9} parent=1 // loop_header_branch
      %14 = sbr.rel (%p12) target = $region8
    $region5: #{gat_encoder_pallas.9} parent=1 // loop_body
      %s16 = ssub.s32 %s11, 1
      %s17 = ssub.s32 %s11, 2
      %s18 = sadd.s32 %s11, 1
      %s19 = ssub.s32 %s11, %s18
      %p20 = scmp.eq.s32.totalorder %s19, 0
      %s22 = sadd.s32 %s21, 1
      %s23 = scalar_select %p20, %s21, %s22
      %p26 = pneg %p20
      %p27 = scmp.eq.s32.totalorder %s11, 1
      %p28 = por %p26, %p27
      %p29 = scmp.ne.s32.totalorder %s21, %s24
      %p30 = scmp.eq.s32.totalorder %s11, 0
      %p31 = por %p29, %p30
      %p32 = scmp.ne.s32.totalorder %s21, %s24
      %p33 = scmp.eq.s32.totalorder %s16, 1
      %p34 = por %p32, %p33
      %p35 = scmp.ne.s32.totalorder %s24, %s25
      %p36 = scmp.eq.s32.totalorder %s16, 0
      %p37 = por %p35, %p36
      %p38 = scmp.ne.s32.totalorder %s24, %s25
      %p39 = scmp.eq.s32.totalorder %s17, 1
      %p40 = por %p38, %p39
      %p42 = scmp.ne.s32.totalorder %s25, %s41
      %p43 = scmp.eq.s32.totalorder %s17, 0
      %p44 = por %p42, %p43
      %s46 = sadd.s32 %s45, 1
      %p49 = scmp.eq.s32.totalorder %s11, 1
      %p50 = scmp.ne.s32.totalorder %s45, %s47
      %p51 = scmp.eq.s32.totalorder %s11, 0
      %p52 = por %p50, %p51
      %p53 = scmp.ne.s32.totalorder %s45, %s47
      %p54 = scmp.eq.s32.totalorder %s16, 1
      %p55 = por %p53, %p54
      %p56 = scmp.ne.s32.totalorder %s47, %s48
      %p57 = scmp.eq.s32.totalorder %s16, 0
      %p58 = por %p56, %p57
      %p59 = scmp.ne.s32.totalorder %s47, %s48
      %p60 = scmp.eq.s32.totalorder %s17, 1
      %p61 = por %p59, %p60
      %p63 = scmp.ne.s32.totalorder %s48, %s62
      %p64 = scmp.eq.s32.totalorder %s17, 0
      %p65 = por %p63, %p64
      %s67 = sadd.s32 %s66, 1
      %p70 = scmp.eq.s32.totalorder %s11, 1
      %p71 = scmp.ne.s32.totalorder %s66, %s68
      %p72 = scmp.eq.s32.totalorder %s11, 0
      %p73 = por %p71, %p72
      %p74 = scmp.ne.s32.totalorder %s66, %s68
      %p75 = scmp.eq.s32.totalorder %s16, 1
      %p76 = por %p74, %p75
      %p77 = scmp.ne.s32.totalorder %s68, %s69
      %p78 = scmp.eq.s32.totalorder %s16, 0
      %p79 = por %p77, %p78
      %p80 = scmp.ne.s32.totalorder %s68, %s69
      %p81 = scmp.eq.s32.totalorder %s17, 1
      %p82 = por %p80, %p81
      %p84 = scmp.ne.s32.totalorder %s69, %s83
      %p85 = scmp.eq.s32.totalorder %s17, 0
      %p86 = por %p84, %p85
      %s87 = ssub.s32 %s11, %s18
      %p88 = scmp.eq.s32.totalorder %s87, 0
      %s90 = sadd.s32 %s89, 1
      %s91 = scalar_select %p88, %s89, %s90
      %p94 = pneg %p88
      %p95 = scmp.eq.s32.totalorder %s11, 1
      %p96 = por %p94, %p95
      %p97 = scmp.ne.s32.totalorder %s89, %s92
      %p98 = scmp.eq.s32.totalorder %s11, 0
      %p99 = por %p97, %p98
      %p100 = scmp.ne.s32.totalorder %s89, %s92
      %p101 = scmp.eq.s32.totalorder %s16, 1
      %p102 = por %p100, %p101
      %p103 = scmp.ne.s32.totalorder %s92, %s93
      %p104 = scmp.eq.s32.totalorder %s16, 0
      %p105 = por %p103, %p104
      %p106 = scmp.ne.s32.totalorder %s92, %s93
      %p107 = scmp.eq.s32.totalorder %s17, 1
      %p108 = por %p106, %p107
      %p110 = scmp.ne.s32.totalorder %s93, %s109
      %p111 = scmp.eq.s32.totalorder %s17, 0
      %p112 = por %p110, %p111
      %s113 = ssub.s32 %s11, %s18
      %p114 = scmp.eq.s32.totalorder %s113, 0
      %s116 = sadd.s32 %s115, 1
      %s117 = scalar_select %p114, %s115, %s116
      %p120 = pneg %p114
      %p121 = scmp.eq.s32.totalorder %s11, 1
      %p122 = por %p120, %p121
      %p123 = scmp.ne.s32.totalorder %s115, %s118
      %p124 = scmp.eq.s32.totalorder %s11, 0
      %p125 = por %p123, %p124
      %p126 = scmp.ne.s32.totalorder %s115, %s118
      %p127 = scmp.eq.s32.totalorder %s16, 1
      %p128 = por %p126, %p127
      %p129 = scmp.ne.s32.totalorder %s118, %s119
      %p130 = scmp.eq.s32.totalorder %s16, 0
      %p131 = por %p129, %p130
      %p132 = scmp.ne.s32.totalorder %s118, %s119
      %p133 = scmp.eq.s32.totalorder %s17, 1
      %p134 = por %p132, %p133
      %p136 = scmp.ne.s32.totalorder %s119, %s135
      %p137 = scmp.eq.s32.totalorder %s17, 0
      %p138 = por %p136, %p137
      %p139 = scmp.le.s32.totalorder 1, %s11
      %p140 = scmp.lt.s32.totalorder %s11, 3
      %p141 = pnand %p139, %p140
      %p142 = pneg %p141
      // Predicated region
      $region9: #{gat_encoder_pallas.9} parent=5 // pred_check
        _
      $region10: #{gat_encoder_pallas.9} parent=5 // pred_check_branch
        %144 = sbr.rel (%p141) target = $region12
      $region11: #{gat_encoder_pallas.9} parent=5 // pred_region
        %s145 = ssub.s32 %s11, 1
        // Predicated region
        $region13: #{gat_encoder_pallas.9} parent=11 // pred_check
          %p146 = pneg %p58
        $region14: #{gat_encoder_pallas.9} parent=11 // pred_check_branch
          %148 = sbr.rel (%p146) target = $region16
        $region15: #{gat_encoder_pallas.9} parent=11 // pred_region
          _
        $region16: #{gat_encoder_pallas.9} parent=11 // pred_fallthru
          _
        // Predicated region
        $region17: #{gat_encoder_pallas.9} parent=11 // pred_check
          %p149 = pneg %p79
        $region18: #{gat_encoder_pallas.9} parent=11 // pred_check_branch
          %151 = sbr.rel (%p149) target = $region20
        $region19: #{gat_encoder_pallas.9} parent=11 // pred_region
          _
        $region20: #{gat_encoder_pallas.9} parent=11 // pred_fallthru
          _
      $region12: #{gat_encoder_pallas.9} parent=5 // pred_fallthru
        _
      %p152 = scmp.lt.s32.totalorder %s11, 2
      // Predicated region
      $region21: #{gat_encoder_pallas.9} parent=5 // pred_check
        %p153 = pneg %p152
      $region22: #{gat_encoder_pallas.9} parent=5 // pred_check_branch
        %155 = sbr.rel (%p153) target = $region24
      $region23: #{gat_encoder_pallas.9} parent=5 // pred_region
        // Predicated region
        $region25: #{gat_encoder_pallas.9} parent=23 // pred_check
          %p156 = pneg %p31
        $region26: #{gat_encoder_pallas.9} parent=23 // pred_check_branch
          %158 = sbr.rel (%p156) target = $region28
        $region27: #{gat_encoder_pallas.9} parent=23 // pred_region
          %s159 = smul.u32 16, %s11
          %p160 = scmp.lt.s32.totalorder %s159, 31
          %s161 = scalar_select %p160, %s159, 31
          %s162 = smul.addr %s161, 4
          %s163 = scalar_lea.vmem %s0, %s162
          %s164 = smul.u32 16, %s11
        $region28: #{gat_encoder_pallas.9} parent=23 // pred_fallthru
          _
      $region24: #{gat_encoder_pallas.9} parent=5 // pred_fallthru
        _
      %p165 = scmp.le.s32.totalorder 1, %s11
      %p166 = scmp.lt.s32.totalorder %s11, 3
      %p167 = pnand %p165, %p166
      %p168 = pneg %p167
      // Predicated region
      $region29: #{gat_encoder_pallas.9} parent=5 // pred_check
        _
      $region30: #{gat_encoder_pallas.9} parent=5 // pred_check_branch
        %170 = sbr.rel (%p167) target = $region32
      $region31: #{gat_encoder_pallas.9} parent=5 // pred_region
        %s171 = ssub.s32 %s11, 1
        %s172 = smul.u32 16, %s16
        %p173 = scmp.lt.s32.totalorder %s172, 31
        %s174 = scalar_select %p173, %s172, 31
        %s175 = smul.addr %s174, 4
        %s176 = scalar_lea.vmem %s0, %s175
        %p177 = pneg %p37
        %p178 = pneg %p34
        %p179 = pneg %p58
        %p180 = pneg %p55
        %p181 = pneg %p79
        %p182 = pneg %p76
        %p183 = pneg %p105
        %p184 = pneg %p102
        %s185 = sand.u32 %s92, 1
        %s186 = sand.u32 %s92, 1
        %s187 = smul.addr %s186, 256
        %s188 = scalar_lea.vmem [#allocation2], %s187
        %p189 = pneg %p131
        %p190 = pneg %p128
        %s191 = smul.u32 16, %s16
        %p192 = scmp.lt.s32.totalorder %s191, 31
        %s193 = scalar_select %p192, %s191, 31
        %s194 = smul.addr %s193, 8
        %s195 = scalar_lea.vmem %s4, %s194
        %s196 = smul.u32 16, %s16
        %p197 = scmp.lt.s32.totalorder %s196, 31
        %s198 = scalar_select %p197, %s196, 31
        %s199 = smul.addr %s198, 4
        %s200 = scalar_lea.vmem %s0, %s199
        %s201 = smul.u32 16, %s16
        %s202 = smul.u32 16, %s16
        %s203 = smul.u32 16, %s16
        %p204 = scmp.lt.s32.totalorder %s203, 31
        %s205 = scalar_select %p204, %s203, 31
        %s206 = smul.addr %s205, 8
        %s207 = scalar_lea.vmem %s4, %s206
        %s208 = smul.u32 16, %s16
        %v210 = vld [vmem:[%s200] sm:$0xf]
        %v211 = vld [vmem:[%s200 + $0x4] sm:$0xf]
        %v212 = vld [vmem:[%s200 + $0x8] sm:$0xf]
        %v213 = vld [vmem:[%s200 + $0xc] sm:$0xf]
        %v214 = vld [vmem:[%s200 + $0x10] sm:$0xf]
        %v215 = vld [vmem:[%s200 + $0x14] sm:$0xf]
        %v216 = vld [vmem:[%s200 + $0x18] sm:$0xf]
        %v217 = vld [vmem:[%s200 + $0x1c] sm:$0xf]
        %v218 = vld [vmem:[%s200 + $0x20] sm:$0xf]
        %v219 = vld [vmem:[%s200 + $0x24] sm:$0xf]
        %v220 = vld [vmem:[%s200 + $0x28] sm:$0xf]
        %v221 = vld [vmem:[%s200 + $0x2c] sm:$0xf]
        %v222 = vld [vmem:[%s200 + $0x30] sm:$0xf]
        %v223 = vld [vmem:[%s200 + $0x34] sm:$0xf]
        %v224 = vld [vmem:[%s200 + $0x38] sm:$0xf]
        %v225 = vld [vmem:[%s200 + $0x3c] sm:$0xf]
        %v226 = vld [vmem:[%s2] sm:$0xf]
        %v227 = vld [vmem:[%s2 + $0x4] sm:$0xf]
        %v228 = vld [vmem:[%s2 + $0x8] sm:$0xf]
        %v229 = vld [vmem:[%s2 + $0xc] sm:$0xf]
        %v246 = vunpack.c.l.b16 %v210
        %v247 = vunpack.c.l.b16 %v211
        %v248 = vunpack.c.l.b16 %v212
        %v249 = vunpack.c.l.b16 %v213
        %v250 = vunpack.c.l.b16 %v214
        %v251 = vunpack.c.l.b16 %v215
        %v252 = vunpack.c.l.b16 %v216
        %v253 = vunpack.c.l.b16 %v217
        %v254 = vunpack.c.l.b16 %v218
        %v255 = vunpack.c.l.b16 %v219
        %v256 = vunpack.c.l.b16 %v220
        %v257 = vunpack.c.l.b16 %v221
        %v258 = vunpack.c.l.b16 %v222
        %v259 = vunpack.c.l.b16 %v223
        %v260 = vunpack.c.l.b16 %v224
        %v261 = vunpack.c.l.b16 %v225
        %v262 = vpack.c.b16 %v247, %v246
        %v263 = vpack.c.b16 %v249, %v248
        %v264 = vpack.c.b16 %v251, %v250
        %v265 = vpack.c.b16 %v253, %v252
        %v266 = vpack.c.b16 %v255, %v254
        %v267 = vpack.c.b16 %v257, %v256
        %v268 = vpack.c.b16 %v259, %v258
        %v269 = vpack.c.b16 %v261, %v260
        %v274 = vunpack.c.l.b16 %v226
        %v275 = vunpack.c.l.b16 %v227
        %v276 = vunpack.c.l.b16 %v228
        %v277 = vunpack.c.l.b16 %v229
        %v278 = vpack.c.b16 %v275, %v274
        %v279 = vpack.c.b16 %v277, %v276
        %vm282 = vcmask 261120
        %v284 = vsel %vm282, %v262, 0
        %v287 = vsel %vm282, %v263, 0
        %v290 = vsel %vm282, %v264, 0
        %v293 = vsel %vm282, %v265, 0
        %v296 = vsel %vm282, %v266, 0
        %v299 = vsel %vm282, %v267, 0
        %v302 = vsel %vm282, %v268, 0
        %v305 = vsel %vm282, %v269, 0
        %307 = vmatpush.bf16.msra.mxu0 0
        %308 = vmatpush.bf16.msra.mxu0 0
        %309 = vmatpush.bf16.msra.mxu0 0
        %310 = vmatpush.bf16.msra.mxu0 0
        %311 = vmatpush.bf16.msra.mxu0 0
        %312 = vmatpush.bf16.msra.mxu0 0
        %313 = vmatpush.bf16.msra.mxu0 %v279
        %314 = vmatpush.bf16.msra.mxu0 %v278
        %315 = vmatmul.bf16.gmra.mxu0 %v284
        %v316 = vpop.f32.mrf.mxu0
        %v317 = vadd.f32 0.0, %v316
        %v318 = vpop.f32.mrf.mxu0
        %v319 = vadd.f32 0.0, %v318
        %320 = vmatmul.bf16.gmra.mxu0 %v287
        %v321 = vpop.f32.mrf.mxu0
        %v322 = vadd.f32 0.0, %v321
        %v323 = vpop.f32.mrf.mxu0
        %v324 = vadd.f32 0.0, %v323
        %325 = vmatmul.bf16.gmra.mxu0 %v290
        %v326 = vpop.f32.mrf.mxu0
        %v327 = vadd.f32 0.0, %v326
        %v328 = vpop.f32.mrf.mxu0
        %v329 = vadd.f32 0.0, %v328
        %330 = vmatmul.bf16.gmra.mxu0 %v293
        %v331 = vpop.f32.mrf.mxu0
        %v332 = vadd.f32 0.0, %v331
        %v333 = vpop.f32.mrf.mxu0
        %v334 = vadd.f32 0.0, %v333
        %335 = vmatmul.bf16.gmra.mxu0 %v296
        %v336 = vpop.f32.mrf.mxu0
        %v337 = vadd.f32 0.0, %v336
        %v338 = vpop.f32.mrf.mxu0
        %v339 = vadd.f32 0.0, %v338
        %340 = vmatmul.bf16.gmra.mxu0 %v299
        %v341 = vpop.f32.mrf.mxu0
        %v342 = vadd.f32 0.0, %v341
        %v343 = vpop.f32.mrf.mxu0
        %v344 = vadd.f32 0.0, %v343
        %345 = vmatmul.bf16.gmra.mxu0 %v302
        %v346 = vpop.f32.mrf.mxu0
        %v347 = vadd.f32 0.0, %v346
        %v348 = vpop.f32.mrf.mxu0
        %v349 = vadd.f32 0.0, %v348
        %350 = vmatmul.bf16.gmra.mxu0 %v305
        %v351 = vpop.f32.mrf.mxu0
        %v352 = vadd.f32 0.0, %v351
        %v353 = vpop.f32.mrf.mxu0
        %v354 = vadd.f32 0.0, %v353
        %355 = vdwg.mxu0
        %vm356 = vcmask 64512
        %357 = vst.msk [vmem:[%s207] sm:$0xff] %vm356, %v317
        %358 = vst.msk [vmem:[%s207 + $0x8] sm:$0xff] %vm356, %v319
        %359 = vst.msk [vmem:[%s207 + $0x10] sm:$0xff] %vm356, %v322
        %360 = vst.msk [vmem:[%s207 + $0x18] sm:$0xff] %vm356, %v324
        %361 = vst.msk [vmem:[%s207 + $0x20] sm:$0xff] %vm356, %v327
        %362 = vst.msk [vmem:[%s207 + $0x28] sm:$0xff] %vm356, %v329
        %363 = vst.msk [vmem:[%s207 + $0x30] sm:$0xff] %vm356, %v332
        %364 = vst.msk [vmem:[%s207 + $0x38] sm:$0xff] %vm356, %v334
        %365 = vst.msk [vmem:[%s207 + $0x40] sm:$0xff] %vm356, %v337
        %366 = vst.msk [vmem:[%s207 + $0x48] sm:$0xff] %vm356, %v339
        %367 = vst.msk [vmem:[%s207 + $0x50] sm:$0xff] %vm356, %v342
        %368 = vst.msk [vmem:[%s207 + $0x58] sm:$0xff] %vm356, %v344
        %369 = vst.msk [vmem:[%s207 + $0x60] sm:$0xff] %vm356, %v347
        %370 = vst.msk [vmem:[%s207 + $0x68] sm:$0xff] %vm356, %v349
        %371 = vst.msk [vmem:[%s207 + $0x70] sm:$0xff] %vm356, %v352
        %372 = vst.msk [vmem:[%s207 + $0x78] sm:$0xff] %vm356, %v354
        %v373 = vld [vmem:[%s1] sm:$0xf]
        %v374 = vld [vmem:[%s1 + $0x4] sm:$0xf]
        %v375 = vld [vmem:[%s1 + $0x8] sm:$0xf]
        %v376 = vld [vmem:[%s1 + $0xc] sm:$0xf]
        %v381 = vunpack.c.l.b16 %v373
        %v382 = vunpack.c.l.b16 %v374
        %v383 = vunpack.c.l.b16 %v375
        %v384 = vunpack.c.l.b16 %v376
        %v385 = vpack.c.b16 %v382, %v381
        %v386 = vpack.c.b16 %v384, %v383
        %389 = vmatpush.bf16.msra.mxu0 0
        %390 = vmatpush.bf16.msra.mxu0 0
        %391 = vmatpush.bf16.msra.mxu0 0
        %392 = vmatpush.bf16.msra.mxu0 0
        %393 = vmatpush.bf16.msra.mxu0 0
        %394 = vmatpush.bf16.msra.mxu0 0
        %395 = vmatpush.bf16.msra.mxu0 %v386
        %396 = vmatpush.bf16.msra.mxu0 %v385
        %397 = vmatmul.bf16.gmra.mxu0 %v284
        %v398 = vpop.f32.mrf.mxu0
        %v399 = vadd.f32 0.0, %v398
        %v400 = vpop.f32.mrf.mxu0
        %v401 = vadd.f32 0.0, %v400
        %402 = vmatmul.bf16.gmra.mxu0 %v287
        %v403 = vpop.f32.mrf.mxu0
        %v404 = vadd.f32 0.0, %v403
        %v405 = vpop.f32.mrf.mxu0
        %v406 = vadd.f32 0.0, %v405
        %407 = vmatmul.bf16.gmra.mxu0 %v290
        %v408 = vpop.f32.mrf.mxu0
        %v409 = vadd.f32 0.0, %v408
        %v410 = vpop.f32.mrf.mxu0
        %v411 = vadd.f32 0.0, %v410
        %412 = vmatmul.bf16.gmra.mxu0 %v293
        %v413 = vpop.f32.mrf.mxu0
        %v414 = vadd.f32 0.0, %v413
        %v415 = vpop.f32.mrf.mxu0
        %v416 = vadd.f32 0.0, %v415
        %417 = vmatmul.bf16.gmra.mxu0 %v296
        %v418 = vpop.f32.mrf.mxu0
        %v419 = vadd.f32 0.0, %v418
        %v420 = vpop.f32.mrf.mxu0
        %v421 = vadd.f32 0.0, %v420
        %422 = vmatmul.bf16.gmra.mxu0 %v299
        %v423 = vpop.f32.mrf.mxu0
        %v424 = vadd.f32 0.0, %v423
        %v425 = vpop.f32.mrf.mxu0
        %v426 = vadd.f32 0.0, %v425
        %427 = vmatmul.bf16.gmra.mxu0 %v302
        %v428 = vpop.f32.mrf.mxu0
        %v429 = vadd.f32 0.0, %v428
        %v430 = vpop.f32.mrf.mxu0
        %v431 = vadd.f32 0.0, %v430
        %432 = vmatmul.bf16.gmra.mxu0 %v305
        %v433 = vpop.f32.mrf.mxu0
        %v434 = vadd.f32 0.0, %v433
        %v435 = vpop.f32.mrf.mxu0
        %v436 = vadd.f32 0.0, %v435
        %437 = vdwg.mxu0
        %v438 = vpack.c.bf16 %v399, %v399
        %v439 = vpack.c.bf16 %v401, %v401
        %v440 = vpack.c.bf16 %v404, %v404
        %v441 = vpack.c.bf16 %v406, %v406
        %v442 = vpack.c.bf16 %v409, %v409
        %v443 = vpack.c.bf16 %v411, %v411
        %v444 = vpack.c.bf16 %v414, %v414
        %v445 = vpack.c.bf16 %v416, %v416
        %v446 = vpack.c.bf16 %v419, %v419
        %v447 = vpack.c.bf16 %v421, %v421
        %v448 = vpack.c.bf16 %v424, %v424
        %v449 = vpack.c.bf16 %v426, %v426
        %v450 = vpack.c.bf16 %v429, %v429
        %v451 = vpack.c.bf16 %v431, %v431
        %v452 = vpack.c.bf16 %v434, %v434
        %v453 = vpack.c.bf16 %v436, %v436
        %vm454 = vcmask 257024
        %455 = vst.msk [vmem:[%s188] sm:$0xf] %vm454, %v438
        %456 = vst.msk [vmem:[%s188 + $0x4] sm:$0xf] %vm454, %v439
        %457 = vst.msk [vmem:[%s188 + $0x8] sm:$0xf] %vm454, %v440
        %458 = vst.msk [vmem:[%s188 + $0xc] sm:$0xf] %vm454, %v441
        %459 = vst.msk [vmem:[%s188 + $0x10] sm:$0xf] %vm454, %v442
        %460 = vst.msk [vmem:[%s188 + $0x14] sm:$0xf] %vm454, %v443
        %461 = vst.msk [vmem:[%s188 + $0x18] sm:$0xf] %vm454, %v444
        %462 = vst.msk [vmem:[%s188 + $0x1c] sm:$0xf] %vm454, %v445
        %463 = vst.msk [vmem:[%s188 + $0x20] sm:$0xf] %vm454, %v446
        %464 = vst.msk [vmem:[%s188 + $0x24] sm:$0xf] %vm454, %v447
        %465 = vst.msk [vmem:[%s188 + $0x28] sm:$0xf] %vm454, %v448
        %466 = vst.msk [vmem:[%s188 + $0x2c] sm:$0xf] %vm454, %v449
        %467 = vst.msk [vmem:[%s188 + $0x30] sm:$0xf] %vm454, %v450
        %468 = vst.msk [vmem:[%s188 + $0x34] sm:$0xf] %vm454, %v451
        %469 = vst.msk [vmem:[%s188 + $0x38] sm:$0xf] %vm454, %v452
        %470 = vst.msk [vmem:[%s188 + $0x3c] sm:$0xf] %vm454, %v453
        %s471 = scalar_lea.vmem %s1, 16
        %v472 = vld [vmem:[%s471] sm:$0xf]
        %v473 = vld [vmem:[%s471 + $0x4] sm:$0xf]
        %v474 = vld [vmem:[%s471 + $0x8] sm:$0xf]
        %v475 = vld [vmem:[%s471 + $0xc] sm:$0xf]
        %v480 = vunpack.c.l.b16 %v472
        %v481 = vunpack.c.l.b16 %v473
        %v482 = vunpack.c.l.b16 %v474
        %v483 = vunpack.c.l.b16 %v475
        %v484 = vpack.c.b16 %v481, %v480
        %v485 = vpack.c.b16 %v483, %v482
        %488 = vmatpush.bf16.msra.mxu0 0
        %489 = vmatpush.bf16.msra.mxu0 0
        %490 = vmatpush.bf16.msra.mxu0 0
        %491 = vmatpush.bf16.msra.mxu0 0
        %492 = vmatpush.bf16.msra.mxu0 0
        %493 = vmatpush.bf16.msra.mxu0 0
        %494 = vmatpush.bf16.msra.mxu0 %v485
        %495 = vmatpush.bf16.msra.mxu0 %v484
        %496 = vmatmul.bf16.gmra.mxu0 %v284
        %v497 = vpop.f32.mrf.mxu0
        %v498 = vadd.f32 0.0, %v497
        %v499 = vpop.f32.mrf.mxu0
        %v500 = vadd.f32 0.0, %v499
        %501 = vmatmul.bf16.gmra.mxu0 %v287
        %v502 = vpop.f32.mrf.mxu0
        %v503 = vadd.f32 0.0, %v502
        %v504 = vpop.f32.mrf.mxu0
        %v505 = vadd.f32 0.0, %v504
        %506 = vmatmul.bf16.gmra.mxu0 %v290
        %v507 = vpop.f32.mrf.mxu0
        %v508 = vadd.f32 0.0, %v507
        %v509 = vpop.f32.mrf.mxu0
        %v510 = vadd.f32 0.0, %v509
        %511 = vmatmul.bf16.gmra.mxu0 %v293
        %v512 = vpop.f32.mrf.mxu0
        %v513 = vadd.f32 0.0, %v512
        %v514 = vpop.f32.mrf.mxu0
        %v515 = vadd.f32 0.0, %v514
        %516 = vmatmul.bf16.gmra.mxu0 %v296
        %v517 = vpop.f32.mrf.mxu0
        %v518 = vadd.f32 0.0, %v517
        %v519 = vpop.f32.mrf.mxu0
        %v520 = vadd.f32 0.0, %v519
        %521 = vmatmul.bf16.gmra.mxu0 %v299
        %v522 = vpop.f32.mrf.mxu0
        %v523 = vadd.f32 0.0, %v522
        %v524 = vpop.f32.mrf.mxu0
        %v525 = vadd.f32 0.0, %v524
        %526 = vmatmul.bf16.gmra.mxu0 %v302
        %v527 = vpop.f32.mrf.mxu0
        %v528 = vadd.f32 0.0, %v527
        %v529 = vpop.f32.mrf.mxu0
        %v530 = vadd.f32 0.0, %v529
        %531 = vmatmul.bf16.gmra.mxu0 %v305
        %v532 = vpop.f32.mrf.mxu0
        %v533 = vadd.f32 0.0, %v532
        %v534 = vpop.f32.mrf.mxu0
        %v535 = vadd.f32 0.0, %v534
        %536 = vdwg.mxu0
        %v537 = vpack.c.bf16 %v498, %v498
        %v538 = vpack.c.bf16 %v500, %v500
        %v539 = vpack.c.bf16 %v503, %v503
        %v540 = vpack.c.bf16 %v505, %v505
        %v541 = vpack.c.bf16 %v508, %v508
        %v542 = vpack.c.bf16 %v510, %v510
        %v543 = vpack.c.bf16 %v513, %v513
        %v544 = vpack.c.bf16 %v515, %v515
        %v545 = vpack.c.bf16 %v518, %v518
        %v546 = vpack.c.bf16 %v520, %v520
        %v547 = vpack.c.bf16 %v523, %v523
        %v548 = vpack.c.bf16 %v525, %v525
        %v549 = vpack.c.bf16 %v528, %v528
        %v550 = vpack.c.bf16 %v530, %v530
        %v551 = vpack.c.bf16 %v533, %v533
        %v552 = vpack.c.bf16 %v535, %v535
        %s553 = scalar_lea.vmem %s188, 64 [#allocation2]
        %554 = vst.msk [vmem:[%s553] sm:$0xf] %vm454, %v537
        %555 = vst.msk [vmem:[%s553 + $0x4] sm:$0xf] %vm454, %v538
        %556 = vst.msk [vmem:[%s553 + $0x8] sm:$0xf] %vm454, %v539
        %557 = vst.msk [vmem:[%s553 + $0xc] sm:$0xf] %vm454, %v540
        %558 = vst.msk [vmem:[%s553 + $0x10] sm:$0xf] %vm454, %v541
        %559 = vst.msk [vmem:[%s553 + $0x14] sm:$0xf] %vm454, %v542
        %560 = vst.msk [vmem:[%s553 + $0x18] sm:$0xf] %vm454, %v543
        %561 = vst.msk [vmem:[%s553 + $0x1c] sm:$0xf] %vm454, %v544
        %562 = vst.msk [vmem:[%s553 + $0x20] sm:$0xf] %vm454, %v545
        %563 = vst.msk [vmem:[%s553 + $0x24] sm:$0xf] %vm454, %v546
        %564 = vst.msk [vmem:[%s553 + $0x28] sm:$0xf] %vm454, %v547
        %565 = vst.msk [vmem:[%s553 + $0x2c] sm:$0xf] %vm454, %v548
        %566 = vst.msk [vmem:[%s553 + $0x30] sm:$0xf] %vm454, %v549
        %567 = vst.msk [vmem:[%s553 + $0x34] sm:$0xf] %vm454, %v550
        %568 = vst.msk [vmem:[%s553 + $0x38] sm:$0xf] %vm454, %v551
        %569 = vst.msk [vmem:[%s553 + $0x3c] sm:$0xf] %vm454, %v552
        %s570 = scalar_lea.vmem %s1, 32
        %v571 = vld [vmem:[%s570] sm:$0xf]
        %v572 = vld [vmem:[%s570 + $0x4] sm:$0xf]
        %v573 = vld [vmem:[%s570 + $0x8] sm:$0xf]
        %v574 = vld [vmem:[%s570 + $0xc] sm:$0xf]
        %v579 = vunpack.c.l.b16 %v571
        %v580 = vunpack.c.l.b16 %v572
        %v581 = vunpack.c.l.b16 %v573
        %v582 = vunpack.c.l.b16 %v574
        %v583 = vpack.c.b16 %v580, %v579
        %v584 = vpack.c.b16 %v582, %v581
        %587 = vmatpush.bf16.msra.mxu0 0
        %588 = vmatpush.bf16.msra.mxu0 0
        %589 = vmatpush.bf16.msra.mxu0 0
        %590 = vmatpush.bf16.msra.mxu0 0
        %591 = vmatpush.bf16.msra.mxu0 0
        %592 = vmatpush.bf16.msra.mxu0 0
        %593 = vmatpush.bf16.msra.mxu0 %v584
        %594 = vmatpush.bf16.msra.mxu0 %v583
        %595 = vmatmul.bf16.gmra.mxu0 %v284
        %v596 = vpop.f32.mrf.mxu0
        %v597 = vadd.f32 0.0, %v596
        %v598 = vpop.f32.mrf.mxu0
        %v599 = vadd.f32 0.0, %v598
        %600 = vmatmul.bf16.gmra.mxu0 %v287
        %v601 = vpop.f32.mrf.mxu0
        %v602 = vadd.f32 0.0, %v601
        %v603 = vpop.f32.mrf.mxu0
        %v604 = vadd.f32 0.0, %v603
        %605 = vmatmul.bf16.gmra.mxu0 %v290
        %v606 = vpop.f32.mrf.mxu0
        %v607 = vadd.f32 0.0, %v606
        %v608 = vpop.f32.mrf.mxu0
        %v609 = vadd.f32 0.0, %v608
        %610 = vmatmul.bf16.gmra.mxu0 %v293
        %v611 = vpop.f32.mrf.mxu0
        %v612 = vadd.f32 0.0, %v611
        %v613 = vpop.f32.mrf.mxu0
        %v614 = vadd.f32 0.0, %v613
        %615 = vmatmul.bf16.gmra.mxu0 %v296
        %v616 = vpop.f32.mrf.mxu0
        %v617 = vadd.f32 0.0, %v616
        %v618 = vpop.f32.mrf.mxu0
        %v619 = vadd.f32 0.0, %v618
        %620 = vmatmul.bf16.gmra.mxu0 %v299
        %v621 = vpop.f32.mrf.mxu0
        %v622 = vadd.f32 0.0, %v621
        %v623 = vpop.f32.mrf.mxu0
        %v624 = vadd.f32 0.0, %v623
        %625 = vmatmul.bf16.gmra.mxu0 %v302
        %v626 = vpop.f32.mrf.mxu0
        %v627 = vadd.f32 0.0, %v626
        %v628 = vpop.f32.mrf.mxu0
        %v629 = vadd.f32 0.0, %v628
        %630 = vmatmul.bf16.gmra.mxu0 %v305
        %v631 = vpop.f32.mrf.mxu0
        %v632 = vadd.f32 0.0, %v631
        %v633 = vpop.f32.mrf.mxu0
        %v634 = vadd.f32 0.0, %v633
        %635 = vdwg.mxu0
        %v636 = vpack.c.bf16 %v597, %v597
        %v637 = vpack.c.bf16 %v599, %v599
        %v638 = vpack.c.bf16 %v602, %v602
        %v639 = vpack.c.bf16 %v604, %v604
        %v640 = vpack.c.bf16 %v607, %v607
        %v641 = vpack.c.bf16 %v609, %v609
        %v642 = vpack.c.bf16 %v612, %v612
        %v643 = vpack.c.bf16 %v614, %v614
        %v644 = vpack.c.bf16 %v617, %v617
        %v645 = vpack.c.bf16 %v619, %v619
        %v646 = vpack.c.bf16 %v622, %v622
        %v647 = vpack.c.bf16 %v624, %v624
        %v648 = vpack.c.bf16 %v627, %v627
        %v649 = vpack.c.bf16 %v629, %v629
        %v650 = vpack.c.bf16 %v632, %v632
        %v651 = vpack.c.bf16 %v634, %v634
        %s652 = scalar_lea.vmem %s188, 128 [#allocation2]
        %653 = vst.msk [vmem:[%s652] sm:$0xf] %vm454, %v636
        %654 = vst.msk [vmem:[%s652 + $0x4] sm:$0xf] %vm454, %v637
        %655 = vst.msk [vmem:[%s652 + $0x8] sm:$0xf] %vm454, %v638
        %656 = vst.msk [vmem:[%s652 + $0xc] sm:$0xf] %vm454, %v639
        %657 = vst.msk [vmem:[%s652 + $0x10] sm:$0xf] %vm454, %v640
        %658 = vst.msk [vmem:[%s652 + $0x14] sm:$0xf] %vm454, %v641
        %659 = vst.msk [vmem:[%s652 + $0x18] sm:$0xf] %vm454, %v642
        %660 = vst.msk [vmem:[%s652 + $0x1c] sm:$0xf] %vm454, %v643
        %661 = vst.msk [vmem:[%s652 + $0x20] sm:$0xf] %vm454, %v644
        %662 = vst.msk [vmem:[%s652 + $0x24] sm:$0xf] %vm454, %v645
        %663 = vst.msk [vmem:[%s652 + $0x28] sm:$0xf] %vm454, %v646
        %664 = vst.msk [vmem:[%s652 + $0x2c] sm:$0xf] %vm454, %v647
        %665 = vst.msk [vmem:[%s652 + $0x30] sm:$0xf] %vm454, %v648
        %666 = vst.msk [vmem:[%s652 + $0x34] sm:$0xf] %vm454, %v649
        %667 = vst.msk [vmem:[%s652 + $0x38] sm:$0xf] %vm454, %v650
        %668 = vst.msk [vmem:[%s652 + $0x3c] sm:$0xf] %vm454, %v651
        %s669 = scalar_lea.vmem %s1, 48
        %v670 = vld [vmem:[%s669] sm:$0xf]
        %v671 = vld [vmem:[%s669 + $0x4] sm:$0xf]
        %v672 = vld [vmem:[%s669 + $0x8] sm:$0xf]
        %v673 = vld [vmem:[%s669 + $0xc] sm:$0xf]
        %v678 = vunpack.c.l.b16 %v670
        %v679 = vunpack.c.l.b16 %v671
        %v680 = vunpack.c.l.b16 %v672
        %v681 = vunpack.c.l.b16 %v673
        %v682 = vpack.c.b16 %v679, %v678
        %v683 = vpack.c.b16 %v681, %v680
        %686 = vmatpush.bf16.msra.mxu0 0
        %687 = vmatpush.bf16.msra.mxu0 0
        %688 = vmatpush.bf16.msra.mxu0 0
        %689 = vmatpush.bf16.msra.mxu0 0
        %690 = vmatpush.bf16.msra.mxu0 0
        %691 = vmatpush.bf16.msra.mxu0 0
        %692 = vmatpush.bf16.msra.mxu0 %v683
        %693 = vmatpush.bf16.msra.mxu0 %v682
        %694 = vmatmul.bf16.gmra.mxu0 %v284
        %v695 = vpop.f32.mrf.mxu0
        %v696 = vadd.f32 0.0, %v695
        %v697 = vpop.f32.mrf.mxu0
        %v698 = vadd.f32 0.0, %v697
        %699 = vmatmul.bf16.gmra.mxu0 %v287
        %v700 = vpop.f32.mrf.mxu0
        %v701 = vadd.f32 0.0, %v700
        %v702 = vpop.f32.mrf.mxu0
        %v703 = vadd.f32 0.0, %v702
        %704 = vmatmul.bf16.gmra.mxu0 %v290
        %v705 = vpop.f32.mrf.mxu0
        %v706 = vadd.f32 0.0, %v705
        %v707 = vpop.f32.mrf.mxu0
        %v708 = vadd.f32 0.0, %v707
        %709 = vmatmul.bf16.gmra.mxu0 %v293
        %v710 = vpop.f32.mrf.mxu0
        %v711 = vadd.f32 0.0, %v710
        %v712 = vpop.f32.mrf.mxu0
        %v713 = vadd.f32 0.0, %v712
        %714 = vmatmul.bf16.gmra.mxu0 %v296
        %v715 = vpop.f32.mrf.mxu0
        %v716 = vadd.f32 0.0, %v715
        %v717 = vpop.f32.mrf.mxu0
        %v718 = vadd.f32 0.0, %v717
        %719 = vmatmul.bf16.gmra.mxu0 %v299
        %v720 = vpop.f32.mrf.mxu0
        %v721 = vadd.f32 0.0, %v720
        %v722 = vpop.f32.mrf.mxu0
        %v723 = vadd.f32 0.0, %v722
        %724 = vmatmul.bf16.gmra.mxu0 %v302
        %v725 = vpop.f32.mrf.mxu0
        %v726 = vadd.f32 0.0, %v725
        %v727 = vpop.f32.mrf.mxu0
        %v728 = vadd.f32 0.0, %v727
        %729 = vmatmul.bf16.gmra.mxu0 %v305
        %v730 = vpop.f32.mrf.mxu0
        %v731 = vadd.f32 0.0, %v730
        %v732 = vpop.f32.mrf.mxu0
        %v733 = vadd.f32 0.0, %v732
        %734 = vdwg.mxu0
        %v735 = vpack.c.bf16 %v696, %v696
        %v736 = vpack.c.bf16 %v698, %v698
        %v737 = vpack.c.bf16 %v701, %v701
        %v738 = vpack.c.bf16 %v703, %v703
        %v739 = vpack.c.bf16 %v706, %v706
        %v740 = vpack.c.bf16 %v708, %v708
        %v741 = vpack.c.bf16 %v711, %v711
        %v742 = vpack.c.bf16 %v713, %v713
        %v743 = vpack.c.bf16 %v716, %v716
        %v744 = vpack.c.bf16 %v718, %v718
        %v745 = vpack.c.bf16 %v721, %v721
        %v746 = vpack.c.bf16 %v723, %v723
        %v747 = vpack.c.bf16 %v726, %v726
        %v748 = vpack.c.bf16 %v728, %v728
        %v749 = vpack.c.bf16 %v731, %v731
        %v750 = vpack.c.bf16 %v733, %v733
        %s751 = scalar_lea.vmem %s188, 192 [#allocation2]
        %752 = vst.msk [vmem:[%s751] sm:$0xf] %vm454, %v735
        %753 = vst.msk [vmem:[%s751 + $0x4] sm:$0xf] %vm454, %v736
        %754 = vst.msk [vmem:[%s751 + $0x8] sm:$0xf] %vm454, %v737
        %755 = vst.msk [vmem:[%s751 + $0xc] sm:$0xf] %vm454, %v738
        %756 = vst.msk [vmem:[%s751 + $0x10] sm:$0xf] %vm454, %v739
        %757 = vst.msk [vmem:[%s751 + $0x14] sm:$0xf] %vm454, %v740
        %758 = vst.msk [vmem:[%s751 + $0x18] sm:$0xf] %vm454, %v741
        %759 = vst.msk [vmem:[%s751 + $0x1c] sm:$0xf] %vm454, %v742
        %760 = vst.msk [vmem:[%s751 + $0x20] sm:$0xf] %vm454, %v743
        %761 = vst.msk [vmem:[%s751 + $0x24] sm:$0xf] %vm454, %v744
        %762 = vst.msk [vmem:[%s751 + $0x28] sm:$0xf] %vm454, %v745
        %763 = vst.msk [vmem:[%s751 + $0x2c] sm:$0xf] %vm454, %v746
        %764 = vst.msk [vmem:[%s751 + $0x30] sm:$0xf] %vm454, %v747
        %765 = vst.msk [vmem:[%s751 + $0x34] sm:$0xf] %vm454, %v748
        %766 = vst.msk [vmem:[%s751 + $0x38] sm:$0xf] %vm454, %v749
        %767 = vst.msk [vmem:[%s751 + $0x3c] sm:$0xf] %vm454, %v750
        %s768 = sand.u32 %s92, 1
        %s769 = sand.u32 %s92, 1
        %s770 = smul.addr %s769, 256
        %s771 = scalar_lea.vmem [#allocation2], %s770
        %s772 = smul.u32 16, %s16
        %p773 = scmp.lt.s32.totalorder %s772, 31
        %s774 = scalar_select %p773, %s772, 31
        %s775 = smul.addr %s774, 8
        %s776 = scalar_lea.vmem %s4, %s775
        // Predicated region
        $region33: #{gat_encoder_pallas.9} parent=31 // pred_check
          %p777 = pneg %p102
        $region34: #{gat_encoder_pallas.9} parent=31 // pred_check_branch
          %779 = sbr.rel (%p777) target = $region36
        $region35: #{gat_encoder_pallas.9} parent=31 // pred_region
          %s780 = smul.u32 16, %s16
          %s781 = smul.addr %s780, 4
          %s782 = scalar_lea.vmem %s3, %s781
          // Predicated region
          $region37: #{gat_encoder_pallas.9} parent=35 // pred_check
            _
          $region38: #{gat_encoder_pallas.9} parent=35 // pred_check_branch
            %784 = sbr.rel (0) target = $region40
          $region39: #{gat_encoder_pallas.9} parent=35 // pred_region
            // Predicated region
            $region41: #{gat_encoder_pallas.9} parent=39 // pred_check
              _
            $region42: #{gat_encoder_pallas.9} parent=39 // pred_check_branch
              %786 = sbr.rel target = $region44
            $region43: #{gat_encoder_pallas.9} parent=39 // pred_region
              // Predicated region
              $region56: #{gat_encoder_pallas.9} parent=43 // pred_check
                _
              $region57: #{gat_encoder_pallas.9} parent=43 // pred_check_branch
                %928 = sbr.rel (0) target = $region59
              $region58: #{gat_encoder_pallas.9} parent=43 // pred_region
                loop: start=0, step=1, limit=1
                $region60: #{gat_encoder_pallas.9} parent=58 // loop_pre_header
                  _
                $region61: #{gat_encoder_pallas.9} parent=58 // loop_header
                  %s930 = sphi 0, %s934
                  %p931 = scmp.ge.s32.totalorder %s930, 1
                  %s935 = sphi %s771, %s771
                  %s936 = sphi %s782, %s782
                $region62: #{gat_encoder_pallas.9} parent=58 // loop_header_branch
                  %933 = sbr.rel (%p931) target = $region66
                $region63: #{gat_encoder_pallas.9} parent=58 // loop_body
                  _
                $region64: #{gat_encoder_pallas.9} parent=58 // loop_footer
                  %s934 = sadd.s32 1, %s930
                $region65: #{gat_encoder_pallas.9} parent=58 // loop_footer_branch
                  %929 = sbr.rel target = $region61
                $region66: #{gat_encoder_pallas.9} parent=58 // loop_exit
                  _
                %s938 = ssub.s32 16, 1
                loop: start=0, step=1, limit=1
                $region67: #{gat_encoder_pallas.9} parent=58 // loop_pre_header
                  _
                $region68: #{gat_encoder_pallas.9} parent=58 // loop_header
                  %s940 = sphi 0, %s944
                  %p941 = scmp.ge.s32.totalorder %s940, 1
                  %s945 = sphi %s771, %s771
                  %s946 = sphi %s782, %s782
                $region69: #{gat_encoder_pallas.9} parent=58 // loop_header_branch
                  %943 = sbr.rel (%p941) target = $region73
                $region70: #{gat_encoder_pallas.9} parent=58 // loop_body
                  %v947 = vld [vmem:[%s945] sm:%s938]
                  %948 = vst [vmem:[%s946] sm:%s938] %v947
                  %v949 = vld [vmem:[%s945 + $0x4] sm:%s938]
                  %950 = vst [vmem:[%s946 + $0x4] sm:%s938] %v949
                  %v951 = vld [vmem:[%s945 + $0x8] sm:%s938]
                  %952 = vst [vmem:[%s946 + $0x8] sm:%s938] %v951
                  %v953 = vld [vmem:[%s945 + $0xc] sm:%s938]
                  %954 = vst [vmem:[%s946 + $0xc] sm:%s938] %v953
                  %v955 = vld [vmem:[%s945 + $0x10] sm:%s938]
                  %956 = vst [vmem:[%s946 + $0x10] sm:%s938] %v955
                  %v957 = vld [vmem:[%s945 + $0x14] sm:%s938]
                  %958 = vst [vmem:[%s946 + $0x14] sm:%s938] %v957
                  %v959 = vld [vmem:[%s945 + $0x18] sm:%s938]
                  %960 = vst [vmem:[%s946 + $0x18] sm:%s938] %v959
                  %v961 = vld [vmem:[%s945 + $0x1c] sm:%s938]
                  %962 = vst [vmem:[%s946 + $0x1c] sm:%s938] %v961
                  %v963 = vld [vmem:[%s945 + $0x20] sm:%s938]
                  %964 = vst [vmem:[%s946 + $0x20] sm:%s938] %v963
                  %v965 = vld [vmem:[%s945 + $0x24] sm:%s938]
                  %966 = vst [vmem:[%s946 + $0x24] sm:%s938] %v965
                  %v967 = vld [vmem:[%s945 + $0x28] sm:%s938]
                  %968 = vst [vmem:[%s946 + $0x28] sm:%s938] %v967
                  %v969 = vld [vmem:[%s945 + $0x2c] sm:%s938]
                  %970 = vst [vmem:[%s946 + $0x2c] sm:%s938] %v969
                  %v971 = vld [vmem:[%s945 + $0x30] sm:%s938]
                  %972 = vst [vmem:[%s946 + $0x30] sm:%s938] %v971
                  %v973 = vld [vmem:[%s945 + $0x34] sm:%s938]
                  %974 = vst [vmem:[%s946 + $0x34] sm:%s938] %v973
                  %v975 = vld [vmem:[%s945 + $0x38] sm:%s938]
                  %976 = vst [vmem:[%s946 + $0x38] sm:%s938] %v975
                  %v977 = vld [vmem:[%s945 + $0x3c] sm:%s938]
                  %978 = vst [vmem:[%s946 + $0x3c] sm:%s938] %v977
                  %v979 = vld [vmem:[%s945 + $0x40] sm:%s938]
                  %980 = vst [vmem:[%s946 + $0x80] sm:%s938] %v979
                  %v981 = vld [vmem:[%s945 + $0x44] sm:%s938]
                  %982 = vst [vmem:[%s946 + $0x84] sm:%s938] %v981
                  %v983 = vld [vmem:[%s945 + $0x48] sm:%s938]
                  %984 = vst [vmem:[%s946 + $0x88] sm:%s938] %v983
                  %v985 = vld [vmem:[%s945 + $0x4c] sm:%s938]
                  %986 = vst [vmem:[%s946 + $0x8c] sm:%s938] %v985
                  %v987 = vld [vmem:[%s945 + $0x50] sm:%s938]
                  %988 = vst [vmem:[%s946 + $0x90] sm:%s938] %v987
                  %v989 = vld [vmem:[%s945 + $0x54] sm:%s938]
                  %990 = vst [vmem:[%s946 + $0x94] sm:%s938] %v989
                  %v991 = vld [vmem:[%s945 + $0x58] sm:%s938]
                  %992 = vst [vmem:[%s946 + $0x98] sm:%s938] %v991
                  %v993 = vld [vmem:[%s945 + $0x5c] sm:%s938]
                  %994 = vst [vmem:[%s946 + $0x9c] sm:%s938] %v993
                  %v995 = vld [vmem:[%s945 + $0x60] sm:%s938]
                  %996 = vst [vmem:[%s946 + $0xa0] sm:%s938] %v995
                  %v997 = vld [vmem:[%s945 + $0x64] sm:%s938]
                  %998 = vst [vmem:[%s946 + $0xa4] sm:%s938] %v997
                  %v999 = vld [vmem:[%s945 + $0x68] sm:%s938]
                  %1000 = vst [vmem:[%s946 + $0xa8] sm:%s938] %v999
                  %v1001 = vld [vmem:[%s945 + $0x6c] sm:%s938]
                  %1002 = vst [vmem:[%s946 + $0xac] sm:%s938] %v1001
                  %v1003 = vld [vmem:[%s945 + $0x70] sm:%s938]
                  %1004 = vst [vmem:[%s946 + $0xb0] sm:%s938] %v1003
                  %v1005 = vld [vmem:[%s945 + $0x74] sm:%s938]
                  %1006 = vst [vmem:[%s946 + $0xb4] sm:%s938] %v1005
                  %v1007 = vld [vmem:[%s945 + $0x78] sm:%s938]
                  %1008 = vst [vmem:[%s946 + $0xb8] sm:%s938] %v1007
                  %v1009 = vld [vmem:[%s945 + $0x7c] sm:%s938]
                  %1010 = vst [vmem:[%s946 + $0xbc] sm:%s938] %v1009
                  %v1011 = vld [vmem:[%s945 + $0x80] sm:%s938]
                  %1012 = vst [vmem:[%s946 + $0x100] sm:%s938] %v1011
                  %v1013 = vld [vmem:[%s945 + $0x84] sm:%s938]
                  %1014 = vst [vmem:[%s946 + $0x104] sm:%s938] %v1013
                  %v1015 = vld [vmem:[%s945 + $0x88] sm:%s938]
                  %1016 = vst [vmem:[%s946 + $0x108] sm:%s938] %v1015
                  %v1017 = vld [vmem:[%s945 + $0x8c] sm:%s938]
                  %1018 = vst [vmem:[%s946 + $0x10c] sm:%s938] %v1017
                  %v1019 = vld [vmem:[%s945 + $0x90] sm:%s938]
                  %1020 = vst [vmem:[%s946 + $0x110] sm:%s938] %v1019
                  %v1021 = vld [vmem:[%s945 + $0x94] sm:%s938]
                  %1022 = vst [vmem:[%s946 + $0x114] sm:%s938] %v1021
                  %v1023 = vld [vmem:[%s945 + $0x98] sm:%s938]
                  %1024 = vst [vmem:[%s946 + $0x118] sm:%s938] %v1023
                  %v1025 = vld [vmem:[%s945 + $0x9c] sm:%s938]
                  %1026 = vst [vmem:[%s946 + $0x11c] sm:%s938] %v1025
                  %v1027 = vld [vmem:[%s945 + $0xa0] sm:%s938]
                  %1028 = vst [vmem:[%s946 + $0x120] sm:%s938] %v1027
                  %v1029 = vld [vmem:[%s945 + $0xa4] sm:%s938]
                  %1030 = vst [vmem:[%s946 + $0x124] sm:%s938] %v1029
                  %v1031 = vld [vmem:[%s945 + $0xa8] sm:%s938]
                  %1032 = vst [vmem:[%s946 + $0x128] sm:%s938] %v1031
                  %v1033 = vld [vmem:[%s945 + $0xac] sm:%s938]
                  %1034 = vst [vmem:[%s946 + $0x12c] sm:%s938] %v1033
                  %v1035 = vld [vmem:[%s945 + $0xb0] sm:%s938]
                  %1036 = vst [vmem:[%s946 + $0x130] sm:%s938] %v1035
                  %v1037 = vld [vmem:[%s945 + $0xb4] sm:%s938]
                  %1038 = vst [vmem:[%s946 + $0x134] sm:%s938] %v1037
                  %v1039 = vld [vmem:[%s945 + $0xb8] sm:%s938]
                  %1040 = vst [vmem:[%s946 + $0x138] sm:%s938] %v1039
                  %v1041 = vld [vmem:[%s945 + $0xbc] sm:%s938]
                  %1042 = vst [vmem:[%s946 + $0x13c] sm:%s938] %v1041
                  %v1043 = vld [vmem:[%s945 + $0xc0] sm:%s938]
                  %1044 = vst [vmem:[%s946 + $0x180] sm:%s938] %v1043
                  %v1045 = vld [vmem:[%s945 + $0xc4] sm:%s938]
                  %1046 = vst [vmem:[%s946 + $0x184] sm:%s938] %v1045
                  %v1047 = vld [vmem:[%s945 + $0xc8] sm:%s938]
                  %1048 = vst [vmem:[%s946 + $0x188] sm:%s938] %v1047
                  %v1049 = vld [vmem:[%s945 + $0xcc] sm:%s938]
                  %1050 = vst [vmem:[%s946 + $0x18c] sm:%s938] %v1049
                  %v1051 = vld [vmem:[%s945 + $0xd0] sm:%s938]
                  %1052 = vst [vmem:[%s946 + $0x190] sm:%s938] %v1051
                  %v1053 = vld [vmem:[%s945 + $0xd4] sm:%s938]
                  %1054 = vst [vmem:[%s946 + $0x194] sm:%s938] %v1053
                  %v1055 = vld [vmem:[%s945 + $0xd8] sm:%s938]
                  %1056 = vst [vmem:[%s946 + $0x198] sm:%s938] %v1055
                  %v1057 = vld [vmem:[%s945 + $0xdc] sm:%s938]
                  %1058 = vst [vmem:[%s946 + $0x19c] sm:%s938] %v1057
                  %v1059 = vld [vmem:[%s945 + $0xe0] sm:%s938]
                  %1060 = vst [vmem:[%s946 + $0x1a0] sm:%s938] %v1059
                  %v1061 = vld [vmem:[%s945 + $0xe4] sm:%s938]
                  %1062 = vst [vmem:[%s946 + $0x1a4] sm:%s938] %v1061
                  %v1063 = vld [vmem:[%s945 + $0xe8] sm:%s938]
                  %1064 = vst [vmem:[%s946 + $0x1a8] sm:%s938] %v1063
                  %v1065 = vld [vmem:[%s945 + $0xec] sm:%s938]
                  %1066 = vst [vmem:[%s946 + $0x1ac] sm:%s938] %v1065
                  %v1067 = vld [vmem:[%s945 + $0xf0] sm:%s938]
                  %1068 = vst [vmem:[%s946 + $0x1b0] sm:%s938] %v1067
                  %v1069 = vld [vmem:[%s945 + $0xf4] sm:%s938]
                  %1070 = vst [vmem:[%s946 + $0x1b4] sm:%s938] %v1069
                  %v1071 = vld [vmem:[%s945 + $0xf8] sm:%s938]
                  %1072 = vst [vmem:[%s946 + $0x1b8] sm:%s938] %v1071
                  %v1073 = vld [vmem:[%s945 + $0xfc] sm:%s938]
                  %1074 = vst [vmem:[%s946 + $0x1bc] sm:%s938] %v1073
                $region71: #{gat_encoder_pallas.9} parent=58 // loop_footer
                  %s944 = sadd.s32 1, %s940
                $region72: #{gat_encoder_pallas.9} parent=58 // loop_footer_branch
                  %939 = sbr.rel target = $region68
                $region73: #{gat_encoder_pallas.9} parent=58 // loop_exit
                  _
              $region59: #{gat_encoder_pallas.9} parent=43 // pred_fallthru
                _
            $region44: #{gat_encoder_pallas.9} parent=39 // pred_fallthru
              _
            // Predicated region
            $region45: #{gat_encoder_pallas.9} parent=39 // pred_check
              _
            $region46: #{gat_encoder_pallas.9} parent=39 // pred_check_branch
              %788 = sbr.rel (0) target = $region48
            $region47: #{gat_encoder_pallas.9} parent=39 // pred_region
              %s790 = ssub.s32 16, 1
              loop: start=0, step=1, limit=1
              $region49: #{gat_encoder_pallas.9} parent=47 // loop_pre_header
                _
              $region50: #{gat_encoder_pallas.9} parent=47 // loop_header
                %s792 = sphi 0, %s796
                %p793 = scmp.ge.s32.totalorder %s792, 1
                %s797 = sphi %s771, %s771
                %s798 = sphi %s782, %s782
              $region51: #{gat_encoder_pallas.9} parent=47 // loop_header_branch
                %795 = sbr.rel (%p793) target = $region55
              $region52: #{gat_encoder_pallas.9} parent=47 // loop_body
                %v799 = vld [vmem:[%s797] sm:%s790]
                %800 = vst [vmem:[%s798] sm:%s790] %v799
                %v801 = vld [vmem:[%s797 + $0x4] sm:%s790]
                %802 = vst [vmem:[%s798 + $0x4] sm:%s790] %v801
                %v803 = vld [vmem:[%s797 + $0x8] sm:%s790]
                %804 = vst [vmem:[%s798 + $0x8] sm:%s790] %v803
                %v805 = vld [vmem:[%s797 + $0xc] sm:%s790]
                %806 = vst [vmem:[%s798 + $0xc] sm:%s790] %v805
                %v807 = vld [vmem:[%s797 + $0x10] sm:%s790]
                %808 = vst [vmem:[%s798 + $0x10] sm:%s790] %v807
                %v809 = vld [vmem:[%s797 + $0x14] sm:%s790]
                %810 = vst [vmem:[%s798 + $0x14] sm:%s790] %v809
                %v811 = vld [vmem:[%s797 + $0x18] sm:%s790]
                %812 = vst [vmem:[%s798 + $0x18] sm:%s790] %v811
                %v813 = vld [vmem:[%s797 + $0x1c] sm:%s790]
                %814 = vst [vmem:[%s798 + $0x1c] sm:%s790] %v813
                %v815 = vld [vmem:[%s797 + $0x20] sm:%s790]
                %816 = vst [vmem:[%s798 + $0x20] sm:%s790] %v815
                %v817 = vld [vmem:[%s797 + $0x24] sm:%s790]
                %818 = vst [vmem:[%s798 + $0x24] sm:%s790] %v817
                %v819 = vld [vmem:[%s797 + $0x28] sm:%s790]
                %820 = vst [vmem:[%s798 + $0x28] sm:%s790] %v819
                %v821 = vld [vmem:[%s797 + $0x2c] sm:%s790]
                %822 = vst [vmem:[%s798 + $0x2c] sm:%s790] %v821
                %v823 = vld [vmem:[%s797 + $0x30] sm:%s790]
                %824 = vst [vmem:[%s798 + $0x30] sm:%s790] %v823
                %v825 = vld [vmem:[%s797 + $0x34] sm:%s790]
                %826 = vst [vmem:[%s798 + $0x34] sm:%s790] %v825
                %v827 = vld [vmem:[%s797 + $0x38] sm:%s790]
                %828 = vst [vmem:[%s798 + $0x38] sm:%s790] %v827
                %v829 = vld [vmem:[%s797 + $0x3c] sm:%s790]
                %830 = vst [vmem:[%s798 + $0x3c] sm:%s790] %v829
                %v831 = vld [vmem:[%s797 + $0x40] sm:%s790]
                %832 = vst [vmem:[%s798 + $0x80] sm:%s790] %v831
                %v833 = vld [vmem:[%s797 + $0x44] sm:%s790]
                %834 = vst [vmem:[%s798 + $0x84] sm:%s790] %v833
                %v835 = vld [vmem:[%s797 + $0x48] sm:%s790]
                %836 = vst [vmem:[%s798 + $0x88] sm:%s790] %v835
                %v837 = vld [vmem:[%s797 + $0x4c] sm:%s790]
                %838 = vst [vmem:[%s798 + $0x8c] sm:%s790] %v837
                %v839 = vld [vmem:[%s797 + $0x50] sm:%s790]
                %840 = vst [vmem:[%s798 + $0x90] sm:%s790] %v839
                %v841 = vld [vmem:[%s797 + $0x54] sm:%s790]
                %842 = vst [vmem:[%s798 + $0x94] sm:%s790] %v841
                %v843 = vld [vmem:[%s797 + $0x58] sm:%s790]
                %844 = vst [vmem:[%s798 + $0x98] sm:%s790] %v843
                %v845 = vld [vmem:[%s797 + $0x5c] sm:%s790]
                %846 = vst [vmem:[%s798 + $0x9c] sm:%s790] %v845
                %v847 = vld [vmem:[%s797 + $0x60] sm:%s790]
                %848 = vst [vmem:[%s798 + $0xa0] sm:%s790] %v847
                %v849 = vld [vmem:[%s797 + $0x64] sm:%s790]
                %850 = vst [vmem:[%s798 + $0xa4] sm:%s790] %v849
                %v851 = vld [vmem:[%s797 + $0x68] sm:%s790]
                %852 = vst [vmem:[%s798 + $0xa8] sm:%s790] %v851
                %v853 = vld [vmem:[%s797 + $0x6c] sm:%s790]
                %854 = vst [vmem:[%s798 + $0xac] sm:%s790] %v853
                %v855 = vld [vmem:[%s797 + $0x70] sm:%s790]
                %856 = vst [vmem:[%s798 + $0xb0] sm:%s790] %v855
                %v857 = vld [vmem:[%s797 + $0x74] sm:%s790]
                %858 = vst [vmem:[%s798 + $0xb4] sm:%s790] %v857
                %v859 = vld [vmem:[%s797 + $0x78] sm:%s790]
                %860 = vst [vmem:[%s798 + $0xb8] sm:%s790] %v859
                %v861 = vld [vmem:[%s797 + $0x7c] sm:%s790]
                %862 = vst [vmem:[%s798 + $0xbc] sm:%s790] %v861
                %v863 = vld [vmem:[%s797 + $0x80] sm:%s790]
                %864 = vst [vmem:[%s798 + $0x100] sm:%s790] %v863
                %v865 = vld [vmem:[%s797 + $0x84] sm:%s790]
                %866 = vst [vmem:[%s798 + $0x104] sm:%s790] %v865
                %v867 = vld [vmem:[%s797 + $0x88] sm:%s790]
                %868 = vst [vmem:[%s798 + $0x108] sm:%s790] %v867
                %v869 = vld [vmem:[%s797 + $0x8c] sm:%s790]
                %870 = vst [vmem:[%s798 + $0x10c] sm:%s790] %v869
                %v871 = vld [vmem:[%s797 + $0x90] sm:%s790]
                %872 = vst [vmem:[%s798 + $0x110] sm:%s790] %v871
                %v873 = vld [vmem:[%s797 + $0x94] sm:%s790]
                %874 = vst [vmem:[%s798 + $0x114] sm:%s790] %v873
                %v875 = vld [vmem:[%s797 + $0x98] sm:%s790]
                %876 = vst [vmem:[%s798 + $0x118] sm:%s790] %v875
                %v877 = vld [vmem:[%s797 + $0x9c] sm:%s790]
                %878 = vst [vmem:[%s798 + $0x11c] sm:%s790] %v877
                %v879 = vld [vmem:[%s797 + $0xa0] sm:%s790]
                %880 = vst [vmem:[%s798 + $0x120] sm:%s790] %v879
                %v881 = vld [vmem:[%s797 + $0xa4] sm:%s790]
                %882 = vst [vmem:[%s798 + $0x124] sm:%s790] %v881
                %v883 = vld [vmem:[%s797 + $0xa8] sm:%s790]
                %884 = vst [vmem:[%s798 + $0x128] sm:%s790] %v883
                %v885 = vld [vmem:[%s797 + $0xac] sm:%s790]
                %886 = vst [vmem:[%s798 + $0x12c] sm:%s790] %v885
                %v887 = vld [vmem:[%s797 + $0xb0] sm:%s790]
                %888 = vst [vmem:[%s798 + $0x130] sm:%s790] %v887
                %v889 = vld [vmem:[%s797 + $0xb4] sm:%s790]
                %890 = vst [vmem:[%s798 + $0x134] sm:%s790] %v889
                %v891 = vld [vmem:[%s797 + $0xb8] sm:%s790]
                %892 = vst [vmem:[%s798 + $0x138] sm:%s790] %v891
                %v893 = vld [vmem:[%s797 + $0xbc] sm:%s790]
                %894 = vst [vmem:[%s798 + $0x13c] sm:%s790] %v893
                %v895 = vld [vmem:[%s797 + $0xc0] sm:%s790]
                %896 = vst [vmem:[%s798 + $0x180] sm:%s790] %v895
                %v897 = vld [vmem:[%s797 + $0xc4] sm:%s790]
                %898 = vst [vmem:[%s798 + $0x184] sm:%s790] %v897
                %v899 = vld [vmem:[%s797 + $0xc8] sm:%s790]
                %900 = vst [vmem:[%s798 + $0x188] sm:%s790] %v899
                %v901 = vld [vmem:[%s797 + $0xcc] sm:%s790]
                %902 = vst [vmem:[%s798 + $0x18c] sm:%s790] %v901
                %v903 = vld [vmem:[%s797 + $0xd0] sm:%s790]
                %904 = vst [vmem:[%s798 + $0x190] sm:%s790] %v903
                %v905 = vld [vmem:[%s797 + $0xd4] sm:%s790]
                %906 = vst [vmem:[%s798 + $0x194] sm:%s790] %v905
                %v907 = vld [vmem:[%s797 + $0xd8] sm:%s790]
                %908 = vst [vmem:[%s798 + $0x198] sm:%s790] %v907
                %v909 = vld [vmem:[%s797 + $0xdc] sm:%s790]
                %910 = vst [vmem:[%s798 + $0x19c] sm:%s790] %v909
                %v911 = vld [vmem:[%s797 + $0xe0] sm:%s790]
                %912 = vst [vmem:[%s798 + $0x1a0] sm:%s790] %v911
                %v913 = vld [vmem:[%s797 + $0xe4] sm:%s790]
                %914 = vst [vmem:[%s798 + $0x1a4] sm:%s790] %v913
                %v915 = vld [vmem:[%s797 + $0xe8] sm:%s790]
                %916 = vst [vmem:[%s798 + $0x1a8] sm:%s790] %v915
                %v917 = vld [vmem:[%s797 + $0xec] sm:%s790]
                %918 = vst [vmem:[%s798 + $0x1ac] sm:%s790] %v917
                %v919 = vld [vmem:[%s797 + $0xf0] sm:%s790]
                %920 = vst [vmem:[%s798 + $0x1b0] sm:%s790] %v919
                %v921 = vld [vmem:[%s797 + $0xf4] sm:%s790]
                %922 = vst [vmem:[%s798 + $0x1b4] sm:%s790] %v921
                %v923 = vld [vmem:[%s797 + $0xf8] sm:%s790]
                %924 = vst [vmem:[%s798 + $0x1b8] sm:%s790] %v923
                %v925 = vld [vmem:[%s797 + $0xfc] sm:%s790]
                %926 = vst [vmem:[%s798 + $0x1bc] sm:%s790] %v925
              $region53: #{gat_encoder_pallas.9} parent=47 // loop_footer
                %s796 = sadd.s32 1, %s792
              $region54: #{gat_encoder_pallas.9} parent=47 // loop_footer_branch
                %791 = sbr.rel target = $region50
              $region55: #{gat_encoder_pallas.9} parent=47 // loop_exit
                _
            $region48: #{gat_encoder_pallas.9} parent=39 // pred_fallthru
              _
          $region40: #{gat_encoder_pallas.9} parent=35 // pred_fallthru
            _
          %1075 = vnop
        $region36: #{gat_encoder_pallas.9} parent=31 // pred_fallthru
          _
        // Predicated region
        $region74: #{gat_encoder_pallas.9} parent=31 // pred_check
          %p1076 = pneg %p128
        $region75: #{gat_encoder_pallas.9} parent=31 // pred_check_branch
          %1078 = sbr.rel (%p1076) target = $region77
        $region76: #{gat_encoder_pallas.9} parent=31 // pred_region
          %s1079 = smul.u32 16, %s16
        $region77: #{gat_encoder_pallas.9} parent=31 // pred_fallthru
          _
      $region32: #{gat_encoder_pallas.9} parent=5 // pred_fallthru
        _
      %p1080 = scmp.le.s32.totalorder 2, %s11
      // Predicated region
      $region78: #{gat_encoder_pallas.9} parent=5 // pred_check
        %p1081 = pneg %p1080
      $region79: #{gat_encoder_pallas.9} parent=5 // pred_check_branch
        %1083 = sbr.rel (%p1081) target = $region81
      $region80: #{gat_encoder_pallas.9} parent=5 // pred_region
        %s1084 = ssub.s32 %s11, 2
        // Predicated region
        $region82: #{gat_encoder_pallas.9} parent=80 // pred_check
          %p1085 = pneg %p108
        $region83: #{gat_encoder_pallas.9} parent=80 // pred_check_branch
          %1087 = sbr.rel (%p1085) target = $region85
        $region84: #{gat_encoder_pallas.9} parent=80 // pred_region
          %s1088 = sand.u32 %s93, 1
          %s1089 = sand.u32 %s93, 1
          %s1090 = smul.addr %s1089, 256
          %s1091 = scalar_lea.vmem [#allocation2], %s1090
        $region85: #{gat_encoder_pallas.9} parent=80 // pred_fallthru
          _
        // Predicated region
        $region86: #{gat_encoder_pallas.9} parent=80 // pred_check
          %p1092 = pneg %p134
        $region87: #{gat_encoder_pallas.9} parent=80 // pred_check_branch
          %1094 = sbr.rel (%p1092) target = $region89
        $region88: #{gat_encoder_pallas.9} parent=80 // pred_region
          %s1095 = smul.u32 16, %s17
          %p1096 = scmp.lt.s32.totalorder %s1095, 31
          %s1097 = scalar_select %p1096, %s1095, 31
          %s1098 = smul.addr %s1097, 8
          %s1099 = scalar_lea.vmem %s4, %s1098
        $region89: #{gat_encoder_pallas.9} parent=80 // pred_fallthru
          _
      $region81: #{gat_encoder_pallas.9} parent=5 // pred_fallthru
        _
    $region6: #{gat_encoder_pallas.9} parent=1 // loop_footer
      %s15 = sadd.s32 1, %s11
    $region7: #{gat_encoder_pallas.9} parent=1 // loop_footer_branch
      %10 = sbr.rel target = $region3
    $region8: #{gat_encoder_pallas.9} parent=1 // loop_exit
      _

// kernel: gat_encoder_pallas.13
$region0: #{gat_encoder_pallas.13}
  #allocation0 [shape = 'u32[]', space=smem, size = 0x4, offset = 0x4, fixed_abs, tag = 'smem constant byte address 0x4 - core index']
  #allocation1 [shape = 'u32[72,128]{1,0:T(1,128)}', space=vmem, size = 0x9000, scoped, tag = 'internal scratch']
  %s0 = inlined_call_operand.vmem [shape: f32[2,256], index: 0, kind: input, shape index: {}]
  %s1 = inlined_call_operand.vmem [shape: bf16[256,32], index: 1, kind: input, shape index: {}]
  %s2 = inlined_call_operand.vmem [shape: f32[32,32], index: 2, kind: input, shape index: {}]
  %s3 = inlined_call_operand.vmem [shape: f32[1,32], index: 3, kind: input, shape index: {}]
  %s4 = inlined_call_operand.vmem [shape: f32[32,16], index: 4, kind: input, shape index: {}]
  %s5 = inlined_call_operand.vmem [shape: f32[1,16], index: 5, kind: input, shape index: {}]
  %s6 = inlined_call_operand.hbm [shape: f32[2,16], index: 6, kind: output, shape index: {}]
  %s7 = sld [smem:[#allocation0]]
  $region34: #{gat_encoder_pallas.13} parent=0
    _
  %s9 = ssub.s32 1, %s7
  %s10 = scalar_select 0, %s9, %s7
  $region1: #{gat_encoder_pallas.13} parent=0
    #allocation2 [shape = 'u8[1024]{0}', space=vmem, size = 0x400, scoped, tag = 'output window, operand 0, single buffered']
    #allocation3 [shape = 's32[1]{0}', space=sflag, size = 0x4, scoped, tag = 'scoped memory for gat_encoder_pallas.13']
    %11 = vsyncpa [#allocation3], 0
    // Predicated region
    $region2: #{gat_encoder_pallas.13} parent=1 // pred_check
      _
    $region3: #{gat_encoder_pallas.13} parent=1 // pred_check_branch
      %13 = sbr.rel (0) target = $region5
    $region4: #{gat_encoder_pallas.13} parent=1 // pred_region
      _
    $region5: #{gat_encoder_pallas.13} parent=1 // pred_fallthru
      _
    // Predicated region
    $region6: #{gat_encoder_pallas.13} parent=1 // pred_check
      _
    $region7: #{gat_encoder_pallas.13} parent=1 // pred_check_branch
      %15 = sbr.rel (0) target = $region9
    $region8: #{gat_encoder_pallas.13} parent=1 // pred_region
      _
    $region9: #{gat_encoder_pallas.13} parent=1 // pred_fallthru
      _
    // Predicated region
    $region10: #{gat_encoder_pallas.13} parent=1 // pred_check
      _
    $region11: #{gat_encoder_pallas.13} parent=1 // pred_check_branch
      %17 = sbr.rel (0) target = $region13
    $region12: #{gat_encoder_pallas.13} parent=1 // pred_region
      _
    $region13: #{gat_encoder_pallas.13} parent=1 // pred_fallthru
      _
    // Predicated region
    $region14: #{gat_encoder_pallas.13} parent=1 // pred_check
      _
    $region15: #{gat_encoder_pallas.13} parent=1 // pred_check_branch
      %19 = sbr.rel (0) target = $region17
    $region16: #{gat_encoder_pallas.13} parent=1 // pred_region
      _
    $region17: #{gat_encoder_pallas.13} parent=1 // pred_fallthru
      _
    // Predicated region
    $region18: #{gat_encoder_pallas.13} parent=1 // pred_check
      _
    $region19: #{gat_encoder_pallas.13} parent=1 // pred_check_branch
      %21 = sbr.rel (0) target = $region21
    $region20: #{gat_encoder_pallas.13} parent=1 // pred_region
      _
    $region21: #{gat_encoder_pallas.13} parent=1 // pred_fallthru
      _
    // Predicated region
    $region22: #{gat_encoder_pallas.13} parent=1 // pred_check
      _
    $region23: #{gat_encoder_pallas.13} parent=1 // pred_check_branch
      %23 = sbr.rel (0) target = $region25
    $region24: #{gat_encoder_pallas.13} parent=1 // pred_region
      _
    $region25: #{gat_encoder_pallas.13} parent=1 // pred_fallthru
      _
    %v24 = vld [vmem:[%s0] sm:$0xf]
    %v25 = vld [vmem:[%s1] sm:$0xf]
    %v26 = vld [vmem:[%s1 + $0x4] sm:$0xf]
    %v27 = vld [vmem:[%s1 + $0x8] sm:$0xf]
    %v28 = vld [vmem:[%s1 + $0xc] sm:$0xf]
    %v29 = vld [vmem:[%s1 + $0x10] sm:$0xf]
    %v30 = vld [vmem:[%s1 + $0x14] sm:$0xf]
    %v31 = vld [vmem:[%s1 + $0x18] sm:$0xf]
    %v32 = vld [vmem:[%s1 + $0x1c] sm:$0xf]
    %v33 = vld [vmem:[%s1 + $0x20] sm:$0xf]
    %v34 = vld [vmem:[%s1 + $0x24] sm:$0xf]
    %v35 = vld [vmem:[%s1 + $0x28] sm:$0xf]
    %v36 = vld [vmem:[%s1 + $0x2c] sm:$0xf]
    %v37 = vld [vmem:[%s1 + $0x30] sm:$0xf]
    %v38 = vld [vmem:[%s1 + $0x34] sm:$0xf]
    %v39 = vld [vmem:[%s1 + $0x38] sm:$0xf]
    %v40 = vld [vmem:[%s1 + $0x3c] sm:$0xf]
    %v41 = vld [vmem:[%s1 + $0x40] sm:$0xf]
    %v42 = vld [vmem:[%s1 + $0x44] sm:$0xf]
    %v43 = vld [vmem:[%s1 + $0x48] sm:$0xf]
    %v44 = vld [vmem:[%s1 + $0x4c] sm:$0xf]
    %v45 = vld [vmem:[%s1 + $0x50] sm:$0xf]
    %v46 = vld [vmem:[%s1 + $0x54] sm:$0xf]
    %v47 = vld [vmem:[%s1 + $0x58] sm:$0xf]
    %v48 = vld [vmem:[%s1 + $0x5c] sm:$0xf]
    %v49 = vld [vmem:[%s1 + $0x60] sm:$0xf]
    %v50 = vld [vmem:[%s1 + $0x64] sm:$0xf]
    %v51 = vld [vmem:[%s1 + $0x68] sm:$0xf]
    %v52 = vld [vmem:[%s1 + $0x6c] sm:$0xf]
    %v53 = vld [vmem:[%s1 + $0x70] sm:$0xf]
    %v54 = vld [vmem:[%s1 + $0x74] sm:$0xf]
    %v55 = vld [vmem:[%s1 + $0x78] sm:$0xf]
    %v56 = vld [vmem:[%s1 + $0x7c] sm:$0xf]
    %v57 = vunpack.c.l.bf16 %v25
    %v58 = vunpack.c.l.bf16 %v26
    %v59 = vunpack.c.l.bf16 %v27
    %v60 = vunpack.c.l.bf16 %v28
    %v61 = vunpack.c.l.bf16 %v29
    %v62 = vunpack.c.l.bf16 %v30
    %v63 = vunpack.c.l.bf16 %v31
    %v64 = vunpack.c.l.bf16 %v32
    %v65 = vunpack.c.l.bf16 %v33
    %v66 = vunpack.c.l.bf16 %v34
    %v67 = vunpack.c.l.bf16 %v35
    %v68 = vunpack.c.l.bf16 %v36
    %v69 = vunpack.c.l.bf16 %v37
    %v70 = vunpack.c.l.bf16 %v38
    %v71 = vunpack.c.l.bf16 %v39
    %v72 = vunpack.c.l.bf16 %v40
    %v73 = vunpack.c.l.bf16 %v41
    %v74 = vunpack.c.l.bf16 %v42
    %v75 = vunpack.c.l.bf16 %v43
    %v76 = vunpack.c.l.bf16 %v44
    %v77 = vunpack.c.l.bf16 %v45
    %v78 = vunpack.c.l.bf16 %v46
    %v79 = vunpack.c.l.bf16 %v47
    %v80 = vunpack.c.l.bf16 %v48
    %v81 = vunpack.c.l.bf16 %v49
    %v82 = vunpack.c.l.bf16 %v50
    %v83 = vunpack.c.l.bf16 %v51
    %v84 = vunpack.c.l.bf16 %v52
    %v85 = vunpack.c.l.bf16 %v53
    %v86 = vunpack.c.l.bf16 %v54
    %v87 = vunpack.c.l.bf16 %v55
    %v88 = vunpack.c.l.bf16 %v56
    %90 = vst [vmem:[#allocation1] ss:$4 sm:$0xff] %v24
    %v91 = vld.sshfl [vmem:[#allocation1] sm:$0xff pattern:$0x73625140]
    %v92 = vld.sshfl [vmem:[#allocation1 + $0x8] sm:$0xff pattern:$0x73625140]
    %95 = vmatpush.msra.mxu0 %v72
    %96 = vmatpush.msra.mxu0 %v71
    %97 = vmatpush.msra.mxu0 %v70
    %98 = vmatpush.msra.mxu0 %v69
    %99 = vmatpush.msra.mxu0 %v68
    %100 = vmatpush.msra.mxu0 %v67
    %101 = vmatpush.msra.mxu0 %v66
    %102 = vmatpush.msra.mxu0 %v65
    %103 = vmatpush.msra.mxu0 %v64
    %104 = vmatpush.msra.mxu0 %v63
    %105 = vmatpush.msra.mxu0 %v62
    %106 = vmatpush.msra.mxu0 %v61
    %107 = vmatpush.msra.mxu0 %v60
    %108 = vmatpush.msra.mxu0 %v59
    %109 = vmatpush.msra.mxu0 %v58
    %110 = vmatpush.msra.mxu0 %v57
    %111 = vmatmul.f32.gmra.mxu0 %v91
    %v112 = vpop.f32.mrf.mxu0
    %v113 = vadd.f32 0.0, %v112
    %114 = vdwg.mxu0
    %115 = vmatpush.msra.mxu0 %v88
    %116 = vmatpush.msra.mxu0 %v87
    %117 = vmatpush.msra.mxu0 %v86
    %118 = vmatpush.msra.mxu0 %v85
    %119 = vmatpush.msra.mxu0 %v84
    %120 = vmatpush.msra.mxu0 %v83
    %121 = vmatpush.msra.mxu0 %v82
    %122 = vmatpush.msra.mxu0 %v81
    %123 = vmatpush.msra.mxu0 %v80
    %124 = vmatpush.msra.mxu0 %v79
    %125 = vmatpush.msra.mxu0 %v78
    %126 = vmatpush.msra.mxu0 %v77
    %127 = vmatpush.msra.mxu0 %v76
    %128 = vmatpush.msra.mxu0 %v75
    %129 = vmatpush.msra.mxu0 %v74
    %130 = vmatpush.msra.mxu0 %v73
    %131 = vmatmul.f32.gmra.mxu0 %v92
    %v132 = vpop.f32.mrf.mxu0
    %v133 = vadd.f32 %v113, %v132
    %134 = vdwg.mxu0
    %v135 = vld [vmem:[%s2] sm:$0xff]
    %v136 = vld [vmem:[%s2 + $0x8] sm:$0xff]
    %v137 = vld [vmem:[%s2 + $0x10] sm:$0xff]
    %v138 = vld [vmem:[%s2 + $0x18] sm:$0xff]
    %v139 = vld [vmem:[%s3] sm:$0x1]
    %v141 = vperm.slane %v139, 0
    %vm143 = vcmask 261120
    %v145 = vsel %vm143, %v133, 0
    %147 = vmatpush.msra.mxu0 0.0
    %148 = vmatpush.msra.mxu0 0.0
    %149 = vmatpush.msra.mxu0 0.0
    %150 = vmatpush.msra.mxu0 0.0
    %151 = vmatpush.msra.mxu0 0.0
    %152 = vmatpush.msra.mxu0 0.0
    %153 = vmatpush.msra.mxu0 0.0
    %154 = vmatpush.msra.mxu0 0.0
    %155 = vmatpush.msra.mxu0 0.0
    %156 = vmatpush.msra.mxu0 0.0
    %157 = vmatpush.msra.mxu0 0.0
    %158 = vmatpush.msra.mxu0 0.0
    %159 = vmatpush.msra.mxu0 %v138
    %160 = vmatpush.msra.mxu0 %v137
    %161 = vmatpush.msra.mxu0 %v136
    %162 = vmatpush.msra.mxu0 %v135
    %163 = vmatmul.f32.gmra.mxu0 %v145
    %v164 = vpop.f32.mrf.mxu0
    %v165 = vadd.f32 %v141, %v164
    %166 = vdwg.mxu0
    %v167 = vmax.f32 %v165, 0.0
    %v168 = vld [vmem:[%s4] sm:$0xff]
    %v169 = vld [vmem:[%s4 + $0x8] sm:$0xff]
    %v170 = vld [vmem:[%s4 + $0x10] sm:$0xff]
    %v171 = vld [vmem:[%s4 + $0x18] sm:$0xff]
    %v172 = vld [vmem:[%s5] sm:$0x1]
    %v174 = vperm.slane %v172, 0
    %v177 = vsel %vm143, %v167, 0
    %179 = vmatpush.msra.mxu0 0.0
    %180 = vmatpush.msra.mxu0 0.0
    %181 = vmatpush.msra.mxu0 0.0
    %182 = vmatpush.msra.mxu0 0.0
    %183 = vmatpush.msra.mxu0 0.0
    %184 = vmatpush.msra.mxu0 0.0
    %185 = vmatpush.msra.mxu0 0.0
    %186 = vmatpush.msra.mxu0 0.0
    %187 = vmatpush.msra.mxu0 0.0
    %188 = vmatpush.msra.mxu0 0.0
    %189 = vmatpush.msra.mxu0 0.0
    %190 = vmatpush.msra.mxu0 0.0
    %191 = vmatpush.msra.mxu0 %v171
    %192 = vmatpush.msra.mxu0 %v170
    %193 = vmatpush.msra.mxu0 %v169
    %194 = vmatpush.msra.mxu0 %v168
    %195 = vmatmul.f32.gmra.mxu0 %v177
    %v196 = vpop.f32.mrf.mxu0
    %v197 = vadd.f32 %v174, %v196
    %198 = vdwg.mxu0
    %vm199 = vcmask 123904
    %200 = vst.msk [vmem:[#allocation2] sm:$0x3] %vm199, %v197
    // Predicated region
    $region26: #{gat_encoder_pallas.13} parent=1 // pred_check
      _
    $region27: #{gat_encoder_pallas.13} parent=1 // pred_check_branch
      %202 = sbr.rel (0) target = $region29
    $region28: #{gat_encoder_pallas.13} parent=1 // pred_region
      %204 = vsyncadd [#allocation3], 0
      %s206 = sshll.u32 [#allocation2], 4
      %s207 = int_to_ptr.vmem [resolvable:$true] %s206
      %s208 = sshll.u32 %s6, 4
      %s209 = int_to_ptr.hbm [resolvable:$true] %s208
      %211 = dma.vmem_to_hbm [thread:$0]  %s207, 32, %s209, [#allocation3]
    $region29: #{gat_encoder_pallas.13} parent=1 // pred_fallthru
      _
    // Predicated region
    $region30: #{gat_encoder_pallas.13} parent=1 // pred_check
      _
    $region31: #{gat_encoder_pallas.13} parent=1 // pred_check_branch
      %213 = sbr.rel (0) target = $region33
    $region32: #{gat_encoder_pallas.13} parent=1 // pred_region
      %215 = dma.done [#allocation3], 32
    $region33: #{gat_encoder_pallas.13} parent=1 // pred_fallthru
      _
    %216 = vsyncpa [#allocation3], 1

// kernel: gat_encoder_pallas.8
$region0: #{gat_encoder_pallas.8}
  #allocation0 [shape = 'u32[]', space=smem, size = 0x4, offset = 0x4, fixed_abs, tag = 'smem constant byte address 0x4 - core index']
  #allocation1 [shape = 'u32[72,128]{1,0:T(1,128)}', space=vmem, size = 0x9000, scoped, tag = 'internal scratch']
  %s0 = inlined_call_operand.vmem [shape: s8[256,256], index: 0, kind: input, shape index: {}]
  %s1 = inlined_call_operand.vmem [shape: f32[256,4], index: 1, kind: input, shape index: {}]
  %s2 = inlined_call_operand.vmem [shape: f32[4,256], index: 2, kind: input, shape index: {}]
  %s3 = inlined_call_operand.vmem [shape: bf16[4,256,32], index: 3, kind: input, shape index: {}]
  %s4 = inlined_call_operand.vmem [shape: f32[1,32], index: 4, kind: input, shape index: {}]
  %s5 = inlined_call_operand.vmem [shape: bf16[256,32], index: 5, kind: output, shape index: {}]
  %s6 = sld [smem:[#allocation0]]
  $region53: #{gat_encoder_pallas.8} parent=0
    _
  %s8 = ssub.s32 1, %s6
  %s9 = scalar_select 0, %s8, %s6
  loop: start=0, step=1, limit=4
  $region2: #{gat_encoder_pallas.8} parent=0 // loop_pre_header
    _
  $region3: #{gat_encoder_pallas.8} parent=0 // loop_header
    %s11 = sphi 0, %s15
    %p12 = scmp.ge.s32.totalorder %s11, 4
    %s21 = sphi 0, %s23
    %s24 = sphi 0, %s21
    %s25 = sphi 0, %s24
    %s41 = sphi 0, %s25
    %s47 = sphi 0, %s49
    %s50 = sphi 0, %s47
    %s51 = sphi 0, %s50
    %s67 = sphi 0, %s51
    %s71 = sphi 0, %s71
    %s73 = sphi 0, %s71
    %s74 = sphi 0, %s73
    %s88 = sphi 0, %s74
    %s92 = sphi 0, %s92
    %s94 = sphi 0, %s92
    %s95 = sphi 0, %s94
    %s109 = sphi 0, %s95
    %s113 = sphi 0, %s113
    %s115 = sphi 0, %s113
    %s116 = sphi 0, %s115
    %s130 = sphi 0, %s116
    %s136 = sphi 0, %s138
    %s139 = sphi 0, %s136
    %s140 = sphi 0, %s139
    %s156 = sphi 0, %s140
  $region4: #{gat_encoder_pallas.8} parent=0 // loop_header_branch
    %14 = sbr.rel (%p12) target = $region8
  $region5: #{gat_encoder_pallas.8} parent=0 // loop_body
    %s16 = ssub.s32 %s11, 1
    %s17 = ssub.s32 %s11, 2
    %s18 = sadd.s32 %s11, 1
    %s19 = ssub.s32 %s11, %s18
    %p20 = scmp.eq.s32.totalorder %s19, 0
    %s22 = sadd.s32 %s21, 1
    %s23 = scalar_select %p20, %s21, %s22
    %p26 = pneg %p20
    %p27 = scmp.eq.s32.totalorder %s11, 1
    %p28 = por %p26, %p27
    %p29 = scmp.ne.s32.totalorder %s21, %s24
    %p30 = scmp.eq.s32.totalorder %s11, 0
    %p31 = por %p29, %p30
    %p32 = scmp.ne.s32.totalorder %s21, %s24
    %p33 = scmp.eq.s32.totalorder %s16, 1
    %p34 = por %p32, %p33
    %p35 = scmp.ne.s32.totalorder %s24, %s25
    %p36 = scmp.eq.s32.totalorder %s16, 0
    %p37 = por %p35, %p36
    %p38 = scmp.ne.s32.totalorder %s24, %s25
    %p39 = scmp.eq.s32.totalorder %s17, 1
    %p40 = por %p38, %p39
    %p42 = scmp.ne.s32.totalorder %s25, %s41
    %p43 = scmp.eq.s32.totalorder %s17, 0
    %p44 = por %p42, %p43
    %s45 = ssub.s32 %s11, %s18
    %p46 = scmp.eq.s32.totalorder %s45, 0
    %s48 = sadd.s32 %s47, 1
    %s49 = scalar_select %p46, %s47, %s48
    %p52 = pneg %p46
    %p53 = scmp.eq.s32.totalorder %s11, 1
    %p54 = por %p52, %p53
    %p55 = scmp.ne.s32.totalorder %s47, %s50
    %p56 = scmp.eq.s32.totalorder %s11, 0
    %p57 = por %p55, %p56
    %p58 = scmp.ne.s32.totalorder %s47, %s50
    %p59 = scmp.eq.s32.totalorder %s16, 1
    %p60 = por %p58, %p59
    %p61 = scmp.ne.s32.totalorder %s50, %s51
    %p62 = scmp.eq.s32.totalorder %s16, 0
    %p63 = por %p61, %p62
    %p64 = scmp.ne.s32.totalorder %s50, %s51
    %p65 = scmp.eq.s32.totalorder %s17, 1
    %p66 = por %p64, %p65
    %p68 = scmp.ne.s32.totalorder %s51, %s67
    %p69 = scmp.eq.s32.totalorder %s17, 0
    %p70 = por %p68, %p69
    %s72 = sadd.s32 %s71, 1
    %p75 = scmp.eq.s32.totalorder %s11, 1
    %p76 = scmp.ne.s32.totalorder %s71, %s73
    %p77 = scmp.eq.s32.totalorder %s11, 0
    %p78 = por %p76, %p77
    %p79 = scmp.ne.s32.totalorder %s71, %s73
    %p80 = scmp.eq.s32.totalorder %s16, 1
    %p81 = por %p79, %p80
    %p82 = scmp.ne.s32.totalorder %s73, %s74
    %p83 = scmp.eq.s32.totalorder %s16, 0
    %p84 = por %p82, %p83
    %p85 = scmp.ne.s32.totalorder %s73, %s74
    %p86 = scmp.eq.s32.totalorder %s17, 1
    %p87 = por %p85, %p86
    %p89 = scmp.ne.s32.totalorder %s74, %s88
    %p90 = scmp.eq.s32.totalorder %s17, 0
    %p91 = por %p89, %p90
    %s93 = sadd.s32 %s92, 1
    %p96 = scmp.eq.s32.totalorder %s11, 1
    %p97 = scmp.ne.s32.totalorder %s92, %s94
    %p98 = scmp.eq.s32.totalorder %s11, 0
    %p99 = por %p97, %p98
    %p100 = scmp.ne.s32.totalorder %s92, %s94
    %p101 = scmp.eq.s32.totalorder %s16, 1
    %p102 = por %p100, %p101
    %p103 = scmp.ne.s32.totalorder %s94, %s95
    %p104 = scmp.eq.s32.totalorder %s16, 0
    %p105 = por %p103, %p104
    %p106 = scmp.ne.s32.totalorder %s94, %s95
    %p107 = scmp.eq.s32.totalorder %s17, 1
    %p108 = por %p106, %p107
    %p110 = scmp.ne.s32.totalorder %s95, %s109
    %p111 = scmp.eq.s32.totalorder %s17, 0
    %p112 = por %p110, %p111
    %s114 = sadd.s32 %s113, 1
    %p117 = scmp.eq.s32.totalorder %s11, 1
    %p118 = scmp.ne.s32.totalorder %s113, %s115
    %p119 = scmp.eq.s32.totalorder %s11, 0
    %p120 = por %p118, %p119
    %p121 = scmp.ne.s32.totalorder %s113, %s115
    %p122 = scmp.eq.s32.totalorder %s16, 1
    %p123 = por %p121, %p122
    %p124 = scmp.ne.s32.totalorder %s115, %s116
    %p125 = scmp.eq.s32.totalorder %s16, 0
    %p126 = por %p124, %p125
    %p127 = scmp.ne.s32.totalorder %s115, %s116
    %p128 = scmp.eq.s32.totalorder %s17, 1
    %p129 = por %p127, %p128
    %p131 = scmp.ne.s32.totalorder %s116, %s130
    %p132 = scmp.eq.s32.totalorder %s17, 0
    %p133 = por %p131, %p132
    %s134 = ssub.s32 %s11, %s18
    %p135 = scmp.eq.s32.totalorder %s134, 0
    %s137 = sadd.s32 %s136, 1
    %s138 = scalar_select %p135, %s136, %s137
    %p141 = pneg %p135
    %p142 = scmp.eq.s32.totalorder %s11, 1
    %p143 = por %p141, %p142
    %p144 = scmp.ne.s32.totalorder %s136, %s139
    %p145 = scmp.eq.s32.totalorder %s11, 0
    %p146 = por %p144, %p145
    %p147 = scmp.ne.s32.totalorder %s136, %s139
    %p148 = scmp.eq.s32.totalorder %s16, 1
    %p149 = por %p147, %p148
    %p150 = scmp.ne.s32.totalorder %s139, %s140
    %p151 = scmp.eq.s32.totalorder %s16, 0
    %p152 = por %p150, %p151
    %p153 = scmp.ne.s32.totalorder %s139, %s140
    %p154 = scmp.eq.s32.totalorder %s17, 1
    %p155 = por %p153, %p154
    %p157 = scmp.ne.s32.totalorder %s140, %s156
    %p158 = scmp.eq.s32.totalorder %s17, 0
    %p159 = por %p157, %p158
    %p160 = scmp.le.s32.totalorder 1, %s11
    %p161 = scmp.lt.s32.totalorder %s11, 3
    %p162 = pnand %p160, %p161
    %p163 = pneg %p162
    // Predicated region
    $region9: #{gat_encoder_pallas.8} parent=5 // pred_check
      _
    $region10: #{gat_encoder_pallas.8} parent=5 // pred_check_branch
      %165 = sbr.rel (%p162) target = $region12
    $region11: #{gat_encoder_pallas.8} parent=5 // pred_region
      %s166 = ssub.s32 %s11, 1
      // Predicated region
      $region13: #{gat_encoder_pallas.8} parent=11 // pred_check
        %p167 = pneg %p84
      $region14: #{gat_encoder_pallas.8} parent=11 // pred_check_branch
        %169 = sbr.rel (%p167) target = $region16
      $region15: #{gat_encoder_pallas.8} parent=11 // pred_region
        _
      $region16: #{gat_encoder_pallas.8} parent=11 // pred_fallthru
        _
      // Predicated region
      $region17: #{gat_encoder_pallas.8} parent=11 // pred_check
        %p170 = pneg %p105
      $region18: #{gat_encoder_pallas.8} parent=11 // pred_check_branch
        %172 = sbr.rel (%p170) target = $region20
      $region19: #{gat_encoder_pallas.8} parent=11 // pred_region
        _
      $region20: #{gat_encoder_pallas.8} parent=11 // pred_fallthru
        _
      // Predicated region
      $region21: #{gat_encoder_pallas.8} parent=11 // pred_check
        %p173 = pneg %p126
      $region22: #{gat_encoder_pallas.8} parent=11 // pred_check_branch
        %175 = sbr.rel (%p173) target = $region24
      $region23: #{gat_encoder_pallas.8} parent=11 // pred_region
        _
      $region24: #{gat_encoder_pallas.8} parent=11 // pred_fallthru
        _
    $region12: #{gat_encoder_pallas.8} parent=5 // pred_fallthru
      _
    %p176 = scmp.lt.s32.totalorder %s11, 2
    // Predicated region
    $region25: #{gat_encoder_pallas.8} parent=5 // pred_check
      %p177 = pneg %p176
    $region26: #{gat_encoder_pallas.8} parent=5 // pred_check_branch
      %179 = sbr.rel (%p177) target = $region28
    $region27: #{gat_encoder_pallas.8} parent=5 // pred_region
      // Predicated region
      $region29: #{gat_encoder_pallas.8} parent=27 // pred_check
        %p180 = pneg %p31
      $region30: #{gat_encoder_pallas.8} parent=27 // pred_check_branch
        %182 = sbr.rel (%p180) target = $region32
      $region31: #{gat_encoder_pallas.8} parent=27 // pred_region
        %s183 = smul.u32 4, %s11
        %p184 = scmp.lt.s32.totalorder %s183, 7
        %s185 = scalar_select %p184, %s183, 7
        %s186 = smul.addr %s185, 2
        %s187 = smul.addr %s186, 8
        %s188 = scalar_lea.vmem %s0, %s187
        %s189 = smul.u32 4, %s11
      $region32: #{gat_encoder_pallas.8} parent=27 // pred_fallthru
        _
      // Predicated region
      $region33: #{gat_encoder_pallas.8} parent=27 // pred_check
        %p190 = pneg %p57
      $region34: #{gat_encoder_pallas.8} parent=27 // pred_check_branch
        %192 = sbr.rel (%p190) target = $region36
      $region35: #{gat_encoder_pallas.8} parent=27 // pred_region
        %s193 = smul.u32 16, %s11
        %p194 = scmp.lt.s32.totalorder %s193, 31
        %s195 = scalar_select %p194, %s193, 31
        %s196 = smul.addr %s195, 8
        %s197 = scalar_lea.vmem %s1, %s196
        %s198 = smul.u32 16, %s11
      $region36: #{gat_encoder_pallas.8} parent=27 // pred_fallthru
        _
    $region28: #{gat_encoder_pallas.8} parent=5 // pred_fallthru
      _
    %p199 = scmp.le.s32.totalorder 1, %s11
    %p200 = scmp.lt.s32.totalorder %s11, 3
    %p201 = pnand %p199, %p200
    %p202 = pneg %p201
    // Predicated region
    $region37: #{gat_encoder_pallas.8} parent=5 // pred_check
      _
    $region38: #{gat_encoder_pallas.8} parent=5 // pred_check_branch
      %204 = sbr.rel (%p201) target = $region40
    $region39: #{gat_encoder_pallas.8} parent=5 // pred_region
      %s205 = ssub.s32 %s11, 1
      %s206 = smul.u32 4, %s16
      %p207 = scmp.lt.s32.totalorder %s206, 7
      %s208 = scalar_select %p207, %s206, 7
      %s209 = smul.addr %s208, 2
      %s210 = smul.addr %s209, 8
      %s211 = scalar_lea.vmem %s0, %s210
      %p212 = pneg %p37
      %p213 = pneg %p34
      %s214 = smul.u32 16, %s16
      %p215 = scmp.lt.s32.totalorder %s214, 31
      %s216 = scalar_select %p215, %s214, 31
      %s217 = smul.addr %s216, 8
      %s218 = scalar_lea.vmem %s1, %s217
      %p219 = pneg %p63
      %p220 = pneg %p60
      %p221 = pneg %p84
      %p222 = pneg %p81
      %p223 = pneg %p105
      %p224 = pneg %p102
      %p225 = pneg %p126
      %p226 = pneg %p123
      %p227 = pneg %p152
      %p228 = pneg %p149
      %s229 = smul.u32 16, %s16
      %p230 = scmp.lt.s32.totalorder %s229, 31
      %s231 = scalar_select %p230, %s229, 31
      %s232 = smul.addr %s231, 4
      %s233 = scalar_lea.vmem %s5, %s232
      %s234 = smul.u32 4, %s16
      %p235 = scmp.lt.s32.totalorder %s234, 7
      %s236 = scalar_select %p235, %s234, 7
      %s237 = smul.addr %s236, 2
      %s238 = smul.addr %s237, 8
      %s239 = scalar_lea.vmem %s0, %s238
      %s240 = smul.u32 4, %s16
      %s241 = smul.u32 16, %s16
      %p242 = scmp.lt.s32.totalorder %s241, 31
      %s243 = scalar_select %p242, %s241, 31
      %s244 = smul.addr %s243, 8
      %s245 = scalar_lea.vmem %s1, %s244
      %s246 = smul.u32 16, %s16
      %s247 = smul.u32 16, %s16
      %p248 = scmp.lt.s32.totalorder %s247, 31
      %s249 = scalar_select %p248, %s247, 31
      %s250 = smul.addr %s249, 4
      %s251 = scalar_lea.vmem %s5, %s250
      %s252 = smul.u32 16, %s16
      %v253 = vld [vmem:[%s239] sm:$0xff]
      %v254 = vld [vmem:[%s239 + $0x8] sm:$0xff]
      %v255 = vld [vmem:[%s239 + $0x10] sm:$0xff]
      %v256 = vld [vmem:[%s239 + $0x18] sm:$0xff]
      %v257 = vld [vmem:[%s239 + $0x20] sm:$0xff]
      %v258 = vld [vmem:[%s239 + $0x28] sm:$0xff]
      %v259 = vld [vmem:[%s239 + $0x30] sm:$0xff]
      %v260 = vld [vmem:[%s239 + $0x38] sm:$0xff]
      %v261 = vunpack.c.0.s8 %v253
      %v262 = vunpack.c.0.s8 %v254
      %v263 = vunpack.c.1.s8 %v253
      %v264 = vunpack.c.1.s8 %v254
      %v265 = vunpack.c.2.s8 %v253
      %v266 = vunpack.c.2.s8 %v254
      %v267 = vunpack.c.3.s8 %v253
      %v268 = vunpack.c.3.s8 %v254
      %v269 = vunpack.c.0.s8 %v255
      %v270 = vunpack.c.0.s8 %v256
      %v271 = vunpack.c.1.s8 %v255
      %v272 = vunpack.c.1.s8 %v256
      %v273 = vunpack.c.2.s8 %v255
      %v274 = vunpack.c.2.s8 %v256
      %v275 = vunpack.c.3.s8 %v255
      %v276 = vunpack.c.3.s8 %v256
      %v277 = vunpack.c.0.s8 %v257
      %v278 = vunpack.c.0.s8 %v258
      %v279 = vunpack.c.1.s8 %v257
      %v280 = vunpack.c.1.s8 %v258
      %v281 = vunpack.c.2.s8 %v257
      %v282 = vunpack.c.2.s8 %v258
      %v283 = vunpack.c.3.s8 %v257
      %v284 = vunpack.c.3.s8 %v258
      %v285 = vunpack.c.0.s8 %v259
      %v286 = vunpack.c.0.s8 %v260
      %v287 = vunpack.c.1.s8 %v259
      %v288 = vunpack.c.1.s8 %v260
      %v289 = vunpack.c.2.s8 %v259
      %v290 = vunpack.c.2.s8 %v260
      %v291 = vunpack.c.3.s8 %v259
      %v292 = vunpack.c.3.s8 %v260
      %v293 = vcvt.s32.f32 %v261
      %v294 = vcvt.s32.f32 %v262
      %v295 = vcvt.s32.f32 %v263
      %v296 = vcvt.s32.f32 %v264
      %v297 = vcvt.s32.f32 %v265
      %v298 = vcvt.s32.f32 %v266
      %v299 = vcvt.s32.f32 %v267
      %v300 = vcvt.s32.f32 %v268
      %v301 = vcvt.s32.f32 %v269
      %v302 = vcvt.s32.f32 %v270
      %v303 = vcvt.s32.f32 %v271
      %v304 = vcvt.s32.f32 %v272
      %v305 = vcvt.s32.f32 %v273
      %v306 = vcvt.s32.f32 %v274
      %v307 = vcvt.s32.f32 %v275
      %v308 = vcvt.s32.f32 %v276
      %v309 = vcvt.s32.f32 %v277
      %v310 = vcvt.s32.f32 %v278
      %v311 = vcvt.s32.f32 %v279
      %v312 = vcvt.s32.f32 %v280
      %v313 = vcvt.s32.f32 %v281
      %v314 = vcvt.s32.f32 %v282
      %v315 = vcvt.s32.f32 %v283
      %v316 = vcvt.s32.f32 %v284
      %v317 = vcvt.s32.f32 %v285
      %v318 = vcvt.s32.f32 %v286
      %v319 = vcvt.s32.f32 %v287
      %v320 = vcvt.s32.f32 %v288
      %v321 = vcvt.s32.f32 %v289
      %v322 = vcvt.s32.f32 %v290
      %v323 = vcvt.s32.f32 %v291
      %v324 = vcvt.s32.f32 %v292
      %v325 = vsub.f32 %v293, 1.0
      %v326 = vsub.f32 %v294, 1.0
      %v327 = vsub.f32 %v295, 1.0
      %v328 = vsub.f32 %v296, 1.0
      %v329 = vsub.f32 %v297, 1.0
      %v330 = vsub.f32 %v298, 1.0
      %v331 = vsub.f32 %v299, 1.0
      %v332 = vsub.f32 %v300, 1.0
      %v333 = vsub.f32 %v301, 1.0
      %v334 = vsub.f32 %v302, 1.0
      %v335 = vsub.f32 %v303, 1.0
      %v336 = vsub.f32 %v304, 1.0
      %v337 = vsub.f32 %v305, 1.0
      %v338 = vsub.f32 %v306, 1.0
      %v339 = vsub.f32 %v307, 1.0
      %v340 = vsub.f32 %v308, 1.0
      %v341 = vsub.f32 %v309, 1.0
      %v342 = vsub.f32 %v310, 1.0
      %v343 = vsub.f32 %v311, 1.0
      %v344 = vsub.f32 %v312, 1.0
      %v345 = vsub.f32 %v313, 1.0
      %v346 = vsub.f32 %v314, 1.0
      %v347 = vsub.f32 %v315, 1.0
      %v348 = vsub.f32 %v316, 1.0
      %v349 = vsub.f32 %v317, 1.0
      %v350 = vsub.f32 %v318, 1.0
      %v351 = vsub.f32 %v319, 1.0
      %v352 = vsub.f32 %v320, 1.0
      %v353 = vsub.f32 %v321, 1.0
      %v354 = vsub.f32 %v322, 1.0
      %v355 = vsub.f32 %v323, 1.0
      %v356 = vsub.f32 %v324, 1.0
      %v357 = vmul.f32 %v325, 1e+30
      %v358 = vmul.f32 %v326, 1e+30
      %v359 = vmul.f32 %v327, 1e+30
      %v360 = vmul.f32 %v328, 1e+30
      %v361 = vmul.f32 %v329, 1e+30
      %v362 = vmul.f32 %v330, 1e+30
      %v363 = vmul.f32 %v331, 1e+30
      %v364 = vmul.f32 %v332, 1e+30
      %v365 = vmul.f32 %v333, 1e+30
      %v366 = vmul.f32 %v334, 1e+30
      %v367 = vmul.f32 %v335, 1e+30
      %v368 = vmul.f32 %v336, 1e+30
      %v369 = vmul.f32 %v337, 1e+30
      %v370 = vmul.f32 %v338, 1e+30
      %v371 = vmul.f32 %v339, 1e+30
      %v372 = vmul.f32 %v340, 1e+30
      %v373 = vmul.f32 %v341, 1e+30
      %v374 = vmul.f32 %v342, 1e+30
      %v375 = vmul.f32 %v343, 1e+30
      %v376 = vmul.f32 %v344, 1e+30
      %v377 = vmul.f32 %v345, 1e+30
      %v378 = vmul.f32 %v346, 1e+30
      %v379 = vmul.f32 %v347, 1e+30
      %v380 = vmul.f32 %v348, 1e+30
      %v381 = vmul.f32 %v349, 1e+30
      %v382 = vmul.f32 %v350, 1e+30
      %v383 = vmul.f32 %v351, 1e+30
      %v384 = vmul.f32 %v352, 1e+30
      %v385 = vmul.f32 %v353, 1e+30
      %v386 = vmul.f32 %v354, 1e+30
      %v387 = vmul.f32 %v355, 1e+30
      %v388 = vmul.f32 %v356, 1e+30
      %v389 = vld [vmem:[%s245] sm:$0xff]
      %v390 = vld [vmem:[%s245 + $0x8] sm:$0xff]
      %v391 = vld [vmem:[%s245 + $0x10] sm:$0xff]
      %v392 = vld [vmem:[%s245 + $0x18] sm:$0xff]
      %v393 = vld [vmem:[%s245 + $0x20] sm:$0xff]
      %v394 = vld [vmem:[%s245 + $0x28] sm:$0xff]
      %v395 = vld [vmem:[%s245 + $0x30] sm:$0xff]
      %v396 = vld [vmem:[%s245 + $0x38] sm:$0xff]
      %v397 = vld [vmem:[%s245 + $0x40] sm:$0xff]
      %v398 = vld [vmem:[%s245 + $0x48] sm:$0xff]
      %v399 = vld [vmem:[%s245 + $0x50] sm:$0xff]
      %v400 = vld [vmem:[%s245 + $0x58] sm:$0xff]
      %v401 = vld [vmem:[%s245 + $0x60] sm:$0xff]
      %v402 = vld [vmem:[%s245 + $0x68] sm:$0xff]
      %v403 = vld [vmem:[%s245 + $0x70] sm:$0xff]
      %v404 = vld [vmem:[%s245 + $0x78] sm:$0xff]
      %v405 = vld [vmem:[%s2] ss:$4 sm:$0x3]
      %407 = vset.pattern.permute.xlu0 0
      %408 = vperm.xlu0 %407, %v389
      %v409 = vpop.permute.xlu0 %408
      %412 = vset.pattern.permute.xlu0 0
      %413 = vperm.xlu0 %412, %v390
      %v414 = vpop.permute.xlu0 %413
      %417 = vset.pattern.permute.xlu0 0
      %418 = vperm.xlu0 %417, %v391
      %v419 = vpop.permute.xlu0 %418
      %422 = vset.pattern.permute.xlu0 0
      %423 = vperm.xlu0 %422, %v392
      %v424 = vpop.permute.xlu0 %423
      %427 = vset.pattern.permute.xlu0 0
      %428 = vperm.xlu0 %427, %v393
      %v429 = vpop.permute.xlu0 %428
      %432 = vset.pattern.permute.xlu0 0
      %433 = vperm.xlu0 %432, %v394
      %v434 = vpop.permute.xlu0 %433
      %437 = vset.pattern.permute.xlu0 0
      %438 = vperm.xlu0 %437, %v395
      %v439 = vpop.permute.xlu0 %438
      %442 = vset.pattern.permute.xlu0 0
      %443 = vperm.xlu0 %442, %v396
      %v444 = vpop.permute.xlu0 %443
      %447 = vset.pattern.permute.xlu0 0
      %448 = vperm.xlu0 %447, %v397
      %v449 = vpop.permute.xlu0 %448
      %452 = vset.pattern.permute.xlu0 0
      %453 = vperm.xlu0 %452, %v398
      %v454 = vpop.permute.xlu0 %453
      %457 = vset.pattern.permute.xlu0 0
      %458 = vperm.xlu0 %457, %v399
      %v459 = vpop.permute.xlu0 %458
      %462 = vset.pattern.permute.xlu0 0
      %463 = vperm.xlu0 %462, %v400
      %v464 = vpop.permute.xlu0 %463
      %467 = vset.pattern.permute.xlu0 0
      %468 = vperm.xlu0 %467, %v401
      %v469 = vpop.permute.xlu0 %468
      %472 = vset.pattern.permute.xlu0 0
      %473 = vperm.xlu0 %472, %v402
      %v474 = vpop.permute.xlu0 %473
      %477 = vset.pattern.permute.xlu0 0
      %478 = vperm.xlu0 %477, %v403
      %v479 = vpop.permute.xlu0 %478
      %482 = vset.pattern.permute.xlu0 0
      %483 = vperm.xlu0 %482, %v404
      %v484 = vpop.permute.xlu0 %483
      %v487 = vperm.slane %v405, 0
      %v488 = vperm.slane %v405, 1
      %v491 = vadd.f32 %v409, %v487
      %v492 = vadd.f32 %v409, %v488
      %v493 = vadd.f32 %v414, %v487
      %v494 = vadd.f32 %v414, %v488
      %v495 = vadd.f32 %v419, %v487
      %v496 = vadd.f32 %v419, %v488
      %v497 = vadd.f32 %v424, %v487
      %v498 = vadd.f32 %v424, %v488
      %v499 = vadd.f32 %v429, %v487
      %v500 = vadd.f32 %v429, %v488
      %v501 = vadd.f32 %v434, %v487
      %v502 = vadd.f32 %v434, %v488
      %v503 = vadd.f32 %v439, %v487
      %v504 = vadd.f32 %v439, %v488
      %v505 = vadd.f32 %v444, %v487
      %v506 = vadd.f32 %v444, %v488
      %v507 = vadd.f32 %v449, %v487
      %v508 = vadd.f32 %v449, %v488
      %v509 = vadd.f32 %v454, %v487
      %v510 = vadd.f32 %v454, %v488
      %v511 = vadd.f32 %v459, %v487
      %v512 = vadd.f32 %v459, %v488
      %v513 = vadd.f32 %v464, %v487
      %v514 = vadd.f32 %v464, %v488
      %v515 = vadd.f32 %v469, %v487
      %v516 = vadd.f32 %v469, %v488
      %v517 = vadd.f32 %v474, %v487
      %v518 = vadd.f32 %v474, %v488
      %v519 = vadd.f32 %v479, %v487
      %v520 = vadd.f32 %v479, %v488
      %v521 = vadd.f32 %v484, %v487
      %v522 = vadd.f32 %v484, %v488
      %vm523 = vcmp.gt.f32.partialorder %v491, 0.0
      %vm524 = vcmp.gt.f32.partialorder %v492, 0.0
      %vm525 = vcmp.gt.f32.partialorder %v493, 0.0
      %vm526 = vcmp.gt.f32.partialorder %v494, 0.0
      %vm527 = vcmp.gt.f32.partialorder %v495, 0.0
      %vm528 = vcmp.gt.f32.partialorder %v496, 0.0
      %vm529 = vcmp.gt.f32.partialorder %v497, 0.0
      %vm530 = vcmp.gt.f32.partialorder %v498, 0.0
      %vm531 = vcmp.gt.f32.partialorder %v499, 0.0
      %vm532 = vcmp.gt.f32.partialorder %v500, 0.0
      %vm533 = vcmp.gt.f32.partialorder %v501, 0.0
      %vm534 = vcmp.gt.f32.partialorder %v502, 0.0
      %vm535 = vcmp.gt.f32.partialorder %v503, 0.0
      %vm536 = vcmp.gt.f32.partialorder %v504, 0.0
      %vm537 = vcmp.gt.f32.partialorder %v505, 0.0
      %vm538 = vcmp.gt.f32.partialorder %v506, 0.0
      %vm539 = vcmp.gt.f32.partialorder %v507, 0.0
      %vm540 = vcmp.gt.f32.partialorder %v508, 0.0
      %vm541 = vcmp.gt.f32.partialorder %v509, 0.0
      %vm542 = vcmp.gt.f32.partialorder %v510, 0.0
      %vm543 = vcmp.gt.f32.partialorder %v511, 0.0
      %vm544 = vcmp.gt.f32.partialorder %v512, 0.0
      %vm545 = vcmp.gt.f32.partialorder %v513, 0.0
      %vm546 = vcmp.gt.f32.partialorder %v514, 0.0
      %vm547 = vcmp.gt.f32.partialorder %v515, 0.0
      %vm548 = vcmp.gt.f32.partialorder %v516, 0.0
      %vm549 = vcmp.gt.f32.partialorder %v517, 0.0
      %vm550 = vcmp.gt.f32.partialorder %v518, 0.0
      %vm551 = vcmp.gt.f32.partialorder %v519, 0.0
      %vm552 = vcmp.gt.f32.partialorder %v520, 0.0
      %vm553 = vcmp.gt.f32.partialorder %v521, 0.0
      %vm554 = vcmp.gt.f32.partialorder %v522, 0.0
      %v555 = vmul.f32 %v491, 0.2
      %v556 = vmul.f32 %v492, 0.2
      %v557 = vmul.f32 %v493, 0.2
      %v558 = vmul.f32 %v494, 0.2
      %v559 = vmul.f32 %v495, 0.2
      %v560 = vmul.f32 %v496, 0.2
      %v561 = vmul.f32 %v497, 0.2
      %v562 = vmul.f32 %v498, 0.2
      %v563 = vmul.f32 %v499, 0.2
      %v564 = vmul.f32 %v500, 0.2
      %v565 = vmul.f32 %v501, 0.2
      %v566 = vmul.f32 %v502, 0.2
      %v567 = vmul.f32 %v503, 0.2
      %v568 = vmul.f32 %v504, 0.2
      %v569 = vmul.f32 %v505, 0.2
      %v570 = vmul.f32 %v506, 0.2
      %v571 = vmul.f32 %v507, 0.2
      %v572 = vmul.f32 %v508, 0.2
      %v573 = vmul.f32 %v509, 0.2
      %v574 = vmul.f32 %v510, 0.2
      %v575 = vmul.f32 %v511, 0.2
      %v576 = vmul.f32 %v512, 0.2
      %v577 = vmul.f32 %v513, 0.2
      %v578 = vmul.f32 %v514, 0.2
      %v579 = vmul.f32 %v515, 0.2
      %v580 = vmul.f32 %v516, 0.2
      %v581 = vmul.f32 %v517, 0.2
      %v582 = vmul.f32 %v518, 0.2
      %v583 = vmul.f32 %v519, 0.2
      %v584 = vmul.f32 %v520, 0.2
      %v585 = vmul.f32 %v521, 0.2
      %v586 = vmul.f32 %v522, 0.2
      %v587 = vsel %vm523, %v491, %v555
      %v588 = vsel %vm524, %v492, %v556
      %v589 = vsel %vm525, %v493, %v557
      %v590 = vsel %vm526, %v494, %v558
      %v591 = vsel %vm527, %v495, %v559
      %v592 = vsel %vm528, %v496, %v560
      %v593 = vsel %vm529, %v497, %v561
      %v594 = vsel %vm530, %v498, %v562
      %v595 = vsel %vm531, %v499, %v563
      %v596 = vsel %vm532, %v500, %v564
      %v597 = vsel %vm533, %v501, %v565
      %v598 = vsel %vm534, %v502, %v566
      %v599 = vsel %vm535, %v503, %v567
      %v600 = vsel %vm536, %v504, %v568
      %v601 = vsel %vm537, %v505, %v569
      %v602 = vsel %vm538, %v506, %v570
      %v603 = vsel %vm539, %v507, %v571
      %v604 = vsel %vm540, %v508, %v572
      %v605 = vsel %vm541, %v509, %v573
      %v606 = vsel %vm542, %v510, %v574
      %v607 = vsel %vm543, %v511, %v575
      %v608 = vsel %vm544, %v512, %v576
      %v609 = vsel %vm545, %v513, %v577
      %v610 = vsel %vm546, %v514, %v578
      %v611 = vsel %vm547, %v515, %v579
      %v612 = vsel %vm548, %v516, %v580
      %v613 = vsel %vm549, %v517, %v581
      %v614 = vsel %vm550, %v518, %v582
      %v615 = vsel %vm551, %v519, %v583
      %v616 = vsel %vm552, %v520, %v584
      %v617 = vsel %vm553, %v521, %v585
      %v618 = vsel %vm554, %v522, %v586
      %v619 = vadd.f32 %v587, %v357
      %v620 = vadd.f32 %v588, %v358
      %v621 = vadd.f32 %v589, %v359
      %v622 = vadd.f32 %v590, %v360
      %v623 = vadd.f32 %v591, %v361
      %v624 = vadd.f32 %v592, %v362
      %v625 = vadd.f32 %v593, %v363
      %v626 = vadd.f32 %v594, %v364
      %v627 = vadd.f32 %v595, %v365
      %v628 = vadd.f32 %v596, %v366
      %v629 = vadd.f32 %v597, %v367
      %v630 = vadd.f32 %v598, %v368
      %v631 = vadd.f32 %v599, %v369
      %v632 = vadd.f32 %v600, %v370
      %v633 = vadd.f32 %v601, %v371
      %v634 = vadd.f32 %v602, %v372
      %v635 = vadd.f32 %v603, %v373
      %v636 = vadd.f32 %v604, %v374
      %v637 = vadd.f32 %v605, %v375
      %v638 = vadd.f32 %v606, %v376
      %v639 = vadd.f32 %v607, %v377
      %v640 = vadd.f32 %v608, %v378
      %v641 = vadd.f32 %v609, %v379
      %v642 = vadd.f32 %v610, %v380
      %v643 = vadd.f32 %v611, %v381
      %v644 = vadd.f32 %v612, %v382
      %v645 = vadd.f32 %v613, %v383
      %v646 = vadd.f32 %v614, %v384
      %v647 = vadd.f32 %v615, %v385
      %v648 = vadd.f32 %v616, %v386
      %v649 = vadd.f32 %v617, %v387
      %v650 = vadd.f32 %v618, %v388
      %v651 = vmax.f32 %v619, %v620
      %652 = vmax.xlane.f32.xlu0 %v651
      %v653 = vpop.xlane.xlu0 %652
      %v654 = vmax.f32 %v621, %v622
      %655 = vmax.xlane.f32.xlu0 %v654
      %v656 = vpop.xlane.xlu0 %655
      %v657 = vmax.f32 %v623, %v624
      %658 = vmax.xlane.f32.xlu0 %v657
      %v659 = vpop.xlane.xlu0 %658
      %v660 = vmax.f32 %v625, %v626
      %661 = vmax.xlane.f32.xlu0 %v660
      %v662 = vpop.xlane.xlu0 %661
      %v663 = vmax.f32 %v627, %v628
      %664 = vmax.xlane.f32.xlu0 %v663
      %v665 = vpop.xlane.xlu0 %664
      %v666 = vmax.f32 %v629, %v630
      %667 = vmax.xlane.f32.xlu0 %v666
      %v668 = vpop.xlane.xlu0 %667
      %v669 = vmax.f32 %v631, %v632
      %670 = vmax.xlane.f32.xlu0 %v669
      %v671 = vpop.xlane.xlu0 %670
      %v672 = vmax.f32 %v633, %v634
      %673 = vmax.xlane.f32.xlu0 %v672
      %v674 = vpop.xlane.xlu0 %673
      %v675 = vmax.f32 %v635, %v636
      %676 = vmax.xlane.f32.xlu0 %v675
      %v677 = vpop.xlane.xlu0 %676
      %v678 = vmax.f32 %v637, %v638
      %679 = vmax.xlane.f32.xlu0 %v678
      %v680 = vpop.xlane.xlu0 %679
      %v681 = vmax.f32 %v639, %v640
      %682 = vmax.xlane.f32.xlu0 %v681
      %v683 = vpop.xlane.xlu0 %682
      %v684 = vmax.f32 %v641, %v642
      %685 = vmax.xlane.f32.xlu0 %v684
      %v686 = vpop.xlane.xlu0 %685
      %v687 = vmax.f32 %v643, %v644
      %688 = vmax.xlane.f32.xlu0 %v687
      %v689 = vpop.xlane.xlu0 %688
      %v690 = vmax.f32 %v645, %v646
      %691 = vmax.xlane.f32.xlu0 %v690
      %v692 = vpop.xlane.xlu0 %691
      %v693 = vmax.f32 %v647, %v648
      %694 = vmax.xlane.f32.xlu0 %v693
      %v695 = vpop.xlane.xlu0 %694
      %v696 = vmax.f32 %v649, %v650
      %697 = vmax.xlane.f32.xlu0 %v696
      %v698 = vpop.xlane.xlu0 %697
      %v699 = vsub.f32 %v619, %v653
      %v700 = vsub.f32 %v620, %v653
      %v701 = vsub.f32 %v621, %v656
      %v702 = vsub.f32 %v622, %v656
      %v703 = vsub.f32 %v623, %v659
      %v704 = vsub.f32 %v624, %v659
      %v705 = vsub.f32 %v625, %v662
      %v706 = vsub.f32 %v626, %v662
      %v707 = vsub.f32 %v627, %v665
      %v708 = vsub.f32 %v628, %v665
      %v709 = vsub.f32 %v629, %v668
      %v710 = vsub.f32 %v630, %v668
      %v711 = vsub.f32 %v631, %v671
      %v712 = vsub.f32 %v632, %v671
      %v713 = vsub.f32 %v633, %v674
      %v714 = vsub.f32 %v634, %v674
      %v715 = vsub.f32 %v635, %v677
      %v716 = vsub.f32 %v636, %v677
      %v717 = vsub.f32 %v637, %v680
      %v718 = vsub.f32 %v638, %v680
      %v719 = vsub.f32 %v639, %v683
      %v720 = vsub.f32 %v640, %v683
      %v721 = vsub.f32 %v641, %v686
      %v722 = vsub.f32 %v642, %v686
      %v723 = vsub.f32 %v643, %v689
      %v724 = vsub.f32 %v644, %v689
      %v725 = vsub.f32 %v645, %v692
      %v726 = vsub.f32 %v646, %v692
      %v727 = vsub.f32 %v647, %v695
      %v728 = vsub.f32 %v648, %v695
      %v729 = vsub.f32 %v649, %v698
      %v730 = vsub.f32 %v650, %v698
      %v731 = vmul.f32 %v699, 1.442695
      %v732 = vpow.pop %v731
      %v733 = vmul.f32 %v700, 1.442695
      %v734 = vpow.pop %v733
      %v735 = vmul.f32 %v701, 1.442695
      %v736 = vpow.pop %v735
      %v737 = vmul.f32 %v702, 1.442695
      %v738 = vpow.pop %v737
      %v739 = vmul.f32 %v703, 1.442695
      %v740 = vpow.pop %v739
      %v741 = vmul.f32 %v704, 1.442695
      %v742 = vpow.pop %v741
      %v743 = vmul.f32 %v705, 1.442695
      %v744 = vpow.pop %v743
      %v745 = vmul.f32 %v706, 1.442695
      %v746 = vpow.pop %v745
      %v747 = vmul.f32 %v707, 1.442695
      %v748 = vpow.pop %v747
      %v749 = vmul.f32 %v708, 1.442695
      %v750 = vpow.pop %v749
      %v751 = vmul.f32 %v709, 1.442695
      %v752 = vpow.pop %v751
      %v753 = vmul.f32 %v710, 1.442695
      %v754 = vpow.pop %v753
      %v755 = vmul.f32 %v711, 1.442695
      %v756 = vpow.pop %v755
      %v757 = vmul.f32 %v712, 1.442695
      %v758 = vpow.pop %v757
      %v759 = vmul.f32 %v713, 1.442695
      %v760 = vpow.pop %v759
      %v761 = vmul.f32 %v714, 1.442695
      %v762 = vpow.pop %v761
      %v763 = vmul.f32 %v715, 1.442695
      %v764 = vpow.pop %v763
      %v765 = vmul.f32 %v716, 1.442695
      %v766 = vpow.pop %v765
      %v767 = vmul.f32 %v717, 1.442695
      %v768 = vpow.pop %v767
      %v769 = vmul.f32 %v718, 1.442695
      %v770 = vpow.pop %v769
      %v771 = vmul.f32 %v719, 1.442695
      %v772 = vpow.pop %v771
      %v773 = vmul.f32 %v720, 1.442695
      %v774 = vpow.pop %v773
      %v775 = vmul.f32 %v721, 1.442695
      %v776 = vpow.pop %v775
      %v777 = vmul.f32 %v722, 1.442695
      %v778 = vpow.pop %v777
      %v779 = vmul.f32 %v723, 1.442695
      %v780 = vpow.pop %v779
      %v781 = vmul.f32 %v724, 1.442695
      %v782 = vpow.pop %v781
      %v783 = vmul.f32 %v725, 1.442695
      %v784 = vpow.pop %v783
      %v785 = vmul.f32 %v726, 1.442695
      %v786 = vpow.pop %v785
      %v787 = vmul.f32 %v727, 1.442695
      %v788 = vpow.pop %v787
      %v789 = vmul.f32 %v728, 1.442695
      %v790 = vpow.pop %v789
      %v791 = vmul.f32 %v729, 1.442695
      %v792 = vpow.pop %v791
      %v793 = vmul.f32 %v730, 1.442695
      %v794 = vpow.pop %v793
      %v795 = vadd.f32 %v732, %v734
      %796 = vadd.xlane.f32.xlu0 %v795
      %v797 = vpop.xlane.xlu0 %796
      %v798 = vadd.f32 %v736, %v738
      %799 = vadd.xlane.f32.xlu0 %v798
      %v800 = vpop.xlane.xlu0 %799
      %v801 = vadd.f32 %v740, %v742
      %802 = vadd.xlane.f32.xlu0 %v801
      %v803 = vpop.xlane.xlu0 %802
      %v804 = vadd.f32 %v744, %v746
      %805 = vadd.xlane.f32.xlu0 %v804
      %v806 = vpop.xlane.xlu0 %805
      %v807 = vadd.f32 %v748, %v750
      %808 = vadd.xlane.f32.xlu0 %v807
      %v809 = vpop.xlane.xlu0 %808
      %v810 = vadd.f32 %v752, %v754
      %811 = vadd.xlane.f32.xlu0 %v810
      %v812 = vpop.xlane.xlu0 %811
      %v813 = vadd.f32 %v756, %v758
      %814 = vadd.xlane.f32.xlu0 %v813
      %v815 = vpop.xlane.xlu0 %814
      %v816 = vadd.f32 %v760, %v762
      %817 = vadd.xlane.f32.xlu0 %v816
      %v818 = vpop.xlane.xlu0 %817
      %v819 = vadd.f32 %v764, %v766
      %820 = vadd.xlane.f32.xlu0 %v819
      %v821 = vpop.xlane.xlu0 %820
      %v822 = vadd.f32 %v768, %v770
      %823 = vadd.xlane.f32.xlu0 %v822
      %v824 = vpop.xlane.xlu0 %823
      %v825 = vadd.f32 %v772, %v774
      %826 = vadd.xlane.f32.xlu0 %v825
      %v827 = vpop.xlane.xlu0 %826
      %v828 = vadd.f32 %v776, %v778
      %829 = vadd.xlane.f32.xlu0 %v828
      %v830 = vpop.xlane.xlu0 %829
      %v831 = vadd.f32 %v780, %v782
      %832 = vadd.xlane.f32.xlu0 %v831
      %v833 = vpop.xlane.xlu0 %832
      %v834 = vadd.f32 %v784, %v786
      %835 = vadd.xlane.f32.xlu0 %v834
      %v836 = vpop.xlane.xlu0 %835
      %v837 = vadd.f32 %v788, %v790
      %838 = vadd.xlane.f32.xlu0 %v837
      %v839 = vpop.xlane.xlu0 %838
      %v840 = vadd.f32 %v792, %v794
      %841 = vadd.xlane.f32.xlu0 %v840
      %v842 = vpop.xlane.xlu0 %841
      %v843 = vrcp.pop %v797
      %v844 = vrcp.pop %v800
      %v845 = vrcp.pop %v803
      %v846 = vrcp.pop %v806
      %v847 = vrcp.pop %v809
      %v848 = vrcp.pop %v812
      %v849 = vrcp.pop %v815
      %v850 = vrcp.pop %v818
      %v851 = vrcp.pop %v821
      %v852 = vrcp.pop %v824
      %v853 = vrcp.pop %v827
      %v854 = vrcp.pop %v830
      %v855 = vrcp.pop %v833
      %v856 = vrcp.pop %v836
      %v857 = vrcp.pop %v839
      %v858 = vrcp.pop %v842
      %v859 = vmul.f32 %v732, %v843
      %v860 = vmul.f32 %v734, %v843
      %v861 = vmul.f32 %v736, %v844
      %v862 = vmul.f32 %v738, %v844
      %v863 = vmul.f32 %v740, %v845
      %v864 = vmul.f32 %v742, %v845
      %v865 = vmul.f32 %v744, %v846
      %v866 = vmul.f32 %v746, %v846
      %v867 = vmul.f32 %v748, %v847
      %v868 = vmul.f32 %v750, %v847
      %v869 = vmul.f32 %v752, %v848
      %v870 = vmul.f32 %v754, %v848
      %v871 = vmul.f32 %v756, %v849
      %v872 = vmul.f32 %v758, %v849
      %v873 = vmul.f32 %v760, %v850
      %v874 = vmul.f32 %v762, %v850
      %v875 = vmul.f32 %v764, %v851
      %v876 = vmul.f32 %v766, %v851
      %v877 = vmul.f32 %v768, %v852
      %v878 = vmul.f32 %v770, %v852
      %v879 = vmul.f32 %v772, %v853
      %v880 = vmul.f32 %v774, %v853
      %v881 = vmul.f32 %v776, %v854
      %v882 = vmul.f32 %v778, %v854
      %v883 = vmul.f32 %v780, %v855
      %v884 = vmul.f32 %v782, %v855
      %v885 = vmul.f32 %v784, %v856
      %v886 = vmul.f32 %v786, %v856
      %v887 = vmul.f32 %v788, %v857
      %v888 = vmul.f32 %v790, %v857
      %v889 = vmul.f32 %v792, %v858
      %v890 = vmul.f32 %v794, %v858
      %v891 = vpack.c.bf16 %v861, %v859
      %v892 = vpack.c.bf16 %v862, %v860
      %v893 = vpack.c.bf16 %v865, %v863
      %v894 = vpack.c.bf16 %v866, %v864
      %v895 = vpack.c.bf16 %v869, %v867
      %v896 = vpack.c.bf16 %v870, %v868
      %v897 = vpack.c.bf16 %v873, %v871
      %v898 = vpack.c.bf16 %v874, %v872
      %v899 = vpack.c.bf16 %v877, %v875
      %v900 = vpack.c.bf16 %v878, %v876
      %v901 = vpack.c.bf16 %v881, %v879
      %v902 = vpack.c.bf16 %v882, %v880
      %v903 = vpack.c.bf16 %v885, %v883
      %v904 = vpack.c.bf16 %v886, %v884
      %v905 = vpack.c.bf16 %v889, %v887
      %v906 = vpack.c.bf16 %v890, %v888
      %v907 = vld [vmem:[%s3] sm:$0xf]
      %v908 = vld [vmem:[%s3 + $0x4] sm:$0xf]
      %v909 = vld [vmem:[%s3 + $0x8] sm:$0xf]
      %v910 = vld [vmem:[%s3 + $0xc] sm:$0xf]
      %v911 = vld [vmem:[%s3 + $0x10] sm:$0xf]
      %v912 = vld [vmem:[%s3 + $0x14] sm:$0xf]
      %v913 = vld [vmem:[%s3 + $0x18] sm:$0xf]
      %v914 = vld [vmem:[%s3 + $0x1c] sm:$0xf]
      %v915 = vld [vmem:[%s3 + $0x20] sm:$0xf]
      %v916 = vld [vmem:[%s3 + $0x24] sm:$0xf]
      %v917 = vld [vmem:[%s3 + $0x28] sm:$0xf]
      %v918 = vld [vmem:[%s3 + $0x2c] sm:$0xf]
      %v919 = vld [vmem:[%s3 + $0x30] sm:$0xf]
      %v920 = vld [vmem:[%s3 + $0x34] sm:$0xf]
      %v921 = vld [vmem:[%s3 + $0x38] sm:$0xf]
      %v922 = vld [vmem:[%s3 + $0x3c] sm:$0xf]
      %v923 = vld [vmem:[%s3 + $0x40] sm:$0xf]
      %v924 = vld [vmem:[%s3 + $0x44] sm:$0xf]
      %v925 = vld [vmem:[%s3 + $0x48] sm:$0xf]
      %v926 = vld [vmem:[%s3 + $0x4c] sm:$0xf]
      %v927 = vld [vmem:[%s3 + $0x50] sm:$0xf]
      %v928 = vld [vmem:[%s3 + $0x54] sm:$0xf]
      %v929 = vld [vmem:[%s3 + $0x58] sm:$0xf]
      %v930 = vld [vmem:[%s3 + $0x5c] sm:$0xf]
      %v931 = vld [vmem:[%s3 + $0x60] sm:$0xf]
      %v932 = vld [vmem:[%s3 + $0x64] sm:$0xf]
      %v933 = vld [vmem:[%s3 + $0x68] sm:$0xf]
      %v934 = vld [vmem:[%s3 + $0x6c] sm:$0xf]
      %v935 = vld [vmem:[%s3 + $0x70] sm:$0xf]
      %v936 = vld [vmem:[%s3 + $0x74] sm:$0xf]
      %v937 = vld [vmem:[%s3 + $0x78] sm:$0xf]
      %v938 = vld [vmem:[%s3 + $0x7c] sm:$0xf]
      %s939 = scalar_lea.vmem %s2, 1
      %v940 = vld [vmem:[%s939] ss:$4 sm:$0x3]
      %941 = vset.pattern.permute.xlu0 1
      %942 = vperm.xlu0 %941, %v389
      %v943 = vpop.permute.xlu0 %942
      %945 = vset.pattern.permute.xlu0 1
      %946 = vperm.xlu0 %945, %v390
      %v947 = vpop.permute.xlu0 %946
      %949 = vset.pattern.permute.xlu0 1
      %950 = vperm.xlu0 %949, %v391
      %v951 = vpop.permute.xlu0 %950
      %953 = vset.pattern.permute.xlu0 1
      %954 = vperm.xlu0 %953, %v392
      %v955 = vpop.permute.xlu0 %954
      %957 = vset.pattern.permute.xlu0 1
      %958 = vperm.xlu0 %957, %v393
      %v959 = vpop.permute.xlu0 %958
      %961 = vset.pattern.permute.xlu0 1
      %962 = vperm.xlu0 %961, %v394
      %v963 = vpop.permute.xlu0 %962
      %965 = vset.pattern.permute.xlu0 1
      %966 = vperm.xlu0 %965, %v395
      %v967 = vpop.permute.xlu0 %966
      %969 = vset.pattern.permute.xlu0 1
      %970 = vperm.xlu0 %969, %v396
      %v971 = vpop.permute.xlu0 %970
      %973 = vset.pattern.permute.xlu0 1
      %974 = vperm.xlu0 %973, %v397
      %v975 = vpop.permute.xlu0 %974
      %977 = vset.pattern.permute.xlu0 1
      %978 = vperm.xlu0 %977, %v398
      %v979 = vpop.permute.xlu0 %978
      %981 = vset.pattern.permute.xlu0 1
      %982 = vperm.xlu0 %981, %v399
      %v983 = vpop.permute.xlu0 %982
      %985 = vset.pattern.permute.xlu0 1
      %986 = vperm.xlu0 %985, %v400
      %v987 = vpop.permute.xlu0 %986
      %989 = vset.pattern.permute.xlu0 1
      %990 = vperm.xlu0 %989, %v401
      %v991 = vpop.permute.xlu0 %990
      %993 = vset.pattern.permute.xlu0 1
      %994 = vperm.xlu0 %993, %v402
      %v995 = vpop.permute.xlu0 %994
      %997 = vset.pattern.permute.xlu0 1
      %998 = vperm.xlu0 %997, %v403
      %v999 = vpop.permute.xlu0 %998
      %1001 = vset.pattern.permute.xlu0 1
      %1002 = vperm.xlu0 %1001, %v404
      %v1003 = vpop.permute.xlu0 %1002
      %v1006 = vperm.slane %v940, 0
      %v1007 = vperm.slane %v940, 1
      %v1010 = vadd.f32 %v943, %v1006
      %v1011 = vadd.f32 %v943, %v1007
      %v1012 = vadd.f32 %v947, %v1006
      %v1013 = vadd.f32 %v947, %v1007
      %v1014 = vadd.f32 %v951, %v1006
      %v1015 = vadd.f32 %v951, %v1007
      %v1016 = vadd.f32 %v955, %v1006
      %v1017 = vadd.f32 %v955, %v1007
      %v1018 = vadd.f32 %v959, %v1006
      %v1019 = vadd.f32 %v959, %v1007
      %v1020 = vadd.f32 %v963, %v1006
      %v1021 = vadd.f32 %v963, %v1007
      %v1022 = vadd.f32 %v967, %v1006
      %v1023 = vadd.f32 %v967, %v1007
      %v1024 = vadd.f32 %v971, %v1006
      %v1025 = vadd.f32 %v971, %v1007
      %v1026 = vadd.f32 %v975, %v1006
      %v1027 = vadd.f32 %v975, %v1007
      %v1028 = vadd.f32 %v979, %v1006
      %v1029 = vadd.f32 %v979, %v1007
      %v1030 = vadd.f32 %v983, %v1006
      %v1031 = vadd.f32 %v983, %v1007
      %v1032 = vadd.f32 %v987, %v1006
      %v1033 = vadd.f32 %v987, %v1007
      %v1034 = vadd.f32 %v991, %v1006
      %v1035 = vadd.f32 %v991, %v1007
      %v1036 = vadd.f32 %v995, %v1006
      %v1037 = vadd.f32 %v995, %v1007
      %v1038 = vadd.f32 %v999, %v1006
      %v1039 = vadd.f32 %v999, %v1007
      %v1040 = vadd.f32 %v1003, %v1006
      %v1041 = vadd.f32 %v1003, %v1007
      %vm1042 = vcmp.gt.f32.partialorder %v1010, 0.0
      %vm1043 = vcmp.gt.f32.partialorder %v1011, 0.0
      %vm1044 = vcmp.gt.f32.partialorder %v1012, 0.0
      %vm1045 = vcmp.gt.f32.partialorder %v1013, 0.0
      %vm1046 = vcmp.gt.f32.partialorder %v1014, 0.0
      %vm1047 = vcmp.gt.f32.partialorder %v1015, 0.0
      %vm1048 = vcmp.gt.f32.partialorder %v1016, 0.0
      %vm1049 = vcmp.gt.f32.partialorder %v1017, 0.0
      %vm1050 = vcmp.gt.f32.partialorder %v1018, 0.0
      %vm1051 = vcmp.gt.f32.partialorder %v1019, 0.0
      %vm1052 = vcmp.gt.f32.partialorder %v1020, 0.0
      %vm1053 = vcmp.gt.f32.partialorder %v1021, 0.0
      %vm1054 = vcmp.gt.f32.partialorder %v1022, 0.0
      %vm1055 = vcmp.gt.f32.partialorder %v1023, 0.0
      %vm1056 = vcmp.gt.f32.partialorder %v1024, 0.0
      %vm1057 = vcmp.gt.f32.partialorder %v1025, 0.0
      %vm1058 = vcmp.gt.f32.partialorder %v1026, 0.0
      %vm1059 = vcmp.gt.f32.partialorder %v1027, 0.0
      %vm1060 = vcmp.gt.f32.partialorder %v1028, 0.0
      %vm1061 = vcmp.gt.f32.partialorder %v1029, 0.0
      %vm1062 = vcmp.gt.f32.partialorder %v1030, 0.0
      %vm1063 = vcmp.gt.f32.partialorder %v1031, 0.0
      %vm1064 = vcmp.gt.f32.partialorder %v1032, 0.0
      %vm1065 = vcmp.gt.f32.partialorder %v1033, 0.0
      %vm1066 = vcmp.gt.f32.partialorder %v1034, 0.0
      %vm1067 = vcmp.gt.f32.partialorder %v1035, 0.0
      %vm1068 = vcmp.gt.f32.partialorder %v1036, 0.0
      %vm1069 = vcmp.gt.f32.partialorder %v1037, 0.0
      %vm1070 = vcmp.gt.f32.partialorder %v1038, 0.0
      %vm1071 = vcmp.gt.f32.partialorder %v1039, 0.0
      %vm1072 = vcmp.gt.f32.partialorder %v1040, 0.0
      %vm1073 = vcmp.gt.f32.partialorder %v1041, 0.0
      %v1074 = vmul.f32 %v1010, 0.2
      %v1075 = vmul.f32 %v1011, 0.2
      %v1076 = vmul.f32 %v1012, 0.2
      %v1077 = vmul.f32 %v1013, 0.2
      %v1078 = vmul.f32 %v1014, 0.2
      %v1079 = vmul.f32 %v1015, 0.2
      %v1080 = vmul.f32 %v1016, 0.2
      %v1081 = vmul.f32 %v1017, 0.2
      %v1082 = vmul.f32 %v1018, 0.2
      %v1083 = vmul.f32 %v1019, 0.2
      %v1084 = vmul.f32 %v1020, 0.2
      %v1085 = vmul.f32 %v1021, 0.2
      %v1086 = vmul.f32 %v1022, 0.2
      %v1087 = vmul.f32 %v1023, 0.2
      %v1088 = vmul.f32 %v1024, 0.2
      %v1089 = vmul.f32 %v1025, 0.2
      %v1090 = vmul.f32 %v1026, 0.2
      %v1091 = vmul.f32 %v1027, 0.2
      %v1092 = vmul.f32 %v1028, 0.2
      %v1093 = vmul.f32 %v1029, 0.2
      %v1094 = vmul.f32 %v1030, 0.2
      %v1095 = vmul.f32 %v1031, 0.2
      %v1096 = vmul.f32 %v1032, 0.2
      %v1097 = vmul.f32 %v1033, 0.2
      %v1098 = vmul.f32 %v1034, 0.2
      %v1099 = vmul.f32 %v1035, 0.2
      %v1100 = vmul.f32 %v1036, 0.2
      %v1101 = vmul.f32 %v1037, 0.2
      %v1102 = vmul.f32 %v1038, 0.2
      %v1103 = vmul.f32 %v1039, 0.2
      %v1104 = vmul.f32 %v1040, 0.2
      %v1105 = vmul.f32 %v1041, 0.2
      %v1106 = vsel %vm1042, %v1010, %v1074
      %v1107 = vsel %vm1043, %v1011, %v1075
      %v1108 = vsel %vm1044, %v1012, %v1076
      %v1109 = vsel %vm1045, %v1013, %v1077
      %v1110 = vsel %vm1046, %v1014, %v1078
      %v1111 = vsel %vm1047, %v1015, %v1079
      %v1112 = vsel %vm1048, %v1016, %v1080
      %v1113 = vsel %vm1049, %v1017, %v1081
      %v1114 = vsel %vm1050, %v1018, %v1082
      %v1115 = vsel %vm1051, %v1019, %v1083
      %v1116 = vsel %vm1052, %v1020, %v1084
      %v1117 = vsel %vm1053, %v1021, %v1085
      %v1118 = vsel %vm1054, %v1022, %v1086
      %v1119 = vsel %vm1055, %v1023, %v1087
      %v1120 = vsel %vm1056, %v1024, %v1088
      %v1121 = vsel %vm1057, %v1025, %v1089
      %v1122 = vsel %vm1058, %v1026, %v1090
      %v1123 = vsel %vm1059, %v1027, %v1091
      %v1124 = vsel %vm1060, %v1028, %v1092
      %v1125 = vsel %vm1061, %v1029, %v1093
      %v1126 = vsel %vm1062, %v1030, %v1094
      %v1127 = vsel %vm1063, %v1031, %v1095
      %v1128 = vsel %vm1064, %v1032, %v1096
      %v1129 = vsel %vm1065, %v1033, %v1097
      %v1130 = vsel %vm1066, %v1034, %v1098
      %v1131 = vsel %vm1067, %v1035, %v1099
      %v1132 = vsel %vm1068, %v1036, %v1100
      %v1133 = vsel %vm1069, %v1037, %v1101
      %v1134 = vsel %vm1070, %v1038, %v1102
      %v1135 = vsel %vm1071, %v1039, %v1103
      %v1136 = vsel %vm1072, %v1040, %v1104
      %v1137 = vsel %vm1073, %v1041, %v1105
      %v1138 = vadd.f32 %v1106, %v357
      %v1139 = vadd.f32 %v1107, %v358
      %v1140 = vadd.f32 %v1108, %v359
      %v1141 = vadd.f32 %v1109, %v360
      %v1142 = vadd.f32 %v1110, %v361
      %v1143 = vadd.f32 %v1111, %v362
      %v1144 = vadd.f32 %v1112, %v363
      %v1145 = vadd.f32 %v1113, %v364
      %v1146 = vadd.f32 %v1114, %v365
      %v1147 = vadd.f32 %v1115, %v366
      %v1148 = vadd.f32 %v1116, %v367
      %v1149 = vadd.f32 %v1117, %v368
      %v1150 = vadd.f32 %v1118, %v369
      %v1151 = vadd.f32 %v1119, %v370
      %v1152 = vadd.f32 %v1120, %v371
      %v1153 = vadd.f32 %v1121, %v372
      %v1154 = vadd.f32 %v1122, %v373
      %v1155 = vadd.f32 %v1123, %v374
      %v1156 = vadd.f32 %v1124, %v375
      %v1157 = vadd.f32 %v1125, %v376
      %v1158 = vadd.f32 %v1126, %v377
      %v1159 = vadd.f32 %v1127, %v378
      %v1160 = vadd.f32 %v1128, %v379
      %v1161 = vadd.f32 %v1129, %v380
      %v1162 = vadd.f32 %v1130, %v381
      %v1163 = vadd.f32 %v1131, %v382
      %v1164 = vadd.f32 %v1132, %v383
      %v1165 = vadd.f32 %v1133, %v384
      %v1166 = vadd.f32 %v1134, %v385
      %v1167 = vadd.f32 %v1135, %v386
      %v1168 = vadd.f32 %v1136, %v387
      %v1169 = vadd.f32 %v1137, %v388
      %v1170 = vmax.f32 %v1138, %v1139
      %1171 = vmax.xlane.f32.xlu0 %v1170
      %v1172 = vpop.xlane.xlu0 %1171
      %v1173 = vmax.f32 %v1140, %v1141
      %1174 = vmax.xlane.f32.xlu0 %v1173
      %v1175 = vpop.xlane.xlu0 %1174
      %v1176 = vmax.f32 %v1142, %v1143
      %1177 = vmax.xlane.f32.xlu0 %v1176
      %v1178 = vpop.xlane.xlu0 %1177
      %v1179 = vmax.f32 %v1144, %v1145
      %1180 = vmax.xlane.f32.xlu0 %v1179
      %v1181 = vpop.xlane.xlu0 %1180
      %v1182 = vmax.f32 %v1146, %v1147
      %1183 = vmax.xlane.f32.xlu0 %v1182
      %v1184 = vpop.xlane.xlu0 %1183
      %v1185 = vmax.f32 %v1148, %v1149
      %1186 = vmax.xlane.f32.xlu0 %v1185
      %v1187 = vpop.xlane.xlu0 %1186
      %v1188 = vmax.f32 %v1150, %v1151
      %1189 = vmax.xlane.f32.xlu0 %v1188
      %v1190 = vpop.xlane.xlu0 %1189
      %v1191 = vmax.f32 %v1152, %v1153
      %1192 = vmax.xlane.f32.xlu0 %v1191
      %v1193 = vpop.xlane.xlu0 %1192
      %v1194 = vmax.f32 %v1154, %v1155
      %1195 = vmax.xlane.f32.xlu0 %v1194
      %v1196 = vpop.xlane.xlu0 %1195
      %v1197 = vmax.f32 %v1156, %v1157
      %1198 = vmax.xlane.f32.xlu0 %v1197
      %v1199 = vpop.xlane.xlu0 %1198
      %v1200 = vmax.f32 %v1158, %v1159
      %1201 = vmax.xlane.f32.xlu0 %v1200
      %v1202 = vpop.xlane.xlu0 %1201
      %v1203 = vmax.f32 %v1160, %v1161
      %1204 = vmax.xlane.f32.xlu0 %v1203
      %v1205 = vpop.xlane.xlu0 %1204
      %v1206 = vmax.f32 %v1162, %v1163
      %1207 = vmax.xlane.f32.xlu0 %v1206
      %v1208 = vpop.xlane.xlu0 %1207
      %v1209 = vmax.f32 %v1164, %v1165
      %1210 = vmax.xlane.f32.xlu0 %v1209
      %v1211 = vpop.xlane.xlu0 %1210
      %v1212 = vmax.f32 %v1166, %v1167
      %1213 = vmax.xlane.f32.xlu0 %v1212
      %v1214 = vpop.xlane.xlu0 %1213
      %v1215 = vmax.f32 %v1168, %v1169
      %1216 = vmax.xlane.f32.xlu0 %v1215
      %v1217 = vpop.xlane.xlu0 %1216
      %v1218 = vsub.f32 %v1138, %v1172
      %v1219 = vsub.f32 %v1139, %v1172
      %v1220 = vsub.f32 %v1140, %v1175
      %v1221 = vsub.f32 %v1141, %v1175
      %v1222 = vsub.f32 %v1142, %v1178
      %v1223 = vsub.f32 %v1143, %v1178
      %v1224 = vsub.f32 %v1144, %v1181
      %v1225 = vsub.f32 %v1145, %v1181
      %v1226 = vsub.f32 %v1146, %v1184
      %v1227 = vsub.f32 %v1147, %v1184
      %v1228 = vsub.f32 %v1148, %v1187
      %v1229 = vsub.f32 %v1149, %v1187
      %v1230 = vsub.f32 %v1150, %v1190
      %v1231 = vsub.f32 %v1151, %v1190
      %v1232 = vsub.f32 %v1152, %v1193
      %v1233 = vsub.f32 %v1153, %v1193
      %v1234 = vsub.f32 %v1154, %v1196
      %v1235 = vsub.f32 %v1155, %v1196
      %v1236 = vsub.f32 %v1156, %v1199
      %v1237 = vsub.f32 %v1157, %v1199
      %v1238 = vsub.f32 %v1158, %v1202
      %v1239 = vsub.f32 %v1159, %v1202
      %v1240 = vsub.f32 %v1160, %v1205
      %v1241 = vsub.f32 %v1161, %v1205
      %v1242 = vsub.f32 %v1162, %v1208
      %v1243 = vsub.f32 %v1163, %v1208
      %v1244 = vsub.f32 %v1164, %v1211
      %v1245 = vsub.f32 %v1165, %v1211
      %v1246 = vsub.f32 %v1166, %v1214
      %v1247 = vsub.f32 %v1167, %v1214
      %v1248 = vsub.f32 %v1168, %v1217
      %v1249 = vsub.f32 %v1169, %v1217
      %v1250 = vmul.f32 %v1218, 1.442695
      %v1251 = vpow.pop %v1250
      %v1252 = vmul.f32 %v1219, 1.442695
      %v1253 = vpow.pop %v1252
      %v1254 = vmul.f32 %v1220, 1.442695
      %v1255 = vpow.pop %v1254
      %v1256 = vmul.f32 %v1221, 1.442695
      %v1257 = vpow.pop %v1256
      %v1258 = vmul.f32 %v1222, 1.442695
      %v1259 = vpow.pop %v1258
      %v1260 = vmul.f32 %v1223, 1.442695
      %v1261 = vpow.pop %v1260
      %v1262 = vmul.f32 %v1224, 1.442695
      %v1263 = vpow.pop %v1262
      %v1264 = vmul.f32 %v1225, 1.442695
      %v1265 = vpow.pop %v1264
      %v1266 = vmul.f32 %v1226, 1.442695
      %v1267 = vpow.pop %v1266
      %v1268 = vmul.f32 %v1227, 1.442695
      %v1269 = vpow.pop %v1268
      %v1270 = vmul.f32 %v1228, 1.442695
      %v1271 = vpow.pop %v1270
      %v1272 = vmul.f32 %v1229, 1.442695
      %v1273 = vpow.pop %v1272
      %v1274 = vmul.f32 %v1230, 1.442695
      %v1275 = vpow.pop %v1274
      %v1276 = vmul.f32 %v1231, 1.442695
      %v1277 = vpow.pop %v1276
      %v1278 = vmul.f32 %v1232, 1.442695
      %v1279 = vpow.pop %v1278
      %v1280 = vmul.f32 %v1233, 1.442695
      %v1281 = vpow.pop %v1280
      %v1282 = vmul.f32 %v1234, 1.442695
      %v1283 = vpow.pop %v1282
      %v1284 = vmul.f32 %v1235, 1.442695
      %v1285 = vpow.pop %v1284
      %v1286 = vmul.f32 %v1236, 1.442695
      %v1287 = vpow.pop %v1286
      %v1288 = vmul.f32 %v1237, 1.442695
      %v1289 = vpow.pop %v1288
      %v1290 = vmul.f32 %v1238, 1.442695
      %v1291 = vpow.pop %v1290
      %v1292 = vmul.f32 %v1239, 1.442695
      %v1293 = vpow.pop %v1292
      %v1294 = vmul.f32 %v1240, 1.442695
      %v1295 = vpow.pop %v1294
      %v1296 = vmul.f32 %v1241, 1.442695
      %v1297 = vpow.pop %v1296
      %v1298 = vmul.f32 %v1242, 1.442695
      %v1299 = vpow.pop %v1298
      %v1300 = vmul.f32 %v1243, 1.442695
      %v1301 = vpow.pop %v1300
      %v1302 = vmul.f32 %v1244, 1.442695
      %v1303 = vpow.pop %v1302
      %v1304 = vmul.f32 %v1245, 1.442695
      %v1305 = vpow.pop %v1304
      %v1306 = vmul.f32 %v1246, 1.442695
      %v1307 = vpow.pop %v1306
      %v1308 = vmul.f32 %v1247, 1.442695
      %v1309 = vpow.pop %v1308
      %v1310 = vmul.f32 %v1248, 1.442695
      %v1311 = vpow.pop %v1310
      %v1312 = vmul.f32 %v1249, 1.442695
      %v1313 = vpow.pop %v1312
      %v1314 = vadd.f32 %v1251, %v1253
      %1315 = vadd.xlane.f32.xlu0 %v1314
      %v1316 = vpop.xlane.xlu0 %1315
      %v1317 = vadd.f32 %v1255, %v1257
      %1318 = vadd.xlane.f32.xlu0 %v1317
      %v1319 = vpop.xlane.xlu0 %1318
      %v1320 = vadd.f32 %v1259, %v1261
      %1321 = vadd.xlane.f32.xlu0 %v1320
      %v1322 = vpop.xlane.xlu0 %1321
      %v1323 = vadd.f32 %v1263, %v1265
      %1324 = vadd.xlane.f32.xlu0 %v1323
      %v1325 = vpop.xlane.xlu0 %1324
      %v1326 = vadd.f32 %v1267, %v1269
      %1327 = vadd.xlane.f32.xlu0 %v1326
      %v1328 = vpop.xlane.xlu0 %1327
      %v1329 = vadd.f32 %v1271, %v1273
      %1330 = vadd.xlane.f32.xlu0 %v1329
      %v1331 = vpop.xlane.xlu0 %1330
      %v1332 = vadd.f32 %v1275, %v1277
      %1333 = vadd.xlane.f32.xlu0 %v1332
      %v1334 = vpop.xlane.xlu0 %1333
      %v1335 = vadd.f32 %v1279, %v1281
      %1336 = vadd.xlane.f32.xlu0 %v1335
      %v1337 = vpop.xlane.xlu0 %1336
      %v1338 = vadd.f32 %v1283, %v1285
      %1339 = vadd.xlane.f32.xlu0 %v1338
      %v1340 = vpop.xlane.xlu0 %1339
      %v1341 = vadd.f32 %v1287, %v1289
      %1342 = vadd.xlane.f32.xlu0 %v1341
      %v1343 = vpop.xlane.xlu0 %1342
      %v1344 = vadd.f32 %v1291, %v1293
      %1345 = vadd.xlane.f32.xlu0 %v1344
      %v1346 = vpop.xlane.xlu0 %1345
      %v1347 = vadd.f32 %v1295, %v1297
      %1348 = vadd.xlane.f32.xlu0 %v1347
      %v1349 = vpop.xlane.xlu0 %1348
      %v1350 = vadd.f32 %v1299, %v1301
      %1351 = vadd.xlane.f32.xlu0 %v1350
      %v1352 = vpop.xlane.xlu0 %1351
      %v1353 = vadd.f32 %v1303, %v1305
      %1354 = vadd.xlane.f32.xlu0 %v1353
      %v1355 = vpop.xlane.xlu0 %1354
      %v1356 = vadd.f32 %v1307, %v1309
      %1357 = vadd.xlane.f32.xlu0 %v1356
      %v1358 = vpop.xlane.xlu0 %1357
      %v1359 = vadd.f32 %v1311, %v1313
      %1360 = vadd.xlane.f32.xlu0 %v1359
      %v1361 = vpop.xlane.xlu0 %1360
      %v1362 = vrcp.pop %v1316
      %v1363 = vrcp.pop %v1319
      %v1364 = vrcp.pop %v1322
      %v1365 = vrcp.pop %v1325
      %v1366 = vrcp.pop %v1328
      %v1367 = vrcp.pop %v1331
      %v1368 = vrcp.pop %v1334
      %v1369 = vrcp.pop %v1337
      %v1370 = vrcp.pop %v1340
      %v1371 = vrcp.pop %v1343
      %v1372 = vrcp.pop %v1346
      %v1373 = vrcp.pop %v1349
      %v1374 = vrcp.pop %v1352
      %v1375 = vrcp.pop %v1355
      %v1376 = vrcp.pop %v1358
      %v1377 = vrcp.pop %v1361
      %v1378 = vmul.f32 %v1251, %v1362
      %v1379 = vmul.f32 %v1253, %v1362
      %v1380 = vmul.f32 %v1255, %v1363
      %v1381 = vmul.f32 %v1257, %v1363
      %v1382 = vmul.f32 %v1259, %v1364
      %v1383 = vmul.f32 %v1261, %v1364
      %v1384 = vmul.f32 %v1263, %v1365
      %v1385 = vmul.f32 %v1265, %v1365
      %v1386 = vmul.f32 %v1267, %v1366
      %v1387 = vmul.f32 %v1269, %v1366
      %v1388 = vmul.f32 %v1271, %v1367
      %v1389 = vmul.f32 %v1273, %v1367
      %v1390 = vmul.f32 %v1275, %v1368
      %v1391 = vmul.f32 %v1277, %v1368
      %v1392 = vmul.f32 %v1279, %v1369
      %v1393 = vmul.f32 %v1281, %v1369
      %v1394 = vmul.f32 %v1283, %v1370
      %v1395 = vmul.f32 %v1285, %v1370
      %v1396 = vmul.f32 %v1287, %v1371
      %v1397 = vmul.f32 %v1289, %v1371
      %v1398 = vmul.f32 %v1291, %v1372
      %v1399 = vmul.f32 %v1293, %v1372
      %v1400 = vmul.f32 %v1295, %v1373
      %v1401 = vmul.f32 %v1297, %v1373
      %v1402 = vmul.f32 %v1299, %v1374
      %v1403 = vmul.f32 %v1301, %v1374
      %v1404 = vmul.f32 %v1303, %v1375
      %v1405 = vmul.f32 %v1305, %v1375
      %v1406 = vmul.f32 %v1307, %v1376
      %v1407 = vmul.f32 %v1309, %v1376
      %v1408 = vmul.f32 %v1311, %v1377
      %v1409 = vmul.f32 %v1313, %v1377
      %v1410 = vpack.c.bf16 %v1380, %v1378
      %v1411 = vpack.c.bf16 %v1381, %v1379
      %v1412 = vpack.c.bf16 %v1384, %v1382
      %v1413 = vpack.c.bf16 %v1385, %v1383
      %v1414 = vpack.c.bf16 %v1388, %v1386
      %v1415 = vpack.c.bf16 %v1389, %v1387
      %v1416 = vpack.c.bf16 %v1392, %v1390
      %v1417 = vpack.c.bf16 %v1393, %v1391
      %v1418 = vpack.c.bf16 %v1396, %v1394
      %v1419 = vpack.c.bf16 %v1397, %v1395
      %v1420 = vpack.c.bf16 %v1400, %v1398
      %v1421 = vpack.c.bf16 %v1401, %v1399
      %v1422 = vpack.c.bf16 %v1404, %v1402
      %v1423 = vpack.c.bf16 %v1405, %v1403
      %v1424 = vpack.c.bf16 %v1408, %v1406
      %v1425 = vpack.c.bf16 %v1409, %v1407
      %s1426 = scalar_lea.vmem %s3, 128
      %v1427 = vld [vmem:[%s1426] sm:$0xf]
      %v1428 = vld [vmem:[%s1426 + $0x4] sm:$0xf]
      %v1429 = vld [vmem:[%s1426 + $0x8] sm:$0xf]
      %v1430 = vld [vmem:[%s1426 + $0xc] sm:$0xf]
      %v1431 = vld [vmem:[%s1426 + $0x10] sm:$0xf]
      %v1432 = vld [vmem:[%s1426 + $0x14] sm:$0xf]
      %v1433 = vld [vmem:[%s1426 + $0x18] sm:$0xf]
      %v1434 = vld [vmem:[%s1426 + $0x1c] sm:$0xf]
      %v1435 = vld [vmem:[%s1426 + $0x20] sm:$0xf]
      %v1436 = vld [vmem:[%s1426 + $0x24] sm:$0xf]
      %v1437 = vld [vmem:[%s1426 + $0x28] sm:$0xf]
      %v1438 = vld [vmem:[%s1426 + $0x2c] sm:$0xf]
      %v1439 = vld [vmem:[%s1426 + $0x30] sm:$0xf]
      %v1440 = vld [vmem:[%s1426 + $0x34] sm:$0xf]
      %v1441 = vld [vmem:[%s1426 + $0x38] sm:$0xf]
      %v1442 = vld [vmem:[%s1426 + $0x3c] sm:$0xf]
      %v1443 = vld [vmem:[%s1426 + $0x40] sm:$0xf]
      %v1444 = vld [vmem:[%s1426 + $0x44] sm:$0xf]
      %v1445 = vld [vmem:[%s1426 + $0x48] sm:$0xf]
      %v1446 = vld [vmem:[%s1426 + $0x4c] sm:$0xf]
      %v1447 = vld [vmem:[%s1426 + $0x50] sm:$0xf]
      %v1448 = vld [vmem:[%s1426 + $0x54] sm:$0xf]
      %v1449 = vld [vmem:[%s1426 + $0x58] sm:$0xf]
      %v1450 = vld [vmem:[%s1426 + $0x5c] sm:$0xf]
      %v1451 = vld [vmem:[%s1426 + $0x60] sm:$0xf]
      %v1452 = vld [vmem:[%s1426 + $0x64] sm:$0xf]
      %v1453 = vld [vmem:[%s1426 + $0x68] sm:$0xf]
      %v1454 = vld [vmem:[%s1426 + $0x6c] sm:$0xf]
      %v1455 = vld [vmem:[%s1426 + $0x70] sm:$0xf]
      %v1456 = vld [vmem:[%s1426 + $0x74] sm:$0xf]
      %v1457 = vld [vmem:[%s1426 + $0x78] sm:$0xf]
      %v1458 = vld [vmem:[%s1426 + $0x7c] sm:$0xf]
      %v1491 = vunpack.c.l.b16 %v1427
      %v1492 = vunpack.c.l.b16 %v1428
      %v1493 = vunpack.c.l.b16 %v1429
      %v1494 = vunpack.c.l.b16 %v1430
      %v1495 = vunpack.c.l.b16 %v1431
      %v1496 = vunpack.c.l.b16 %v1432
      %v1497 = vunpack.c.l.b16 %v1433
      %v1498 = vunpack.c.l.b16 %v1434
      %v1499 = vunpack.c.l.b16 %v1435
      %v1500 = vunpack.c.l.b16 %v1436
      %v1501 = vunpack.c.l.b16 %v1437
      %v1502 = vunpack.c.l.b16 %v1438
      %v1503 = vunpack.c.l.b16 %v1439
      %v1504 = vunpack.c.l.b16 %v1440
      %v1505 = vunpack.c.l.b16 %v1441
      %v1506 = vunpack.c.l.b16 %v1442
      %v1507 = vunpack.c.l.b16 %v1443
      %v1508 = vunpack.c.l.b16 %v1444
      %v1509 = vunpack.c.l.b16 %v1445
      %v1510 = vunpack.c.l.b16 %v1446
      %v1511 = vunpack.c.l.b16 %v1447
      %v1512 = vunpack.c.l.b16 %v1448
      %v1513 = vunpack.c.l.b16 %v1449
      %v1514 = vunpack.c.l.b16 %v1450
      %v1515 = vunpack.c.l.b16 %v1451
      %v1516 = vunpack.c.l.b16 %v1452
      %v1517 = vunpack.c.l.b16 %v1453
      %v1518 = vunpack.c.l.b16 %v1454
      %v1519 = vunpack.c.l.b16 %v1455
      %v1520 = vunpack.c.l.b16 %v1456
      %v1521 = vunpack.c.l.b16 %v1457
      %v1522 = vunpack.c.l.b16 %v1458
      %v1523 = vpack.c.b16 %v1492, %v1491
      %v1524 = vpack.c.b16 %v1494, %v1493
      %v1525 = vpack.c.b16 %v1496, %v1495
      %v1526 = vpack.c.b16 %v1498, %v1497
      %v1527 = vpack.c.b16 %v1500, %v1499
      %v1528 = vpack.c.b16 %v1502, %v1501
      %v1529 = vpack.c.b16 %v1504, %v1503
      %v1530 = vpack.c.b16 %v1506, %v1505
      %v1531 = vpack.c.b16 %v1508, %v1507
      %v1532 = vpack.c.b16 %v1510, %v1509
      %v1533 = vpack.c.b16 %v1512, %v1511
      %v1534 = vpack.c.b16 %v1514, %v1513
      %v1535 = vpack.c.b16 %v1516, %v1515
      %v1536 = vpack.c.b16 %v1518, %v1517
      %v1537 = vpack.c.b16 %v1520, %v1519
      %v1538 = vpack.c.b16 %v1522, %v1521
      %1555 = vmatpush.bf16.msra.mxu0 %v1530
      %1556 = vmatpush.bf16.msra.mxu0 %v1529
      %1557 = vmatpush.bf16.msra.mxu0 %v1528
      %1558 = vmatpush.bf16.msra.mxu0 %v1527
      %1559 = vmatpush.bf16.msra.mxu0 %v1526
      %1560 = vmatpush.bf16.msra.mxu0 %v1525
      %1561 = vmatpush.bf16.msra.mxu0 %v1524
      %1562 = vmatpush.bf16.msra.mxu0 %v1523
      %1563 = vmatmul.bf16.gmra.mxu0 %v1410
      %v1564 = vpop.f32.mrf.mxu0
      %v1565 = vadd.f32 0.0, %v1564
      %v1566 = vpop.f32.mrf.mxu0
      %v1567 = vadd.f32 0.0, %v1566
      %1568 = vmatmul.bf16.gmra.mxu0 %v1412
      %v1569 = vpop.f32.mrf.mxu0
      %v1570 = vadd.f32 0.0, %v1569
      %v1571 = vpop.f32.mrf.mxu0
      %v1572 = vadd.f32 0.0, %v1571
      %1573 = vmatmul.bf16.gmra.mxu0 %v1414
      %v1574 = vpop.f32.mrf.mxu0
      %v1575 = vadd.f32 0.0, %v1574
      %v1576 = vpop.f32.mrf.mxu0
      %v1577 = vadd.f32 0.0, %v1576
      %1578 = vmatmul.bf16.gmra.mxu0 %v1416
      %v1579 = vpop.f32.mrf.mxu0
      %v1580 = vadd.f32 0.0, %v1579
      %v1581 = vpop.f32.mrf.mxu0
      %v1582 = vadd.f32 0.0, %v1581
      %1583 = vmatmul.bf16.gmra.mxu0 %v1418
      %v1584 = vpop.f32.mrf.mxu0
      %v1585 = vadd.f32 0.0, %v1584
      %v1586 = vpop.f32.mrf.mxu0
      %v1587 = vadd.f32 0.0, %v1586
      %1588 = vmatmul.bf16.gmra.mxu0 %v1420
      %v1589 = vpop.f32.mrf.mxu0
      %v1590 = vadd.f32 0.0, %v1589
      %v1591 = vpop.f32.mrf.mxu0
      %v1592 = vadd.f32 0.0, %v1591
      %1593 = vmatmul.bf16.gmra.mxu0 %v1422
      %v1594 = vpop.f32.mrf.mxu0
      %v1595 = vadd.f32 0.0, %v1594
      %v1596 = vpop.f32.mrf.mxu0
      %v1597 = vadd.f32 0.0, %v1596
      %1598 = vmatmul.bf16.gmra.mxu0 %v1424
      %v1599 = vpop.f32.mrf.mxu0
      %v1600 = vadd.f32 0.0, %v1599
      %v1601 = vpop.f32.mrf.mxu0
      %v1602 = vadd.f32 0.0, %v1601
      %1603 = vdwg.mxu0
      %1604 = vmatpush.bf16.msra.mxu0 %v1538
      %1605 = vmatpush.bf16.msra.mxu0 %v1537
      %1606 = vmatpush.bf16.msra.mxu0 %v1536
      %1607 = vmatpush.bf16.msra.mxu0 %v1535
      %1608 = vmatpush.bf16.msra.mxu0 %v1534
      %1609 = vmatpush.bf16.msra.mxu0 %v1533
      %1610 = vmatpush.bf16.msra.mxu0 %v1532
      %1611 = vmatpush.bf16.msra.mxu0 %v1531
      %1612 = vmatmul.bf16.gmra.mxu0 %v1411
      %v1613 = vpop.f32.mrf.mxu0
      %v1614 = vadd.f32 %v1565, %v1613
      %v1615 = vpop.f32.mrf.mxu0
      %v1616 = vadd.f32 %v1567, %v1615
      %1617 = vmatmul.bf16.gmra.mxu0 %v1413
      %v1618 = vpop.f32.mrf.mxu0
      %v1619 = vadd.f32 %v1570, %v1618
      %v1620 = vpop.f32.mrf.mxu0
      %v1621 = vadd.f32 %v1572, %v1620
      %1622 = vmatmul.bf16.gmra.mxu0 %v1415
      %v1623 = vpop.f32.mrf.mxu0
      %v1624 = vadd.f32 %v1575, %v1623
      %v1625 = vpop.f32.mrf.mxu0
      %v1626 = vadd.f32 %v1577, %v1625
      %1627 = vmatmul.bf16.gmra.mxu0 %v1417
      %v1628 = vpop.f32.mrf.mxu0
      %v1629 = vadd.f32 %v1580, %v1628
      %v1630 = vpop.f32.mrf.mxu0
      %v1631 = vadd.f32 %v1582, %v1630
      %1632 = vmatmul.bf16.gmra.mxu0 %v1419
      %v1633 = vpop.f32.mrf.mxu0
      %v1634 = vadd.f32 %v1585, %v1633
      %v1635 = vpop.f32.mrf.mxu0
      %v1636 = vadd.f32 %v1587, %v1635
      %1637 = vmatmul.bf16.gmra.mxu0 %v1421
      %v1638 = vpop.f32.mrf.mxu0
      %v1639 = vadd.f32 %v1590, %v1638
      %v1640 = vpop.f32.mrf.mxu0
      %v1641 = vadd.f32 %v1592, %v1640
      %1642 = vmatmul.bf16.gmra.mxu0 %v1423
      %v1643 = vpop.f32.mrf.mxu0
      %v1644 = vadd.f32 %v1595, %v1643
      %v1645 = vpop.f32.mrf.mxu0
      %v1646 = vadd.f32 %v1597, %v1645
      %1647 = vmatmul.bf16.gmra.mxu0 %v1425
      %v1648 = vpop.f32.mrf.mxu0
      %v1649 = vadd.f32 %v1600, %v1648
      %v1650 = vpop.f32.mrf.mxu0
      %v1651 = vadd.f32 %v1602, %v1650
      %1652 = vdwg.mxu0
      %v1685 = vunpack.c.l.b16 %v907
      %v1686 = vunpack.c.l.b16 %v908
      %v1687 = vunpack.c.l.b16 %v909
      %v1688 = vunpack.c.l.b16 %v910
      %v1689 = vunpack.c.l.b16 %v911
      %v1690 = vunpack.c.l.b16 %v912
      %v1691 = vunpack.c.l.b16 %v913
      %v1692 = vunpack.c.l.b16 %v914
      %v1693 = vunpack.c.l.b16 %v915
      %v1694 = vunpack.c.l.b16 %v916
      %v1695 = vunpack.c.l.b16 %v917
      %v1696 = vunpack.c.l.b16 %v918
      %v1697 = vunpack.c.l.b16 %v919
      %v1698 = vunpack.c.l.b16 %v920
      %v1699 = vunpack.c.l.b16 %v921
      %v1700 = vunpack.c.l.b16 %v922
      %v1701 = vunpack.c.l.b16 %v923
      %v1702 = vunpack.c.l.b16 %v924
      %v1703 = vunpack.c.l.b16 %v925
      %v1704 = vunpack.c.l.b16 %v926
      %v1705 = vunpack.c.l.b16 %v927
      %v1706 = vunpack.c.l.b16 %v928
      %v1707 = vunpack.c.l.b16 %v929
      %v1708 = vunpack.c.l.b16 %v930
      %v1709 = vunpack.c.l.b16 %v931
      %v1710 = vunpack.c.l.b16 %v932
      %v1711 = vunpack.c.l.b16 %v933
      %v1712 = vunpack.c.l.b16 %v934
      %v1713 = vunpack.c.l.b16 %v935
      %v1714 = vunpack.c.l.b16 %v936
      %v1715 = vunpack.c.l.b16 %v937
      %v1716 = vunpack.c.l.b16 %v938
      %v1717 = vpack.c.b16 %v1686, %v1685
      %v1718 = vpack.c.b16 %v1688, %v1687
      %v1719 = vpack.c.b16 %v1690, %v1689
      %v1720 = vpack.c.b16 %v1692, %v1691
      %v1721 = vpack.c.b16 %v1694, %v1693
      %v1722 = vpack.c.b16 %v1696, %v1695
      %v1723 = vpack.c.b16 %v1698, %v1697
      %v1724 = vpack.c.b16 %v1700, %v1699
      %v1725 = vpack.c.b16 %v1702, %v1701
      %v1726 = vpack.c.b16 %v1704, %v1703
      %v1727 = vpack.c.b16 %v1706, %v1705
      %v1728 = vpack.c.b16 %v1708, %v1707
      %v1729 = vpack.c.b16 %v1710, %v1709
      %v1730 = vpack.c.b16 %v1712, %v1711
      %v1731 = vpack.c.b16 %v1714, %v1713
      %v1732 = vpack.c.b16 %v1716, %v1715
      %1749 = vmatpush.bf16.msra.mxu0 %v1724
      %1750 = vmatpush.bf16.msra.mxu0 %v1723
      %1751 = vmatpush.bf16.msra.mxu0 %v1722
      %1752 = vmatpush.bf16.msra.mxu0 %v1721
      %1753 = vmatpush.bf16.msra.mxu0 %v1720
      %1754 = vmatpush.bf16.msra.mxu0 %v1719
      %1755 = vmatpush.bf16.msra.mxu0 %v1718
      %1756 = vmatpush.bf16.msra.mxu0 %v1717
      %1757 = vmatmul.bf16.gmra.mxu0 %v891
      %v1758 = vpop.f32.mrf.mxu0
      %v1759 = vadd.f32 %v1614, %v1758
      %v1760 = vpop.f32.mrf.mxu0
      %v1761 = vadd.f32 %v1616, %v1760
      %1762 = vmatmul.bf16.gmra.mxu0 %v893
      %v1763 = vpop.f32.mrf.mxu0
      %v1764 = vadd.f32 %v1619, %v1763
      %v1765 = vpop.f32.mrf.mxu0
      %v1766 = vadd.f32 %v1621, %v1765
      %1767 = vmatmul.bf16.gmra.mxu0 %v895
      %v1768 = vpop.f32.mrf.mxu0
      %v1769 = vadd.f32 %v1624, %v1768
      %v1770 = vpop.f32.mrf.mxu0
      %v1771 = vadd.f32 %v1626, %v1770
      %1772 = vmatmul.bf16.gmra.mxu0 %v897
      %v1773 = vpop.f32.mrf.mxu0
      %v1774 = vadd.f32 %v1629, %v1773
      %v1775 = vpop.f32.mrf.mxu0
      %v1776 = vadd.f32 %v1631, %v1775
      %1777 = vmatmul.bf16.gmra.mxu0 %v899
      %v1778 = vpop.f32.mrf.mxu0
      %v1779 = vadd.f32 %v1634, %v1778
      %v1780 = vpop.f32.mrf.mxu0
      %v1781 = vadd.f32 %v1636, %v1780
      %1782 = vmatmul.bf16.gmra.mxu0 %v901
      %v1783 = vpop.f32.mrf.mxu0
      %v1784 = vadd.f32 %v1639, %v1783
      %v1785 = vpop.f32.mrf.mxu0
      %v1786 = vadd.f32 %v1641, %v1785
      %1787 = vmatmul.bf16.gmra.mxu0 %v903
      %v1788 = vpop.f32.mrf.mxu0
      %v1789 = vadd.f32 %v1644, %v1788
      %v1790 = vpop.f32.mrf.mxu0
      %v1791 = vadd.f32 %v1646, %v1790
      %1792 = vmatmul.bf16.gmra.mxu0 %v905
      %v1793 = vpop.f32.mrf.mxu0
      %v1794 = vadd.f32 %v1649, %v1793
      %v1795 = vpop.f32.mrf.mxu0
      %v1796 = vadd.f32 %v1651, %v1795
      %1797 = vdwg.mxu0
      %1798 = vmatpush.bf16.msra.mxu0 %v1732
      %1799 = vmatpush.bf16.msra.mxu0 %v1731
      %1800 = vmatpush.bf16.msra.mxu0 %v1730
      %1801 = vmatpush.bf16.msra.mxu0 %v1729
      %1802 = vmatpush.bf16.msra.mxu0 %v1728
      %1803 = vmatpush.bf16.msra.mxu0 %v1727
      %1804 = vmatpush.bf16.msra.mxu0 %v1726
      %1805 = vmatpush.bf16.msra.mxu0 %v1725
      %1806 = vmatmul.bf16.gmra.mxu0 %v892
      %v1807 = vpop.f32.mrf.mxu0
      %v1808 = vadd.f32 %v1759, %v1807
      %v1809 = vpop.f32.mrf.mxu0
      %v1810 = vadd.f32 %v1761, %v1809
      %1811 = vmatmul.bf16.gmra.mxu0 %v894
      %v1812 = vpop.f32.mrf.mxu0
      %v1813 = vadd.f32 %v1764, %v1812
      %v1814 = vpop.f32.mrf.mxu0
      %v1815 = vadd.f32 %v1766, %v1814
      %1816 = vmatmul.bf16.gmra.mxu0 %v896
      %v1817 = vpop.f32.mrf.mxu0
      %v1818 = vadd.f32 %v1769, %v1817
      %v1819 = vpop.f32.mrf.mxu0
      %v1820 = vadd.f32 %v1771, %v1819
      %1821 = vmatmul.bf16.gmra.mxu0 %v898
      %v1822 = vpop.f32.mrf.mxu0
      %v1823 = vadd.f32 %v1774, %v1822
      %v1824 = vpop.f32.mrf.mxu0
      %v1825 = vadd.f32 %v1776, %v1824
      %1826 = vmatmul.bf16.gmra.mxu0 %v900
      %v1827 = vpop.f32.mrf.mxu0
      %v1828 = vadd.f32 %v1779, %v1827
      %v1829 = vpop.f32.mrf.mxu0
      %v1830 = vadd.f32 %v1781, %v1829
      %1831 = vmatmul.bf16.gmra.mxu0 %v902
      %v1832 = vpop.f32.mrf.mxu0
      %v1833 = vadd.f32 %v1784, %v1832
      %v1834 = vpop.f32.mrf.mxu0
      %v1835 = vadd.f32 %v1786, %v1834
      %1836 = vmatmul.bf16.gmra.mxu0 %v904
      %v1837 = vpop.f32.mrf.mxu0
      %v1838 = vadd.f32 %v1789, %v1837
      %v1839 = vpop.f32.mrf.mxu0
      %v1840 = vadd.f32 %v1791, %v1839
      %1841 = vmatmul.bf16.gmra.mxu0 %v906
      %v1842 = vpop.f32.mrf.mxu0
      %v1843 = vadd.f32 %v1794, %v1842
      %v1844 = vpop.f32.mrf.mxu0
      %v1845 = vadd.f32 %v1796, %v1844
      %1846 = vdwg.mxu0
      %s1847 = scalar_lea.vmem %s2, 2
      %v1848 = vld [vmem:[%s1847] ss:$4 sm:$0x3]
      %1849 = vset.pattern.permute.xlu0 2
      %1850 = vperm.xlu0 %1849, %v389
      %v1851 = vpop.permute.xlu0 %1850
      %1853 = vset.pattern.permute.xlu0 2
      %1854 = vperm.xlu0 %1853, %v390
      %v1855 = vpop.permute.xlu0 %1854
      %1857 = vset.pattern.permute.xlu0 2
      %1858 = vperm.xlu0 %1857, %v391
      %v1859 = vpop.permute.xlu0 %1858
      %1861 = vset.pattern.permute.xlu0 2
      %1862 = vperm.xlu0 %1861, %v392
      %v1863 = vpop.permute.xlu0 %1862
      %1865 = vset.pattern.permute.xlu0 2
      %1866 = vperm.xlu0 %1865, %v393
      %v1867 = vpop.permute.xlu0 %1866
      %1869 = vset.pattern.permute.xlu0 2
      %1870 = vperm.xlu0 %1869, %v394
      %v1871 = vpop.permute.xlu0 %1870
      %1873 = vset.pattern.permute.xlu0 2
      %1874 = vperm.xlu0 %1873, %v395
      %v1875 = vpop.permute.xlu0 %1874
      %1877 = vset.pattern.permute.xlu0 2
      %1878 = vperm.xlu0 %1877, %v396
      %v1879 = vpop.permute.xlu0 %1878
      %1881 = vset.pattern.permute.xlu0 2
      %1882 = vperm.xlu0 %1881, %v397
      %v1883 = vpop.permute.xlu0 %1882
      %1885 = vset.pattern.permute.xlu0 2
      %1886 = vperm.xlu0 %1885, %v398
      %v1887 = vpop.permute.xlu0 %1886
      %1889 = vset.pattern.permute.xlu0 2
      %1890 = vperm.xlu0 %1889, %v399
      %v1891 = vpop.permute.xlu0 %1890
      %1893 = vset.pattern.permute.xlu0 2
      %1894 = vperm.xlu0 %1893, %v400
      %v1895 = vpop.permute.xlu0 %1894
      %1897 = vset.pattern.permute.xlu0 2
      %1898 = vperm.xlu0 %1897, %v401
      %v1899 = vpop.permute.xlu0 %1898
      %1901 = vset.pattern.permute.xlu0 2
      %1902 = vperm.xlu0 %1901, %v402
      %v1903 = vpop.permute.xlu0 %1902
      %1905 = vset.pattern.permute.xlu0 2
      %1906 = vperm.xlu0 %1905, %v403
      %v1907 = vpop.permute.xlu0 %1906
      %1909 = vset.pattern.permute.xlu0 2
      %1910 = vperm.xlu0 %1909, %v404
      %v1911 = vpop.permute.xlu0 %1910
      %v1914 = vperm.slane %v1848, 0
      %v1915 = vperm.slane %v1848, 1
      %v1918 = vadd.f32 %v1851, %v1914
      %v1919 = vadd.f32 %v1851, %v1915
      %v1920 = vadd.f32 %v1855, %v1914
      %v1921 = vadd.f32 %v1855, %v1915
      %v1922 = vadd.f32 %v1859, %v1914
      %v1923 = vadd.f32 %v1859, %v1915
      %v1924 = vadd.f32 %v1863, %v1914
      %v1925 = vadd.f32 %v1863, %v1915
      %v1926 = vadd.f32 %v1867, %v1914
      %v1927 = vadd.f32 %v1867, %v1915
      %v1928 = vadd.f32 %v1871, %v1914
      %v1929 = vadd.f32 %v1871, %v1915
      %v1930 = vadd.f32 %v1875, %v1914
      %v1931 = vadd.f32 %v1875, %v1915
      %v1932 = vadd.f32 %v1879, %v1914
      %v1933 = vadd.f32 %v1879, %v1915
      %v1934 = vadd.f32 %v1883, %v1914
      %v1935 = vadd.f32 %v1883, %v1915
      %v1936 = vadd.f32 %v1887, %v1914
      %v1937 = vadd.f32 %v1887, %v1915
      %v1938 = vadd.f32 %v1891, %v1914
      %v1939 = vadd.f32 %v1891, %v1915
      %v1940 = vadd.f32 %v1895, %v1914
      %v1941 = vadd.f32 %v1895, %v1915
      %v1942 = vadd.f32 %v1899, %v1914
      %v1943 = vadd.f32 %v1899, %v1915
      %v1944 = vadd.f32 %v1903, %v1914
      %v1945 = vadd.f32 %v1903, %v1915
      %v1946 = vadd.f32 %v1907, %v1914
      %v1947 = vadd.f32 %v1907, %v1915
      %v1948 = vadd.f32 %v1911, %v1914
      %v1949 = vadd.f32 %v1911, %v1915
      %vm1950 = vcmp.gt.f32.partialorder %v1918, 0.0
      %vm1951 = vcmp.gt.f32.partialorder %v1919, 0.0
      %vm1952 = vcmp.gt.f32.partialorder %v1920, 0.0
      %vm1953 = vcmp.gt.f32.partialorder %v1921, 0.0
      %vm1954 = vcmp.gt.f32.partialorder %v1922, 0.0
      %vm1955 = vcmp.gt.f32.partialorder %v1923, 0.0
      %vm1956 = vcmp.gt.f32.partialorder %v1924, 0.0
      %vm1957 = vcmp.gt.f32.partialorder %v1925, 0.0
      %vm1958 = vcmp.gt.f32.partialorder %v1926, 0.0
      %vm1959 = vcmp.gt.f32.partialorder %v1927, 0.0
      %vm1960 = vcmp.gt.f32.partialorder %v1928, 0.0
      %vm1961 = vcmp.gt.f32.partialorder %v1929, 0.0
      %vm1962 = vcmp.gt.f32.partialorder %v1930, 0.0
      %vm1963 = vcmp.gt.f32.partialorder %v1931, 0.0
      %vm1964 = vcmp.gt.f32.partialorder %v1932, 0.0
      %vm1965 = vcmp.gt.f32.partialorder %v1933, 0.0
      %vm1966 = vcmp.gt.f32.partialorder %v1934, 0.0
      %vm1967 = vcmp.gt.f32.partialorder %v1935, 0.0
      %vm1968 = vcmp.gt.f32.partialorder %v1936, 0.0
      %vm1969 = vcmp.gt.f32.partialorder %v1937, 0.0
      %vm1970 = vcmp.gt.f32.partialorder %v1938, 0.0
      %vm1971 = vcmp.gt.f32.partialorder %v1939, 0.0
      %vm1972 = vcmp.gt.f32.partialorder %v1940, 0.0
      %vm1973 = vcmp.gt.f32.partialorder %v1941, 0.0
      %vm1974 = vcmp.gt.f32.partialorder %v1942, 0.0
      %vm1975 = vcmp.gt.f32.partialorder %v1943, 0.0
      %vm1976 = vcmp.gt.f32.partialorder %v1944, 0.0
      %vm1977 = vcmp.gt.f32.partialorder %v1945, 0.0
      %vm1978 = vcmp.gt.f32.partialorder %v1946, 0.0
      %vm1979 = vcmp.gt.f32.partialorder %v1947, 0.0
      %vm1980 = vcmp.gt.f32.partialorder %v1948, 0.0
      %vm1981 = vcmp.gt.f32.partialorder %v1949, 0.0
      %v1982 = vmul.f32 %v1918, 0.2
      %v1983 = vmul.f32 %v1919, 0.2
      %v1984 = vmul.f32 %v1920, 0.2
      %v1985 = vmul.f32 %v1921, 0.2
      %v1986 = vmul.f32 %v1922, 0.2
      %v1987 = vmul.f32 %v1923, 0.2
      %v1988 = vmul.f32 %v1924, 0.2
      %v1989 = vmul.f32 %v1925, 0.2
      %v1990 = vmul.f32 %v1926, 0.2
      %v1991 = vmul.f32 %v1927, 0.2
      %v1992 = vmul.f32 %v1928, 0.2
      %v1993 = vmul.f32 %v1929, 0.2
      %v1994 = vmul.f32 %v1930, 0.2
      %v1995 = vmul.f32 %v1931, 0.2
      %v1996 = vmul.f32 %v1932, 0.2
      %v1997 = vmul.f32 %v1933, 0.2
      %v1998 = vmul.f32 %v1934, 0.2
      %v1999 = vmul.f32 %v1935, 0.2
      %v2000 = vmul.f32 %v1936, 0.2
      %v2001 = vmul.f32 %v1937, 0.2
      %v2002 = vmul.f32 %v1938, 0.2
      %v2003 = vmul.f32 %v1939, 0.2
      %v2004 = vmul.f32 %v1940, 0.2
      %v2005 = vmul.f32 %v1941, 0.2
      %v2006 = vmul.f32 %v1942, 0.2
      %v2007 = vmul.f32 %v1943, 0.2
      %v2008 = vmul.f32 %v1944, 0.2
      %v2009 = vmul.f32 %v1945, 0.2
      %v2010 = vmul.f32 %v1946, 0.2
      %v2011 = vmul.f32 %v1947, 0.2
      %v2012 = vmul.f32 %v1948, 0.2
      %v2013 = vmul.f32 %v1949, 0.2
      %v2014 = vsel %vm1950, %v1918, %v1982
      %v2015 = vsel %vm1951, %v1919, %v1983
      %v2016 = vsel %vm1952, %v1920, %v1984
      %v2017 = vsel %vm1953, %v1921, %v1985
      %v2018 = vsel %vm1954, %v1922, %v1986
      %v2019 = vsel %vm1955, %v1923, %v1987
      %v2020 = vsel %vm1956, %v1924, %v1988
      %v2021 = vsel %vm1957, %v1925, %v1989
      %v2022 = vsel %vm1958, %v1926, %v1990
      %v2023 = vsel %vm1959, %v1927, %v1991
      %v2024 = vsel %vm1960, %v1928, %v1992
      %v2025 = vsel %vm1961, %v1929, %v1993
      %v2026 = vsel %vm1962, %v1930, %v1994
      %v2027 = vsel %vm1963, %v1931, %v1995
      %v2028 = vsel %vm1964, %v1932, %v1996
      %v2029 = vsel %vm1965, %v1933, %v1997
      %v2030 = vsel %vm1966, %v1934, %v1998
      %v2031 = vsel %vm1967, %v1935, %v1999
      %v2032 = vsel %vm1968, %v1936, %v2000
      %v2033 = vsel %vm1969, %v1937, %v2001
      %v2034 = vsel %vm1970, %v1938, %v2002
      %v2035 = vsel %vm1971, %v1939, %v2003
      %v2036 = vsel %vm1972, %v1940, %v2004
      %v2037 = vsel %vm1973, %v1941, %v2005
      %v2038 = vsel %vm1974, %v1942, %v2006
      %v2039 = vsel %vm1975, %v1943, %v2007
      %v2040 = vsel %vm1976, %v1944, %v2008
      %v2041 = vsel %vm1977, %v1945, %v2009
      %v2042 = vsel %vm1978, %v1946, %v2010
      %v2043 = vsel %vm1979, %v1947, %v2011
      %v2044 = vsel %vm1980, %v1948, %v2012
      %v2045 = vsel %vm1981, %v1949, %v2013
      %v2046 = vadd.f32 %v2014, %v357
      %v2047 = vadd.f32 %v2015, %v358
      %v2048 = vadd.f32 %v2016, %v359
      %v2049 = vadd.f32 %v2017, %v360
      %v2050 = vadd.f32 %v2018, %v361
      %v2051 = vadd.f32 %v2019, %v362
      %v2052 = vadd.f32 %v2020, %v363
      %v2053 = vadd.f32 %v2021, %v364
      %v2054 = vadd.f32 %v2022, %v365
      %v2055 = vadd.f32 %v2023, %v366
      %v2056 = vadd.f32 %v2024, %v367
      %v2057 = vadd.f32 %v2025, %v368
      %v2058 = vadd.f32 %v2026, %v369
      %v2059 = vadd.f32 %v2027, %v370
      %v2060 = vadd.f32 %v2028, %v371
      %v2061 = vadd.f32 %v2029, %v372
      %v2062 = vadd.f32 %v2030, %v373
      %v2063 = vadd.f32 %v2031, %v374
      %v2064 = vadd.f32 %v2032, %v375
      %v2065 = vadd.f32 %v2033, %v376
      %v2066 = vadd.f32 %v2034, %v377
      %v2067 = vadd.f32 %v2035, %v378
      %v2068 = vadd.f32 %v2036, %v379
      %v2069 = vadd.f32 %v2037, %v380
      %v2070 = vadd.f32 %v2038, %v381
      %v2071 = vadd.f32 %v2039, %v382
      %v2072 = vadd.f32 %v2040, %v383
      %v2073 = vadd.f32 %v2041, %v384
      %v2074 = vadd.f32 %v2042, %v385
      %v2075 = vadd.f32 %v2043, %v386
      %v2076 = vadd.f32 %v2044, %v387
      %v2077 = vadd.f32 %v2045, %v388
      %v2078 = vmax.f32 %v2046, %v2047
      %2079 = vmax.xlane.f32.xlu0 %v2078
      %v2080 = vpop.xlane.xlu0 %2079
      %v2081 = vmax.f32 %v2048, %v2049
      %2082 = vmax.xlane.f32.xlu0 %v2081
      %v2083 = vpop.xlane.xlu0 %2082
      %v2084 = vmax.f32 %v2050, %v2051
      %2085 = vmax.xlane.f32.xlu0 %v2084
      %v2086 = vpop.xlane.xlu0 %2085
      %v2087 = vmax.f32 %v2052, %v2053
      %2088 = vmax.xlane.f32.xlu0 %v2087
      %v2089 = vpop.xlane.xlu0 %2088
      %v2090 = vmax.f32 %v2054, %v2055
      %2091 = vmax.xlane.f32.xlu0 %v2090
      %v2092 = vpop.xlane.xlu0 %2091
      %v2093 = vmax.f32 %v2056, %v2057
      %2094 = vmax.xlane.f32.xlu0 %v2093
      %v2095 = vpop.xlane.xlu0 %2094
      %v2096 = vmax.f32 %v2058, %v2059
      %2097 = vmax.xlane.f32.xlu0 %v2096
      %v2098 = vpop.xlane.xlu0 %2097
      %v2099 = vmax.f32 %v2060, %v2061
      %2100 = vmax.xlane.f32.xlu0 %v2099
      %v2101 = vpop.xlane.xlu0 %2100
      %v2102 = vmax.f32 %v2062, %v2063
      %2103 = vmax.xlane.f32.xlu0 %v2102
      %v2104 = vpop.xlane.xlu0 %2103
      %v2105 = vmax.f32 %v2064, %v2065
      %2106 = vmax.xlane.f32.xlu0 %v2105
      %v2107 = vpop.xlane.xlu0 %2106
      %v2108 = vmax.f32 %v2066, %v2067
      %2109 = vmax.xlane.f32.xlu0 %v2108
      %v2110 = vpop.xlane.xlu0 %2109
      %v2111 = vmax.f32 %v2068, %v2069
      %2112 = vmax.xlane.f32.xlu0 %v2111
      %v2113 = vpop.xlane.xlu0 %2112
      %v2114 = vmax.f32 %v2070, %v2071
      %2115 = vmax.xlane.f32.xlu0 %v2114
      %v2116 = vpop.xlane.xlu0 %2115
      %v2117 = vmax.f32 %v2072, %v2073
      %2118 = vmax.xlane.f32.xlu0 %v2117
      %v2119 = vpop.xlane.xlu0 %2118
      %v2120 = vmax.f32 %v2074, %v2075
      %2121 = vmax.xlane.f32.xlu0 %v2120
      %v2122 = vpop.xlane.xlu0 %2121
      %v2123 = vmax.f32 %v2076, %v2077
      %2124 = vmax.xlane.f32.xlu0 %v2123
      %v2125 = vpop.xlane.xlu0 %2124
      %v2126 = vsub.f32 %v2046, %v2080
      %v2127 = vsub.f32 %v2047, %v2080
      %v2128 = vsub.f32 %v2048, %v2083
      %v2129 = vsub.f32 %v2049, %v2083
      %v2130 = vsub.f32 %v2050, %v2086
      %v2131 = vsub.f32 %v2051, %v2086
      %v2132 = vsub.f32 %v2052, %v2089
      %v2133 = vsub.f32 %v2053, %v2089
      %v2134 = vsub.f32 %v2054, %v2092
      %v2135 = vsub.f32 %v2055, %v2092
      %v2136 = vsub.f32 %v2056, %v2095
      %v2137 = vsub.f32 %v2057, %v2095
      %v2138 = vsub.f32 %v2058, %v2098
      %v2139 = vsub.f32 %v2059, %v2098
      %v2140 = vsub.f32 %v2060, %v2101
      %v2141 = vsub.f32 %v2061, %v2101
      %v2142 = vsub.f32 %v2062, %v2104
      %v2143 = vsub.f32 %v2063, %v2104
      %v2144 = vsub.f32 %v2064, %v2107
      %v2145 = vsub.f32 %v2065, %v2107
      %v2146 = vsub.f32 %v2066, %v2110
      %v2147 = vsub.f32 %v2067, %v2110
      %v2148 = vsub.f32 %v2068, %v2113
      %v2149 = vsub.f32 %v2069, %v2113
      %v2150 = vsub.f32 %v2070, %v2116
      %v2151 = vsub.f32 %v2071, %v2116
      %v2152 = vsub.f32 %v2072, %v2119
      %v2153 = vsub.f32 %v2073, %v2119
      %v2154 = vsub.f32 %v2074, %v2122
      %v2155 = vsub.f32 %v2075, %v2122
      %v2156 = vsub.f32 %v2076, %v2125
      %v2157 = vsub.f32 %v2077, %v2125
      %v2158 = vmul.f32 %v2126, 1.442695
      %v2159 = vpow.pop %v2158
      %v2160 = vmul.f32 %v2127, 1.442695
      %v2161 = vpow.pop %v2160
      %v2162 = vmul.f32 %v2128, 1.442695
      %v2163 = vpow.pop %v2162
      %v2164 = vmul.f32 %v2129, 1.442695
      %v2165 = vpow.pop %v2164
      %v2166 = vmul.f32 %v2130, 1.442695
      %v2167 = vpow.pop %v2166
      %v2168 = vmul.f32 %v2131, 1.442695
      %v2169 = vpow.pop %v2168
      %v2170 = vmul.f32 %v2132, 1.442695
      %v2171 = vpow.pop %v2170
      %v2172 = vmul.f32 %v2133, 1.442695
      %v2173 = vpow.pop %v2172
      %v2174 = vmul.f32 %v2134, 1.442695
      %v2175 = vpow.pop %v2174
      %v2176 = vmul.f32 %v2135, 1.442695
      %v2177 = vpow.pop %v2176
      %v2178 = vmul.f32 %v2136, 1.442695
      %v2179 = vpow.pop %v2178
      %v2180 = vmul.f32 %v2137, 1.442695
      %v2181 = vpow.pop %v2180
      %v2182 = vmul.f32 %v2138, 1.442695
      %v2183 = vpow.pop %v2182
      %v2184 = vmul.f32 %v2139, 1.442695
      %v2185 = vpow.pop %v2184
      %v2186 = vmul.f32 %v2140, 1.442695
      %v2187 = vpow.pop %v2186
      %v2188 = vmul.f32 %v2141, 1.442695
      %v2189 = vpow.pop %v2188
      %v2190 = vmul.f32 %v2142, 1.442695
      %v2191 = vpow.pop %v2190
      %v2192 = vmul.f32 %v2143, 1.442695
      %v2193 = vpow.pop %v2192
      %v2194 = vmul.f32 %v2144, 1.442695
      %v2195 = vpow.pop %v2194
      %v2196 = vmul.f32 %v2145, 1.442695
      %v2197 = vpow.pop %v2196
      %v2198 = vmul.f32 %v2146, 1.442695
      %v2199 = vpow.pop %v2198
      %v2200 = vmul.f32 %v2147, 1.442695
      %v2201 = vpow.pop %v2200
      %v2202 = vmul.f32 %v2148, 1.442695
      %v2203 = vpow.pop %v2202
      %v2204 = vmul.f32 %v2149, 1.442695
      %v2205 = vpow.pop %v2204
      %v2206 = vmul.f32 %v2150, 1.442695
      %v2207 = vpow.pop %v2206
      %v2208 = vmul.f32 %v2151, 1.442695
      %v2209 = vpow.pop %v2208
      %v2210 = vmul.f32 %v2152, 1.442695
      %v2211 = vpow.pop %v2210
      %v2212 = vmul.f32 %v2153, 1.442695
      %v2213 = vpow.pop %v2212
      %v2214 = vmul.f32 %v2154, 1.442695
      %v2215 = vpow.pop %v2214
      %v2216 = vmul.f32 %v2155, 1.442695
      %v2217 = vpow.pop %v2216
      %v2218 = vmul.f32 %v2156, 1.442695
      %v2219 = vpow.pop %v2218
      %v2220 = vmul.f32 %v2157, 1.442695
      %v2221 = vpow.pop %v2220
      %v2222 = vadd.f32 %v2159, %v2161
      %2223 = vadd.xlane.f32.xlu0 %v2222
      %v2224 = vpop.xlane.xlu0 %2223
      %v2225 = vadd.f32 %v2163, %v2165
      %2226 = vadd.xlane.f32.xlu0 %v2225
      %v2227 = vpop.xlane.xlu0 %2226
      %v2228 = vadd.f32 %v2167, %v2169
      %2229 = vadd.xlane.f32.xlu0 %v2228
      %v2230 = vpop.xlane.xlu0 %2229
      %v2231 = vadd.f32 %v2171, %v2173
      %2232 = vadd.xlane.f32.xlu0 %v2231
      %v2233 = vpop.xlane.xlu0 %2232
      %v2234 = vadd.f32 %v2175, %v2177
      %2235 = vadd.xlane.f32.xlu0 %v2234
      %v2236 = vpop.xlane.xlu0 %2235
      %v2237 = vadd.f32 %v2179, %v2181
      %2238 = vadd.xlane.f32.xlu0 %v2237
      %v2239 = vpop.xlane.xlu0 %2238
      %v2240 = vadd.f32 %v2183, %v2185
      %2241 = vadd.xlane.f32.xlu0 %v2240
      %v2242 = vpop.xlane.xlu0 %2241
      %v2243 = vadd.f32 %v2187, %v2189
      %2244 = vadd.xlane.f32.xlu0 %v2243
      %v2245 = vpop.xlane.xlu0 %2244
      %v2246 = vadd.f32 %v2191, %v2193
      %2247 = vadd.xlane.f32.xlu0 %v2246
      %v2248 = vpop.xlane.xlu0 %2247
      %v2249 = vadd.f32 %v2195, %v2197
      %2250 = vadd.xlane.f32.xlu0 %v2249
      %v2251 = vpop.xlane.xlu0 %2250
      %v2252 = vadd.f32 %v2199, %v2201
      %2253 = vadd.xlane.f32.xlu0 %v2252
      %v2254 = vpop.xlane.xlu0 %2253
      %v2255 = vadd.f32 %v2203, %v2205
      %2256 = vadd.xlane.f32.xlu0 %v2255
      %v2257 = vpop.xlane.xlu0 %2256
      %v2258 = vadd.f32 %v2207, %v2209
      %2259 = vadd.xlane.f32.xlu0 %v2258
      %v2260 = vpop.xlane.xlu0 %2259
      %v2261 = vadd.f32 %v2211, %v2213
      %2262 = vadd.xlane.f32.xlu0 %v2261
      %v2263 = vpop.xlane.xlu0 %2262
      %v2264 = vadd.f32 %v2215, %v2217
      %2265 = vadd.xlane.f32.xlu0 %v2264
      %v2266 = vpop.xlane.xlu0 %2265
      %v2267 = vadd.f32 %v2219, %v2221
      %2268 = vadd.xlane.f32.xlu0 %v2267
      %v2269 = vpop.xlane.xlu0 %2268
      %v2270 = vrcp.pop %v2224
      %v2271 = vrcp.pop %v2227
      %v2272 = vrcp.pop %v2230
      %v2273 = vrcp.pop %v2233
      %v2274 = vrcp.pop %v2236
      %v2275 = vrcp.pop %v2239
      %v2276 = vrcp.pop %v2242
      %v2277 = vrcp.pop %v2245
      %v2278 = vrcp.pop %v2248
      %v2279 = vrcp.pop %v2251
      %v2280 = vrcp.pop %v2254
      %v2281 = vrcp.pop %v2257
      %v2282 = vrcp.pop %v2260
      %v2283 = vrcp.pop %v2263
      %v2284 = vrcp.pop %v2266
      %v2285 = vrcp.pop %v2269
      %v2286 = vmul.f32 %v2159, %v2270
      %v2287 = vmul.f32 %v2161, %v2270
      %v2288 = vmul.f32 %v2163, %v2271
      %v2289 = vmul.f32 %v2165, %v2271
      %v2290 = vmul.f32 %v2167, %v2272
      %v2291 = vmul.f32 %v2169, %v2272
      %v2292 = vmul.f32 %v2171, %v2273
      %v2293 = vmul.f32 %v2173, %v2273
      %v2294 = vmul.f32 %v2175, %v2274
      %v2295 = vmul.f32 %v2177, %v2274
      %v2296 = vmul.f32 %v2179, %v2275
      %v2297 = vmul.f32 %v2181, %v2275
      %v2298 = vmul.f32 %v2183, %v2276
      %v2299 = vmul.f32 %v2185, %v2276
      %v2300 = vmul.f32 %v2187, %v2277
      %v2301 = vmul.f32 %v2189, %v2277
      %v2302 = vmul.f32 %v2191, %v2278
      %v2303 = vmul.f32 %v2193, %v2278
      %v2304 = vmul.f32 %v2195, %v2279
      %v2305 = vmul.f32 %v2197, %v2279
      %v2306 = vmul.f32 %v2199, %v2280
      %v2307 = vmul.f32 %v2201, %v2280
      %v2308 = vmul.f32 %v2203, %v2281
      %v2309 = vmul.f32 %v2205, %v2281
      %v2310 = vmul.f32 %v2207, %v2282
      %v2311 = vmul.f32 %v2209, %v2282
      %v2312 = vmul.f32 %v2211, %v2283
      %v2313 = vmul.f32 %v2213, %v2283
      %v2314 = vmul.f32 %v2215, %v2284
      %v2315 = vmul.f32 %v2217, %v2284
      %v2316 = vmul.f32 %v2219, %v2285
      %v2317 = vmul.f32 %v2221, %v2285
      %v2318 = vpack.c.bf16 %v2288, %v2286
      %v2319 = vpack.c.bf16 %v2289, %v2287
      %v2320 = vpack.c.bf16 %v2292, %v2290
      %v2321 = vpack.c.bf16 %v2293, %v2291
      %v2322 = vpack.c.bf16 %v2296, %v2294
      %v2323 = vpack.c.bf16 %v2297, %v2295
      %v2324 = vpack.c.bf16 %v2300, %v2298
      %v2325 = vpack.c.bf16 %v2301, %v2299
      %v2326 = vpack.c.bf16 %v2304, %v2302
      %v2327 = vpack.c.bf16 %v2305, %v2303
      %v2328 = vpack.c.bf16 %v2308, %v2306
      %v2329 = vpack.c.bf16 %v2309, %v2307
      %v2330 = vpack.c.bf16 %v2312, %v2310
      %v2331 = vpack.c.bf16 %v2313, %v2311
      %v2332 = vpack.c.bf16 %v2316, %v2314
      %v2333 = vpack.c.bf16 %v2317, %v2315
      %s2334 = scalar_lea.vmem %s3, 256
      %v2335 = vld [vmem:[%s2334] sm:$0xf]
      %v2336 = vld [vmem:[%s2334 + $0x4] sm:$0xf]
      %v2337 = vld [vmem:[%s2334 + $0x8] sm:$0xf]
      %v2338 = vld [vmem:[%s2334 + $0xc] sm:$0xf]
      %v2339 = vld [vmem:[%s2334 + $0x10] sm:$0xf]
      %v2340 = vld [vmem:[%s2334 + $0x14] sm:$0xf]
      %v2341 = vld [vmem:[%s2334 + $0x18] sm:$0xf]
      %v2342 = vld [vmem:[%s2334 + $0x1c] sm:$0xf]
      %v2343 = vld [vmem:[%s2334 + $0x20] sm:$0xf]
      %v2344 = vld [vmem:[%s2334 + $0x24] sm:$0xf]
      %v2345 = vld [vmem:[%s2334 + $0x28] sm:$0xf]
      %v2346 = vld [vmem:[%s2334 + $0x2c] sm:$0xf]
      %v2347 = vld [vmem:[%s2334 + $0x30] sm:$0xf]
      %v2348 = vld [vmem:[%s2334 + $0x34] sm:$0xf]
      %v2349 = vld [vmem:[%s2334 + $0x38] sm:$0xf]
      %v2350 = vld [vmem:[%s2334 + $0x3c] sm:$0xf]
      %v2351 = vld [vmem:[%s2334 + $0x40] sm:$0xf]
      %v2352 = vld [vmem:[%s2334 + $0x44] sm:$0xf]
      %v2353 = vld [vmem:[%s2334 + $0x48] sm:$0xf]
      %v2354 = vld [vmem:[%s2334 + $0x4c] sm:$0xf]
      %v2355 = vld [vmem:[%s2334 + $0x50] sm:$0xf]
      %v2356 = vld [vmem:[%s2334 + $0x54] sm:$0xf]
      %v2357 = vld [vmem:[%s2334 + $0x58] sm:$0xf]
      %v2358 = vld [vmem:[%s2334 + $0x5c] sm:$0xf]
      %v2359 = vld [vmem:[%s2334 + $0x60] sm:$0xf]
      %v2360 = vld [vmem:[%s2334 + $0x64] sm:$0xf]
      %v2361 = vld [vmem:[%s2334 + $0x68] sm:$0xf]
      %v2362 = vld [vmem:[%s2334 + $0x6c] sm:$0xf]
      %v2363 = vld [vmem:[%s2334 + $0x70] sm:$0xf]
      %v2364 = vld [vmem:[%s2334 + $0x74] sm:$0xf]
      %v2365 = vld [vmem:[%s2334 + $0x78] sm:$0xf]
      %v2366 = vld [vmem:[%s2334 + $0x7c] sm:$0xf]
      %v2399 = vunpack.c.l.b16 %v2335
      %v2400 = vunpack.c.l.b16 %v2336
      %v2401 = vunpack.c.l.b16 %v2337
      %v2402 = vunpack.c.l.b16 %v2338
      %v2403 = vunpack.c.l.b16 %v2339
      %v2404 = vunpack.c.l.b16 %v2340
      %v2405 = vunpack.c.l.b16 %v2341
      %v2406 = vunpack.c.l.b16 %v2342
      %v2407 = vunpack.c.l.b16 %v2343
      %v2408 = vunpack.c.l.b16 %v2344
      %v2409 = vunpack.c.l.b16 %v2345
      %v2410 = vunpack.c.l.b16 %v2346
      %v2411 = vunpack.c.l.b16 %v2347
      %v2412 = vunpack.c.l.b16 %v2348
      %v2413 = vunpack.c.l.b16 %v2349
      %v2414 = vunpack.c.l.b16 %v2350
      %v2415 = vunpack.c.l.b16 %v2351
      %v2416 = vunpack.c.l.b16 %v2352
      %v2417 = vunpack.c.l.b16 %v2353
      %v2418 = vunpack.c.l.b16 %v2354
      %v2419 = vunpack.c.l.b16 %v2355
      %v2420 = vunpack.c.l.b16 %v2356
      %v2421 = vunpack.c.l.b16 %v2357
      %v2422 = vunpack.c.l.b16 %v2358
      %v2423 = vunpack.c.l.b16 %v2359
      %v2424 = vunpack.c.l.b16 %v2360
      %v2425 = vunpack.c.l.b16 %v2361
      %v2426 = vunpack.c.l.b16 %v2362
      %v2427 = vunpack.c.l.b16 %v2363
      %v2428 = vunpack.c.l.b16 %v2364
      %v2429 = vunpack.c.l.b16 %v2365
      %v2430 = vunpack.c.l.b16 %v2366
      %v2431 = vpack.c.b16 %v2400, %v2399
      %v2432 = vpack.c.b16 %v2402, %v2401
      %v2433 = vpack.c.b16 %v2404, %v2403
      %v2434 = vpack.c.b16 %v2406, %v2405
      %v2435 = vpack.c.b16 %v2408, %v2407
      %v2436 = vpack.c.b16 %v2410, %v2409
      %v2437 = vpack.c.b16 %v2412, %v2411
      %v2438 = vpack.c.b16 %v2414, %v2413
      %v2439 = vpack.c.b16 %v2416, %v2415
      %v2440 = vpack.c.b16 %v2418, %v2417
      %v2441 = vpack.c.b16 %v2420, %v2419
      %v2442 = vpack.c.b16 %v2422, %v2421
      %v2443 = vpack.c.b16 %v2424, %v2423
      %v2444 = vpack.c.b16 %v2426, %v2425
      %v2445 = vpack.c.b16 %v2428, %v2427
      %v2446 = vpack.c.b16 %v2430, %v2429
      %2463 = vmatpush.bf16.msra.mxu0 %v2438
      %2464 = vmatpush.bf16.msra.mxu0 %v2437
      %2465 = vmatpush.bf16.msra.mxu0 %v2436
      %2466 = vmatpush.bf16.msra.mxu0 %v2435
      %2467 = vmatpush.bf16.msra.mxu0 %v2434
      %2468 = vmatpush.bf16.msra.mxu0 %v2433
      %2469 = vmatpush.bf16.msra.mxu0 %v2432
      %2470 = vmatpush.bf16.msra.mxu0 %v2431
      %2471 = vmatmul.bf16.gmra.mxu0 %v2318
      %v2472 = vpop.f32.mrf.mxu0
      %v2473 = vadd.f32 0.0, %v2472
      %v2474 = vpop.f32.mrf.mxu0
      %v2475 = vadd.f32 0.0, %v2474
      %2476 = vmatmul.bf16.gmra.mxu0 %v2320
      %v2477 = vpop.f32.mrf.mxu0
      %v2478 = vadd.f32 0.0, %v2477
      %v2479 = vpop.f32.mrf.mxu0
      %v2480 = vadd.f32 0.0, %v2479
      %2481 = vmatmul.bf16.gmra.mxu0 %v2322
      %v2482 = vpop.f32.mrf.mxu0
      %v2483 = vadd.f32 0.0, %v2482
      %v2484 = vpop.f32.mrf.mxu0
      %v2485 = vadd.f32 0.0, %v2484
      %2486 = vmatmul.bf16.gmra.mxu0 %v2324
      %v2487 = vpop.f32.mrf.mxu0
      %v2488 = vadd.f32 0.0, %v2487
      %v2489 = vpop.f32.mrf.mxu0
      %v2490 = vadd.f32 0.0, %v2489
      %2491 = vmatmul.bf16.gmra.mxu0 %v2326
      %v2492 = vpop.f32.mrf.mxu0
      %v2493 = vadd.f32 0.0, %v2492
      %v2494 = vpop.f32.mrf.mxu0
      %v2495 = vadd.f32 0.0, %v2494
      %2496 = vmatmul.bf16.gmra.mxu0 %v2328
      %v2497 = vpop.f32.mrf.mxu0
      %v2498 = vadd.f32 0.0, %v2497
      %v2499 = vpop.f32.mrf.mxu0
      %v2500 = vadd.f32 0.0, %v2499
      %2501 = vmatmul.bf16.gmra.mxu0 %v2330
      %v2502 = vpop.f32.mrf.mxu0
      %v2503 = vadd.f32 0.0, %v2502
      %v2504 = vpop.f32.mrf.mxu0
      %v2505 = vadd.f32 0.0, %v2504
      %2506 = vmatmul.bf16.gmra.mxu0 %v2332
      %v2507 = vpop.f32.mrf.mxu0
      %v2508 = vadd.f32 0.0, %v2507
      %v2509 = vpop.f32.mrf.mxu0
      %v2510 = vadd.f32 0.0, %v2509
      %2511 = vdwg.mxu0
      %2512 = vmatpush.bf16.msra.mxu0 %v2446
      %2513 = vmatpush.bf16.msra.mxu0 %v2445
      %2514 = vmatpush.bf16.msra.mxu0 %v2444
      %2515 = vmatpush.bf16.msra.mxu0 %v2443
      %2516 = vmatpush.bf16.msra.mxu0 %v2442
      %2517 = vmatpush.bf16.msra.mxu0 %v2441
      %2518 = vmatpush.bf16.msra.mxu0 %v2440
      %2519 = vmatpush.bf16.msra.mxu0 %v2439
      %2520 = vmatmul.bf16.gmra.mxu0 %v2319
      %v2521 = vpop.f32.mrf.mxu0
      %v2522 = vadd.f32 %v2473, %v2521
      %v2523 = vpop.f32.mrf.mxu0
      %v2524 = vadd.f32 %v2475, %v2523
      %2525 = vmatmul.bf16.gmra.mxu0 %v2321
      %v2526 = vpop.f32.mrf.mxu0
      %v2527 = vadd.f32 %v2478, %v2526
      %v2528 = vpop.f32.mrf.mxu0
      %v2529 = vadd.f32 %v2480, %v2528
      %2530 = vmatmul.bf16.gmra.mxu0 %v2323
      %v2531 = vpop.f32.mrf.mxu0
      %v2532 = vadd.f32 %v2483, %v2531
      %v2533 = vpop.f32.mrf.mxu0
      %v2534 = vadd.f32 %v2485, %v2533
      %2535 = vmatmul.bf16.gmra.mxu0 %v2325
      %v2536 = vpop.f32.mrf.mxu0
      %v2537 = vadd.f32 %v2488, %v2536
      %v2538 = vpop.f32.mrf.mxu0
      %v2539 = vadd.f32 %v2490, %v2538
      %2540 = vmatmul.bf16.gmra.mxu0 %v2327
      %v2541 = vpop.f32.mrf.mxu0
      %v2542 = vadd.f32 %v2493, %v2541
      %v2543 = vpop.f32.mrf.mxu0
      %v2544 = vadd.f32 %v2495, %v2543
      %2545 = vmatmul.bf16.gmra.mxu0 %v2329
      %v2546 = vpop.f32.mrf.mxu0
      %v2547 = vadd.f32 %v2498, %v2546
      %v2548 = vpop.f32.mrf.mxu0
      %v2549 = vadd.f32 %v2500, %v2548
      %2550 = vmatmul.bf16.gmra.mxu0 %v2331
      %v2551 = vpop.f32.mrf.mxu0
      %v2552 = vadd.f32 %v2503, %v2551
      %v2553 = vpop.f32.mrf.mxu0
      %v2554 = vadd.f32 %v2505, %v2553
      %2555 = vmatmul.bf16.gmra.mxu0 %v2333
      %v2556 = vpop.f32.mrf.mxu0
      %v2557 = vadd.f32 %v2508, %v2556
      %v2558 = vpop.f32.mrf.mxu0
      %v2559 = vadd.f32 %v2510, %v2558
      %2560 = vdwg.mxu0
      %v2561 = vadd.f32 %v1808, %v2522
      %v2562 = vadd.f32 %v1810, %v2524
      %v2563 = vadd.f32 %v1813, %v2527
      %v2564 = vadd.f32 %v1815, %v2529
      %v2565 = vadd.f32 %v1818, %v2532
      %v2566 = vadd.f32 %v1820, %v2534
      %v2567 = vadd.f32 %v1823, %v2537
      %v2568 = vadd.f32 %v1825, %v2539
      %v2569 = vadd.f32 %v1828, %v2542
      %v2570 = vadd.f32 %v1830, %v2544
      %v2571 = vadd.f32 %v1833, %v2547
      %v2572 = vadd.f32 %v1835, %v2549
      %v2573 = vadd.f32 %v1838, %v2552
      %v2574 = vadd.f32 %v1840, %v2554
      %v2575 = vadd.f32 %v1843, %v2557
      %v2576 = vadd.f32 %v1845, %v2559
      %s2577 = scalar_lea.vmem %s2, 3
      %v2578 = vld [vmem:[%s2577] ss:$4 sm:$0x3]
      %2579 = vset.pattern.permute.xlu0 3
      %2580 = vperm.xlu0 %2579, %v389
      %v2581 = vpop.permute.xlu0 %2580
      %2583 = vset.pattern.permute.xlu0 3
      %2584 = vperm.xlu0 %2583, %v390
      %v2585 = vpop.permute.xlu0 %2584
      %2587 = vset.pattern.permute.xlu0 3
      %2588 = vperm.xlu0 %2587, %v391
      %v2589 = vpop.permute.xlu0 %2588
      %2591 = vset.pattern.permute.xlu0 3
      %2592 = vperm.xlu0 %2591, %v392
      %v2593 = vpop.permute.xlu0 %2592
      %2595 = vset.pattern.permute.xlu0 3
      %2596 = vperm.xlu0 %2595, %v393
      %v2597 = vpop.permute.xlu0 %2596
      %2599 = vset.pattern.permute.xlu0 3
      %2600 = vperm.xlu0 %2599, %v394
      %v2601 = vpop.permute.xlu0 %2600
      %2603 = vset.pattern.permute.xlu0 3
      %2604 = vperm.xlu0 %2603, %v395
      %v2605 = vpop.permute.xlu0 %2604
      %2607 = vset.pattern.permute.xlu0 3
      %2608 = vperm.xlu0 %2607, %v396
      %v2609 = vpop.permute.xlu0 %2608
      %2611 = vset.pattern.permute.xlu0 3
      %2612 = vperm.xlu0 %2611, %v397
      %v2613 = vpop.permute.xlu0 %2612
      %2615 = vset.pattern.permute.xlu0 3
      %2616 = vperm.xlu0 %2615, %v398
      %v2617 = vpop.permute.xlu0 %2616
      %2619 = vset.pattern.permute.xlu0 3
      %2620 = vperm.xlu0 %2619, %v399
      %v2621 = vpop.permute.xlu0 %2620
      %2623 = vset.pattern.permute.xlu0 3
      %2624 = vperm.xlu0 %2623, %v400
      %v2625 = vpop.permute.xlu0 %2624
      %2627 = vset.pattern.permute.xlu0 3
      %2628 = vperm.xlu0 %2627, %v401
      %v2629 = vpop.permute.xlu0 %2628
      %2631 = vset.pattern.permute.xlu0 3
      %2632 = vperm.xlu0 %2631, %v402
      %v2633 = vpop.permute.xlu0 %2632
      %2635 = vset.pattern.permute.xlu0 3
      %2636 = vperm.xlu0 %2635, %v403
      %v2637 = vpop.permute.xlu0 %2636
      %2639 = vset.pattern.permute.xlu0 3
      %2640 = vperm.xlu0 %2639, %v404
      %v2641 = vpop.permute.xlu0 %2640
      %v2644 = vperm.slane %v2578, 0
      %v2645 = vperm.slane %v2578, 1
      %v2648 = vadd.f32 %v2581, %v2644
      %v2649 = vadd.f32 %v2581, %v2645
      %v2650 = vadd.f32 %v2585, %v2644
      %v2651 = vadd.f32 %v2585, %v2645
      %v2652 = vadd.f32 %v2589, %v2644
      %v2653 = vadd.f32 %v2589, %v2645
      %v2654 = vadd.f32 %v2593, %v2644
      %v2655 = vadd.f32 %v2593, %v2645
      %v2656 = vadd.f32 %v2597, %v2644
      %v2657 = vadd.f32 %v2597, %v2645
      %v2658 = vadd.f32 %v2601, %v2644
      %v2659 = vadd.f32 %v2601, %v2645
      %v2660 = vadd.f32 %v2605, %v2644
      %v2661 = vadd.f32 %v2605, %v2645
      %v2662 = vadd.f32 %v2609, %v2644
      %v2663 = vadd.f32 %v2609, %v2645
      %v2664 = vadd.f32 %v2613, %v2644
      %v2665 = vadd.f32 %v2613, %v2645
      %v2666 = vadd.f32 %v2617, %v2644
      %v2667 = vadd.f32 %v2617, %v2645
      %v2668 = vadd.f32 %v2621, %v2644
      %v2669 = vadd.f32 %v2621, %v2645
      %v2670 = vadd.f32 %v2625, %v2644
      %v2671 = vadd.f32 %v2625, %v2645
      %v2672 = vadd.f32 %v2629, %v2644
      %v2673 = vadd.f32 %v2629, %v2645
      %v2674 = vadd.f32 %v2633, %v2644
      %v2675 = vadd.f32 %v2633, %v2645
      %v2676 = vadd.f32 %v2637, %v2644
      %v2677 = vadd.f32 %v2637, %v2645
      %v2678 = vadd.f32 %v2641, %v2644
      %v2679 = vadd.f32 %v2641, %v2645
      %vm2680 = vcmp.gt.f32.partialorder %v2648, 0.0
      %vm2681 = vcmp.gt.f32.partialorder %v2649, 0.0
      %vm2682 = vcmp.gt.f32.partialorder %v2650, 0.0
      %vm2683 = vcmp.gt.f32.partialorder %v2651, 0.0
      %vm2684 = vcmp.gt.f32.partialorder %v2652, 0.0
      %vm2685 = vcmp.gt.f32.partialorder %v2653, 0.0
      %vm2686 = vcmp.gt.f32.partialorder %v2654, 0.0
      %vm2687 = vcmp.gt.f32.partialorder %v2655, 0.0
      %vm2688 = vcmp.gt.f32.partialorder %v2656, 0.0
      %vm2689 = vcmp.gt.f32.partialorder %v2657, 0.0
      %vm2690 = vcmp.gt.f32.partialorder %v2658, 0.0
      %vm2691 = vcmp.gt.f32.partialorder %v2659, 0.0
      %vm2692 = vcmp.gt.f32.partialorder %v2660, 0.0
      %vm2693 = vcmp.gt.f32.partialorder %v2661, 0.0
      %vm2694 = vcmp.gt.f32.partialorder %v2662, 0.0
      %vm2695 = vcmp.gt.f32.partialorder %v2663, 0.0
      %vm2696 = vcmp.gt.f32.partialorder %v2664, 0.0
      %vm2697 = vcmp.gt.f32.partialorder %v2665, 0.0
      %vm2698 = vcmp.gt.f32.partialorder %v2666, 0.0
      %vm2699 = vcmp.gt.f32.partialorder %v2667, 0.0
      %vm2700 = vcmp.gt.f32.partialorder %v2668, 0.0
      %vm2701 = vcmp.gt.f32.partialorder %v2669, 0.0
      %vm2702 = vcmp.gt.f32.partialorder %v2670, 0.0
      %vm2703 = vcmp.gt.f32.partialorder %v2671, 0.0
      %vm2704 = vcmp.gt.f32.partialorder %v2672, 0.0
      %vm2705 = vcmp.gt.f32.partialorder %v2673, 0.0
      %vm2706 = vcmp.gt.f32.partialorder %v2674, 0.0
      %vm2707 = vcmp.gt.f32.partialorder %v2675, 0.0
      %vm2708 = vcmp.gt.f32.partialorder %v2676, 0.0
      %vm2709 = vcmp.gt.f32.partialorder %v2677, 0.0
      %vm2710 = vcmp.gt.f32.partialorder %v2678, 0.0
      %vm2711 = vcmp.gt.f32.partialorder %v2679, 0.0
      %v2712 = vmul.f32 %v2648, 0.2
      %v2713 = vmul.f32 %v2649, 0.2
      %v2714 = vmul.f32 %v2650, 0.2
      %v2715 = vmul.f32 %v2651, 0.2
      %v2716 = vmul.f32 %v2652, 0.2
      %v2717 = vmul.f32 %v2653, 0.2
      %v2718 = vmul.f32 %v2654, 0.2
      %v2719 = vmul.f32 %v2655, 0.2
      %v2720 = vmul.f32 %v2656, 0.2
      %v2721 = vmul.f32 %v2657, 0.2
      %v2722 = vmul.f32 %v2658, 0.2
      %v2723 = vmul.f32 %v2659, 0.2
      %v2724 = vmul.f32 %v2660, 0.2
      %v2725 = vmul.f32 %v2661, 0.2
      %v2726 = vmul.f32 %v2662, 0.2
      %v2727 = vmul.f32 %v2663, 0.2
      %v2728 = vmul.f32 %v2664, 0.2
      %v2729 = vmul.f32 %v2665, 0.2
      %v2730 = vmul.f32 %v2666, 0.2
      %v2731 = vmul.f32 %v2667, 0.2
      %v2732 = vmul.f32 %v2668, 0.2
      %v2733 = vmul.f32 %v2669, 0.2
      %v2734 = vmul.f32 %v2670, 0.2
      %v2735 = vmul.f32 %v2671, 0.2
      %v2736 = vmul.f32 %v2672, 0.2
      %v2737 = vmul.f32 %v2673, 0.2
      %v2738 = vmul.f32 %v2674, 0.2
      %v2739 = vmul.f32 %v2675, 0.2
      %v2740 = vmul.f32 %v2676, 0.2
      %v2741 = vmul.f32 %v2677, 0.2
      %v2742 = vmul.f32 %v2678, 0.2
      %v2743 = vmul.f32 %v2679, 0.2
      %v2744 = vsel %vm2680, %v2648, %v2712
      %v2745 = vsel %vm2681, %v2649, %v2713
      %v2746 = vsel %vm2682, %v2650, %v2714
      %v2747 = vsel %vm2683, %v2651, %v2715
      %v2748 = vsel %vm2684, %v2652, %v2716
      %v2749 = vsel %vm2685, %v2653, %v2717
      %v2750 = vsel %vm2686, %v2654, %v2718
      %v2751 = vsel %vm2687, %v2655, %v2719
      %v2752 = vsel %vm2688, %v2656, %v2720
      %v2753 = vsel %vm2689, %v2657, %v2721
      %v2754 = vsel %vm2690, %v2658, %v2722
      %v2755 = vsel %vm2691, %v2659, %v2723
      %v2756 = vsel %vm2692, %v2660, %v2724
      %v2757 = vsel %vm2693, %v2661, %v2725
      %v2758 = vsel %vm2694, %v2662, %v2726
      %v2759 = vsel %vm2695, %v2663, %v2727
      %v2760 = vsel %vm2696, %v2664, %v2728
      %v2761 = vsel %vm2697, %v2665, %v2729
      %v2762 = vsel %vm2698, %v2666, %v2730
      %v2763 = vsel %vm2699, %v2667, %v2731
      %v2764 = vsel %vm2700, %v2668, %v2732
      %v2765 = vsel %vm2701, %v2669, %v2733
      %v2766 = vsel %vm2702, %v2670, %v2734
      %v2767 = vsel %vm2703, %v2671, %v2735
      %v2768 = vsel %vm2704, %v2672, %v2736
      %v2769 = vsel %vm2705, %v2673, %v2737
      %v2770 = vsel %vm2706, %v2674, %v2738
      %v2771 = vsel %vm2707, %v2675, %v2739
      %v2772 = vsel %vm2708, %v2676, %v2740
      %v2773 = vsel %vm2709, %v2677, %v2741
      %v2774 = vsel %vm2710, %v2678, %v2742
      %v2775 = vsel %vm2711, %v2679, %v2743
      %v2776 = vadd.f32 %v2744, %v357
      %v2777 = vadd.f32 %v2745, %v358
      %v2778 = vadd.f32 %v2746, %v359
      %v2779 = vadd.f32 %v2747, %v360
      %v2780 = vadd.f32 %v2748, %v361
      %v2781 = vadd.f32 %v2749, %v362
      %v2782 = vadd.f32 %v2750, %v363
      %v2783 = vadd.f32 %v2751, %v364
      %v2784 = vadd.f32 %v2752, %v365
      %v2785 = vadd.f32 %v2753, %v366
      %v2786 = vadd.f32 %v2754, %v367
      %v2787 = vadd.f32 %v2755, %v368
      %v2788 = vadd.f32 %v2756, %v369
      %v2789 = vadd.f32 %v2757, %v370
      %v2790 = vadd.f32 %v2758, %v371
      %v2791 = vadd.f32 %v2759, %v372
      %v2792 = vadd.f32 %v2760, %v373
      %v2793 = vadd.f32 %v2761, %v374
      %v2794 = vadd.f32 %v2762, %v375
      %v2795 = vadd.f32 %v2763, %v376
      %v2796 = vadd.f32 %v2764, %v377
      %v2797 = vadd.f32 %v2765, %v378
      %v2798 = vadd.f32 %v2766, %v379
      %v2799 = vadd.f32 %v2767, %v380
      %v2800 = vadd.f32 %v2768, %v381
      %v2801 = vadd.f32 %v2769, %v382
      %v2802 = vadd.f32 %v2770, %v383
      %v2803 = vadd.f32 %v2771, %v384
      %v2804 = vadd.f32 %v2772, %v385
      %v2805 = vadd.f32 %v2773, %v386
      %v2806 = vadd.f32 %v2774, %v387
      %v2807 = vadd.f32 %v2775, %v388
      %v2808 = vmax.f32 %v2776, %v2777
      %2809 = vmax.xlane.f32.xlu0 %v2808
      %v2810 = vpop.xlane.xlu0 %2809
      %v2811 = vmax.f32 %v2778, %v2779
      %2812 = vmax.xlane.f32.xlu0 %v2811
      %v2813 = vpop.xlane.xlu0 %2812
      %v2814 = vmax.f32 %v2780, %v2781
      %2815 = vmax.xlane.f32.xlu0 %v2814
      %v2816 = vpop.xlane.xlu0 %2815
      %v2817 = vmax.f32 %v2782, %v2783
      %2818 = vmax.xlane.f32.xlu0 %v2817
      %v2819 = vpop.xlane.xlu0 %2818
      %v2820 = vmax.f32 %v2784, %v2785
      %2821 = vmax.xlane.f32.xlu0 %v2820
      %v2822 = vpop.xlane.xlu0 %2821
      %v2823 = vmax.f32 %v2786, %v2787
      %2824 = vmax.xlane.f32.xlu0 %v2823
      %v2825 = vpop.xlane.xlu0 %2824
      %v2826 = vmax.f32 %v2788, %v2789
      %2827 = vmax.xlane.f32.xlu0 %v2826
      %v2828 = vpop.xlane.xlu0 %2827
      %v2829 = vmax.f32 %v2790, %v2791
      %2830 = vmax.xlane.f32.xlu0 %v2829
      %v2831 = vpop.xlane.xlu0 %2830
      %v2832 = vmax.f32 %v2792, %v2793
      %2833 = vmax.xlane.f32.xlu0 %v2832
      %v2834 = vpop.xlane.xlu0 %2833
      %v2835 = vmax.f32 %v2794, %v2795
      %2836 = vmax.xlane.f32.xlu0 %v2835
      %v2837 = vpop.xlane.xlu0 %2836
      %v2838 = vmax.f32 %v2796, %v2797
      %2839 = vmax.xlane.f32.xlu0 %v2838
      %v2840 = vpop.xlane.xlu0 %2839
      %v2841 = vmax.f32 %v2798, %v2799
      %2842 = vmax.xlane.f32.xlu0 %v2841
      %v2843 = vpop.xlane.xlu0 %2842
      %v2844 = vmax.f32 %v2800, %v2801
      %2845 = vmax.xlane.f32.xlu0 %v2844
      %v2846 = vpop.xlane.xlu0 %2845
      %v2847 = vmax.f32 %v2802, %v2803
      %2848 = vmax.xlane.f32.xlu0 %v2847
      %v2849 = vpop.xlane.xlu0 %2848
      %v2850 = vmax.f32 %v2804, %v2805
      %2851 = vmax.xlane.f32.xlu0 %v2850
      %v2852 = vpop.xlane.xlu0 %2851
      %v2853 = vmax.f32 %v2806, %v2807
      %2854 = vmax.xlane.f32.xlu0 %v2853
      %v2855 = vpop.xlane.xlu0 %2854
      %v2856 = vsub.f32 %v2776, %v2810
      %v2857 = vsub.f32 %v2777, %v2810
      %v2858 = vsub.f32 %v2778, %v2813
      %v2859 = vsub.f32 %v2779, %v2813
      %v2860 = vsub.f32 %v2780, %v2816
      %v2861 = vsub.f32 %v2781, %v2816
      %v2862 = vsub.f32 %v2782, %v2819
      %v2863 = vsub.f32 %v2783, %v2819
      %v2864 = vsub.f32 %v2784, %v2822
      %v2865 = vsub.f32 %v2785, %v2822
      %v2866 = vsub.f32 %v2786, %v2825
      %v2867 = vsub.f32 %v2787, %v2825
      %v2868 = vsub.f32 %v2788, %v2828
      %v2869 = vsub.f32 %v2789, %v2828
      %v2870 = vsub.f32 %v2790, %v2831
      %v2871 = vsub.f32 %v2791, %v2831
      %v2872 = vsub.f32 %v2792, %v2834
      %v2873 = vsub.f32 %v2793, %v2834
      %v2874 = vsub.f32 %v2794, %v2837
      %v2875 = vsub.f32 %v2795, %v2837
      %v2876 = vsub.f32 %v2796, %v2840
      %v2877 = vsub.f32 %v2797, %v2840
      %v2878 = vsub.f32 %v2798, %v2843
      %v2879 = vsub.f32 %v2799, %v2843
      %v2880 = vsub.f32 %v2800, %v2846
      %v2881 = vsub.f32 %v2801, %v2846
      %v2882 = vsub.f32 %v2802, %v2849
      %v2883 = vsub.f32 %v2803, %v2849
      %v2884 = vsub.f32 %v2804, %v2852
      %v2885 = vsub.f32 %v2805, %v2852
      %v2886 = vsub.f32 %v2806, %v2855
      %v2887 = vsub.f32 %v2807, %v2855
      %v2888 = vmul.f32 %v2856, 1.442695
      %v2889 = vpow.pop %v2888
      %v2890 = vmul.f32 %v2857, 1.442695
      %v2891 = vpow.pop %v2890
      %v2892 = vmul.f32 %v2858, 1.442695
      %v2893 = vpow.pop %v2892
      %v2894 = vmul.f32 %v2859, 1.442695
      %v2895 = vpow.pop %v2894
      %v2896 = vmul.f32 %v2860, 1.442695
      %v2897 = vpow.pop %v2896
      %v2898 = vmul.f32 %v2861, 1.442695
      %v2899 = vpow.pop %v2898
      %v2900 = vmul.f32 %v2862, 1.442695
      %v2901 = vpow.pop %v2900
      %v2902 = vmul.f32 %v2863, 1.442695
      %v2903 = vpow.pop %v2902
      %v2904 = vmul.f32 %v2864, 1.442695
      %v2905 = vpow.pop %v2904
      %v2906 = vmul.f32 %v2865, 1.442695
      %v2907 = vpow.pop %v2906
      %v2908 = vmul.f32 %v2866, 1.442695
      %v2909 = vpow.pop %v2908
      %v2910 = vmul.f32 %v2867, 1.442695
      %v2911 = vpow.pop %v2910
      %v2912 = vmul.f32 %v2868, 1.442695
      %v2913 = vpow.pop %v2912
      %v2914 = vmul.f32 %v2869, 1.442695
      %v2915 = vpow.pop %v2914
      %v2916 = vmul.f32 %v2870, 1.442695
      %v2917 = vpow.pop %v2916
      %v2918 = vmul.f32 %v2871, 1.442695
      %v2919 = vpow.pop %v2918
      %v2920 = vmul.f32 %v2872, 1.442695
      %v2921 = vpow.pop %v2920
      %v2922 = vmul.f32 %v2873, 1.442695
      %v2923 = vpow.pop %v2922
      %v2924 = vmul.f32 %v2874, 1.442695
      %v2925 = vpow.pop %v2924
      %v2926 = vmul.f32 %v2875, 1.442695
      %v2927 = vpow.pop %v2926
      %v2928 = vmul.f32 %v2876, 1.442695
      %v2929 = vpow.pop %v2928
      %v2930 = vmul.f32 %v2877, 1.442695
      %v2931 = vpow.pop %v2930
      %v2932 = vmul.f32 %v2878, 1.442695
      %v2933 = vpow.pop %v2932
      %v2934 = vmul.f32 %v2879, 1.442695
      %v2935 = vpow.pop %v2934
      %v2936 = vmul.f32 %v2880, 1.442695
      %v2937 = vpow.pop %v2936
      %v2938 = vmul.f32 %v2881, 1.442695
      %v2939 = vpow.pop %v2938
      %v2940 = vmul.f32 %v2882, 1.442695
      %v2941 = vpow.pop %v2940
      %v2942 = vmul.f32 %v2883, 1.442695
      %v2943 = vpow.pop %v2942
      %v2944 = vmul.f32 %v2884, 1.442695
      %v2945 = vpow.pop %v2944
      %v2946 = vmul.f32 %v2885, 1.442695
      %v2947 = vpow.pop %v2946
      %v2948 = vmul.f32 %v2886, 1.442695
      %v2949 = vpow.pop %v2948
      %v2950 = vmul.f32 %v2887, 1.442695
      %v2951 = vpow.pop %v2950
      %v2952 = vadd.f32 %v2889, %v2891
      %2953 = vadd.xlane.f32.xlu0 %v2952
      %v2954 = vpop.xlane.xlu0 %2953
      %v2955 = vadd.f32 %v2893, %v2895
      %2956 = vadd.xlane.f32.xlu0 %v2955
      %v2957 = vpop.xlane.xlu0 %2956
      %v2958 = vadd.f32 %v2897, %v2899
      %2959 = vadd.xlane.f32.xlu0 %v2958
      %v2960 = vpop.xlane.xlu0 %2959
      %v2961 = vadd.f32 %v2901, %v2903
      %2962 = vadd.xlane.f32.xlu0 %v2961
      %v2963 = vpop.xlane.xlu0 %2962
      %v2964 = vadd.f32 %v2905, %v2907
      %2965 = vadd.xlane.f32.xlu0 %v2964
      %v2966 = vpop.xlane.xlu0 %2965
      %v2967 = vadd.f32 %v2909, %v2911
      %2968 = vadd.xlane.f32.xlu0 %v2967
      %v2969 = vpop.xlane.xlu0 %2968
      %v2970 = vadd.f32 %v2913, %v2915
      %2971 = vadd.xlane.f32.xlu0 %v2970
      %v2972 = vpop.xlane.xlu0 %2971
      %v2973 = vadd.f32 %v2917, %v2919
      %2974 = vadd.xlane.f32.xlu0 %v2973
      %v2975 = vpop.xlane.xlu0 %2974
      %v2976 = vadd.f32 %v2921, %v2923
      %2977 = vadd.xlane.f32.xlu0 %v2976
      %v2978 = vpop.xlane.xlu0 %2977
      %v2979 = vadd.f32 %v2925, %v2927
      %2980 = vadd.xlane.f32.xlu0 %v2979
      %v2981 = vpop.xlane.xlu0 %2980
      %v2982 = vadd.f32 %v2929, %v2931
      %2983 = vadd.xlane.f32.xlu0 %v2982
      %v2984 = vpop.xlane.xlu0 %2983
      %v2985 = vadd.f32 %v2933, %v2935
      %2986 = vadd.xlane.f32.xlu0 %v2985
      %v2987 = vpop.xlane.xlu0 %2986
      %v2988 = vadd.f32 %v2937, %v2939
      %2989 = vadd.xlane.f32.xlu0 %v2988
      %v2990 = vpop.xlane.xlu0 %2989
      %v2991 = vadd.f32 %v2941, %v2943
      %2992 = vadd.xlane.f32.xlu0 %v2991
      %v2993 = vpop.xlane.xlu0 %2992
      %v2994 = vadd.f32 %v2945, %v2947
      %2995 = vadd.xlane.f32.xlu0 %v2994
      %v2996 = vpop.xlane.xlu0 %2995
      %v2997 = vadd.f32 %v2949, %v2951
      %2998 = vadd.xlane.f32.xlu0 %v2997
      %v2999 = vpop.xlane.xlu0 %2998
      %v3000 = vrcp.pop %v2954
      %v3001 = vrcp.pop %v2957
      %v3002 = vrcp.pop %v2960
      %v3003 = vrcp.pop %v2963
      %v3004 = vrcp.pop %v2966
      %v3005 = vrcp.pop %v2969
      %v3006 = vrcp.pop %v2972
      %v3007 = vrcp.pop %v2975
      %v3008 = vrcp.pop %v2978
      %v3009 = vrcp.pop %v2981
      %v3010 = vrcp.pop %v2984
      %v3011 = vrcp.pop %v2987
      %v3012 = vrcp.pop %v2990
      %v3013 = vrcp.pop %v2993
      %v3014 = vrcp.pop %v2996
      %v3015 = vrcp.pop %v2999
      %v3016 = vmul.f32 %v2889, %v3000
      %v3017 = vmul.f32 %v2891, %v3000
      %v3018 = vmul.f32 %v2893, %v3001
      %v3019 = vmul.f32 %v2895, %v3001
      %v3020 = vmul.f32 %v2897, %v3002
      %v3021 = vmul.f32 %v2899, %v3002
      %v3022 = vmul.f32 %v2901, %v3003
      %v3023 = vmul.f32 %v2903, %v3003
      %v3024 = vmul.f32 %v2905, %v3004
      %v3025 = vmul.f32 %v2907, %v3004
      %v3026 = vmul.f32 %v2909, %v3005
      %v3027 = vmul.f32 %v2911, %v3005
      %v3028 = vmul.f32 %v2913, %v3006
      %v3029 = vmul.f32 %v2915, %v3006
      %v3030 = vmul.f32 %v2917, %v3007
      %v3031 = vmul.f32 %v2919, %v3007
      %v3032 = vmul.f32 %v2921, %v3008
      %v3033 = vmul.f32 %v2923, %v3008
      %v3034 = vmul.f32 %v2925, %v3009
      %v3035 = vmul.f32 %v2927, %v3009
      %v3036 = vmul.f32 %v2929, %v3010
      %v3037 = vmul.f32 %v2931, %v3010
      %v3038 = vmul.f32 %v2933, %v3011
      %v3039 = vmul.f32 %v2935, %v3011
      %v3040 = vmul.f32 %v2937, %v3012
      %v3041 = vmul.f32 %v2939, %v3012
      %v3042 = vmul.f32 %v2941, %v3013
      %v3043 = vmul.f32 %v2943, %v3013
      %v3044 = vmul.f32 %v2945, %v3014
      %v3045 = vmul.f32 %v2947, %v3014
      %v3046 = vmul.f32 %v2949, %v3015
      %v3047 = vmul.f32 %v2951, %v3015
      %v3048 = vpack.c.bf16 %v3018, %v3016
      %v3049 = vpack.c.bf16 %v3019, %v3017
      %v3050 = vpack.c.bf16 %v3022, %v3020
      %v3051 = vpack.c.bf16 %v3023, %v3021
      %v3052 = vpack.c.bf16 %v3026, %v3024
      %v3053 = vpack.c.bf16 %v3027, %v3025
      %v3054 = vpack.c.bf16 %v3030, %v3028
      %v3055 = vpack.c.bf16 %v3031, %v3029
      %v3056 = vpack.c.bf16 %v3034, %v3032
      %v3057 = vpack.c.bf16 %v3035, %v3033
      %v3058 = vpack.c.bf16 %v3038, %v3036
      %v3059 = vpack.c.bf16 %v3039, %v3037
      %v3060 = vpack.c.bf16 %v3042, %v3040
      %v3061 = vpack.c.bf16 %v3043, %v3041
      %v3062 = vpack.c.bf16 %v3046, %v3044
      %v3063 = vpack.c.bf16 %v3047, %v3045
      %s3064 = scalar_lea.vmem %s3, 384
      %v3065 = vld [vmem:[%s3064] sm:$0xf]
      %v3066 = vld [vmem:[%s3064 + $0x4] sm:$0xf]
      %v3067 = vld [vmem:[%s3064 + $0x8] sm:$0xf]
      %v3068 = vld [vmem:[%s3064 + $0xc] sm:$0xf]
      %v3069 = vld [vmem:[%s3064 + $0x10] sm:$0xf]
      %v3070 = vld [vmem:[%s3064 + $0x14] sm:$0xf]
      %v3071 = vld [vmem:[%s3064 + $0x18] sm:$0xf]
      %v3072 = vld [vmem:[%s3064 + $0x1c] sm:$0xf]
      %v3073 = vld [vmem:[%s3064 + $0x20] sm:$0xf]
      %v3074 = vld [vmem:[%s3064 + $0x24] sm:$0xf]
      %v3075 = vld [vmem:[%s3064 + $0x28] sm:$0xf]
      %v3076 = vld [vmem:[%s3064 + $0x2c] sm:$0xf]
      %v3077 = vld [vmem:[%s3064 + $0x30] sm:$0xf]
      %v3078 = vld [vmem:[%s3064 + $0x34] sm:$0xf]
      %v3079 = vld [vmem:[%s3064 + $0x38] sm:$0xf]
      %v3080 = vld [vmem:[%s3064 + $0x3c] sm:$0xf]
      %v3081 = vld [vmem:[%s3064 + $0x40] sm:$0xf]
      %v3082 = vld [vmem:[%s3064 + $0x44] sm:$0xf]
      %v3083 = vld [vmem:[%s3064 + $0x48] sm:$0xf]
      %v3084 = vld [vmem:[%s3064 + $0x4c] sm:$0xf]
      %v3085 = vld [vmem:[%s3064 + $0x50] sm:$0xf]
      %v3086 = vld [vmem:[%s3064 + $0x54] sm:$0xf]
      %v3087 = vld [vmem:[%s3064 + $0x58] sm:$0xf]
      %v3088 = vld [vmem:[%s3064 + $0x5c] sm:$0xf]
      %v3089 = vld [vmem:[%s3064 + $0x60] sm:$0xf]
      %v3090 = vld [vmem:[%s3064 + $0x64] sm:$0xf]
      %v3091 = vld [vmem:[%s3064 + $0x68] sm:$0xf]
      %v3092 = vld [vmem:[%s3064 + $0x6c] sm:$0xf]
      %v3093 = vld [vmem:[%s3064 + $0x70] sm:$0xf]
      %v3094 = vld [vmem:[%s3064 + $0x74] sm:$0xf]
      %v3095 = vld [vmem:[%s3064 + $0x78] sm:$0xf]
      %v3096 = vld [vmem:[%s3064 + $0x7c] sm:$0xf]
      %v3129 = vunpack.c.l.b16 %v3065
      %v3130 = vunpack.c.l.b16 %v3066
      %v3131 = vunpack.c.l.b16 %v3067
      %v3132 = vunpack.c.l.b16 %v3068
      %v3133 = vunpack.c.l.b16 %v3069
      %v3134 = vunpack.c.l.b16 %v3070
      %v3135 = vunpack.c.l.b16 %v3071
      %v3136 = vunpack.c.l.b16 %v3072
      %v3137 = vunpack.c.l.b16 %v3073
      %v3138 = vunpack.c.l.b16 %v3074
      %v3139 = vunpack.c.l.b16 %v3075
      %v3140 = vunpack.c.l.b16 %v3076
      %v3141 = vunpack.c.l.b16 %v3077
      %v3142 = vunpack.c.l.b16 %v3078
      %v3143 = vunpack.c.l.b16 %v3079
      %v3144 = vunpack.c.l.b16 %v3080
      %v3145 = vunpack.c.l.b16 %v3081
      %v3146 = vunpack.c.l.b16 %v3082
      %v3147 = vunpack.c.l.b16 %v3083
      %v3148 = vunpack.c.l.b16 %v3084
      %v3149 = vunpack.c.l.b16 %v3085
      %v3150 = vunpack.c.l.b16 %v3086
      %v3151 = vunpack.c.l.b16 %v3087
      %v3152 = vunpack.c.l.b16 %v3088
      %v3153 = vunpack.c.l.b16 %v3089
      %v3154 = vunpack.c.l.b16 %v3090
      %v3155 = vunpack.c.l.b16 %v3091
      %v3156 = vunpack.c.l.b16 %v3092
      %v3157 = vunpack.c.l.b16 %v3093
      %v3158 = vunpack.c.l.b16 %v3094
      %v3159 = vunpack.c.l.b16 %v3095
      %v3160 = vunpack.c.l.b16 %v3096
      %v3161 = vpack.c.b16 %v3130, %v3129
      %v3162 = vpack.c.b16 %v3132, %v3131
      %v3163 = vpack.c.b16 %v3134, %v3133
      %v3164 = vpack.c.b16 %v3136, %v3135
      %v3165 = vpack.c.b16 %v3138, %v3137
      %v3166 = vpack.c.b16 %v3140, %v3139
      %v3167 = vpack.c.b16 %v3142, %v3141
      %v3168 = vpack.c.b16 %v3144, %v3143
      %v3169 = vpack.c.b16 %v3146, %v3145
      %v3170 = vpack.c.b16 %v3148, %v3147
      %v3171 = vpack.c.b16 %v3150, %v3149
      %v3172 = vpack.c.b16 %v3152, %v3151
      %v3173 = vpack.c.b16 %v3154, %v3153
      %v3174 = vpack.c.b16 %v3156, %v3155
      %v3175 = vpack.c.b16 %v3158, %v3157
      %v3176 = vpack.c.b16 %v3160, %v3159
      %3193 = vmatpush.bf16.msra.mxu0 %v3168
      %3194 = vmatpush.bf16.msra.mxu0 %v3167
      %3195 = vmatpush.bf16.msra.mxu0 %v3166
      %3196 = vmatpush.bf16.msra.mxu0 %v3165
      %3197 = vmatpush.bf16.msra.mxu0 %v3164
      %3198 = vmatpush.bf16.msra.mxu0 %v3163
      %3199 = vmatpush.bf16.msra.mxu0 %v3162
      %3200 = vmatpush.bf16.msra.mxu0 %v3161
      %3201 = vmatmul.bf16.gmra.mxu0 %v3048
      %v3202 = vpop.f32.mrf.mxu0
      %v3203 = vadd.f32 0.0, %v3202
      %v3204 = vpop.f32.mrf.mxu0
      %v3205 = vadd.f32 0.0, %v3204
      %3206 = vmatmul.bf16.gmra.mxu0 %v3050
      %v3207 = vpop.f32.mrf.mxu0
      %v3208 = vadd.f32 0.0, %v3207
      %v3209 = vpop.f32.mrf.mxu0
      %v3210 = vadd.f32 0.0, %v3209
      %3211 = vmatmul.bf16.gmra.mxu0 %v3052
      %v3212 = vpop.f32.mrf.mxu0
      %v3213 = vadd.f32 0.0, %v3212
      %v3214 = vpop.f32.mrf.mxu0
      %v3215 = vadd.f32 0.0, %v3214
      %3216 = vmatmul.bf16.gmra.mxu0 %v3054
      %v3217 = vpop.f32.mrf.mxu0
      %v3218 = vadd.f32 0.0, %v3217
      %v3219 = vpop.f32.mrf.mxu0
      %v3220 = vadd.f32 0.0, %v3219
      %3221 = vmatmul.bf16.gmra.mxu0 %v3056
      %v3222 = vpop.f32.mrf.mxu0
      %v3223 = vadd.f32 0.0, %v3222
      %v3224 = vpop.f32.mrf.mxu0
      %v3225 = vadd.f32 0.0, %v3224
      %3226 = vmatmul.bf16.gmra.mxu0 %v3058
      %v3227 = vpop.f32.mrf.mxu0
      %v3228 = vadd.f32 0.0, %v3227
      %v3229 = vpop.f32.mrf.mxu0
      %v3230 = vadd.f32 0.0, %v3229
      %3231 = vmatmul.bf16.gmra.mxu0 %v3060
      %v3232 = vpop.f32.mrf.mxu0
      %v3233 = vadd.f32 0.0, %v3232
      %v3234 = vpop.f32.mrf.mxu0
      %v3235 = vadd.f32 0.0, %v3234
      %3236 = vmatmul.bf16.gmra.mxu0 %v3062
      %v3237 = vpop.f32.mrf.mxu0
      %v3238 = vadd.f32 0.0, %v3237
      %v3239 = vpop.f32.mrf.mxu0
      %v3240 = vadd.f32 0.0, %v3239
      %3241 = vdwg.mxu0
      %3242 = vmatpush.bf16.msra.mxu0 %v3176
      %3243 = vmatpush.bf16.msra.mxu0 %v3175
      %3244 = vmatpush.bf16.msra.mxu0 %v3174
      %3245 = vmatpush.bf16.msra.mxu0 %v3173
      %3246 = vmatpush.bf16.msra.mxu0 %v3172
      %3247 = vmatpush.bf16.msra.mxu0 %v3171
      %3248 = vmatpush.bf16.msra.mxu0 %v3170
      %3249 = vmatpush.bf16.msra.mxu0 %v3169
      %3250 = vmatmul.bf16.gmra.mxu0 %v3049
      %v3251 = vpop.f32.mrf.mxu0
      %v3252 = vadd.f32 %v3203, %v3251
      %v3253 = vpop.f32.mrf.mxu0
      %v3254 = vadd.f32 %v3205, %v3253
      %3255 = vmatmul.bf16.gmra.mxu0 %v3051
      %v3256 = vpop.f32.mrf.mxu0
      %v3257 = vadd.f32 %v3208, %v3256
      %v3258 = vpop.f32.mrf.mxu0
      %v3259 = vadd.f32 %v3210, %v3258
      %3260 = vmatmul.bf16.gmra.mxu0 %v3053
      %v3261 = vpop.f32.mrf.mxu0
      %v3262 = vadd.f32 %v3213, %v3261
      %v3263 = vpop.f32.mrf.mxu0
      %v3264 = vadd.f32 %v3215, %v3263
      %3265 = vmatmul.bf16.gmra.mxu0 %v3055
      %v3266 = vpop.f32.mrf.mxu0
      %v3267 = vadd.f32 %v3218, %v3266
      %v3268 = vpop.f32.mrf.mxu0
      %v3269 = vadd.f32 %v3220, %v3268
      %3270 = vmatmul.bf16.gmra.mxu0 %v3057
      %v3271 = vpop.f32.mrf.mxu0
      %v3272 = vadd.f32 %v3223, %v3271
      %v3273 = vpop.f32.mrf.mxu0
      %v3274 = vadd.f32 %v3225, %v3273
      %3275 = vmatmul.bf16.gmra.mxu0 %v3059
      %v3276 = vpop.f32.mrf.mxu0
      %v3277 = vadd.f32 %v3228, %v3276
      %v3278 = vpop.f32.mrf.mxu0
      %v3279 = vadd.f32 %v3230, %v3278
      %3280 = vmatmul.bf16.gmra.mxu0 %v3061
      %v3281 = vpop.f32.mrf.mxu0
      %v3282 = vadd.f32 %v3233, %v3281
      %v3283 = vpop.f32.mrf.mxu0
      %v3284 = vadd.f32 %v3235, %v3283
      %3285 = vmatmul.bf16.gmra.mxu0 %v3063
      %v3286 = vpop.f32.mrf.mxu0
      %v3287 = vadd.f32 %v3238, %v3286
      %v3288 = vpop.f32.mrf.mxu0
      %v3289 = vadd.f32 %v3240, %v3288
      %3290 = vdwg.mxu0
      %v3291 = vadd.f32 %v2561, %v3252
      %v3292 = vadd.f32 %v2562, %v3254
      %v3293 = vadd.f32 %v2563, %v3257
      %v3294 = vadd.f32 %v2564, %v3259
      %v3295 = vadd.f32 %v2565, %v3262
      %v3296 = vadd.f32 %v2566, %v3264
      %v3297 = vadd.f32 %v2567, %v3267
      %v3298 = vadd.f32 %v2568, %v3269
      %v3299 = vadd.f32 %v2569, %v3272
      %v3300 = vadd.f32 %v2570, %v3274
      %v3301 = vadd.f32 %v2571, %v3277
      %v3302 = vadd.f32 %v2572, %v3279
      %v3303 = vadd.f32 %v2573, %v3282
      %v3304 = vadd.f32 %v2574, %v3284
      %v3305 = vadd.f32 %v2575, %v3287
      %v3306 = vadd.f32 %v2576, %v3289
      %v3307 = vld [vmem:[%s4] sm:$0x1]
      %v3309 = vperm.slane %v3307, 0
      %v3311 = vadd.f32 %v3291, %v3309
      %v3312 = vadd.f32 %v3292, %v3309
      %v3313 = vadd.f32 %v3293, %v3309
      %v3314 = vadd.f32 %v3294, %v3309
      %v3315 = vadd.f32 %v3295, %v3309
      %v3316 = vadd.f32 %v3296, %v3309
      %v3317 = vadd.f32 %v3297, %v3309
      %v3318 = vadd.f32 %v3298, %v3309
      %v3319 = vadd.f32 %v3299, %v3309
      %v3320 = vadd.f32 %v3300, %v3309
      %v3321 = vadd.f32 %v3301, %v3309
      %v3322 = vadd.f32 %v3302, %v3309
      %v3323 = vadd.f32 %v3303, %v3309
      %v3324 = vadd.f32 %v3304, %v3309
      %v3325 = vadd.f32 %v3305, %v3309
      %v3326 = vadd.f32 %v3306, %v3309
      %v3327 = vmax.f32 %v3311, 0.0
      %v3328 = vmax.f32 %v3312, 0.0
      %v3329 = vmax.f32 %v3313, 0.0
      %v3330 = vmax.f32 %v3314, 0.0
      %v3331 = vmax.f32 %v3315, 0.0
      %v3332 = vmax.f32 %v3316, 0.0
      %v3333 = vmax.f32 %v3317, 0.0
      %v3334 = vmax.f32 %v3318, 0.0
      %v3335 = vmax.f32 %v3319, 0.0
      %v3336 = vmax.f32 %v3320, 0.0
      %v3337 = vmax.f32 %v3321, 0.0
      %v3338 = vmax.f32 %v3322, 0.0
      %v3339 = vmax.f32 %v3323, 0.0
      %v3340 = vmax.f32 %v3324, 0.0
      %v3341 = vmax.f32 %v3325, 0.0
      %v3342 = vmax.f32 %v3326, 0.0
      %v3343 = vpack.c.bf16 %v3327, %v3327
      %v3344 = vpack.c.bf16 %v3328, %v3328
      %v3345 = vpack.c.bf16 %v3329, %v3329
      %v3346 = vpack.c.bf16 %v3330, %v3330
      %v3347 = vpack.c.bf16 %v3331, %v3331
      %v3348 = vpack.c.bf16 %v3332, %v3332
      %v3349 = vpack.c.bf16 %v3333, %v3333
      %v3350 = vpack.c.bf16 %v3334, %v3334
      %v3351 = vpack.c.bf16 %v3335, %v3335
      %v3352 = vpack.c.bf16 %v3336, %v3336
      %v3353 = vpack.c.bf16 %v3337, %v3337
      %v3354 = vpack.c.bf16 %v3338, %v3338
      %v3355 = vpack.c.bf16 %v3339, %v3339
      %v3356 = vpack.c.bf16 %v3340, %v3340
      %v3357 = vpack.c.bf16 %v3341, %v3341
      %v3358 = vpack.c.bf16 %v3342, %v3342
      %vm3359 = vcmask 257024
      %3360 = vst.msk [vmem:[%s251] sm:$0xf] %vm3359, %v3343
      %3361 = vst.msk [vmem:[%s251 + $0x4] sm:$0xf] %vm3359, %v3344
      %3362 = vst.msk [vmem:[%s251 + $0x8] sm:$0xf] %vm3359, %v3345
      %3363 = vst.msk [vmem:[%s251 + $0xc] sm:$0xf] %vm3359, %v3346
      %3364 = vst.msk [vmem:[%s251 + $0x10] sm:$0xf] %vm3359, %v3347
      %3365 = vst.msk [vmem:[%s251 + $0x14] sm:$0xf] %vm3359, %v3348
      %3366 = vst.msk [vmem:[%s251 + $0x18] sm:$0xf] %vm3359, %v3349
      %3367 = vst.msk [vmem:[%s251 + $0x1c] sm:$0xf] %vm3359, %v3350
      %3368 = vst.msk [vmem:[%s251 + $0x20] sm:$0xf] %vm3359, %v3351
      %3369 = vst.msk [vmem:[%s251 + $0x24] sm:$0xf] %vm3359, %v3352
      %3370 = vst.msk [vmem:[%s251 + $0x28] sm:$0xf] %vm3359, %v3353
      %3371 = vst.msk [vmem:[%s251 + $0x2c] sm:$0xf] %vm3359, %v3354
      %3372 = vst.msk [vmem:[%s251 + $0x30] sm:$0xf] %vm3359, %v3355
      %3373 = vst.msk [vmem:[%s251 + $0x34] sm:$0xf] %vm3359, %v3356
      %3374 = vst.msk [vmem:[%s251 + $0x38] sm:$0xf] %vm3359, %v3357
      %3375 = vst.msk [vmem:[%s251 + $0x3c] sm:$0xf] %vm3359, %v3358
      %s3376 = smul.u32 16, %s16
      %p3377 = scmp.lt.s32.totalorder %s3376, 31
      %s3378 = scalar_select %p3377, %s3376, 31
      %s3379 = smul.addr %s3378, 4
      %s3380 = scalar_lea.vmem %s5, %s3379
      // Predicated region
      $region41: #{gat_encoder_pallas.8} parent=39 // pred_check
        %p3381 = pneg %p149
      $region42: #{gat_encoder_pallas.8} parent=39 // pred_check_branch
        %3383 = sbr.rel (%p3381) target = $region44
      $region43: #{gat_encoder_pallas.8} parent=39 // pred_region
        %s3384 = smul.u32 16, %s16
      $region44: #{gat_encoder_pallas.8} parent=39 // pred_fallthru
        _
    $region40: #{gat_encoder_pallas.8} parent=5 // pred_fallthru
      _
    %p3385 = scmp.le.s32.totalorder 2, %s11
    // Predicated region
    $region45: #{gat_encoder_pallas.8} parent=5 // pred_check
      %p3386 = pneg %p3385
    $region46: #{gat_encoder_pallas.8} parent=5 // pred_check_branch
      %3388 = sbr.rel (%p3386) target = $region48
    $region47: #{gat_encoder_pallas.8} parent=5 // pred_region
      %s3389 = ssub.s32 %s11, 2
      // Predicated region
      $region49: #{gat_encoder_pallas.8} parent=47 // pred_check
        %p3390 = pneg %p155
      $region50: #{gat_encoder_pallas.8} parent=47 // pred_check_branch
        %3392 = sbr.rel (%p3390) target = $region52
      $region51: #{gat_encoder_pallas.8} parent=47 // pred_region
        %s3393 = smul.u32 16, %s17
        %p3394 = scmp.lt.s32.totalorder %s3393, 31
        %s3395 = scalar_select %p3394, %s3393, 31
        %s3396 = smul.addr %s3395, 4
        %s3397 = scalar_lea.vmem %s5, %s3396
      $region52: #{gat_encoder_pallas.8} parent=47 // pred_fallthru
        _
    $region48: #{gat_encoder_pallas.8} parent=5 // pred_fallthru
      _
  $region6: #{gat_encoder_pallas.8} parent=0 // loop_footer
    %s15 = sadd.s32 1, %s11
  $region7: #{gat_encoder_pallas.8} parent=0 // loop_footer_branch
    %10 = sbr.rel target = $region3
  $region8: #{gat_encoder_pallas.8} parent=0 // loop_exit
    _

// kernel: gat_encoder_pallas.12
$region0: #{gat_encoder_pallas.12}
  #allocation0 [shape = 'u32[]', space=smem, size = 0x4, offset = 0x4, fixed_abs, tag = 'smem constant byte address 0x4 - core index']
  #allocation1 [shape = 'u32[72,128]{1,0:T(1,128)}', space=vmem, size = 0x9000, scoped, tag = 'internal scratch']
  %s0 = inlined_call_operand.vmem [shape: s8[256,256], index: 0, kind: input, shape index: {}]
  %s1 = inlined_call_operand.vmem [shape: f32[256,4], index: 1, kind: input, shape index: {}]
  %s2 = inlined_call_operand.vmem [shape: f32[4,256], index: 2, kind: input, shape index: {}]
  %s3 = inlined_call_operand.vmem [shape: bf16[4,256,32], index: 3, kind: input, shape index: {}]
  %s4 = inlined_call_operand.vmem [shape: f32[1,32], index: 4, kind: input, shape index: {}]
  %s5 = inlined_call_operand.vmem [shape: bf16[256,32], index: 5, kind: output, shape index: {}]
  %s6 = sld [smem:[#allocation0]]
  $region53: #{gat_encoder_pallas.12} parent=0
    _
  %s8 = ssub.s32 1, %s6
  %s9 = scalar_select 0, %s8, %s6
  loop: start=0, step=1, limit=4
  $region2: #{gat_encoder_pallas.12} parent=0 // loop_pre_header
    _
  $region3: #{gat_encoder_pallas.12} parent=0 // loop_header
    %s11 = sphi 0, %s15
    %p12 = scmp.ge.s32.totalorder %s11, 4
    %s21 = sphi 0, %s23
    %s24 = sphi 0, %s21
    %s25 = sphi 0, %s24
    %s41 = sphi 0, %s25
    %s47 = sphi 0, %s49
    %s50 = sphi 0, %s47
    %s51 = sphi 0, %s50
    %s67 = sphi 0, %s51
    %s71 = sphi 0, %s71
    %s73 = sphi 0, %s71
    %s74 = sphi 0, %s73
    %s88 = sphi 0, %s74
    %s92 = sphi 0, %s92
    %s94 = sphi 0, %s92
    %s95 = sphi 0, %s94
    %s109 = sphi 0, %s95
    %s113 = sphi 0, %s113
    %s115 = sphi 0, %s113
    %s116 = sphi 0, %s115
    %s130 = sphi 0, %s116
    %s136 = sphi 0, %s138
    %s139 = sphi 0, %s136
    %s140 = sphi 0, %s139
    %s156 = sphi 0, %s140
  $region4: #{gat_encoder_pallas.12} parent=0 // loop_header_branch
    %14 = sbr.rel (%p12) target = $region8
  $region5: #{gat_encoder_pallas.12} parent=0 // loop_body
    %s16 = ssub.s32 %s11, 1
    %s17 = ssub.s32 %s11, 2
    %s18 = sadd.s32 %s11, 1
    %s19 = ssub.s32 %s11, %s18
    %p20 = scmp.eq.s32.totalorder %s19, 0
    %s22 = sadd.s32 %s21, 1
    %s23 = scalar_select %p20, %s21, %s22
    %p26 = pneg %p20
    %p27 = scmp.eq.s32.totalorder %s11, 1
    %p28 = por %p26, %p27
    %p29 = scmp.ne.s32.totalorder %s21, %s24
    %p30 = scmp.eq.s32.totalorder %s11, 0
    %p31 = por %p29, %p30
    %p32 = scmp.ne.s32.totalorder %s21, %s24
    %p33 = scmp.eq.s32.totalorder %s16, 1
    %p34 = por %p32, %p33
    %p35 = scmp.ne.s32.totalorder %s24, %s25
    %p36 = scmp.eq.s32.totalorder %s16, 0
    %p37 = por %p35, %p36
    %p38 = scmp.ne.s32.totalorder %s24, %s25
    %p39 = scmp.eq.s32.totalorder %s17, 1
    %p40 = por %p38, %p39
    %p42 = scmp.ne.s32.totalorder %s25, %s41
    %p43 = scmp.eq.s32.totalorder %s17, 0
    %p44 = por %p42, %p43
    %s45 = ssub.s32 %s11, %s18
    %p46 = scmp.eq.s32.totalorder %s45, 0
    %s48 = sadd.s32 %s47, 1
    %s49 = scalar_select %p46, %s47, %s48
    %p52 = pneg %p46
    %p53 = scmp.eq.s32.totalorder %s11, 1
    %p54 = por %p52, %p53
    %p55 = scmp.ne.s32.totalorder %s47, %s50
    %p56 = scmp.eq.s32.totalorder %s11, 0
    %p57 = por %p55, %p56
    %p58 = scmp.ne.s32.totalorder %s47, %s50
    %p59 = scmp.eq.s32.totalorder %s16, 1
    %p60 = por %p58, %p59
    %p61 = scmp.ne.s32.totalorder %s50, %s51
    %p62 = scmp.eq.s32.totalorder %s16, 0
    %p63 = por %p61, %p62
    %p64 = scmp.ne.s32.totalorder %s50, %s51
    %p65 = scmp.eq.s32.totalorder %s17, 1
    %p66 = por %p64, %p65
    %p68 = scmp.ne.s32.totalorder %s51, %s67
    %p69 = scmp.eq.s32.totalorder %s17, 0
    %p70 = por %p68, %p69
    %s72 = sadd.s32 %s71, 1
    %p75 = scmp.eq.s32.totalorder %s11, 1
    %p76 = scmp.ne.s32.totalorder %s71, %s73
    %p77 = scmp.eq.s32.totalorder %s11, 0
    %p78 = por %p76, %p77
    %p79 = scmp.ne.s32.totalorder %s71, %s73
    %p80 = scmp.eq.s32.totalorder %s16, 1
    %p81 = por %p79, %p80
    %p82 = scmp.ne.s32.totalorder %s73, %s74
    %p83 = scmp.eq.s32.totalorder %s16, 0
    %p84 = por %p82, %p83
    %p85 = scmp.ne.s32.totalorder %s73, %s74
    %p86 = scmp.eq.s32.totalorder %s17, 1
    %p87 = por %p85, %p86
    %p89 = scmp.ne.s32.totalorder %s74, %s88
    %p90 = scmp.eq.s32.totalorder %s17, 0
    %p91 = por %p89, %p90
    %s93 = sadd.s32 %s92, 1
    %p96 = scmp.eq.s32.totalorder %s11, 1
    %p97 = scmp.ne.s32.totalorder %s92, %s94
    %p98 = scmp.eq.s32.totalorder %s11, 0
    %p99 = por %p97, %p98
    %p100 = scmp.ne.s32.totalorder %s92, %s94
    %p101 = scmp.eq.s32.totalorder %s16, 1
    %p102 = por %p100, %p101
    %p103 = scmp.ne.s32.totalorder %s94, %s95
    %p104 = scmp.eq.s32.totalorder %s16, 0
    %p105 = por %p103, %p104
    %p106 = scmp.ne.s32.totalorder %s94, %s95
    %p107 = scmp.eq.s32.totalorder %s17, 1
    %p108 = por %p106, %p107
    %p110 = scmp.ne.s32.totalorder %s95, %s109
    %p111 = scmp.eq.s32.totalorder %s17, 0
    %p112 = por %p110, %p111
    %s114 = sadd.s32 %s113, 1
    %p117 = scmp.eq.s32.totalorder %s11, 1
    %p118 = scmp.ne.s32.totalorder %s113, %s115
    %p119 = scmp.eq.s32.totalorder %s11, 0
    %p120 = por %p118, %p119
    %p121 = scmp.ne.s32.totalorder %s113, %s115
    %p122 = scmp.eq.s32.totalorder %s16, 1
    %p123 = por %p121, %p122
    %p124 = scmp.ne.s32.totalorder %s115, %s116
    %p125 = scmp.eq.s32.totalorder %s16, 0
    %p126 = por %p124, %p125
    %p127 = scmp.ne.s32.totalorder %s115, %s116
    %p128 = scmp.eq.s32.totalorder %s17, 1
    %p129 = por %p127, %p128
    %p131 = scmp.ne.s32.totalorder %s116, %s130
    %p132 = scmp.eq.s32.totalorder %s17, 0
    %p133 = por %p131, %p132
    %s134 = ssub.s32 %s11, %s18
    %p135 = scmp.eq.s32.totalorder %s134, 0
    %s137 = sadd.s32 %s136, 1
    %s138 = scalar_select %p135, %s136, %s137
    %p141 = pneg %p135
    %p142 = scmp.eq.s32.totalorder %s11, 1
    %p143 = por %p141, %p142
    %p144 = scmp.ne.s32.totalorder %s136, %s139
    %p145 = scmp.eq.s32.totalorder %s11, 0
    %p146 = por %p144, %p145
    %p147 = scmp.ne.s32.totalorder %s136, %s139
    %p148 = scmp.eq.s32.totalorder %s16, 1
    %p149 = por %p147, %p148
    %p150 = scmp.ne.s32.totalorder %s139, %s140
    %p151 = scmp.eq.s32.totalorder %s16, 0
    %p152 = por %p150, %p151
    %p153 = scmp.ne.s32.totalorder %s139, %s140
    %p154 = scmp.eq.s32.totalorder %s17, 1
    %p155 = por %p153, %p154
    %p157 = scmp.ne.s32.totalorder %s140, %s156
    %p158 = scmp.eq.s32.totalorder %s17, 0
    %p159 = por %p157, %p158
    %p160 = scmp.le.s32.totalorder 1, %s11
    %p161 = scmp.lt.s32.totalorder %s11, 3
    %p162 = pnand %p160, %p161
    %p163 = pneg %p162
    // Predicated region
    $region9: #{gat_encoder_pallas.12} parent=5 // pred_check
      _
    $region10: #{gat_encoder_pallas.12} parent=5 // pred_check_branch
      %165 = sbr.rel (%p162) target = $region12
    $region11: #{gat_encoder_pallas.12} parent=5 // pred_region
      %s166 = ssub.s32 %s11, 1
      // Predicated region
      $region13: #{gat_encoder_pallas.12} parent=11 // pred_check
        %p167 = pneg %p84
      $region14: #{gat_encoder_pallas.12} parent=11 // pred_check_branch
        %169 = sbr.rel (%p167) target = $region16
      $region15: #{gat_encoder_pallas.12} parent=11 // pred_region
        _
      $region16: #{gat_encoder_pallas.12} parent=11 // pred_fallthru
        _
      // Predicated region
      $region17: #{gat_encoder_pallas.12} parent=11 // pred_check
        %p170 = pneg %p105
      $region18: #{gat_encoder_pallas.12} parent=11 // pred_check_branch
        %172 = sbr.rel (%p170) target = $region20
      $region19: #{gat_encoder_pallas.12} parent=11 // pred_region
        _
      $region20: #{gat_encoder_pallas.12} parent=11 // pred_fallthru
        _
      // Predicated region
      $region21: #{gat_encoder_pallas.12} parent=11 // pred_check
        %p173 = pneg %p126
      $region22: #{gat_encoder_pallas.12} parent=11 // pred_check_branch
        %175 = sbr.rel (%p173) target = $region24
      $region23: #{gat_encoder_pallas.12} parent=11 // pred_region
        _
      $region24: #{gat_encoder_pallas.12} parent=11 // pred_fallthru
        _
    $region12: #{gat_encoder_pallas.12} parent=5 // pred_fallthru
      _
    %p176 = scmp.lt.s32.totalorder %s11, 2
    // Predicated region
    $region25: #{gat_encoder_pallas.12} parent=5 // pred_check
      %p177 = pneg %p176
    $region26: #{gat_encoder_pallas.12} parent=5 // pred_check_branch
      %179 = sbr.rel (%p177) target = $region28
    $region27: #{gat_encoder_pallas.12} parent=5 // pred_region
      // Predicated region
      $region29: #{gat_encoder_pallas.12} parent=27 // pred_check
        %p180 = pneg %p31
      $region30: #{gat_encoder_pallas.12} parent=27 // pred_check_branch
        %182 = sbr.rel (%p180) target = $region32
      $region31: #{gat_encoder_pallas.12} parent=27 // pred_region
        %s183 = smul.u32 4, %s11
        %p184 = scmp.lt.s32.totalorder %s183, 7
        %s185 = scalar_select %p184, %s183, 7
        %s186 = smul.addr %s185, 2
        %s187 = smul.addr %s186, 8
        %s188 = scalar_lea.vmem %s0, %s187
        %s189 = smul.u32 4, %s11
      $region32: #{gat_encoder_pallas.12} parent=27 // pred_fallthru
        _
      // Predicated region
      $region33: #{gat_encoder_pallas.12} parent=27 // pred_check
        %p190 = pneg %p57
      $region34: #{gat_encoder_pallas.12} parent=27 // pred_check_branch
        %192 = sbr.rel (%p190) target = $region36
      $region35: #{gat_encoder_pallas.12} parent=27 // pred_region
        %s193 = smul.u32 16, %s11
        %p194 = scmp.lt.s32.totalorder %s193, 31
        %s195 = scalar_select %p194, %s193, 31
        %s196 = smul.addr %s195, 8
        %s197 = scalar_lea.vmem %s1, %s196
        %s198 = smul.u32 16, %s11
      $region36: #{gat_encoder_pallas.12} parent=27 // pred_fallthru
        _
    $region28: #{gat_encoder_pallas.12} parent=5 // pred_fallthru
      _
    %p199 = scmp.le.s32.totalorder 1, %s11
    %p200 = scmp.lt.s32.totalorder %s11, 3
    %p201 = pnand %p199, %p200
    %p202 = pneg %p201
    // Predicated region
    $region37: #{gat_encoder_pallas.12} parent=5 // pred_check
      _
    $region38: #{gat_encoder_pallas.12} parent=5 // pred_check_branch
      %204 = sbr.rel (%p201) target = $region40
    $region39: #{gat_encoder_pallas.12} parent=5 // pred_region
      %s205 = ssub.s32 %s11, 1
      %s206 = smul.u32 4, %s16
      %p207 = scmp.lt.s32.totalorder %s206, 7
      %s208 = scalar_select %p207, %s206, 7
      %s209 = smul.addr %s208, 2
      %s210 = smul.addr %s209, 8
      %s211 = scalar_lea.vmem %s0, %s210
      %p212 = pneg %p37
      %p213 = pneg %p34
      %s214 = smul.u32 16, %s16
      %p215 = scmp.lt.s32.totalorder %s214, 31
      %s216 = scalar_select %p215, %s214, 31
      %s217 = smul.addr %s216, 8
      %s218 = scalar_lea.vmem %s1, %s217
      %p219 = pneg %p63
      %p220 = pneg %p60
      %p221 = pneg %p84
      %p222 = pneg %p81
      %p223 = pneg %p105
      %p224 = pneg %p102
      %p225 = pneg %p126
      %p226 = pneg %p123
      %p227 = pneg %p152
      %p228 = pneg %p149
      %s229 = smul.u32 16, %s16
      %p230 = scmp.lt.s32.totalorder %s229, 31
      %s231 = scalar_select %p230, %s229, 31
      %s232 = smul.addr %s231, 4
      %s233 = scalar_lea.vmem %s5, %s232
      %s234 = smul.u32 4, %s16
      %p235 = scmp.lt.s32.totalorder %s234, 7
      %s236 = scalar_select %p235, %s234, 7
      %s237 = smul.addr %s236, 2
      %s238 = smul.addr %s237, 8
      %s239 = scalar_lea.vmem %s0, %s238
      %s240 = smul.u32 4, %s16
      %s241 = smul.u32 16, %s16
      %p242 = scmp.lt.s32.totalorder %s241, 31
      %s243 = scalar_select %p242, %s241, 31
      %s244 = smul.addr %s243, 8
      %s245 = scalar_lea.vmem %s1, %s244
      %s246 = smul.u32 16, %s16
      %s247 = smul.u32 16, %s16
      %p248 = scmp.lt.s32.totalorder %s247, 31
      %s249 = scalar_select %p248, %s247, 31
      %s250 = smul.addr %s249, 4
      %s251 = scalar_lea.vmem %s5, %s250
      %s252 = smul.u32 16, %s16
      %v253 = vld [vmem:[%s239] sm:$0xff]
      %v254 = vld [vmem:[%s239 + $0x8] sm:$0xff]
      %v255 = vld [vmem:[%s239 + $0x10] sm:$0xff]
      %v256 = vld [vmem:[%s239 + $0x18] sm:$0xff]
      %v257 = vld [vmem:[%s239 + $0x20] sm:$0xff]
      %v258 = vld [vmem:[%s239 + $0x28] sm:$0xff]
      %v259 = vld [vmem:[%s239 + $0x30] sm:$0xff]
      %v260 = vld [vmem:[%s239 + $0x38] sm:$0xff]
      %v261 = vunpack.c.0.s8 %v253
      %v262 = vunpack.c.0.s8 %v254
      %v263 = vunpack.c.1.s8 %v253
      %v264 = vunpack.c.1.s8 %v254
      %v265 = vunpack.c.2.s8 %v253
      %v266 = vunpack.c.2.s8 %v254
      %v267 = vunpack.c.3.s8 %v253
      %v268 = vunpack.c.3.s8 %v254
      %v269 = vunpack.c.0.s8 %v255
      %v270 = vunpack.c.0.s8 %v256
      %v271 = vunpack.c.1.s8 %v255
      %v272 = vunpack.c.1.s8 %v256
      %v273 = vunpack.c.2.s8 %v255
      %v274 = vunpack.c.2.s8 %v256
      %v275 = vunpack.c.3.s8 %v255
      %v276 = vunpack.c.3.s8 %v256
      %v277 = vunpack.c.0.s8 %v257
      %v278 = vunpack.c.0.s8 %v258
      %v279 = vunpack.c.1.s8 %v257
      %v280 = vunpack.c.1.s8 %v258
      %v281 = vunpack.c.2.s8 %v257
      %v282 = vunpack.c.2.s8 %v258
      %v283 = vunpack.c.3.s8 %v257
      %v284 = vunpack.c.3.s8 %v258
      %v285 = vunpack.c.0.s8 %v259
      %v286 = vunpack.c.0.s8 %v260
      %v287 = vunpack.c.1.s8 %v259
      %v288 = vunpack.c.1.s8 %v260
      %v289 = vunpack.c.2.s8 %v259
      %v290 = vunpack.c.2.s8 %v260
      %v291 = vunpack.c.3.s8 %v259
      %v292 = vunpack.c.3.s8 %v260
      %v293 = vcvt.s32.f32 %v261
      %v294 = vcvt.s32.f32 %v262
      %v295 = vcvt.s32.f32 %v263
      %v296 = vcvt.s32.f32 %v264
      %v297 = vcvt.s32.f32 %v265
      %v298 = vcvt.s32.f32 %v266
      %v299 = vcvt.s32.f32 %v267
      %v300 = vcvt.s32.f32 %v268
      %v301 = vcvt.s32.f32 %v269
      %v302 = vcvt.s32.f32 %v270
      %v303 = vcvt.s32.f32 %v271
      %v304 = vcvt.s32.f32 %v272
      %v305 = vcvt.s32.f32 %v273
      %v306 = vcvt.s32.f32 %v274
      %v307 = vcvt.s32.f32 %v275
      %v308 = vcvt.s32.f32 %v276
      %v309 = vcvt.s32.f32 %v277
      %v310 = vcvt.s32.f32 %v278
      %v311 = vcvt.s32.f32 %v279
      %v312 = vcvt.s32.f32 %v280
      %v313 = vcvt.s32.f32 %v281
      %v314 = vcvt.s32.f32 %v282
      %v315 = vcvt.s32.f32 %v283
      %v316 = vcvt.s32.f32 %v284
      %v317 = vcvt.s32.f32 %v285
      %v318 = vcvt.s32.f32 %v286
      %v319 = vcvt.s32.f32 %v287
      %v320 = vcvt.s32.f32 %v288
      %v321 = vcvt.s32.f32 %v289
      %v322 = vcvt.s32.f32 %v290
      %v323 = vcvt.s32.f32 %v291
      %v324 = vcvt.s32.f32 %v292
      %v325 = vsub.f32 %v293, 1.0
      %v326 = vsub.f32 %v294, 1.0
      %v327 = vsub.f32 %v295, 1.0
      %v328 = vsub.f32 %v296, 1.0
      %v329 = vsub.f32 %v297, 1.0
      %v330 = vsub.f32 %v298, 1.0
      %v331 = vsub.f32 %v299, 1.0
      %v332 = vsub.f32 %v300, 1.0
      %v333 = vsub.f32 %v301, 1.0
      %v334 = vsub.f32 %v302, 1.0
      %v335 = vsub.f32 %v303, 1.0
      %v336 = vsub.f32 %v304, 1.0
      %v337 = vsub.f32 %v305, 1.0
      %v338 = vsub.f32 %v306, 1.0
      %v339 = vsub.f32 %v307, 1.0
      %v340 = vsub.f32 %v308, 1.0
      %v341 = vsub.f32 %v309, 1.0
      %v342 = vsub.f32 %v310, 1.0
      %v343 = vsub.f32 %v311, 1.0
      %v344 = vsub.f32 %v312, 1.0
      %v345 = vsub.f32 %v313, 1.0
      %v346 = vsub.f32 %v314, 1.0
      %v347 = vsub.f32 %v315, 1.0
      %v348 = vsub.f32 %v316, 1.0
      %v349 = vsub.f32 %v317, 1.0
      %v350 = vsub.f32 %v318, 1.0
      %v351 = vsub.f32 %v319, 1.0
      %v352 = vsub.f32 %v320, 1.0
      %v353 = vsub.f32 %v321, 1.0
      %v354 = vsub.f32 %v322, 1.0
      %v355 = vsub.f32 %v323, 1.0
      %v356 = vsub.f32 %v324, 1.0
      %v357 = vmul.f32 %v325, 1e+30
      %v358 = vmul.f32 %v326, 1e+30
      %v359 = vmul.f32 %v327, 1e+30
      %v360 = vmul.f32 %v328, 1e+30
      %v361 = vmul.f32 %v329, 1e+30
      %v362 = vmul.f32 %v330, 1e+30
      %v363 = vmul.f32 %v331, 1e+30
      %v364 = vmul.f32 %v332, 1e+30
      %v365 = vmul.f32 %v333, 1e+30
      %v366 = vmul.f32 %v334, 1e+30
      %v367 = vmul.f32 %v335, 1e+30
      %v368 = vmul.f32 %v336, 1e+30
      %v369 = vmul.f32 %v337, 1e+30
      %v370 = vmul.f32 %v338, 1e+30
      %v371 = vmul.f32 %v339, 1e+30
      %v372 = vmul.f32 %v340, 1e+30
      %v373 = vmul.f32 %v341, 1e+30
      %v374 = vmul.f32 %v342, 1e+30
      %v375 = vmul.f32 %v343, 1e+30
      %v376 = vmul.f32 %v344, 1e+30
      %v377 = vmul.f32 %v345, 1e+30
      %v378 = vmul.f32 %v346, 1e+30
      %v379 = vmul.f32 %v347, 1e+30
      %v380 = vmul.f32 %v348, 1e+30
      %v381 = vmul.f32 %v349, 1e+30
      %v382 = vmul.f32 %v350, 1e+30
      %v383 = vmul.f32 %v351, 1e+30
      %v384 = vmul.f32 %v352, 1e+30
      %v385 = vmul.f32 %v353, 1e+30
      %v386 = vmul.f32 %v354, 1e+30
      %v387 = vmul.f32 %v355, 1e+30
      %v388 = vmul.f32 %v356, 1e+30
      %v389 = vld [vmem:[%s245] sm:$0xff]
      %v390 = vld [vmem:[%s245 + $0x8] sm:$0xff]
      %v391 = vld [vmem:[%s245 + $0x10] sm:$0xff]
      %v392 = vld [vmem:[%s245 + $0x18] sm:$0xff]
      %v393 = vld [vmem:[%s245 + $0x20] sm:$0xff]
      %v394 = vld [vmem:[%s245 + $0x28] sm:$0xff]
      %v395 = vld [vmem:[%s245 + $0x30] sm:$0xff]
      %v396 = vld [vmem:[%s245 + $0x38] sm:$0xff]
      %v397 = vld [vmem:[%s245 + $0x40] sm:$0xff]
      %v398 = vld [vmem:[%s245 + $0x48] sm:$0xff]
      %v399 = vld [vmem:[%s245 + $0x50] sm:$0xff]
      %v400 = vld [vmem:[%s245 + $0x58] sm:$0xff]
      %v401 = vld [vmem:[%s245 + $0x60] sm:$0xff]
      %v402 = vld [vmem:[%s245 + $0x68] sm:$0xff]
      %v403 = vld [vmem:[%s245 + $0x70] sm:$0xff]
      %v404 = vld [vmem:[%s245 + $0x78] sm:$0xff]
      %v405 = vld [vmem:[%s2] ss:$4 sm:$0x3]
      %407 = vset.pattern.permute.xlu0 0
      %408 = vperm.xlu0 %407, %v389
      %v409 = vpop.permute.xlu0 %408
      %412 = vset.pattern.permute.xlu0 0
      %413 = vperm.xlu0 %412, %v390
      %v414 = vpop.permute.xlu0 %413
      %417 = vset.pattern.permute.xlu0 0
      %418 = vperm.xlu0 %417, %v391
      %v419 = vpop.permute.xlu0 %418
      %422 = vset.pattern.permute.xlu0 0
      %423 = vperm.xlu0 %422, %v392
      %v424 = vpop.permute.xlu0 %423
      %427 = vset.pattern.permute.xlu0 0
      %428 = vperm.xlu0 %427, %v393
      %v429 = vpop.permute.xlu0 %428
      %432 = vset.pattern.permute.xlu0 0
      %433 = vperm.xlu0 %432, %v394
      %v434 = vpop.permute.xlu0 %433
      %437 = vset.pattern.permute.xlu0 0
      %438 = vperm.xlu0 %437, %v395
      %v439 = vpop.permute.xlu0 %438
      %442 = vset.pattern.permute.xlu0 0
      %443 = vperm.xlu0 %442, %v396
      %v444 = vpop.permute.xlu0 %443
      %447 = vset.pattern.permute.xlu0 0
      %448 = vperm.xlu0 %447, %v397
      %v449 = vpop.permute.xlu0 %448
      %452 = vset.pattern.permute.xlu0 0
      %453 = vperm.xlu0 %452, %v398
      %v454 = vpop.permute.xlu0 %453
      %457 = vset.pattern.permute.xlu0 0
      %458 = vperm.xlu0 %457, %v399
      %v459 = vpop.permute.xlu0 %458
      %462 = vset.pattern.permute.xlu0 0
      %463 = vperm.xlu0 %462, %v400
      %v464 = vpop.permute.xlu0 %463
      %467 = vset.pattern.permute.xlu0 0
      %468 = vperm.xlu0 %467, %v401
      %v469 = vpop.permute.xlu0 %468
      %472 = vset.pattern.permute.xlu0 0
      %473 = vperm.xlu0 %472, %v402
      %v474 = vpop.permute.xlu0 %473
      %477 = vset.pattern.permute.xlu0 0
      %478 = vperm.xlu0 %477, %v403
      %v479 = vpop.permute.xlu0 %478
      %482 = vset.pattern.permute.xlu0 0
      %483 = vperm.xlu0 %482, %v404
      %v484 = vpop.permute.xlu0 %483
      %v487 = vperm.slane %v405, 0
      %v488 = vperm.slane %v405, 1
      %v491 = vadd.f32 %v409, %v487
      %v492 = vadd.f32 %v409, %v488
      %v493 = vadd.f32 %v414, %v487
      %v494 = vadd.f32 %v414, %v488
      %v495 = vadd.f32 %v419, %v487
      %v496 = vadd.f32 %v419, %v488
      %v497 = vadd.f32 %v424, %v487
      %v498 = vadd.f32 %v424, %v488
      %v499 = vadd.f32 %v429, %v487
      %v500 = vadd.f32 %v429, %v488
      %v501 = vadd.f32 %v434, %v487
      %v502 = vadd.f32 %v434, %v488
      %v503 = vadd.f32 %v439, %v487
      %v504 = vadd.f32 %v439, %v488
      %v505 = vadd.f32 %v444, %v487
      %v506 = vadd.f32 %v444, %v488
      %v507 = vadd.f32 %v449, %v487
      %v508 = vadd.f32 %v449, %v488
      %v509 = vadd.f32 %v454, %v487
      %v510 = vadd.f32 %v454, %v488
      %v511 = vadd.f32 %v459, %v487
      %v512 = vadd.f32 %v459, %v488
      %v513 = vadd.f32 %v464, %v487
      %v514 = vadd.f32 %v464, %v488
      %v515 = vadd.f32 %v469, %v487
      %v516 = vadd.f32 %v469, %v488
      %v517 = vadd.f32 %v474, %v487
      %v518 = vadd.f32 %v474, %v488
      %v519 = vadd.f32 %v479, %v487
      %v520 = vadd.f32 %v479, %v488
      %v521 = vadd.f32 %v484, %v487
      %v522 = vadd.f32 %v484, %v488
      %vm523 = vcmp.gt.f32.partialorder %v491, 0.0
      %vm524 = vcmp.gt.f32.partialorder %v492, 0.0
      %vm525 = vcmp.gt.f32.partialorder %v493, 0.0
      %vm526 = vcmp.gt.f32.partialorder %v494, 0.0
      %vm527 = vcmp.gt.f32.partialorder %v495, 0.0
      %vm528 = vcmp.gt.f32.partialorder %v496, 0.0
      %vm529 = vcmp.gt.f32.partialorder %v497, 0.0
      %vm530 = vcmp.gt.f32.partialorder %v498, 0.0
      %vm531 = vcmp.gt.f32.partialorder %v499, 0.0
      %vm532 = vcmp.gt.f32.partialorder %v500, 0.0
      %vm533 = vcmp.gt.f32.partialorder %v501, 0.0
      %vm534 = vcmp.gt.f32.partialorder %v502, 0.0
      %vm535 = vcmp.gt.f32.partialorder %v503, 0.0
      %vm536 = vcmp.gt.f32.partialorder %v504, 0.0
      %vm537 = vcmp.gt.f32.partialorder %v505, 0.0
      %vm538 = vcmp.gt.f32.partialorder %v506, 0.0
      %vm539 = vcmp.gt.f32.partialorder %v507, 0.0
      %vm540 = vcmp.gt.f32.partialorder %v508, 0.0
      %vm541 = vcmp.gt.f32.partialorder %v509, 0.0
      %vm542 = vcmp.gt.f32.partialorder %v510, 0.0
      %vm543 = vcmp.gt.f32.partialorder %v511, 0.0
      %vm544 = vcmp.gt.f32.partialorder %v512, 0.0
      %vm545 = vcmp.gt.f32.partialorder %v513, 0.0
      %vm546 = vcmp.gt.f32.partialorder %v514, 0.0
      %vm547 = vcmp.gt.f32.partialorder %v515, 0.0
      %vm548 = vcmp.gt.f32.partialorder %v516, 0.0
      %vm549 = vcmp.gt.f32.partialorder %v517, 0.0
      %vm550 = vcmp.gt.f32.partialorder %v518, 0.0
      %vm551 = vcmp.gt.f32.partialorder %v519, 0.0
      %vm552 = vcmp.gt.f32.partialorder %v520, 0.0
      %vm553 = vcmp.gt.f32.partialorder %v521, 0.0
      %vm554 = vcmp.gt.f32.partialorder %v522, 0.0
      %v555 = vmul.f32 %v491, 0.2
      %v556 = vmul.f32 %v492, 0.2
      %v557 = vmul.f32 %v493, 0.2
      %v558 = vmul.f32 %v494, 0.2
      %v559 = vmul.f32 %v495, 0.2
      %v560 = vmul.f32 %v496, 0.2
      %v561 = vmul.f32 %v497, 0.2
      %v562 = vmul.f32 %v498, 0.2
      %v563 = vmul.f32 %v499, 0.2
      %v564 = vmul.f32 %v500, 0.2
      %v565 = vmul.f32 %v501, 0.2
      %v566 = vmul.f32 %v502, 0.2
      %v567 = vmul.f32 %v503, 0.2
      %v568 = vmul.f32 %v504, 0.2
      %v569 = vmul.f32 %v505, 0.2
      %v570 = vmul.f32 %v506, 0.2
      %v571 = vmul.f32 %v507, 0.2
      %v572 = vmul.f32 %v508, 0.2
      %v573 = vmul.f32 %v509, 0.2
      %v574 = vmul.f32 %v510, 0.2
      %v575 = vmul.f32 %v511, 0.2
      %v576 = vmul.f32 %v512, 0.2
      %v577 = vmul.f32 %v513, 0.2
      %v578 = vmul.f32 %v514, 0.2
      %v579 = vmul.f32 %v515, 0.2
      %v580 = vmul.f32 %v516, 0.2
      %v581 = vmul.f32 %v517, 0.2
      %v582 = vmul.f32 %v518, 0.2
      %v583 = vmul.f32 %v519, 0.2
      %v584 = vmul.f32 %v520, 0.2
      %v585 = vmul.f32 %v521, 0.2
      %v586 = vmul.f32 %v522, 0.2
      %v587 = vsel %vm523, %v491, %v555
      %v588 = vsel %vm524, %v492, %v556
      %v589 = vsel %vm525, %v493, %v557
      %v590 = vsel %vm526, %v494, %v558
      %v591 = vsel %vm527, %v495, %v559
      %v592 = vsel %vm528, %v496, %v560
      %v593 = vsel %vm529, %v497, %v561
      %v594 = vsel %vm530, %v498, %v562
      %v595 = vsel %vm531, %v499, %v563
      %v596 = vsel %vm532, %v500, %v564
      %v597 = vsel %vm533, %v501, %v565
      %v598 = vsel %vm534, %v502, %v566
      %v599 = vsel %vm535, %v503, %v567
      %v600 = vsel %vm536, %v504, %v568
      %v601 = vsel %vm537, %v505, %v569
      %v602 = vsel %vm538, %v506, %v570
      %v603 = vsel %vm539, %v507, %v571
      %v604 = vsel %vm540, %v508, %v572
      %v605 = vsel %vm541, %v509, %v573
      %v606 = vsel %vm542, %v510, %v574
      %v607 = vsel %vm543, %v511, %v575
      %v608 = vsel %vm544, %v512, %v576
      %v609 = vsel %vm545, %v513, %v577
      %v610 = vsel %vm546, %v514, %v578
      %v611 = vsel %vm547, %v515, %v579
      %v612 = vsel %vm548, %v516, %v580
      %v613 = vsel %vm549, %v517, %v581
      %v614 = vsel %vm550, %v518, %v582
      %v615 = vsel %vm551, %v519, %v583
      %v616 = vsel %vm552, %v520, %v584
      %v617 = vsel %vm553, %v521, %v585
      %v618 = vsel %vm554, %v522, %v586
      %v619 = vadd.f32 %v587, %v357
      %v620 = vadd.f32 %v588, %v358
      %v621 = vadd.f32 %v589, %v359
      %v622 = vadd.f32 %v590, %v360
      %v623 = vadd.f32 %v591, %v361
      %v624 = vadd.f32 %v592, %v362
      %v625 = vadd.f32 %v593, %v363
      %v626 = vadd.f32 %v594, %v364
      %v627 = vadd.f32 %v595, %v365
      %v628 = vadd.f32 %v596, %v366
      %v629 = vadd.f32 %v597, %v367
      %v630 = vadd.f32 %v598, %v368
      %v631 = vadd.f32 %v599, %v369
      %v632 = vadd.f32 %v600, %v370
      %v633 = vadd.f32 %v601, %v371
      %v634 = vadd.f32 %v602, %v372
      %v635 = vadd.f32 %v603, %v373
      %v636 = vadd.f32 %v604, %v374
      %v637 = vadd.f32 %v605, %v375
      %v638 = vadd.f32 %v606, %v376
      %v639 = vadd.f32 %v607, %v377
      %v640 = vadd.f32 %v608, %v378
      %v641 = vadd.f32 %v609, %v379
      %v642 = vadd.f32 %v610, %v380
      %v643 = vadd.f32 %v611, %v381
      %v644 = vadd.f32 %v612, %v382
      %v645 = vadd.f32 %v613, %v383
      %v646 = vadd.f32 %v614, %v384
      %v647 = vadd.f32 %v615, %v385
      %v648 = vadd.f32 %v616, %v386
      %v649 = vadd.f32 %v617, %v387
      %v650 = vadd.f32 %v618, %v388
      %v651 = vmax.f32 %v619, %v620
      %652 = vmax.xlane.f32.xlu0 %v651
      %v653 = vpop.xlane.xlu0 %652
      %v654 = vmax.f32 %v621, %v622
      %655 = vmax.xlane.f32.xlu0 %v654
      %v656 = vpop.xlane.xlu0 %655
      %v657 = vmax.f32 %v623, %v624
      %658 = vmax.xlane.f32.xlu0 %v657
      %v659 = vpop.xlane.xlu0 %658
      %v660 = vmax.f32 %v625, %v626
      %661 = vmax.xlane.f32.xlu0 %v660
      %v662 = vpop.xlane.xlu0 %661
      %v663 = vmax.f32 %v627, %v628
      %664 = vmax.xlane.f32.xlu0 %v663
      %v665 = vpop.xlane.xlu0 %664
      %v666 = vmax.f32 %v629, %v630
      %667 = vmax.xlane.f32.xlu0 %v666
      %v668 = vpop.xlane.xlu0 %667
      %v669 = vmax.f32 %v631, %v632
      %670 = vmax.xlane.f32.xlu0 %v669
      %v671 = vpop.xlane.xlu0 %670
      %v672 = vmax.f32 %v633, %v634
      %673 = vmax.xlane.f32.xlu0 %v672
      %v674 = vpop.xlane.xlu0 %673
      %v675 = vmax.f32 %v635, %v636
      %676 = vmax.xlane.f32.xlu0 %v675
      %v677 = vpop.xlane.xlu0 %676
      %v678 = vmax.f32 %v637, %v638
      %679 = vmax.xlane.f32.xlu0 %v678
      %v680 = vpop.xlane.xlu0 %679
      %v681 = vmax.f32 %v639, %v640
      %682 = vmax.xlane.f32.xlu0 %v681
      %v683 = vpop.xlane.xlu0 %682
      %v684 = vmax.f32 %v641, %v642
      %685 = vmax.xlane.f32.xlu0 %v684
      %v686 = vpop.xlane.xlu0 %685
      %v687 = vmax.f32 %v643, %v644
      %688 = vmax.xlane.f32.xlu0 %v687
      %v689 = vpop.xlane.xlu0 %688
      %v690 = vmax.f32 %v645, %v646
      %691 = vmax.xlane.f32.xlu0 %v690
      %v692 = vpop.xlane.xlu0 %691
      %v693 = vmax.f32 %v647, %v648
      %694 = vmax.xlane.f32.xlu0 %v693
      %v695 = vpop.xlane.xlu0 %694
      %v696 = vmax.f32 %v649, %v650
      %697 = vmax.xlane.f32.xlu0 %v696
      %v698 = vpop.xlane.xlu0 %697
      %v699 = vsub.f32 %v619, %v653
      %v700 = vsub.f32 %v620, %v653
      %v701 = vsub.f32 %v621, %v656
      %v702 = vsub.f32 %v622, %v656
      %v703 = vsub.f32 %v623, %v659
      %v704 = vsub.f32 %v624, %v659
      %v705 = vsub.f32 %v625, %v662
      %v706 = vsub.f32 %v626, %v662
      %v707 = vsub.f32 %v627, %v665
      %v708 = vsub.f32 %v628, %v665
      %v709 = vsub.f32 %v629, %v668
      %v710 = vsub.f32 %v630, %v668
      %v711 = vsub.f32 %v631, %v671
      %v712 = vsub.f32 %v632, %v671
      %v713 = vsub.f32 %v633, %v674
      %v714 = vsub.f32 %v634, %v674
      %v715 = vsub.f32 %v635, %v677
      %v716 = vsub.f32 %v636, %v677
      %v717 = vsub.f32 %v637, %v680
      %v718 = vsub.f32 %v638, %v680
      %v719 = vsub.f32 %v639, %v683
      %v720 = vsub.f32 %v640, %v683
      %v721 = vsub.f32 %v641, %v686
      %v722 = vsub.f32 %v642, %v686
      %v723 = vsub.f32 %v643, %v689
      %v724 = vsub.f32 %v644, %v689
      %v725 = vsub.f32 %v645, %v692
      %v726 = vsub.f32 %v646, %v692
      %v727 = vsub.f32 %v647, %v695
      %v728 = vsub.f32 %v648, %v695
      %v729 = vsub.f32 %v649, %v698
      %v730 = vsub.f32 %v650, %v698
      %v731 = vmul.f32 %v699, 1.442695
      %v732 = vpow.pop %v731
      %v733 = vmul.f32 %v700, 1.442695
      %v734 = vpow.pop %v733
      %v735 = vmul.f32 %v701, 1.442695
      %v736 = vpow.pop %v735
      %v737 = vmul.f32 %v702, 1.442695
      %v738 = vpow.pop %v737
      %v739 = vmul.f32 %v703, 1.442695
      %v740 = vpow.pop %v739
      %v741 = vmul.f32 %v704, 1.442695
      %v742 = vpow.pop %v741
      %v743 = vmul.f32 %v705, 1.442695
      %v744 = vpow.pop %v743
      %v745 = vmul.f32 %v706, 1.442695
      %v746 = vpow.pop %v745
      %v747 = vmul.f32 %v707, 1.442695
      %v748 = vpow.pop %v747
      %v749 = vmul.f32 %v708, 1.442695
      %v750 = vpow.pop %v749
      %v751 = vmul.f32 %v709, 1.442695
      %v752 = vpow.pop %v751
      %v753 = vmul.f32 %v710, 1.442695
      %v754 = vpow.pop %v753
      %v755 = vmul.f32 %v711, 1.442695
      %v756 = vpow.pop %v755
      %v757 = vmul.f32 %v712, 1.442695
      %v758 = vpow.pop %v757
      %v759 = vmul.f32 %v713, 1.442695
      %v760 = vpow.pop %v759
      %v761 = vmul.f32 %v714, 1.442695
      %v762 = vpow.pop %v761
      %v763 = vmul.f32 %v715, 1.442695
      %v764 = vpow.pop %v763
      %v765 = vmul.f32 %v716, 1.442695
      %v766 = vpow.pop %v765
      %v767 = vmul.f32 %v717, 1.442695
      %v768 = vpow.pop %v767
      %v769 = vmul.f32 %v718, 1.442695
      %v770 = vpow.pop %v769
      %v771 = vmul.f32 %v719, 1.442695
      %v772 = vpow.pop %v771
      %v773 = vmul.f32 %v720, 1.442695
      %v774 = vpow.pop %v773
      %v775 = vmul.f32 %v721, 1.442695
      %v776 = vpow.pop %v775
      %v777 = vmul.f32 %v722, 1.442695
      %v778 = vpow.pop %v777
      %v779 = vmul.f32 %v723, 1.442695
      %v780 = vpow.pop %v779
      %v781 = vmul.f32 %v724, 1.442695
      %v782 = vpow.pop %v781
      %v783 = vmul.f32 %v725, 1.442695
      %v784 = vpow.pop %v783
      %v785 = vmul.f32 %v726, 1.442695
      %v786 = vpow.pop %v785
      %v787 = vmul.f32 %v727, 1.442695
      %v788 = vpow.pop %v787
      %v789 = vmul.f32 %v728, 1.442695
      %v790 = vpow.pop %v789
      %v791 = vmul.f32 %v729, 1.442695
      %v792 = vpow.pop %v791
      %v793 = vmul.f32 %v730, 1.442695
      %v794 = vpow.pop %v793
      %v795 = vadd.f32 %v732, %v734
      %796 = vadd.xlane.f32.xlu0 %v795
      %v797 = vpop.xlane.xlu0 %796
      %v798 = vadd.f32 %v736, %v738
      %799 = vadd.xlane.f32.xlu0 %v798
      %v800 = vpop.xlane.xlu0 %799
      %v801 = vadd.f32 %v740, %v742
      %802 = vadd.xlane.f32.xlu0 %v801
      %v803 = vpop.xlane.xlu0 %802
      %v804 = vadd.f32 %v744, %v746
      %805 = vadd.xlane.f32.xlu0 %v804
      %v806 = vpop.xlane.xlu0 %805
      %v807 = vadd.f32 %v748, %v750
      %808 = vadd.xlane.f32.xlu0 %v807
      %v809 = vpop.xlane.xlu0 %808
      %v810 = vadd.f32 %v752, %v754
      %811 = vadd.xlane.f32.xlu0 %v810
      %v812 = vpop.xlane.xlu0 %811
      %v813 = vadd.f32 %v756, %v758
      %814 = vadd.xlane.f32.xlu0 %v813
      %v815 = vpop.xlane.xlu0 %814
      %v816 = vadd.f32 %v760, %v762
      %817 = vadd.xlane.f32.xlu0 %v816
      %v818 = vpop.xlane.xlu0 %817
      %v819 = vadd.f32 %v764, %v766
      %820 = vadd.xlane.f32.xlu0 %v819
      %v821 = vpop.xlane.xlu0 %820
      %v822 = vadd.f32 %v768, %v770
      %823 = vadd.xlane.f32.xlu0 %v822
      %v824 = vpop.xlane.xlu0 %823
      %v825 = vadd.f32 %v772, %v774
      %826 = vadd.xlane.f32.xlu0 %v825
      %v827 = vpop.xlane.xlu0 %826
      %v828 = vadd.f32 %v776, %v778
      %829 = vadd.xlane.f32.xlu0 %v828
      %v830 = vpop.xlane.xlu0 %829
      %v831 = vadd.f32 %v780, %v782
      %832 = vadd.xlane.f32.xlu0 %v831
      %v833 = vpop.xlane.xlu0 %832
      %v834 = vadd.f32 %v784, %v786
      %835 = vadd.xlane.f32.xlu0 %v834
      %v836 = vpop.xlane.xlu0 %835
      %v837 = vadd.f32 %v788, %v790
      %838 = vadd.xlane.f32.xlu0 %v837
      %v839 = vpop.xlane.xlu0 %838
      %v840 = vadd.f32 %v792, %v794
      %841 = vadd.xlane.f32.xlu0 %v840
      %v842 = vpop.xlane.xlu0 %841
      %v843 = vrcp.pop %v797
      %v844 = vrcp.pop %v800
      %v845 = vrcp.pop %v803
      %v846 = vrcp.pop %v806
      %v847 = vrcp.pop %v809
      %v848 = vrcp.pop %v812
      %v849 = vrcp.pop %v815
      %v850 = vrcp.pop %v818
      %v851 = vrcp.pop %v821
      %v852 = vrcp.pop %v824
      %v853 = vrcp.pop %v827
      %v854 = vrcp.pop %v830
      %v855 = vrcp.pop %v833
      %v856 = vrcp.pop %v836
      %v857 = vrcp.pop %v839
      %v858 = vrcp.pop %v842
      %v859 = vmul.f32 %v732, %v843
      %v860 = vmul.f32 %v734, %v843
      %v861 = vmul.f32 %v736, %v844
      %v862 = vmul.f32 %v738, %v844
      %v863 = vmul.f32 %v740, %v845
      %v864 = vmul.f32 %v742, %v845
      %v865 = vmul.f32 %v744, %v846
      %v866 = vmul.f32 %v746, %v846
      %v867 = vmul.f32 %v748, %v847
      %v868 = vmul.f32 %v750, %v847
      %v869 = vmul.f32 %v752, %v848
      %v870 = vmul.f32 %v754, %v848
      %v871 = vmul.f32 %v756, %v849
      %v872 = vmul.f32 %v758, %v849
      %v873 = vmul.f32 %v760, %v850
      %v874 = vmul.f32 %v762, %v850
      %v875 = vmul.f32 %v764, %v851
      %v876 = vmul.f32 %v766, %v851
      %v877 = vmul.f32 %v768, %v852
      %v878 = vmul.f32 %v770, %v852
      %v879 = vmul.f32 %v772, %v853
      %v880 = vmul.f32 %v774, %v853
      %v881 = vmul.f32 %v776, %v854
      %v882 = vmul.f32 %v778, %v854
      %v883 = vmul.f32 %v780, %v855
      %v884 = vmul.f32 %v782, %v855
      %v885 = vmul.f32 %v784, %v856
      %v886 = vmul.f32 %v786, %v856
      %v887 = vmul.f32 %v788, %v857
      %v888 = vmul.f32 %v790, %v857
      %v889 = vmul.f32 %v792, %v858
      %v890 = vmul.f32 %v794, %v858
      %v891 = vpack.c.bf16 %v861, %v859
      %v892 = vpack.c.bf16 %v862, %v860
      %v893 = vpack.c.bf16 %v865, %v863
      %v894 = vpack.c.bf16 %v866, %v864
      %v895 = vpack.c.bf16 %v869, %v867
      %v896 = vpack.c.bf16 %v870, %v868
      %v897 = vpack.c.bf16 %v873, %v871
      %v898 = vpack.c.bf16 %v874, %v872
      %v899 = vpack.c.bf16 %v877, %v875
      %v900 = vpack.c.bf16 %v878, %v876
      %v901 = vpack.c.bf16 %v881, %v879
      %v902 = vpack.c.bf16 %v882, %v880
      %v903 = vpack.c.bf16 %v885, %v883
      %v904 = vpack.c.bf16 %v886, %v884
      %v905 = vpack.c.bf16 %v889, %v887
      %v906 = vpack.c.bf16 %v890, %v888
      %v907 = vld [vmem:[%s3] sm:$0xf]
      %v908 = vld [vmem:[%s3 + $0x4] sm:$0xf]
      %v909 = vld [vmem:[%s3 + $0x8] sm:$0xf]
      %v910 = vld [vmem:[%s3 + $0xc] sm:$0xf]
      %v911 = vld [vmem:[%s3 + $0x10] sm:$0xf]
      %v912 = vld [vmem:[%s3 + $0x14] sm:$0xf]
      %v913 = vld [vmem:[%s3 + $0x18] sm:$0xf]
      %v914 = vld [vmem:[%s3 + $0x1c] sm:$0xf]
      %v915 = vld [vmem:[%s3 + $0x20] sm:$0xf]
      %v916 = vld [vmem:[%s3 + $0x24] sm:$0xf]
      %v917 = vld [vmem:[%s3 + $0x28] sm:$0xf]
      %v918 = vld [vmem:[%s3 + $0x2c] sm:$0xf]
      %v919 = vld [vmem:[%s3 + $0x30] sm:$0xf]
      %v920 = vld [vmem:[%s3 + $0x34] sm:$0xf]
      %v921 = vld [vmem:[%s3 + $0x38] sm:$0xf]
      %v922 = vld [vmem:[%s3 + $0x3c] sm:$0xf]
      %v923 = vld [vmem:[%s3 + $0x40] sm:$0xf]
      %v924 = vld [vmem:[%s3 + $0x44] sm:$0xf]
      %v925 = vld [vmem:[%s3 + $0x48] sm:$0xf]
      %v926 = vld [vmem:[%s3 + $0x4c] sm:$0xf]
      %v927 = vld [vmem:[%s3 + $0x50] sm:$0xf]
      %v928 = vld [vmem:[%s3 + $0x54] sm:$0xf]
      %v929 = vld [vmem:[%s3 + $0x58] sm:$0xf]
      %v930 = vld [vmem:[%s3 + $0x5c] sm:$0xf]
      %v931 = vld [vmem:[%s3 + $0x60] sm:$0xf]
      %v932 = vld [vmem:[%s3 + $0x64] sm:$0xf]
      %v933 = vld [vmem:[%s3 + $0x68] sm:$0xf]
      %v934 = vld [vmem:[%s3 + $0x6c] sm:$0xf]
      %v935 = vld [vmem:[%s3 + $0x70] sm:$0xf]
      %v936 = vld [vmem:[%s3 + $0x74] sm:$0xf]
      %v937 = vld [vmem:[%s3 + $0x78] sm:$0xf]
      %v938 = vld [vmem:[%s3 + $0x7c] sm:$0xf]
      %s939 = scalar_lea.vmem %s2, 1
      %v940 = vld [vmem:[%s939] ss:$4 sm:$0x3]
      %941 = vset.pattern.permute.xlu0 1
      %942 = vperm.xlu0 %941, %v389
      %v943 = vpop.permute.xlu0 %942
      %945 = vset.pattern.permute.xlu0 1
      %946 = vperm.xlu0 %945, %v390
      %v947 = vpop.permute.xlu0 %946
      %949 = vset.pattern.permute.xlu0 1
      %950 = vperm.xlu0 %949, %v391
      %v951 = vpop.permute.xlu0 %950
      %953 = vset.pattern.permute.xlu0 1
      %954 = vperm.xlu0 %953, %v392
      %v955 = vpop.permute.xlu0 %954
      %957 = vset.pattern.permute.xlu0 1
      %958 = vperm.xlu0 %957, %v393
      %v959 = vpop.permute.xlu0 %958
      %961 = vset.pattern.permute.xlu0 1
      %962 = vperm.xlu0 %961, %v394
      %v963 = vpop.permute.xlu0 %962
      %965 = vset.pattern.permute.xlu0 1
      %966 = vperm.xlu0 %965, %v395
      %v967 = vpop.permute.xlu0 %966
      %969 = vset.pattern.permute.xlu0 1
      %970 = vperm.xlu0 %969, %v396
      %v971 = vpop.permute.xlu0 %970
      %973 = vset.pattern.permute.xlu0 1
      %974 = vperm.xlu0 %973, %v397
      %v975 = vpop.permute.xlu0 %974
      %977 = vset.pattern.permute.xlu0 1
      %978 = vperm.xlu0 %977, %v398
      %v979 = vpop.permute.xlu0 %978
      %981 = vset.pattern.permute.xlu0 1
      %982 = vperm.xlu0 %981, %v399
      %v983 = vpop.permute.xlu0 %982
      %985 = vset.pattern.permute.xlu0 1
      %986 = vperm.xlu0 %985, %v400
      %v987 = vpop.permute.xlu0 %986
      %989 = vset.pattern.permute.xlu0 1
      %990 = vperm.xlu0 %989, %v401
      %v991 = vpop.permute.xlu0 %990
      %993 = vset.pattern.permute.xlu0 1
      %994 = vperm.xlu0 %993, %v402
      %v995 = vpop.permute.xlu0 %994
      %997 = vset.pattern.permute.xlu0 1
      %998 = vperm.xlu0 %997, %v403
      %v999 = vpop.permute.xlu0 %998
      %1001 = vset.pattern.permute.xlu0 1
      %1002 = vperm.xlu0 %1001, %v404
      %v1003 = vpop.permute.xlu0 %1002
      %v1006 = vperm.slane %v940, 0
      %v1007 = vperm.slane %v940, 1
      %v1010 = vadd.f32 %v943, %v1006
      %v1011 = vadd.f32 %v943, %v1007
      %v1012 = vadd.f32 %v947, %v1006
      %v1013 = vadd.f32 %v947, %v1007
      %v1014 = vadd.f32 %v951, %v1006
      %v1015 = vadd.f32 %v951, %v1007
      %v1016 = vadd.f32 %v955, %v1006
      %v1017 = vadd.f32 %v955, %v1007
      %v1018 = vadd.f32 %v959, %v1006
      %v1019 = vadd.f32 %v959, %v1007
      %v1020 = vadd.f32 %v963, %v1006
      %v1021 = vadd.f32 %v963, %v1007
      %v1022 = vadd.f32 %v967, %v1006
      %v1023 = vadd.f32 %v967, %v1007
      %v1024 = vadd.f32 %v971, %v1006
      %v1025 = vadd.f32 %v971, %v1007
      %v1026 = vadd.f32 %v975, %v1006
      %v1027 = vadd.f32 %v975, %v1007
      %v1028 = vadd.f32 %v979, %v1006
      %v1029 = vadd.f32 %v979, %v1007
      %v1030 = vadd.f32 %v983, %v1006
      %v1031 = vadd.f32 %v983, %v1007
      %v1032 = vadd.f32 %v987, %v1006
      %v1033 = vadd.f32 %v987, %v1007
      %v1034 = vadd.f32 %v991, %v1006
      %v1035 = vadd.f32 %v991, %v1007
      %v1036 = vadd.f32 %v995, %v1006
      %v1037 = vadd.f32 %v995, %v1007
      %v1038 = vadd.f32 %v999, %v1006
      %v1039 = vadd.f32 %v999, %v1007
      %v1040 = vadd.f32 %v1003, %v1006
      %v1041 = vadd.f32 %v1003, %v1007
      %vm1042 = vcmp.gt.f32.partialorder %v1010, 0.0
      %vm1043 = vcmp.gt.f32.partialorder %v1011, 0.0
      %vm1044 = vcmp.gt.f32.partialorder %v1012, 0.0
      %vm1045 = vcmp.gt.f32.partialorder %v1013, 0.0
      %vm1046 = vcmp.gt.f32.partialorder %v1014, 0.0
      %vm1047 = vcmp.gt.f32.partialorder %v1015, 0.0
      %vm1048 = vcmp.gt.f32.partialorder %v1016, 0.0
      %vm1049 = vcmp.gt.f32.partialorder %v1017, 0.0
      %vm1050 = vcmp.gt.f32.partialorder %v1018, 0.0
      %vm1051 = vcmp.gt.f32.partialorder %v1019, 0.0
      %vm1052 = vcmp.gt.f32.partialorder %v1020, 0.0
      %vm1053 = vcmp.gt.f32.partialorder %v1021, 0.0
      %vm1054 = vcmp.gt.f32.partialorder %v1022, 0.0
      %vm1055 = vcmp.gt.f32.partialorder %v1023, 0.0
      %vm1056 = vcmp.gt.f32.partialorder %v1024, 0.0
      %vm1057 = vcmp.gt.f32.partialorder %v1025, 0.0
      %vm1058 = vcmp.gt.f32.partialorder %v1026, 0.0
      %vm1059 = vcmp.gt.f32.partialorder %v1027, 0.0
      %vm1060 = vcmp.gt.f32.partialorder %v1028, 0.0
      %vm1061 = vcmp.gt.f32.partialorder %v1029, 0.0
      %vm1062 = vcmp.gt.f32.partialorder %v1030, 0.0
      %vm1063 = vcmp.gt.f32.partialorder %v1031, 0.0
      %vm1064 = vcmp.gt.f32.partialorder %v1032, 0.0
      %vm1065 = vcmp.gt.f32.partialorder %v1033, 0.0
      %vm1066 = vcmp.gt.f32.partialorder %v1034, 0.0
      %vm1067 = vcmp.gt.f32.partialorder %v1035, 0.0
      %vm1068 = vcmp.gt.f32.partialorder %v1036, 0.0
      %vm1069 = vcmp.gt.f32.partialorder %v1037, 0.0
      %vm1070 = vcmp.gt.f32.partialorder %v1038, 0.0
      %vm1071 = vcmp.gt.f32.partialorder %v1039, 0.0
      %vm1072 = vcmp.gt.f32.partialorder %v1040, 0.0
      %vm1073 = vcmp.gt.f32.partialorder %v1041, 0.0
      %v1074 = vmul.f32 %v1010, 0.2
      %v1075 = vmul.f32 %v1011, 0.2
      %v1076 = vmul.f32 %v1012, 0.2
      %v1077 = vmul.f32 %v1013, 0.2
      %v1078 = vmul.f32 %v1014, 0.2
      %v1079 = vmul.f32 %v1015, 0.2
      %v1080 = vmul.f32 %v1016, 0.2
      %v1081 = vmul.f32 %v1017, 0.2
      %v1082 = vmul.f32 %v1018, 0.2
      %v1083 = vmul.f32 %v1019, 0.2
      %v1084 = vmul.f32 %v1020, 0.2
      %v1085 = vmul.f32 %v1021, 0.2
      %v1086 = vmul.f32 %v1022, 0.2
      %v1087 = vmul.f32 %v1023, 0.2
      %v1088 = vmul.f32 %v1024, 0.2
      %v1089 = vmul.f32 %v1025, 0.2
      %v1090 = vmul.f32 %v1026, 0.2
      %v1091 = vmul.f32 %v1027, 0.2
      %v1092 = vmul.f32 %v1028, 0.2
      %v1093 = vmul.f32 %v1029, 0.2
      %v1094 = vmul.f32 %v1030, 0.2
      %v1095 = vmul.f32 %v1031, 0.2
      %v1096 = vmul.f32 %v1032, 0.2
      %v1097 = vmul.f32 %v1033, 0.2
      %v1098 = vmul.f32 %v1034, 0.2
      %v1099 = vmul.f32 %v1035, 0.2
      %v1100 = vmul.f32 %v1036, 0.2
      %v1101 = vmul.f32 %v1037, 0.2
      %v1102 = vmul.f32 %v1038, 0.2
      %v1103 = vmul.f32 %v1039, 0.2
      %v1104 = vmul.f32 %v1040, 0.2
      %v1105 = vmul.f32 %v1041, 0.2
      %v1106 = vsel %vm1042, %v1010, %v1074
      %v1107 = vsel %vm1043, %v1011, %v1075
      %v1108 = vsel %vm1044, %v1012, %v1076
      %v1109 = vsel %vm1045, %v1013, %v1077
      %v1110 = vsel %vm1046, %v1014, %v1078
      %v1111 = vsel %vm1047, %v1015, %v1079
      %v1112 = vsel %vm1048, %v1016, %v1080
      %v1113 = vsel %vm1049, %v1017, %v1081
      %v1114 = vsel %vm1050, %v1018, %v1082
      %v1115 = vsel %vm1051, %v1019, %v1083
      %v1116 = vsel %vm1052, %v1020, %v1084
      %v1117 = vsel %vm1053, %v1021, %v1085
      %v1118 = vsel %vm1054, %v1022, %v1086
      %v1119 = vsel %vm1055, %v1023, %v1087
      %v1120 = vsel %vm1056, %v1024, %v1088
      %v1121 = vsel %vm1057, %v1025, %v1089
      %v1122 = vsel %vm1058, %v1026, %v1090
      %v1123 = vsel %vm1059, %v1027, %v1091
      %v1124 = vsel %vm1060, %v1028, %v1092
      %v1125 = vsel %vm1061, %v1029, %v1093
      %v1126 = vsel %vm1062, %v1030, %v1094
      %v1127 = vsel %vm1063, %v1031, %v1095
      %v1128 = vsel %vm1064, %v1032, %v1096
      %v1129 = vsel %vm1065, %v1033, %v1097
      %v1130 = vsel %vm1066, %v1034, %v1098
      %v1131 = vsel %vm1067, %v1035, %v1099
      %v1132 = vsel %vm1068, %v1036, %v1100
      %v1133 = vsel %vm1069, %v1037, %v1101
      %v1134 = vsel %vm1070, %v1038, %v1102
      %v1135 = vsel %vm1071, %v1039, %v1103
      %v1136 = vsel %vm1072, %v1040, %v1104
      %v1137 = vsel %vm1073, %v1041, %v1105
      %v1138 = vadd.f32 %v1106, %v357
      %v1139 = vadd.f32 %v1107, %v358
      %v1140 = vadd.f32 %v1108, %v359
      %v1141 = vadd.f32 %v1109, %v360
      %v1142 = vadd.f32 %v1110, %v361
      %v1143 = vadd.f32 %v1111, %v362
      %v1144 = vadd.f32 %v1112, %v363
      %v1145 = vadd.f32 %v1113, %v364
      %v1146 = vadd.f32 %v1114, %v365
      %v1147 = vadd.f32 %v1115, %v366
      %v1148 = vadd.f32 %v1116, %v367
      %v1149 = vadd.f32 %v1117, %v368
      %v1150 = vadd.f32 %v1118, %v369
      %v1151 = vadd.f32 %v1119, %v370
      %v1152 = vadd.f32 %v1120, %v371
      %v1153 = vadd.f32 %v1121, %v372
      %v1154 = vadd.f32 %v1122, %v373
      %v1155 = vadd.f32 %v1123, %v374
      %v1156 = vadd.f32 %v1124, %v375
      %v1157 = vadd.f32 %v1125, %v376
      %v1158 = vadd.f32 %v1126, %v377
      %v1159 = vadd.f32 %v1127, %v378
      %v1160 = vadd.f32 %v1128, %v379
      %v1161 = vadd.f32 %v1129, %v380
      %v1162 = vadd.f32 %v1130, %v381
      %v1163 = vadd.f32 %v1131, %v382
      %v1164 = vadd.f32 %v1132, %v383
      %v1165 = vadd.f32 %v1133, %v384
      %v1166 = vadd.f32 %v1134, %v385
      %v1167 = vadd.f32 %v1135, %v386
      %v1168 = vadd.f32 %v1136, %v387
      %v1169 = vadd.f32 %v1137, %v388
      %v1170 = vmax.f32 %v1138, %v1139
      %1171 = vmax.xlane.f32.xlu0 %v1170
      %v1172 = vpop.xlane.xlu0 %1171
      %v1173 = vmax.f32 %v1140, %v1141
      %1174 = vmax.xlane.f32.xlu0 %v1173
      %v1175 = vpop.xlane.xlu0 %1174
      %v1176 = vmax.f32 %v1142, %v1143
      %1177 = vmax.xlane.f32.xlu0 %v1176
      %v1178 = vpop.xlane.xlu0 %1177
      %v1179 = vmax.f32 %v1144, %v1145
      %1180 = vmax.xlane.f32.xlu0 %v1179
      %v1181 = vpop.xlane.xlu0 %1180
      %v1182 = vmax.f32 %v1146, %v1147
      %1183 = vmax.xlane.f32.xlu0 %v1182
      %v1184 = vpop.xlane.xlu0 %1183
      %v1185 = vmax.f32 %v1148, %v1149
      %1186 = vmax.xlane.f32.xlu0 %v1185
      %v1187 = vpop.xlane.xlu0 %1186
      %v1188 = vmax.f32 %v1150, %v1151
      %1189 = vmax.xlane.f32.xlu0 %v1188
      %v1190 = vpop.xlane.xlu0 %1189
      %v1191 = vmax.f32 %v1152, %v1153
      %1192 = vmax.xlane.f32.xlu0 %v1191
      %v1193 = vpop.xlane.xlu0 %1192
      %v1194 = vmax.f32 %v1154, %v1155
      %1195 = vmax.xlane.f32.xlu0 %v1194
      %v1196 = vpop.xlane.xlu0 %1195
      %v1197 = vmax.f32 %v1156, %v1157
      %1198 = vmax.xlane.f32.xlu0 %v1197
      %v1199 = vpop.xlane.xlu0 %1198
      %v1200 = vmax.f32 %v1158, %v1159
      %1201 = vmax.xlane.f32.xlu0 %v1200
      %v1202 = vpop.xlane.xlu0 %1201
      %v1203 = vmax.f32 %v1160, %v1161
      %1204 = vmax.xlane.f32.xlu0 %v1203
      %v1205 = vpop.xlane.xlu0 %1204
      %v1206 = vmax.f32 %v1162, %v1163
      %1207 = vmax.xlane.f32.xlu0 %v1206
      %v1208 = vpop.xlane.xlu0 %1207
      %v1209 = vmax.f32 %v1164, %v1165
      %1210 = vmax.xlane.f32.xlu0 %v1209
      %v1211 = vpop.xlane.xlu0 %1210
      %v1212 = vmax.f32 %v1166, %v1167
      %1213 = vmax.xlane.f32.xlu0 %v1212
      %v1214 = vpop.xlane.xlu0 %1213
      %v1215 = vmax.f32 %v1168, %v1169
      %1216 = vmax.xlane.f32.xlu0 %v1215
      %v1217 = vpop.xlane.xlu0 %1216
      %v1218 = vsub.f32 %v1138, %v1172
      %v1219 = vsub.f32 %v1139, %v1172
      %v1220 = vsub.f32 %v1140, %v1175
      %v1221 = vsub.f32 %v1141, %v1175
      %v1222 = vsub.f32 %v1142, %v1178
      %v1223 = vsub.f32 %v1143, %v1178
      %v1224 = vsub.f32 %v1144, %v1181
      %v1225 = vsub.f32 %v1145, %v1181
      %v1226 = vsub.f32 %v1146, %v1184
      %v1227 = vsub.f32 %v1147, %v1184
      %v1228 = vsub.f32 %v1148, %v1187
      %v1229 = vsub.f32 %v1149, %v1187
      %v1230 = vsub.f32 %v1150, %v1190
      %v1231 = vsub.f32 %v1151, %v1190
      %v1232 = vsub.f32 %v1152, %v1193
      %v1233 = vsub.f32 %v1153, %v1193
      %v1234 = vsub.f32 %v1154, %v1196
      %v1235 = vsub.f32 %v1155, %v1196
      %v1236 = vsub.f32 %v1156, %v1199
      %v1237 = vsub.f32 %v1157, %v1199
      %v1238 = vsub.f32 %v1158, %v1202
      %v1239 = vsub.f32 %v1159, %v1202
      %v1240 = vsub.f32 %v1160, %v1205
      %v1241 = vsub.f32 %v1161, %v1205
      %v1242 = vsub.f32 %v1162, %v1208
      %v1243 = vsub.f32 %v1163, %v1208
      %v1244 = vsub.f32 %v1164, %v1211
      %v1245 = vsub.f32 %v1165, %v1211
      %v1246 = vsub.f32 %v1166, %v1214
      %v1247 = vsub.f32 %v1167, %v1214
      %v1248 = vsub.f32 %v1168, %v1217
      %v1249 = vsub.f32 %v1169, %v1217
      %v1250 = vmul.f32 %v1218, 1.442695
      %v1251 = vpow.pop %v1250
      %v1252 = vmul.f32 %v1219, 1.442695
      %v1253 = vpow.pop %v1252
      %v1254 = vmul.f32 %v1220, 1.442695
      %v1255 = vpow.pop %v1254
      %v1256 = vmul.f32 %v1221, 1.442695
      %v1257 = vpow.pop %v1256
      %v1258 = vmul.f32 %v1222, 1.442695
      %v1259 = vpow.pop %v1258
      %v1260 = vmul.f32 %v1223, 1.442695
      %v1261 = vpow.pop %v1260
      %v1262 = vmul.f32 %v1224, 1.442695
      %v1263 = vpow.pop %v1262
      %v1264 = vmul.f32 %v1225, 1.442695
      %v1265 = vpow.pop %v1264
      %v1266 = vmul.f32 %v1226, 1.442695
      %v1267 = vpow.pop %v1266
      %v1268 = vmul.f32 %v1227, 1.442695
      %v1269 = vpow.pop %v1268
      %v1270 = vmul.f32 %v1228, 1.442695
      %v1271 = vpow.pop %v1270
      %v1272 = vmul.f32 %v1229, 1.442695
      %v1273 = vpow.pop %v1272
      %v1274 = vmul.f32 %v1230, 1.442695
      %v1275 = vpow.pop %v1274
      %v1276 = vmul.f32 %v1231, 1.442695
      %v1277 = vpow.pop %v1276
      %v1278 = vmul.f32 %v1232, 1.442695
      %v1279 = vpow.pop %v1278
      %v1280 = vmul.f32 %v1233, 1.442695
      %v1281 = vpow.pop %v1280
      %v1282 = vmul.f32 %v1234, 1.442695
      %v1283 = vpow.pop %v1282
      %v1284 = vmul.f32 %v1235, 1.442695
      %v1285 = vpow.pop %v1284
      %v1286 = vmul.f32 %v1236, 1.442695
      %v1287 = vpow.pop %v1286
      %v1288 = vmul.f32 %v1237, 1.442695
      %v1289 = vpow.pop %v1288
      %v1290 = vmul.f32 %v1238, 1.442695
      %v1291 = vpow.pop %v1290
      %v1292 = vmul.f32 %v1239, 1.442695
      %v1293 = vpow.pop %v1292
      %v1294 = vmul.f32 %v1240, 1.442695
      %v1295 = vpow.pop %v1294
      %v1296 = vmul.f32 %v1241, 1.442695
      %v1297 = vpow.pop %v1296
      %v1298 = vmul.f32 %v1242, 1.442695
      %v1299 = vpow.pop %v1298
      %v1300 = vmul.f32 %v1243, 1.442695
      %v1301 = vpow.pop %v1300
      %v1302 = vmul.f32 %v1244, 1.442695
      %v1303 = vpow.pop %v1302
      %v1304 = vmul.f32 %v1245, 1.442695
      %v1305 = vpow.pop %v1304
      %v1306 = vmul.f32 %v1246, 1.442695
      %v1307 = vpow.pop %v1306
      %v1308 = vmul.f32 %v1247, 1.442695
      %v1309 = vpow.pop %v1308
      %v1310 = vmul.f32 %v1248, 1.442695
      %v1311 = vpow.pop %v1310
      %v1312 = vmul.f32 %v1249, 1.442695
      %v1313 = vpow.pop %v1312
      %v1314 = vadd.f32 %v1251, %v1253
      %1315 = vadd.xlane.f32.xlu0 %v1314
      %v1316 = vpop.xlane.xlu0 %1315
      %v1317 = vadd.f32 %v1255, %v1257
      %1318 = vadd.xlane.f32.xlu0 %v1317
      %v1319 = vpop.xlane.xlu0 %1318
      %v1320 = vadd.f32 %v1259, %v1261
      %1321 = vadd.xlane.f32.xlu0 %v1320
      %v1322 = vpop.xlane.xlu0 %1321
      %v1323 = vadd.f32 %v1263, %v1265
      %1324 = vadd.xlane.f32.xlu0 %v1323
      %v1325 = vpop.xlane.xlu0 %1324
      %v1326 = vadd.f32 %v1267, %v1269
      %1327 = vadd.xlane.f32.xlu0 %v1326
      %v1328 = vpop.xlane.xlu0 %1327
      %v1329 = vadd.f32 %v1271, %v1273
      %1330 = vadd.xlane.f32.xlu0 %v1329
      %v1331 = vpop.xlane.xlu0 %1330
      %v1332 = vadd.f32 %v1275, %v1277
      %1333 = vadd.xlane.f32.xlu0 %v1332
      %v1334 = vpop.xlane.xlu0 %1333
      %v1335 = vadd.f32 %v1279, %v1281
      %1336 = vadd.xlane.f32.xlu0 %v1335
      %v1337 = vpop.xlane.xlu0 %1336
      %v1338 = vadd.f32 %v1283, %v1285
      %1339 = vadd.xlane.f32.xlu0 %v1338
      %v1340 = vpop.xlane.xlu0 %1339
      %v1341 = vadd.f32 %v1287, %v1289
      %1342 = vadd.xlane.f32.xlu0 %v1341
      %v1343 = vpop.xlane.xlu0 %1342
      %v1344 = vadd.f32 %v1291, %v1293
      %1345 = vadd.xlane.f32.xlu0 %v1344
      %v1346 = vpop.xlane.xlu0 %1345
      %v1347 = vadd.f32 %v1295, %v1297
      %1348 = vadd.xlane.f32.xlu0 %v1347
      %v1349 = vpop.xlane.xlu0 %1348
      %v1350 = vadd.f32 %v1299, %v1301
      %1351 = vadd.xlane.f32.xlu0 %v1350
      %v1352 = vpop.xlane.xlu0 %1351
      %v1353 = vadd.f32 %v1303, %v1305
      %1354 = vadd.xlane.f32.xlu0 %v1353
      %v1355 = vpop.xlane.xlu0 %1354
      %v1356 = vadd.f32 %v1307, %v1309
      %1357 = vadd.xlane.f32.xlu0 %v1356
      %v1358 = vpop.xlane.xlu0 %1357
      %v1359 = vadd.f32 %v1311, %v1313
      %1360 = vadd.xlane.f32.xlu0 %v1359
      %v1361 = vpop.xlane.xlu0 %1360
      %v1362 = vrcp.pop %v1316
      %v1363 = vrcp.pop %v1319
      %v1364 = vrcp.pop %v1322
      %v1365 = vrcp.pop %v1325
      %v1366 = vrcp.pop %v1328
      %v1367 = vrcp.pop %v1331
      %v1368 = vrcp.pop %v1334
      %v1369 = vrcp.pop %v1337
      %v1370 = vrcp.pop %v1340
      %v1371 = vrcp.pop %v1343
      %v1372 = vrcp.pop %v1346
      %v1373 = vrcp.pop %v1349
      %v1374 = vrcp.pop %v1352
      %v1375 = vrcp.pop %v1355
      %v1376 = vrcp.pop %v1358
      %v1377 = vrcp.pop %v1361
      %v1378 = vmul.f32 %v1251, %v1362
      %v1379 = vmul.f32 %v1253, %v1362
      %v1380 = vmul.f32 %v1255, %v1363
      %v1381 = vmul.f32 %v1257, %v1363
      %v1382 = vmul.f32 %v1259, %v1364
      %v1383 = vmul.f32 %v1261, %v1364
      %v1384 = vmul.f32 %v1263, %v1365
      %v1385 = vmul.f32 %v1265, %v1365
      %v1386 = vmul.f32 %v1267, %v1366
      %v1387 = vmul.f32 %v1269, %v1366
      %v1388 = vmul.f32 %v1271, %v1367
      %v1389 = vmul.f32 %v1273, %v1367
      %v1390 = vmul.f32 %v1275, %v1368
      %v1391 = vmul.f32 %v1277, %v1368
      %v1392 = vmul.f32 %v1279, %v1369
      %v1393 = vmul.f32 %v1281, %v1369
      %v1394 = vmul.f32 %v1283, %v1370
      %v1395 = vmul.f32 %v1285, %v1370
      %v1396 = vmul.f32 %v1287, %v1371
      %v1397 = vmul.f32 %v1289, %v1371
      %v1398 = vmul.f32 %v1291, %v1372
      %v1399 = vmul.f32 %v1293, %v1372
      %v1400 = vmul.f32 %v1295, %v1373
      %v1401 = vmul.f32 %v1297, %v1373
      %v1402 = vmul.f32 %v1299, %v1374
      %v1403 = vmul.f32 %v1301, %v1374
      %v1404 = vmul.f32 %v1303, %v1375
      %v1405 = vmul.f32 %v1305, %v1375
      %v1406 = vmul.f32 %v1307, %v1376
      %v1407 = vmul.f32 %v1309, %v1376
      %v1408 = vmul.f32 %v1311, %v1377
      %v1409 = vmul.f32 %v1313, %v1377
      %v1410 = vpack.c.bf16 %v1380, %v1378
      %v1411 = vpack.c.bf16 %v1381, %v1379
      %v1412 = vpack.c.bf16 %v1384, %v1382
      %v1413 = vpack.c.bf16 %v1385, %v1383
      %v1414 = vpack.c.bf16 %v1388, %v1386
      %v1415 = vpack.c.bf16 %v1389, %v1387
      %v1416 = vpack.c.bf16 %v1392, %v1390
      %v1417 = vpack.c.bf16 %v1393, %v1391
      %v1418 = vpack.c.bf16 %v1396, %v1394
      %v1419 = vpack.c.bf16 %v1397, %v1395
      %v1420 = vpack.c.bf16 %v1400, %v1398
      %v1421 = vpack.c.bf16 %v1401, %v1399
      %v1422 = vpack.c.bf16 %v1404, %v1402
      %v1423 = vpack.c.bf16 %v1405, %v1403
      %v1424 = vpack.c.bf16 %v1408, %v1406
      %v1425 = vpack.c.bf16 %v1409, %v1407
      %s1426 = scalar_lea.vmem %s3, 128
      %v1427 = vld [vmem:[%s1426] sm:$0xf]
      %v1428 = vld [vmem:[%s1426 + $0x4] sm:$0xf]
      %v1429 = vld [vmem:[%s1426 + $0x8] sm:$0xf]
      %v1430 = vld [vmem:[%s1426 + $0xc] sm:$0xf]
      %v1431 = vld [vmem:[%s1426 + $0x10] sm:$0xf]
      %v1432 = vld [vmem:[%s1426 + $0x14] sm:$0xf]
      %v1433 = vld [vmem:[%s1426 + $0x18] sm:$0xf]
      %v1434 = vld [vmem:[%s1426 + $0x1c] sm:$0xf]
      %v1435 = vld [vmem:[%s1426 + $0x20] sm:$0xf]
      %v1436 = vld [vmem:[%s1426 + $0x24] sm:$0xf]
      %v1437 = vld [vmem:[%s1426 + $0x28] sm:$0xf]
      %v1438 = vld [vmem:[%s1426 + $0x2c] sm:$0xf]
      %v1439 = vld [vmem:[%s1426 + $0x30] sm:$0xf]
      %v1440 = vld [vmem:[%s1426 + $0x34] sm:$0xf]
      %v1441 = vld [vmem:[%s1426 + $0x38] sm:$0xf]
      %v1442 = vld [vmem:[%s1426 + $0x3c] sm:$0xf]
      %v1443 = vld [vmem:[%s1426 + $0x40] sm:$0xf]
      %v1444 = vld [vmem:[%s1426 + $0x44] sm:$0xf]
      %v1445 = vld [vmem:[%s1426 + $0x48] sm:$0xf]
      %v1446 = vld [vmem:[%s1426 + $0x4c] sm:$0xf]
      %v1447 = vld [vmem:[%s1426 + $0x50] sm:$0xf]
      %v1448 = vld [vmem:[%s1426 + $0x54] sm:$0xf]
      %v1449 = vld [vmem:[%s1426 + $0x58] sm:$0xf]
      %v1450 = vld [vmem:[%s1426 + $0x5c] sm:$0xf]
      %v1451 = vld [vmem:[%s1426 + $0x60] sm:$0xf]
      %v1452 = vld [vmem:[%s1426 + $0x64] sm:$0xf]
      %v1453 = vld [vmem:[%s1426 + $0x68] sm:$0xf]
      %v1454 = vld [vmem:[%s1426 + $0x6c] sm:$0xf]
      %v1455 = vld [vmem:[%s1426 + $0x70] sm:$0xf]
      %v1456 = vld [vmem:[%s1426 + $0x74] sm:$0xf]
      %v1457 = vld [vmem:[%s1426 + $0x78] sm:$0xf]
      %v1458 = vld [vmem:[%s1426 + $0x7c] sm:$0xf]
      %v1491 = vunpack.c.l.b16 %v1427
      %v1492 = vunpack.c.l.b16 %v1428
      %v1493 = vunpack.c.l.b16 %v1429
      %v1494 = vunpack.c.l.b16 %v1430
      %v1495 = vunpack.c.l.b16 %v1431
      %v1496 = vunpack.c.l.b16 %v1432
      %v1497 = vunpack.c.l.b16 %v1433
      %v1498 = vunpack.c.l.b16 %v1434
      %v1499 = vunpack.c.l.b16 %v1435
      %v1500 = vunpack.c.l.b16 %v1436
      %v1501 = vunpack.c.l.b16 %v1437
      %v1502 = vunpack.c.l.b16 %v1438
      %v1503 = vunpack.c.l.b16 %v1439
      %v1504 = vunpack.c.l.b16 %v1440
      %v1505 = vunpack.c.l.b16 %v1441
      %v1506 = vunpack.c.l.b16 %v1442
      %v1507 = vunpack.c.l.b16 %v1443
      %v1508 = vunpack.c.l.b16 %v1444
      %v1509 = vunpack.c.l.b16 %v1445
      %v1510 = vunpack.c.l.b16 %v1446
      %v1511 = vunpack.c.l.b16 %v1447
      %v1512 = vunpack.c.l.b16 %v1448
      %v1513 = vunpack.c.l.b16 %v1449
      %v1514 = vunpack.c.l.b16 %v1450
      %v1515 = vunpack.c.l.b16 %v1451
      %v1516 = vunpack.c.l.b16 %v1452
      %v1517 = vunpack.c.l.b16 %v1453
      %v1518 = vunpack.c.l.b16 %v1454
      %v1519 = vunpack.c.l.b16 %v1455
      %v1520 = vunpack.c.l.b16 %v1456
      %v1521 = vunpack.c.l.b16 %v1457
      %v1522 = vunpack.c.l.b16 %v1458
      %v1523 = vpack.c.b16 %v1492, %v1491
      %v1524 = vpack.c.b16 %v1494, %v1493
      %v1525 = vpack.c.b16 %v1496, %v1495
      %v1526 = vpack.c.b16 %v1498, %v1497
      %v1527 = vpack.c.b16 %v1500, %v1499
      %v1528 = vpack.c.b16 %v1502, %v1501
      %v1529 = vpack.c.b16 %v1504, %v1503
      %v1530 = vpack.c.b16 %v1506, %v1505
      %v1531 = vpack.c.b16 %v1508, %v1507
      %v1532 = vpack.c.b16 %v1510, %v1509
      %v1533 = vpack.c.b16 %v1512, %v1511
      %v1534 = vpack.c.b16 %v1514, %v1513
      %v1535 = vpack.c.b16 %v1516, %v1515
      %v1536 = vpack.c.b16 %v1518, %v1517
      %v1537 = vpack.c.b16 %v1520, %v1519
      %v1538 = vpack.c.b16 %v1522, %v1521
      %1555 = vmatpush.bf16.msra.mxu0 %v1530
      %1556 = vmatpush.bf16.msra.mxu0 %v1529
      %1557 = vmatpush.bf16.msra.mxu0 %v1528
      %1558 = vmatpush.bf16.msra.mxu0 %v1527
      %1559 = vmatpush.bf16.msra.mxu0 %v1526
      %1560 = vmatpush.bf16.msra.mxu0 %v1525
      %1561 = vmatpush.bf16.msra.mxu0 %v1524
      %1562 = vmatpush.bf16.msra.mxu0 %v1523
      %1563 = vmatmul.bf16.gmra.mxu0 %v1410
      %v1564 = vpop.f32.mrf.mxu0
      %v1565 = vadd.f32 0.0, %v1564
      %v1566 = vpop.f32.mrf.mxu0
      %v1567 = vadd.f32 0.0, %v1566
      %1568 = vmatmul.bf16.gmra.mxu0 %v1412
      %v1569 = vpop.f32.mrf.mxu0
      %v1570 = vadd.f32 0.0, %v1569
      %v1571 = vpop.f32.mrf.mxu0
      %v1572 = vadd.f32 0.0, %v1571
      %1573 = vmatmul.bf16.gmra.mxu0 %v1414
      %v1574 = vpop.f32.mrf.mxu0
      %v1575 = vadd.f32 0.0, %v1574
      %v1576 = vpop.f32.mrf.mxu0
      %v1577 = vadd.f32 0.0, %v1576
      %1578 = vmatmul.bf16.gmra.mxu0 %v1416
      %v1579 = vpop.f32.mrf.mxu0
      %v1580 = vadd.f32 0.0, %v1579
      %v1581 = vpop.f32.mrf.mxu0
      %v1582 = vadd.f32 0.0, %v1581
      %1583 = vmatmul.bf16.gmra.mxu0 %v1418
      %v1584 = vpop.f32.mrf.mxu0
      %v1585 = vadd.f32 0.0, %v1584
      %v1586 = vpop.f32.mrf.mxu0
      %v1587 = vadd.f32 0.0, %v1586
      %1588 = vmatmul.bf16.gmra.mxu0 %v1420
      %v1589 = vpop.f32.mrf.mxu0
      %v1590 = vadd.f32 0.0, %v1589
      %v1591 = vpop.f32.mrf.mxu0
      %v1592 = vadd.f32 0.0, %v1591
      %1593 = vmatmul.bf16.gmra.mxu0 %v1422
      %v1594 = vpop.f32.mrf.mxu0
      %v1595 = vadd.f32 0.0, %v1594
      %v1596 = vpop.f32.mrf.mxu0
      %v1597 = vadd.f32 0.0, %v1596
      %1598 = vmatmul.bf16.gmra.mxu0 %v1424
      %v1599 = vpop.f32.mrf.mxu0
      %v1600 = vadd.f32 0.0, %v1599
      %v1601 = vpop.f32.mrf.mxu0
      %v1602 = vadd.f32 0.0, %v1601
      %1603 = vdwg.mxu0
      %1604 = vmatpush.bf16.msra.mxu0 %v1538
      %1605 = vmatpush.bf16.msra.mxu0 %v1537
      %1606 = vmatpush.bf16.msra.mxu0 %v1536
      %1607 = vmatpush.bf16.msra.mxu0 %v1535
      %1608 = vmatpush.bf16.msra.mxu0 %v1534
      %1609 = vmatpush.bf16.msra.mxu0 %v1533
      %1610 = vmatpush.bf16.msra.mxu0 %v1532
      %1611 = vmatpush.bf16.msra.mxu0 %v1531
      %1612 = vmatmul.bf16.gmra.mxu0 %v1411
      %v1613 = vpop.f32.mrf.mxu0
      %v1614 = vadd.f32 %v1565, %v1613
      %v1615 = vpop.f32.mrf.mxu0
      %v1616 = vadd.f32 %v1567, %v1615
      %1617 = vmatmul.bf16.gmra.mxu0 %v1413
      %v1618 = vpop.f32.mrf.mxu0
      %v1619 = vadd.f32 %v1570, %v1618
      %v1620 = vpop.f32.mrf.mxu0
      %v1621 = vadd.f32 %v1572, %v1620
      %1622 = vmatmul.bf16.gmra.mxu0 %v1415
      %v1623 = vpop.f32.mrf.mxu0
      %v1624 = vadd.f32 %v1575, %v1623
      %v1625 = vpop.f32.mrf.mxu0
      %v1626 = vadd.f32 %v1577, %v1625
      %1627 = vmatmul.bf16.gmra.mxu0 %v1417
      %v1628 = vpop.f32.mrf.mxu0
      %v1629 = vadd.f32 %v1580, %v1628
      %v1630 = vpop.f32.mrf.mxu0
      %v1631 = vadd.f32 %v1582, %v1630
      %1632 = vmatmul.bf16.gmra.mxu0 %v1419
      %v1633 = vpop.f32.mrf.mxu0
      %v1634 = vadd.f32 %v1585, %v1633
      %v1635 = vpop.f32.mrf.mxu0
      %v1636 = vadd.f32 %v1587, %v1635
      %1637 = vmatmul.bf16.gmra.mxu0 %v1421
      %v1638 = vpop.f32.mrf.mxu0
      %v1639 = vadd.f32 %v1590, %v1638
      %v1640 = vpop.f32.mrf.mxu0
      %v1641 = vadd.f32 %v1592, %v1640
      %1642 = vmatmul.bf16.gmra.mxu0 %v1423
      %v1643 = vpop.f32.mrf.mxu0
      %v1644 = vadd.f32 %v1595, %v1643
      %v1645 = vpop.f32.mrf.mxu0
      %v1646 = vadd.f32 %v1597, %v1645
      %1647 = vmatmul.bf16.gmra.mxu0 %v1425
      %v1648 = vpop.f32.mrf.mxu0
      %v1649 = vadd.f32 %v1600, %v1648
      %v1650 = vpop.f32.mrf.mxu0
      %v1651 = vadd.f32 %v1602, %v1650
      %1652 = vdwg.mxu0
      %v1685 = vunpack.c.l.b16 %v907
      %v1686 = vunpack.c.l.b16 %v908
      %v1687 = vunpack.c.l.b16 %v909
      %v1688 = vunpack.c.l.b16 %v910
      %v1689 = vunpack.c.l.b16 %v911
      %v1690 = vunpack.c.l.b16 %v912
      %v1691 = vunpack.c.l.b16 %v913
      %v1692 = vunpack.c.l.b16 %v914
      %v1693 = vunpack.c.l.b16 %v915
      %v1694 = vunpack.c.l.b16 %v916
      %v1695 = vunpack.c.l.b16 %v917
      %v1696 = vunpack.c.l.b16 %v918
      %v1697 = vunpack.c.l.b16 %v919
      %v1698 = vunpack.c.l.b16 %v920
      %v1699 = vunpack.c.l.b16 %v921
      %v1700 = vunpack.c.l.b16 %v922
      %v1701 = vunpack.c.l.b16 %v923
      %v1702 = vunpack.c.l.b16 %v924
      %v1703 = vunpack.c.l.b16 %v925
      %v1704 = vunpack.c.l.b16 %v926
      %v1705 = vunpack.c.l.b16 %v927
      %v1706 = vunpack.c.l.b16 %v928
      %v1707 = vunpack.c.l.b16 %v929
      %v1708 = vunpack.c.l.b16 %v930
      %v1709 = vunpack.c.l.b16 %v931
      %v1710 = vunpack.c.l.b16 %v932
      %v1711 = vunpack.c.l.b16 %v933
      %v1712 = vunpack.c.l.b16 %v934
      %v1713 = vunpack.c.l.b16 %v935
      %v1714 = vunpack.c.l.b16 %v936
      %v1715 = vunpack.c.l.b16 %v937
      %v1716 = vunpack.c.l.b16 %v938
      %v1717 = vpack.c.b16 %v1686, %v1685
      %v1718 = vpack.c.b16 %v1688, %v1687
      %v1719 = vpack.c.b16 %v1690, %v1689
      %v1720 = vpack.c.b16 %v1692, %v1691
      %v1721 = vpack.c.b16 %v1694, %v1693
      %v1722 = vpack.c.b16 %v1696, %v1695
      %v1723 = vpack.c.b16 %v1698, %v1697
      %v1724 = vpack.c.b16 %v1700, %v1699
      %v1725 = vpack.c.b16 %v1702, %v1701
      %v1726 = vpack.c.b16 %v1704, %v1703
      %v1727 = vpack.c.b16 %v1706, %v1705
      %v1728 = vpack.c.b16 %v1708, %v1707
      %v1729 = vpack.c.b16 %v1710, %v1709
      %v1730 = vpack.c.b16 %v1712, %v1711
      %v1731 = vpack.c.b16 %v1714, %v1713
      %v1732 = vpack.c.b16 %v1716, %v1715
      %1749 = vmatpush.bf16.msra.mxu0 %v1724
      %1750 = vmatpush.bf16.msra.mxu0 %v1723
      %1751 = vmatpush.bf16.msra.mxu0 %v1722
      %1752 = vmatpush.bf16.msra.mxu0 %v1721
      %1753 = vmatpush.bf16.msra.mxu0 %v1720
      %1754 = vmatpush.bf16.msra.mxu0 %v1719
      %1755 = vmatpush.bf16.msra.mxu0 %v1718
      %1756 = vmatpush.bf16.msra.mxu0 %v1717
      %1757 = vmatmul.bf16.gmra.mxu0 %v891
      %v1758 = vpop.f32.mrf.mxu0
      %v1759 = vadd.f32 %v1614, %v1758
      %v1760 = vpop.f32.mrf.mxu0
      %v1761 = vadd.f32 %v1616, %v1760
      %1762 = vmatmul.bf16.gmra.mxu0 %v893
      %v1763 = vpop.f32.mrf.mxu0
      %v1764 = vadd.f32 %v1619, %v1763
      %v1765 = vpop.f32.mrf.mxu0
      %v1766 = vadd.f32 %v1621, %v1765
      %1767 = vmatmul.bf16.gmra.mxu0 %v895
      %v1768 = vpop.f32.mrf.mxu0
      %v1769 = vadd.f32 %v1624, %v1768
      %v1770 = vpop.f32.mrf.mxu0
      %v1771 = vadd.f32 %v1626, %v1770
      %1772 = vmatmul.bf16.gmra.mxu0 %v897
      %v1773 = vpop.f32.mrf.mxu0
      %v1774 = vadd.f32 %v1629, %v1773
      %v1775 = vpop.f32.mrf.mxu0
      %v1776 = vadd.f32 %v1631, %v1775
      %1777 = vmatmul.bf16.gmra.mxu0 %v899
      %v1778 = vpop.f32.mrf.mxu0
      %v1779 = vadd.f32 %v1634, %v1778
      %v1780 = vpop.f32.mrf.mxu0
      %v1781 = vadd.f32 %v1636, %v1780
      %1782 = vmatmul.bf16.gmra.mxu0 %v901
      %v1783 = vpop.f32.mrf.mxu0
      %v1784 = vadd.f32 %v1639, %v1783
      %v1785 = vpop.f32.mrf.mxu0
      %v1786 = vadd.f32 %v1641, %v1785
      %1787 = vmatmul.bf16.gmra.mxu0 %v903
      %v1788 = vpop.f32.mrf.mxu0
      %v1789 = vadd.f32 %v1644, %v1788
      %v1790 = vpop.f32.mrf.mxu0
      %v1791 = vadd.f32 %v1646, %v1790
      %1792 = vmatmul.bf16.gmra.mxu0 %v905
      %v1793 = vpop.f32.mrf.mxu0
      %v1794 = vadd.f32 %v1649, %v1793
      %v1795 = vpop.f32.mrf.mxu0
      %v1796 = vadd.f32 %v1651, %v1795
      %1797 = vdwg.mxu0
      %1798 = vmatpush.bf16.msra.mxu0 %v1732
      %1799 = vmatpush.bf16.msra.mxu0 %v1731
      %1800 = vmatpush.bf16.msra.mxu0 %v1730
      %1801 = vmatpush.bf16.msra.mxu0 %v1729
      %1802 = vmatpush.bf16.msra.mxu0 %v1728
      %1803 = vmatpush.bf16.msra.mxu0 %v1727
      %1804 = vmatpush.bf16.msra.mxu0 %v1726
      %1805 = vmatpush.bf16.msra.mxu0 %v1725
      %1806 = vmatmul.bf16.gmra.mxu0 %v892
      %v1807 = vpop.f32.mrf.mxu0
      %v1808 = vadd.f32 %v1759, %v1807
      %v1809 = vpop.f32.mrf.mxu0
      %v1810 = vadd.f32 %v1761, %v1809
      %1811 = vmatmul.bf16.gmra.mxu0 %v894
      %v1812 = vpop.f32.mrf.mxu0
      %v1813 = vadd.f32 %v1764, %v1812
      %v1814 = vpop.f32.mrf.mxu0
      %v1815 = vadd.f32 %v1766, %v1814
      %1816 = vmatmul.bf16.gmra.mxu0 %v896
      %v1817 = vpop.f32.mrf.mxu0
      %v1818 = vadd.f32 %v1769, %v1817
      %v1819 = vpop.f32.mrf.mxu0
      %v1820 = vadd.f32 %v1771, %v1819
      %1821 = vmatmul.bf16.gmra.mxu0 %v898
      %v1822 = vpop.f32.mrf.mxu0
      %v1823 = vadd.f32 %v1774, %v1822
      %v1824 = vpop.f32.mrf.mxu0
      %v1825 = vadd.f32 %v1776, %v1824
      %1826 = vmatmul.bf16.gmra.mxu0 %v900
      %v1827 = vpop.f32.mrf.mxu0
      %v1828 = vadd.f32 %v1779, %v1827
      %v1829 = vpop.f32.mrf.mxu0
      %v1830 = vadd.f32 %v1781, %v1829
      %1831 = vmatmul.bf16.gmra.mxu0 %v902
      %v1832 = vpop.f32.mrf.mxu0
      %v1833 = vadd.f32 %v1784, %v1832
      %v1834 = vpop.f32.mrf.mxu0
      %v1835 = vadd.f32 %v1786, %v1834
      %1836 = vmatmul.bf16.gmra.mxu0 %v904
      %v1837 = vpop.f32.mrf.mxu0
      %v1838 = vadd.f32 %v1789, %v1837
      %v1839 = vpop.f32.mrf.mxu0
      %v1840 = vadd.f32 %v1791, %v1839
      %1841 = vmatmul.bf16.gmra.mxu0 %v906
      %v1842 = vpop.f32.mrf.mxu0
      %v1843 = vadd.f32 %v1794, %v1842
      %v1844 = vpop.f32.mrf.mxu0
      %v1845 = vadd.f32 %v1796, %v1844
      %1846 = vdwg.mxu0
      %s1847 = scalar_lea.vmem %s2, 2
      %v1848 = vld [vmem:[%s1847] ss:$4 sm:$0x3]
      %1849 = vset.pattern.permute.xlu0 2
      %1850 = vperm.xlu0 %1849, %v389
      %v1851 = vpop.permute.xlu0 %1850
      %1853 = vset.pattern.permute.xlu0 2
      %1854 = vperm.xlu0 %1853, %v390
      %v1855 = vpop.permute.xlu0 %1854
      %1857 = vset.pattern.permute.xlu0 2
      %1858 = vperm.xlu0 %1857, %v391
      %v1859 = vpop.permute.xlu0 %1858
      %1861 = vset.pattern.permute.xlu0 2
      %1862 = vperm.xlu0 %1861, %v392
      %v1863 = vpop.permute.xlu0 %1862
      %1865 = vset.pattern.permute.xlu0 2
      %1866 = vperm.xlu0 %1865, %v393
      %v1867 = vpop.permute.xlu0 %1866
      %1869 = vset.pattern.permute.xlu0 2
      %1870 = vperm.xlu0 %1869, %v394
      %v1871 = vpop.permute.xlu0 %1870
      %1873 = vset.pattern.permute.xlu0 2
      %1874 = vperm.xlu0 %1873, %v395
      %v1875 = vpop.permute.xlu0 %1874
      %1877 = vset.pattern.permute.xlu0 2
      %1878 = vperm.xlu0 %1877, %v396
      %v1879 = vpop.permute.xlu0 %1878
      %1881 = vset.pattern.permute.xlu0 2
      %1882 = vperm.xlu0 %1881, %v397
      %v1883 = vpop.permute.xlu0 %1882
      %1885 = vset.pattern.permute.xlu0 2
      %1886 = vperm.xlu0 %1885, %v398
      %v1887 = vpop.permute.xlu0 %1886
      %1889 = vset.pattern.permute.xlu0 2
      %1890 = vperm.xlu0 %1889, %v399
      %v1891 = vpop.permute.xlu0 %1890
      %1893 = vset.pattern.permute.xlu0 2
      %1894 = vperm.xlu0 %1893, %v400
      %v1895 = vpop.permute.xlu0 %1894
      %1897 = vset.pattern.permute.xlu0 2
      %1898 = vperm.xlu0 %1897, %v401
      %v1899 = vpop.permute.xlu0 %1898
      %1901 = vset.pattern.permute.xlu0 2
      %1902 = vperm.xlu0 %1901, %v402
      %v1903 = vpop.permute.xlu0 %1902
      %1905 = vset.pattern.permute.xlu0 2
      %1906 = vperm.xlu0 %1905, %v403
      %v1907 = vpop.permute.xlu0 %1906
      %1909 = vset.pattern.permute.xlu0 2
      %1910 = vperm.xlu0 %1909, %v404
      %v1911 = vpop.permute.xlu0 %1910
      %v1914 = vperm.slane %v1848, 0
      %v1915 = vperm.slane %v1848, 1
      %v1918 = vadd.f32 %v1851, %v1914
      %v1919 = vadd.f32 %v1851, %v1915
      %v1920 = vadd.f32 %v1855, %v1914
      %v1921 = vadd.f32 %v1855, %v1915
      %v1922 = vadd.f32 %v1859, %v1914
      %v1923 = vadd.f32 %v1859, %v1915
      %v1924 = vadd.f32 %v1863, %v1914
      %v1925 = vadd.f32 %v1863, %v1915
      %v1926 = vadd.f32 %v1867, %v1914
      %v1927 = vadd.f32 %v1867, %v1915
      %v1928 = vadd.f32 %v1871, %v1914
      %v1929 = vadd.f32 %v1871, %v1915
      %v1930 = vadd.f32 %v1875, %v1914
      %v1931 = vadd.f32 %v1875, %v1915
      %v1932 = vadd.f32 %v1879, %v1914
      %v1933 = vadd.f32 %v1879, %v1915
      %v1934 = vadd.f32 %v1883, %v1914
      %v1935 = vadd.f32 %v1883, %v1915
      %v1936 = vadd.f32 %v1887, %v1914
      %v1937 = vadd.f32 %v1887, %v1915
      %v1938 = vadd.f32 %v1891, %v1914
      %v1939 = vadd.f32 %v1891, %v1915
      %v1940 = vadd.f32 %v1895, %v1914
      %v1941 = vadd.f32 %v1895, %v1915
      %v1942 = vadd.f32 %v1899, %v1914
      %v1943 = vadd.f32 %v1899, %v1915
      %v1944 = vadd.f32 %v1903, %v1914
      %v1945 = vadd.f32 %v1903, %v1915
      %v1946 = vadd.f32 %v1907, %v1914
      %v1947 = vadd.f32 %v1907, %v1915
      %v1948 = vadd.f32 %v1911, %v1914
      %v1949 = vadd.f32 %v1911, %v1915
      %vm1950 = vcmp.gt.f32.partialorder %v1918, 0.0
      %vm1951 = vcmp.gt.f32.partialorder %v1919, 0.0
      %vm1952 = vcmp.gt.f32.partialorder %v1920, 0.0
      %vm1953 = vcmp.gt.f32.partialorder %v1921, 0.0
      %vm1954 = vcmp.gt.f32.partialorder %v1922, 0.0
      %vm1955 = vcmp.gt.f32.partialorder %v1923, 0.0
      %vm1956 = vcmp.gt.f32.partialorder %v1924, 0.0
      %vm1957 = vcmp.gt.f32.partialorder %v1925, 0.0
      %vm1958 = vcmp.gt.f32.partialorder %v1926, 0.0
      %vm1959 = vcmp.gt.f32.partialorder %v1927, 0.0
      %vm1960 = vcmp.gt.f32.partialorder %v1928, 0.0
      %vm1961 = vcmp.gt.f32.partialorder %v1929, 0.0
      %vm1962 = vcmp.gt.f32.partialorder %v1930, 0.0
      %vm1963 = vcmp.gt.f32.partialorder %v1931, 0.0
      %vm1964 = vcmp.gt.f32.partialorder %v1932, 0.0
      %vm1965 = vcmp.gt.f32.partialorder %v1933, 0.0
      %vm1966 = vcmp.gt.f32.partialorder %v1934, 0.0
      %vm1967 = vcmp.gt.f32.partialorder %v1935, 0.0
      %vm1968 = vcmp.gt.f32.partialorder %v1936, 0.0
      %vm1969 = vcmp.gt.f32.partialorder %v1937, 0.0
      %vm1970 = vcmp.gt.f32.partialorder %v1938, 0.0
      %vm1971 = vcmp.gt.f32.partialorder %v1939, 0.0
      %vm1972 = vcmp.gt.f32.partialorder %v1940, 0.0
      %vm1973 = vcmp.gt.f32.partialorder %v1941, 0.0
      %vm1974 = vcmp.gt.f32.partialorder %v1942, 0.0
      %vm1975 = vcmp.gt.f32.partialorder %v1943, 0.0
      %vm1976 = vcmp.gt.f32.partialorder %v1944, 0.0
      %vm1977 = vcmp.gt.f32.partialorder %v1945, 0.0
      %vm1978 = vcmp.gt.f32.partialorder %v1946, 0.0
      %vm1979 = vcmp.gt.f32.partialorder %v1947, 0.0
      %vm1980 = vcmp.gt.f32.partialorder %v1948, 0.0
      %vm1981 = vcmp.gt.f32.partialorder %v1949, 0.0
      %v1982 = vmul.f32 %v1918, 0.2
      %v1983 = vmul.f32 %v1919, 0.2
      %v1984 = vmul.f32 %v1920, 0.2
      %v1985 = vmul.f32 %v1921, 0.2
      %v1986 = vmul.f32 %v1922, 0.2
      %v1987 = vmul.f32 %v1923, 0.2
      %v1988 = vmul.f32 %v1924, 0.2
      %v1989 = vmul.f32 %v1925, 0.2
      %v1990 = vmul.f32 %v1926, 0.2
      %v1991 = vmul.f32 %v1927, 0.2
      %v1992 = vmul.f32 %v1928, 0.2
      %v1993 = vmul.f32 %v1929, 0.2
      %v1994 = vmul.f32 %v1930, 0.2
      %v1995 = vmul.f32 %v1931, 0.2
      %v1996 = vmul.f32 %v1932, 0.2
      %v1997 = vmul.f32 %v1933, 0.2
      %v1998 = vmul.f32 %v1934, 0.2
      %v1999 = vmul.f32 %v1935, 0.2
      %v2000 = vmul.f32 %v1936, 0.2
      %v2001 = vmul.f32 %v1937, 0.2
      %v2002 = vmul.f32 %v1938, 0.2
      %v2003 = vmul.f32 %v1939, 0.2
      %v2004 = vmul.f32 %v1940, 0.2
      %v2005 = vmul.f32 %v1941, 0.2
      %v2006 = vmul.f32 %v1942, 0.2
      %v2007 = vmul.f32 %v1943, 0.2
      %v2008 = vmul.f32 %v1944, 0.2
      %v2009 = vmul.f32 %v1945, 0.2
      %v2010 = vmul.f32 %v1946, 0.2
      %v2011 = vmul.f32 %v1947, 0.2
      %v2012 = vmul.f32 %v1948, 0.2
      %v2013 = vmul.f32 %v1949, 0.2
      %v2014 = vsel %vm1950, %v1918, %v1982
      %v2015 = vsel %vm1951, %v1919, %v1983
      %v2016 = vsel %vm1952, %v1920, %v1984
      %v2017 = vsel %vm1953, %v1921, %v1985
      %v2018 = vsel %vm1954, %v1922, %v1986
      %v2019 = vsel %vm1955, %v1923, %v1987
      %v2020 = vsel %vm1956, %v1924, %v1988
      %v2021 = vsel %vm1957, %v1925, %v1989
      %v2022 = vsel %vm1958, %v1926, %v1990
      %v2023 = vsel %vm1959, %v1927, %v1991
      %v2024 = vsel %vm1960, %v1928, %v1992
      %v2025 = vsel %vm1961, %v1929, %v1993
      %v2026 = vsel %vm1962, %v1930, %v1994
      %v2027 = vsel %vm1963, %v1931, %v1995
      %v2028 = vsel %vm1964, %v1932, %v1996
      %v2029 = vsel %vm1965, %v1933, %v1997
      %v2030 = vsel %vm1966, %v1934, %v1998
      %v2031 = vsel %vm1967, %v1935, %v1999
      %v2032 = vsel %vm1968, %v1936, %v2000
      %v2033 = vsel %vm1969, %v1937, %v2001
      %v2034 = vsel %vm1970, %v1938, %v2002
      %v2035 = vsel %vm1971, %v1939, %v2003
      %v2036 = vsel %vm1972, %v1940, %v2004
      %v2037 = vsel %vm1973, %v1941, %v2005
      %v2038 = vsel %vm1974, %v1942, %v2006
      %v2039 = vsel %vm1975, %v1943, %v2007
      %v2040 = vsel %vm1976, %v1944, %v2008
      %v2041 = vsel %vm1977, %v1945, %v2009
      %v2042 = vsel %vm1978, %v1946, %v2010
      %v2043 = vsel %vm1979, %v1947, %v2011
      %v2044 = vsel %vm1980, %v1948, %v2012
      %v2045 = vsel %vm1981, %v1949, %v2013
      %v2046 = vadd.f32 %v2014, %v357
      %v2047 = vadd.f32 %v2015, %v358
      %v2048 = vadd.f32 %v2016, %v359
      %v2049 = vadd.f32 %v2017, %v360
      %v2050 = vadd.f32 %v2018, %v361
      %v2051 = vadd.f32 %v2019, %v362
      %v2052 = vadd.f32 %v2020, %v363
      %v2053 = vadd.f32 %v2021, %v364
      %v2054 = vadd.f32 %v2022, %v365
      %v2055 = vadd.f32 %v2023, %v366
      %v2056 = vadd.f32 %v2024, %v367
      %v2057 = vadd.f32 %v2025, %v368
      %v2058 = vadd.f32 %v2026, %v369
      %v2059 = vadd.f32 %v2027, %v370
      %v2060 = vadd.f32 %v2028, %v371
      %v2061 = vadd.f32 %v2029, %v372
      %v2062 = vadd.f32 %v2030, %v373
      %v2063 = vadd.f32 %v2031, %v374
      %v2064 = vadd.f32 %v2032, %v375
      %v2065 = vadd.f32 %v2033, %v376
      %v2066 = vadd.f32 %v2034, %v377
      %v2067 = vadd.f32 %v2035, %v378
      %v2068 = vadd.f32 %v2036, %v379
      %v2069 = vadd.f32 %v2037, %v380
      %v2070 = vadd.f32 %v2038, %v381
      %v2071 = vadd.f32 %v2039, %v382
      %v2072 = vadd.f32 %v2040, %v383
      %v2073 = vadd.f32 %v2041, %v384
      %v2074 = vadd.f32 %v2042, %v385
      %v2075 = vadd.f32 %v2043, %v386
      %v2076 = vadd.f32 %v2044, %v387
      %v2077 = vadd.f32 %v2045, %v388
      %v2078 = vmax.f32 %v2046, %v2047
      %2079 = vmax.xlane.f32.xlu0 %v2078
      %v2080 = vpop.xlane.xlu0 %2079
      %v2081 = vmax.f32 %v2048, %v2049
      %2082 = vmax.xlane.f32.xlu0 %v2081
      %v2083 = vpop.xlane.xlu0 %2082
      %v2084 = vmax.f32 %v2050, %v2051
      %2085 = vmax.xlane.f32.xlu0 %v2084
      %v2086 = vpop.xlane.xlu0 %2085
      %v2087 = vmax.f32 %v2052, %v2053
      %2088 = vmax.xlane.f32.xlu0 %v2087
      %v2089 = vpop.xlane.xlu0 %2088
      %v2090 = vmax.f32 %v2054, %v2055
      %2091 = vmax.xlane.f32.xlu0 %v2090
      %v2092 = vpop.xlane.xlu0 %2091
      %v2093 = vmax.f32 %v2056, %v2057
      %2094 = vmax.xlane.f32.xlu0 %v2093
      %v2095 = vpop.xlane.xlu0 %2094
      %v2096 = vmax.f32 %v2058, %v2059
      %2097 = vmax.xlane.f32.xlu0 %v2096
      %v2098 = vpop.xlane.xlu0 %2097
      %v2099 = vmax.f32 %v2060, %v2061
      %2100 = vmax.xlane.f32.xlu0 %v2099
      %v2101 = vpop.xlane.xlu0 %2100
      %v2102 = vmax.f32 %v2062, %v2063
      %2103 = vmax.xlane.f32.xlu0 %v2102
      %v2104 = vpop.xlane.xlu0 %2103
      %v2105 = vmax.f32 %v2064, %v2065
      %2106 = vmax.xlane.f32.xlu0 %v2105
      %v2107 = vpop.xlane.xlu0 %2106
      %v2108 = vmax.f32 %v2066, %v2067
      %2109 = vmax.xlane.f32.xlu0 %v2108
      %v2110 = vpop.xlane.xlu0 %2109
      %v2111 = vmax.f32 %v2068, %v2069
      %2112 = vmax.xlane.f32.xlu0 %v2111
      %v2113 = vpop.xlane.xlu0 %2112
      %v2114 = vmax.f32 %v2070, %v2071
      %2115 = vmax.xlane.f32.xlu0 %v2114
      %v2116 = vpop.xlane.xlu0 %2115
      %v2117 = vmax.f32 %v2072, %v2073
      %2118 = vmax.xlane.f32.xlu0 %v2117
      %v2119 = vpop.xlane.xlu0 %2118
      %v2120 = vmax.f32 %v2074, %v2075
      %2121 = vmax.xlane.f32.xlu0 %v2120
      %v2122 = vpop.xlane.xlu0 %2121
      %v2123 = vmax.f32 %v2076, %v2077
      %2124 = vmax.xlane.f32.xlu0 %v2123
      %v2125 = vpop.xlane.xlu0 %2124
      %v2126 = vsub.f32 %v2046, %v2080
      %v2127 = vsub.f32 %v2047, %v2080
      %v2128 = vsub.f32 %v2048, %v2083
      %v2129 = vsub.f32 %v2049, %v2083
      %v2130 = vsub.f32 %v2050, %v2086
      %v2131 = vsub.f32 %v2051, %v2086
      %v2132 = vsub.f32 %v2052, %v2089
      %v2133 = vsub.f32 %v2053, %v2089
      %v2134 = vsub.f32 %v2054, %v2092
      %v2135 = vsub.f32 %v2055, %v2092
      %v2136 = vsub.f32 %v2056, %v2095
      %v2137 = vsub.f32 %v2057, %v2095
      %v2138 = vsub.f32 %v2058, %v2098
      %v2139 = vsub.f32 %v2059, %v2098
      %v2140 = vsub.f32 %v2060, %v2101
      %v2141 = vsub.f32 %v2061, %v2101
      %v2142 = vsub.f32 %v2062, %v2104
      %v2143 = vsub.f32 %v2063, %v2104
      %v2144 = vsub.f32 %v2064, %v2107
      %v2145 = vsub.f32 %v2065, %v2107
      %v2146 = vsub.f32 %v2066, %v2110
      %v2147 = vsub.f32 %v2067, %v2110
      %v2148 = vsub.f32 %v2068, %v2113
      %v2149 = vsub.f32 %v2069, %v2113
      %v2150 = vsub.f32 %v2070, %v2116
      %v2151 = vsub.f32 %v2071, %v2116
      %v2152 = vsub.f32 %v2072, %v2119
      %v2153 = vsub.f32 %v2073, %v2119
      %v2154 = vsub.f32 %v2074, %v2122
      %v2155 = vsub.f32 %v2075, %v2122
      %v2156 = vsub.f32 %v2076, %v2125
      %v2157 = vsub.f32 %v2077, %v2125
      %v2158 = vmul.f32 %v2126, 1.442695
      %v2159 = vpow.pop %v2158
      %v2160 = vmul.f32 %v2127, 1.442695
      %v2161 = vpow.pop %v2160
      %v2162 = vmul.f32 %v2128, 1.442695
      %v2163 = vpow.pop %v2162
      %v2164 = vmul.f32 %v2129, 1.442695
      %v2165 = vpow.pop %v2164
      %v2166 = vmul.f32 %v2130, 1.442695
      %v2167 = vpow.pop %v2166
      %v2168 = vmul.f32 %v2131, 1.442695
      %v2169 = vpow.pop %v2168
      %v2170 = vmul.f32 %v2132, 1.442695
      %v2171 = vpow.pop %v2170
      %v2172 = vmul.f32 %v2133, 1.442695
      %v2173 = vpow.pop %v2172
      %v2174 = vmul.f32 %v2134, 1.442695
      %v2175 = vpow.pop %v2174
      %v2176 = vmul.f32 %v2135, 1.442695
      %v2177 = vpow.pop %v2176
      %v2178 = vmul.f32 %v2136, 1.442695
      %v2179 = vpow.pop %v2178
      %v2180 = vmul.f32 %v2137, 1.442695
      %v2181 = vpow.pop %v2180
      %v2182 = vmul.f32 %v2138, 1.442695
      %v2183 = vpow.pop %v2182
      %v2184 = vmul.f32 %v2139, 1.442695
      %v2185 = vpow.pop %v2184
      %v2186 = vmul.f32 %v2140, 1.442695
      %v2187 = vpow.pop %v2186
      %v2188 = vmul.f32 %v2141, 1.442695
      %v2189 = vpow.pop %v2188
      %v2190 = vmul.f32 %v2142, 1.442695
      %v2191 = vpow.pop %v2190
      %v2192 = vmul.f32 %v2143, 1.442695
      %v2193 = vpow.pop %v2192
      %v2194 = vmul.f32 %v2144, 1.442695
      %v2195 = vpow.pop %v2194
      %v2196 = vmul.f32 %v2145, 1.442695
      %v2197 = vpow.pop %v2196
      %v2198 = vmul.f32 %v2146, 1.442695
      %v2199 = vpow.pop %v2198
      %v2200 = vmul.f32 %v2147, 1.442695
      %v2201 = vpow.pop %v2200
      %v2202 = vmul.f32 %v2148, 1.442695
      %v2203 = vpow.pop %v2202
      %v2204 = vmul.f32 %v2149, 1.442695
      %v2205 = vpow.pop %v2204
      %v2206 = vmul.f32 %v2150, 1.442695
      %v2207 = vpow.pop %v2206
      %v2208 = vmul.f32 %v2151, 1.442695
      %v2209 = vpow.pop %v2208
      %v2210 = vmul.f32 %v2152, 1.442695
      %v2211 = vpow.pop %v2210
      %v2212 = vmul.f32 %v2153, 1.442695
      %v2213 = vpow.pop %v2212
      %v2214 = vmul.f32 %v2154, 1.442695
      %v2215 = vpow.pop %v2214
      %v2216 = vmul.f32 %v2155, 1.442695
      %v2217 = vpow.pop %v2216
      %v2218 = vmul.f32 %v2156, 1.442695
      %v2219 = vpow.pop %v2218
      %v2220 = vmul.f32 %v2157, 1.442695
      %v2221 = vpow.pop %v2220
      %v2222 = vadd.f32 %v2159, %v2161
      %2223 = vadd.xlane.f32.xlu0 %v2222
      %v2224 = vpop.xlane.xlu0 %2223
      %v2225 = vadd.f32 %v2163, %v2165
      %2226 = vadd.xlane.f32.xlu0 %v2225
      %v2227 = vpop.xlane.xlu0 %2226
      %v2228 = vadd.f32 %v2167, %v2169
      %2229 = vadd.xlane.f32.xlu0 %v2228
      %v2230 = vpop.xlane.xlu0 %2229
      %v2231 = vadd.f32 %v2171, %v2173
      %2232 = vadd.xlane.f32.xlu0 %v2231
      %v2233 = vpop.xlane.xlu0 %2232
      %v2234 = vadd.f32 %v2175, %v2177
      %2235 = vadd.xlane.f32.xlu0 %v2234
      %v2236 = vpop.xlane.xlu0 %2235
      %v2237 = vadd.f32 %v2179, %v2181
      %2238 = vadd.xlane.f32.xlu0 %v2237
      %v2239 = vpop.xlane.xlu0 %2238
      %v2240 = vadd.f32 %v2183, %v2185
      %2241 = vadd.xlane.f32.xlu0 %v2240
      %v2242 = vpop.xlane.xlu0 %2241
      %v2243 = vadd.f32 %v2187, %v2189
      %2244 = vadd.xlane.f32.xlu0 %v2243
      %v2245 = vpop.xlane.xlu0 %2244
      %v2246 = vadd.f32 %v2191, %v2193
      %2247 = vadd.xlane.f32.xlu0 %v2246
      %v2248 = vpop.xlane.xlu0 %2247
      %v2249 = vadd.f32 %v2195, %v2197
      %2250 = vadd.xlane.f32.xlu0 %v2249
      %v2251 = vpop.xlane.xlu0 %2250
      %v2252 = vadd.f32 %v2199, %v2201
      %2253 = vadd.xlane.f32.xlu0 %v2252
      %v2254 = vpop.xlane.xlu0 %2253
      %v2255 = vadd.f32 %v2203, %v2205
      %2256 = vadd.xlane.f32.xlu0 %v2255
      %v2257 = vpop.xlane.xlu0 %2256
      %v2258 = vadd.f32 %v2207, %v2209
      %2259 = vadd.xlane.f32.xlu0 %v2258
      %v2260 = vpop.xlane.xlu0 %2259
      %v2261 = vadd.f32 %v2211, %v2213
      %2262 = vadd.xlane.f32.xlu0 %v2261
      %v2263 = vpop.xlane.xlu0 %2262
      %v2264 = vadd.f32 %v2215, %v2217
      %2265 = vadd.xlane.f32.xlu0 %v2264
      %v2266 = vpop.xlane.xlu0 %2265
      %v2267 = vadd.f32 %v2219, %v2221
      %2268 = vadd.xlane.f32.xlu0 %v2267
      %v2269 = vpop.xlane.xlu0 %2268
      %v2270 = vrcp.pop %v2224
      %v2271 = vrcp.pop %v2227
      %v2272 = vrcp.pop %v2230
      %v2273 = vrcp.pop %v2233
      %v2274 = vrcp.pop %v2236
      %v2275 = vrcp.pop %v2239
      %v2276 = vrcp.pop %v2242
      %v2277 = vrcp.pop %v2245
      %v2278 = vrcp.pop %v2248
      %v2279 = vrcp.pop %v2251
      %v2280 = vrcp.pop %v2254
      %v2281 = vrcp.pop %v2257
      %v2282 = vrcp.pop %v2260
      %v2283 = vrcp.pop %v2263
      %v2284 = vrcp.pop %v2266
      %v2285 = vrcp.pop %v2269
      %v2286 = vmul.f32 %v2159, %v2270
      %v2287 = vmul.f32 %v2161, %v2270
      %v2288 = vmul.f32 %v2163, %v2271
      %v2289 = vmul.f32 %v2165, %v2271
      %v2290 = vmul.f32 %v2167, %v2272
      %v2291 = vmul.f32 %v2169, %v2272
      %v2292 = vmul.f32 %v2171, %v2273
      %v2293 = vmul.f32 %v2173, %v2273
      %v2294 = vmul.f32 %v2175, %v2274
      %v2295 = vmul.f32 %v2177, %v2274
      %v2296 = vmul.f32 %v2179, %v2275
      %v2297 = vmul.f32 %v2181, %v2275
      %v2298 = vmul.f32 %v2183, %v2276
      %v2299 = vmul.f32 %v2185, %v2276
      %v2300 = vmul.f32 %v2187, %v2277
      %v2301 = vmul.f32 %v2189, %v2277
      %v2302 = vmul.f32 %v2191, %v2278
      %v2303 = vmul.f32 %v2193, %v2278
      %v2304 = vmul.f32 %v2195, %v2279
      %v2305 = vmul.f32 %v2197, %v2279
      %v2306 = vmul.f32 %v2199, %v2280
      %v2307 = vmul.f32 %v2201, %v2280
      %v2308 = vmul.f32 %v2203, %v2281
      %v2309 = vmul.f32 %v2205, %v2281
      %v2310 = vmul.f32 %v2207, %v2282
      %v2311 = vmul.f32 %v2209, %v2282
      %v2312 = vmul.f32 %v2211, %v2283
      %v2313 = vmul.f32 %v2213, %v2283
      %v2314 = vmul.f32 %v2215, %v2284
      %v2315 = vmul.f32 %v2217, %v2284
      %v2316 = vmul.f32 %v2219, %v2285
      %v2317 = vmul.f32 %v2221, %v2285
      %v2318 = vpack.c.bf16 %v2288, %v2286
      %v2319 = vpack.c.bf16 %v2289, %v2287
      %v2320 = vpack.c.bf16 %v2292, %v2290
      %v2321 = vpack.c.bf16 %v2293, %v2291
      %v2322 = vpack.c.bf16 %v2296, %v2294
      %v2323 = vpack.c.bf16 %v2297, %v2295
      %v2324 = vpack.c.bf16 %v2300, %v2298
      %v2325 = vpack.c.bf16 %v2301, %v2299
      %v2326 = vpack.c.bf16 %v2304, %v2302
      %v2327 = vpack.c.bf16 %v2305, %v2303
      %v2328 = vpack.c.bf16 %v2308, %v2306
      %v2329 = vpack.c.bf16 %v2309, %v2307
      %v2330 = vpack.c.bf16 %v2312, %v2310
      %v2331 = vpack.c.bf16 %v2313, %v2311
      %v2332 = vpack.c.bf16 %v2316, %v2314
      %v2333 = vpack.c.bf16 %v2317, %v2315
      %s2334 = scalar_lea.vmem %s3, 256
      %v2335 = vld [vmem:[%s2334] sm:$0xf]
      %v2336 = vld [vmem:[%s2334 + $0x4] sm:$0xf]
      %v2337 = vld [vmem:[%s2334 + $0x8] sm:$0xf]
      %v2338 = vld [vmem:[%s2334 + $0xc] sm:$0xf]
      %v2339 = vld [vmem:[%s2334 + $0x10] sm:$0xf]
      %v2340 = vld [vmem:[%s2334 + $0x14] sm:$0xf]
      %v2341 = vld [vmem:[%s2334 + $0x18] sm:$0xf]
      %v2342 = vld [vmem:[%s2334 + $0x1c] sm:$0xf]
      %v2343 = vld [vmem:[%s2334 + $0x20] sm:$0xf]
      %v2344 = vld [vmem:[%s2334 + $0x24] sm:$0xf]
      %v2345 = vld [vmem:[%s2334 + $0x28] sm:$0xf]
      %v2346 = vld [vmem:[%s2334 + $0x2c] sm:$0xf]
      %v2347 = vld [vmem:[%s2334 + $0x30] sm:$0xf]
      %v2348 = vld [vmem:[%s2334 + $0x34] sm:$0xf]
      %v2349 = vld [vmem:[%s2334 + $0x38] sm:$0xf]
      %v2350 = vld [vmem:[%s2334 + $0x3c] sm:$0xf]
      %v2351 = vld [vmem:[%s2334 + $0x40] sm:$0xf]
      %v2352 = vld [vmem:[%s2334 + $0x44] sm:$0xf]
      %v2353 = vld [vmem:[%s2334 + $0x48] sm:$0xf]
      %v2354 = vld [vmem:[%s2334 + $0x4c] sm:$0xf]
      %v2355 = vld [vmem:[%s2334 + $0x50] sm:$0xf]
      %v2356 = vld [vmem:[%s2334 + $0x54] sm:$0xf]
      %v2357 = vld [vmem:[%s2334 + $0x58] sm:$0xf]
      %v2358 = vld [vmem:[%s2334 + $0x5c] sm:$0xf]
      %v2359 = vld [vmem:[%s2334 + $0x60] sm:$0xf]
      %v2360 = vld [vmem:[%s2334 + $0x64] sm:$0xf]
      %v2361 = vld [vmem:[%s2334 + $0x68] sm:$0xf]
      %v2362 = vld [vmem:[%s2334 + $0x6c] sm:$0xf]
      %v2363 = vld [vmem:[%s2334 + $0x70] sm:$0xf]
      %v2364 = vld [vmem:[%s2334 + $0x74] sm:$0xf]
      %v2365 = vld [vmem:[%s2334 + $0x78] sm:$0xf]
      %v2366 = vld [vmem:[%s2334 + $0x7c] sm:$0xf]
      %v2399 = vunpack.c.l.b16 %v2335
      %v2400 = vunpack.c.l.b16 %v2336
      %v2401 = vunpack.c.l.b16 %v2337
      %v2402 = vunpack.c.l.b16 %v2338
      %v2403 = vunpack.c.l.b16 %v2339
      %v2404 = vunpack.c.l.b16 %v2340
      %v2405 = vunpack.c.l.b16 %v2341
      %v2406 = vunpack.c.l.b16 %v2342
      %v2407 = vunpack.c.l.b16 %v2343
      %v2408 = vunpack.c.l.b16 %v2344
      %v2409 = vunpack.c.l.b16 %v2345
      %v2410 = vunpack.c.l.b16 %v2346
      %v2411 = vunpack.c.l.b16 %v2347
      %v2412 = vunpack.c.l.b16 %v2348
      %v2413 = vunpack.c.l.b16 %v2349
      %v2414 = vunpack.c.l.b16 %v2350
      %v2415 = vunpack.c.l.b16 %v2351
      %v2416 = vunpack.c.l.b16 %v2352
      %v2417 = vunpack.c.l.b16 %v2353
      %v2418 = vunpack.c.l.b16 %v2354
      %v2419 = vunpack.c.l.b16 %v2355
      %v2420 = vunpack.c.l.b16 %v2356
      %v2421 = vunpack.c.l.b16 %v2357
      %v2422 = vunpack.c.l.b16 %v2358
      %v2423 = vunpack.c.l.b16 %v2359
      %v2424 = vunpack.c.l.b16 %v2360
      %v2425 = vunpack.c.l.b16 %v2361
      %v2426 = vunpack.c.l.b16 %v2362
      %v2427 = vunpack.c.l.b16 %v2363
      %v2428 = vunpack.c.l.b16 %v2364
      %v2429 = vunpack.c.l.b16 %v2365
      %v2430 = vunpack.c.l.b16 %v2366
      %v2431 = vpack.c.b16 %v2400, %v2399
      %v2432 = vpack.c.b16 %v2402, %v2401
      %v2433 = vpack.c.b16 %v2404, %v2403
      %v2434 = vpack.c.b16 %v2406, %v2405
      %v2435 = vpack.c.b16 %v2408, %v2407
      %v2436 = vpack.c.b16 %v2410, %v2409
      %v2437 = vpack.c.b16 %v2412, %v2411
      %v2438 = vpack.c.b16 %v2414, %v2413
      %v2439 = vpack.c.b16 %v2416, %v2415
      %v2440 = vpack.c.b16 %v2418, %v2417
      %v2441 = vpack.c.b16 %v2420, %v2419
      %v2442 = vpack.c.b16 %v2422, %v2421
      %v2443 = vpack.c.b16 %v2424, %v2423
      %v2444 = vpack.c.b16 %v2426, %v2425
      %v2445 = vpack.c.b16 %v2428, %v2427
      %v2446 = vpack.c.b16 %v2430, %v2429
      %2463 = vmatpush.bf16.msra.mxu0 %v2438
      %2464 = vmatpush.bf16.msra.mxu0 %v2437
      %2465 = vmatpush.bf16.msra.mxu0 %v2436
      %2466 = vmatpush.bf16.msra.mxu0 %v2435
      %2467 = vmatpush.bf16.msra.mxu0 %v2434
      %2468 = vmatpush.bf16.msra.mxu0 %v2433
      %2469 = vmatpush.bf16.msra.mxu0 %v2432
      %2470 = vmatpush.bf16.msra.mxu0 %v2431
      %2471 = vmatmul.bf16.gmra.mxu0 %v2318
      %v2472 = vpop.f32.mrf.mxu0
      %v2473 = vadd.f32 0.0, %v2472
      %v2474 = vpop.f32.mrf.mxu0
      %v2475 = vadd.f32 0.0, %v2474
      %2476 = vmatmul.bf16.gmra.mxu0 %v2320
      %v2477 = vpop.f32.mrf.mxu0
      %v2478 = vadd.f32 0.0, %v2477
      %v2479 = vpop.f32.mrf.mxu0
      %v2480 = vadd.f32 0.0, %v2479
      %2481 = vmatmul.bf16.gmra.mxu0 %v2322
      %v2482 = vpop.f32.mrf.mxu0
      %v2483 = vadd.f32 0.0, %v2482
      %v2484 = vpop.f32.mrf.mxu0
      %v2485 = vadd.f32 0.0, %v2484
      %2486 = vmatmul.bf16.gmra.mxu0 %v2324
      %v2487 = vpop.f32.mrf.mxu0
      %v2488 = vadd.f32 0.0, %v2487
      %v2489 = vpop.f32.mrf.mxu0
      %v2490 = vadd.f32 0.0, %v2489
      %2491 = vmatmul.bf16.gmra.mxu0 %v2326
      %v2492 = vpop.f32.mrf.mxu0
      %v2493 = vadd.f32 0.0, %v2492
      %v2494 = vpop.f32.mrf.mxu0
      %v2495 = vadd.f32 0.0, %v2494
      %2496 = vmatmul.bf16.gmra.mxu0 %v2328
      %v2497 = vpop.f32.mrf.mxu0
      %v2498 = vadd.f32 0.0, %v2497
      %v2499 = vpop.f32.mrf.mxu0
      %v2500 = vadd.f32 0.0, %v2499
      %2501 = vmatmul.bf16.gmra.mxu0 %v2330
      %v2502 = vpop.f32.mrf.mxu0
      %v2503 = vadd.f32 0.0, %v2502
      %v2504 = vpop.f32.mrf.mxu0
      %v2505 = vadd.f32 0.0, %v2504
      %2506 = vmatmul.bf16.gmra.mxu0 %v2332
      %v2507 = vpop.f32.mrf.mxu0
      %v2508 = vadd.f32 0.0, %v2507
      %v2509 = vpop.f32.mrf.mxu0
      %v2510 = vadd.f32 0.0, %v2509
      %2511 = vdwg.mxu0
      %2512 = vmatpush.bf16.msra.mxu0 %v2446
      %2513 = vmatpush.bf16.msra.mxu0 %v2445
      %2514 = vmatpush.bf16.msra.mxu0 %v2444
      %2515 = vmatpush.bf16.msra.mxu0 %v2443
      %2516 = vmatpush.bf16.msra.mxu0 %v2442
      %2517 = vmatpush.bf16.msra.mxu0 %v2441
      %2518 = vmatpush.bf16.msra.mxu0 %v2440
      %2519 = vmatpush.bf16.msra.mxu0 %v2439
      %2520 = vmatmul.bf16.gmra.mxu0 %v2319
      %v2521 = vpop.f32.mrf.mxu0
      %v2522 = vadd.f32 %v2473, %v2521
      %v2523 = vpop.f32.mrf.mxu0
      %v2524 = vadd.f32 %v2475, %v2523
      %2525 = vmatmul.bf16.gmra.mxu0 %v2321
      %v2526 = vpop.f32.mrf.mxu0
      %v2527 = vadd.f32 %v2478, %v2526
      %v2528 = vpop.f32.mrf.mxu0
      %v2529 = vadd.f32 %v2480, %v2528
      %2530 = vmatmul.bf16.gmra.mxu0 %v2323
      %v2531 = vpop.f32.mrf.mxu0
      %v2532 = vadd.f32 %v2483, %v2531
      %v2533 = vpop.f32.mrf.mxu0
      %v2534 = vadd.f32 %v2485, %v2533
      %2535 = vmatmul.bf16.gmra.mxu0 %v2325
      %v2536 = vpop.f32.mrf.mxu0
      %v2537 = vadd.f32 %v2488, %v2536
      %v2538 = vpop.f32.mrf.mxu0
      %v2539 = vadd.f32 %v2490, %v2538
      %2540 = vmatmul.bf16.gmra.mxu0 %v2327
      %v2541 = vpop.f32.mrf.mxu0
      %v2542 = vadd.f32 %v2493, %v2541
      %v2543 = vpop.f32.mrf.mxu0
      %v2544 = vadd.f32 %v2495, %v2543
      %2545 = vmatmul.bf16.gmra.mxu0 %v2329
      %v2546 = vpop.f32.mrf.mxu0
      %v2547 = vadd.f32 %v2498, %v2546
      %v2548 = vpop.f32.mrf.mxu0
      %v2549 = vadd.f32 %v2500, %v2548
      %2550 = vmatmul.bf16.gmra.mxu0 %v2331
      %v2551 = vpop.f32.mrf.mxu0
      %v2552 = vadd.f32 %v2503, %v2551
      %v2553 = vpop.f32.mrf.mxu0
      %v2554 = vadd.f32 %v2505, %v2553
      %2555 = vmatmul.bf16.gmra.mxu0 %v2333
      %v2556 = vpop.f32.mrf.mxu0
      %v2557 = vadd.f32 %v2508, %v2556
      %v2558 = vpop.f32.mrf.mxu0
      %v2559 = vadd.f32 %v2510, %v2558
      %2560 = vdwg.mxu0
      %v2561 = vadd.f32 %v1808, %v2522
      %v2562 = vadd.f32 %v1810, %v2524
      %v2563 = vadd.f32 %v1813, %v2527
      %v2564 = vadd.f32 %v1815, %v2529
      %v2565 = vadd.f32 %v1818, %v2532
      %v2566 = vadd.f32 %v1820, %v2534
      %v2567 = vadd.f32 %v1823, %v2537
      %v2568 = vadd.f32 %v1825, %v2539
      %v2569 = vadd.f32 %v1828, %v2542
      %v2570 = vadd.f32 %v1830, %v2544
      %v2571 = vadd.f32 %v1833, %v2547
      %v2572 = vadd.f32 %v1835, %v2549
      %v2573 = vadd.f32 %v1838, %v2552
      %v2574 = vadd.f32 %v1840, %v2554
      %v2575 = vadd.f32 %v1843, %v2557
      %v2576 = vadd.f32 %v1845, %v2559
      %s2577 = scalar_lea.vmem %s2, 3
      %v2578 = vld [vmem:[%s2577] ss:$4 sm:$0x3]
      %2579 = vset.pattern.permute.xlu0 3
      %2580 = vperm.xlu0 %2579, %v389
      %v2581 = vpop.permute.xlu0 %2580
      %2583 = vset.pattern.permute.xlu0 3
      %2584 = vperm.xlu0 %2583, %v390
      %v2585 = vpop.permute.xlu0 %2584
      %2587 = vset.pattern.permute.xlu0 3
      %2588 = vperm.xlu0 %2587, %v391
      %v2589 = vpop.permute.xlu0 %2588
      %2591 = vset.pattern.permute.xlu0 3
      %2592 = vperm.xlu0 %2591, %v392
      %v2593 = vpop.permute.xlu0 %2592
      %2595 = vset.pattern.permute.xlu0 3
      %2596 = vperm.xlu0 %2595, %v393
      %v2597 = vpop.permute.xlu0 %2596
      %2599 = vset.pattern.permute.xlu0 3
      %2600 = vperm.xlu0 %2599, %v394
      %v2601 = vpop.permute.xlu0 %2600
      %2603 = vset.pattern.permute.xlu0 3
      %2604 = vperm.xlu0 %2603, %v395
      %v2605 = vpop.permute.xlu0 %2604
      %2607 = vset.pattern.permute.xlu0 3
      %2608 = vperm.xlu0 %2607, %v396
      %v2609 = vpop.permute.xlu0 %2608
      %2611 = vset.pattern.permute.xlu0 3
      %2612 = vperm.xlu0 %2611, %v397
      %v2613 = vpop.permute.xlu0 %2612
      %2615 = vset.pattern.permute.xlu0 3
      %2616 = vperm.xlu0 %2615, %v398
      %v2617 = vpop.permute.xlu0 %2616
      %2619 = vset.pattern.permute.xlu0 3
      %2620 = vperm.xlu0 %2619, %v399
      %v2621 = vpop.permute.xlu0 %2620
      %2623 = vset.pattern.permute.xlu0 3
      %2624 = vperm.xlu0 %2623, %v400
      %v2625 = vpop.permute.xlu0 %2624
      %2627 = vset.pattern.permute.xlu0 3
      %2628 = vperm.xlu0 %2627, %v401
      %v2629 = vpop.permute.xlu0 %2628
      %2631 = vset.pattern.permute.xlu0 3
      %2632 = vperm.xlu0 %2631, %v402
      %v2633 = vpop.permute.xlu0 %2632
      %2635 = vset.pattern.permute.xlu0 3
      %2636 = vperm.xlu0 %2635, %v403
      %v2637 = vpop.permute.xlu0 %2636
      %2639 = vset.pattern.permute.xlu0 3
      %2640 = vperm.xlu0 %2639, %v404
      %v2641 = vpop.permute.xlu0 %2640
      %v2644 = vperm.slane %v2578, 0
      %v2645 = vperm.slane %v2578, 1
      %v2648 = vadd.f32 %v2581, %v2644
      %v2649 = vadd.f32 %v2581, %v2645
      %v2650 = vadd.f32 %v2585, %v2644
      %v2651 = vadd.f32 %v2585, %v2645
      %v2652 = vadd.f32 %v2589, %v2644
      %v2653 = vadd.f32 %v2589, %v2645
      %v2654 = vadd.f32 %v2593, %v2644
      %v2655 = vadd.f32 %v2593, %v2645
      %v2656 = vadd.f32 %v2597, %v2644
      %v2657 = vadd.f32 %v2597, %v2645
      %v2658 = vadd.f32 %v2601, %v2644
      %v2659 = vadd.f32 %v2601, %v2645
      %v2660 = vadd.f32 %v2605, %v2644
      %v2661 = vadd.f32 %v2605, %v2645
      %v2662 = vadd.f32 %v2609, %v2644
      %v2663 = vadd.f32 %v2609, %v2645
      %v2664 = vadd.f32 %v2613, %v2644
      %v2665 = vadd.f32 %v2613, %v2645
      %v2666 = vadd.f32 %v2617, %v2644
      %v2667 = vadd.f32 %v2617, %v2645
      %v2668 = vadd.f32 %v2621, %v2644
      %v2669 = vadd.f32 %v2621, %v2645
      %v2670 = vadd.f32 %v2625, %v2644
      %v2671 = vadd.f32 %v2625, %v2645
      %v2672 = vadd.f32 %v2629, %v2644
      %v2673 = vadd.f32 %v2629, %v2645
      %v2674 = vadd.f32 %v2633, %v2644
      %v2675 = vadd.f32 %v2633, %v2645
      %v2676 = vadd.f32 %v2637, %v2644
      %v2677 = vadd.f32 %v2637, %v2645
      %v2678 = vadd.f32 %v2641, %v2644
      %v2679 = vadd.f32 %v2641, %v2645
      %vm2680 = vcmp.gt.f32.partialorder %v2648, 0.0
      %vm2681 = vcmp.gt.f32.partialorder %v2649, 0.0
      %vm2682 = vcmp.gt.f32.partialorder %v2650, 0.0
      %vm2683 = vcmp.gt.f32.partialorder %v2651, 0.0
      %vm2684 = vcmp.gt.f32.partialorder %v2652, 0.0
      %vm2685 = vcmp.gt.f32.partialorder %v2653, 0.0
      %vm2686 = vcmp.gt.f32.partialorder %v2654, 0.0
      %vm2687 = vcmp.gt.f32.partialorder %v2655, 0.0
      %vm2688 = vcmp.gt.f32.partialorder %v2656, 0.0
      %vm2689 = vcmp.gt.f32.partialorder %v2657, 0.0
      %vm2690 = vcmp.gt.f32.partialorder %v2658, 0.0
      %vm2691 = vcmp.gt.f32.partialorder %v2659, 0.0
      %vm2692 = vcmp.gt.f32.partialorder %v2660, 0.0
      %vm2693 = vcmp.gt.f32.partialorder %v2661, 0.0
      %vm2694 = vcmp.gt.f32.partialorder %v2662, 0.0
      %vm2695 = vcmp.gt.f32.partialorder %v2663, 0.0
      %vm2696 = vcmp.gt.f32.partialorder %v2664, 0.0
      %vm2697 = vcmp.gt.f32.partialorder %v2665, 0.0
      %vm2698 = vcmp.gt.f32.partialorder %v2666, 0.0
      %vm2699 = vcmp.gt.f32.partialorder %v2667, 0.0
      %vm2700 = vcmp.gt.f32.partialorder %v2668, 0.0
      %vm2701 = vcmp.gt.f32.partialorder %v2669, 0.0
      %vm2702 = vcmp.gt.f32.partialorder %v2670, 0.0
      %vm2703 = vcmp.gt.f32.partialorder %v2671, 0.0
      %vm2704 = vcmp.gt.f32.partialorder %v2672, 0.0
      %vm2705 = vcmp.gt.f32.partialorder %v2673, 0.0
      %vm2706 = vcmp.gt.f32.partialorder %v2674, 0.0
      %vm2707 = vcmp.gt.f32.partialorder %v2675, 0.0
      %vm2708 = vcmp.gt.f32.partialorder %v2676, 0.0
      %vm2709 = vcmp.gt.f32.partialorder %v2677, 0.0
      %vm2710 = vcmp.gt.f32.partialorder %v2678, 0.0
      %vm2711 = vcmp.gt.f32.partialorder %v2679, 0.0
      %v2712 = vmul.f32 %v2648, 0.2
      %v2713 = vmul.f32 %v2649, 0.2
      %v2714 = vmul.f32 %v2650, 0.2
      %v2715 = vmul.f32 %v2651, 0.2
      %v2716 = vmul.f32 %v2652, 0.2
      %v2717 = vmul.f32 %v2653, 0.2
      %v2718 = vmul.f32 %v2654, 0.2
      %v2719 = vmul.f32 %v2655, 0.2
      %v2720 = vmul.f32 %v2656, 0.2
      %v2721 = vmul.f32 %v2657, 0.2
      %v2722 = vmul.f32 %v2658, 0.2
      %v2723 = vmul.f32 %v2659, 0.2
      %v2724 = vmul.f32 %v2660, 0.2
      %v2725 = vmul.f32 %v2661, 0.2
      %v2726 = vmul.f32 %v2662, 0.2
      %v2727 = vmul.f32 %v2663, 0.2
      %v2728 = vmul.f32 %v2664, 0.2
      %v2729 = vmul.f32 %v2665, 0.2
      %v2730 = vmul.f32 %v2666, 0.2
      %v2731 = vmul.f32 %v2667, 0.2
      %v2732 = vmul.f32 %v2668, 0.2
      %v2733 = vmul.f32 %v2669, 0.2
      %v2734 = vmul.f32 %v2670, 0.2
      %v2735 = vmul.f32 %v2671, 0.2
      %v2736 = vmul.f32 %v2672, 0.2
      %v2737 = vmul.f32 %v2673, 0.2
      %v2738 = vmul.f32 %v2674, 0.2
      %v2739 = vmul.f32 %v2675, 0.2
      %v2740 = vmul.f32 %v2676, 0.2
      %v2741 = vmul.f32 %v2677, 0.2
      %v2742 = vmul.f32 %v2678, 0.2
      %v2743 = vmul.f32 %v2679, 0.2
      %v2744 = vsel %vm2680, %v2648, %v2712
      %v2745 = vsel %vm2681, %v2649, %v2713
      %v2746 = vsel %vm2682, %v2650, %v2714
      %v2747 = vsel %vm2683, %v2651, %v2715
      %v2748 = vsel %vm2684, %v2652, %v2716
      %v2749 = vsel %vm2685, %v2653, %v2717
      %v2750 = vsel %vm2686, %v2654, %v2718
      %v2751 = vsel %vm2687, %v2655, %v2719
      %v2752 = vsel %vm2688, %v2656, %v2720
      %v2753 = vsel %vm2689, %v2657, %v2721
      %v2754 = vsel %vm2690, %v2658, %v2722
      %v2755 = vsel %vm2691, %v2659, %v2723
      %v2756 = vsel %vm2692, %v2660, %v2724
      %v2757 = vsel %vm2693, %v2661, %v2725
      %v2758 = vsel %vm2694, %v2662, %v2726
      %v2759 = vsel %vm2695, %v2663, %v2727
      %v2760 = vsel %vm2696, %v2664, %v2728
      %v2761 = vsel %vm2697, %v2665, %v2729
      %v2762 = vsel %vm2698, %v2666, %v2730
      %v2763 = vsel %vm2699, %v2667, %v2731
      %v2764 = vsel %vm2700, %v2668, %v2732
      %v2765 = vsel %vm2701, %v2669, %v2733
      %v2766 = vsel %vm2702, %v2670, %v2734
      %v2767 = vsel %vm2703, %v2671, %v2735
      %v2768 = vsel %vm2704, %v2672, %v2736
      %v2769 = vsel %vm2705, %v2673, %v2737
      %v2770 = vsel %vm2706, %v2674, %v2738
      %v2771 = vsel %vm2707, %v2675, %v2739
      %v2772 = vsel %vm2708, %v2676, %v2740
      %v2773 = vsel %vm2709, %v2677, %v2741
      %v2774 = vsel %vm2710, %v2678, %v2742
      %v2775 = vsel %vm2711, %v2679, %v2743
      %v2776 = vadd.f32 %v2744, %v357
      %v2777 = vadd.f32 %v2745, %v358
      %v2778 = vadd.f32 %v2746, %v359
      %v2779 = vadd.f32 %v2747, %v360
      %v2780 = vadd.f32 %v2748, %v361
      %v2781 = vadd.f32 %v2749, %v362
      %v2782 = vadd.f32 %v2750, %v363
      %v2783 = vadd.f32 %v2751, %v364
      %v2784 = vadd.f32 %v2752, %v365
      %v2785 = vadd.f32 %v2753, %v366
      %v2786 = vadd.f32 %v2754, %v367
      %v2787 = vadd.f32 %v2755, %v368
      %v2788 = vadd.f32 %v2756, %v369
      %v2789 = vadd.f32 %v2757, %v370
      %v2790 = vadd.f32 %v2758, %v371
      %v2791 = vadd.f32 %v2759, %v372
      %v2792 = vadd.f32 %v2760, %v373
      %v2793 = vadd.f32 %v2761, %v374
      %v2794 = vadd.f32 %v2762, %v375
      %v2795 = vadd.f32 %v2763, %v376
      %v2796 = vadd.f32 %v2764, %v377
      %v2797 = vadd.f32 %v2765, %v378
      %v2798 = vadd.f32 %v2766, %v379
      %v2799 = vadd.f32 %v2767, %v380
      %v2800 = vadd.f32 %v2768, %v381
      %v2801 = vadd.f32 %v2769, %v382
      %v2802 = vadd.f32 %v2770, %v383
      %v2803 = vadd.f32 %v2771, %v384
      %v2804 = vadd.f32 %v2772, %v385
      %v2805 = vadd.f32 %v2773, %v386
      %v2806 = vadd.f32 %v2774, %v387
      %v2807 = vadd.f32 %v2775, %v388
      %v2808 = vmax.f32 %v2776, %v2777
      %2809 = vmax.xlane.f32.xlu0 %v2808
      %v2810 = vpop.xlane.xlu0 %2809
      %v2811 = vmax.f32 %v2778, %v2779
      %2812 = vmax.xlane.f32.xlu0 %v2811
      %v2813 = vpop.xlane.xlu0 %2812
      %v2814 = vmax.f32 %v2780, %v2781
      %2815 = vmax.xlane.f32.xlu0 %v2814
      %v2816 = vpop.xlane.xlu0 %2815
      %v2817 = vmax.f32 %v2782, %v2783
      %2818 = vmax.xlane.f32.xlu0 %v2817
      %v2819 = vpop.xlane.xlu0 %2818
      %v2820 = vmax.f32 %v2784, %v2785
      %2821 = vmax.xlane.f32.xlu0 %v2820
      %v2822 = vpop.xlane.xlu0 %2821
      %v2823 = vmax.f32 %v2786, %v2787
      %2824 = vmax.xlane.f32.xlu0 %v2823
      %v2825 = vpop.xlane.xlu0 %2824
      %v2826 = vmax.f32 %v2788, %v2789
      %2827 = vmax.xlane.f32.xlu0 %v2826
      %v2828 = vpop.xlane.xlu0 %2827
      %v2829 = vmax.f32 %v2790, %v2791
      %2830 = vmax.xlane.f32.xlu0 %v2829
      %v2831 = vpop.xlane.xlu0 %2830
      %v2832 = vmax.f32 %v2792, %v2793
      %2833 = vmax.xlane.f32.xlu0 %v2832
      %v2834 = vpop.xlane.xlu0 %2833
      %v2835 = vmax.f32 %v2794, %v2795
      %2836 = vmax.xlane.f32.xlu0 %v2835
      %v2837 = vpop.xlane.xlu0 %2836
      %v2838 = vmax.f32 %v2796, %v2797
      %2839 = vmax.xlane.f32.xlu0 %v2838
      %v2840 = vpop.xlane.xlu0 %2839
      %v2841 = vmax.f32 %v2798, %v2799
      %2842 = vmax.xlane.f32.xlu0 %v2841
      %v2843 = vpop.xlane.xlu0 %2842
      %v2844 = vmax.f32 %v2800, %v2801
      %2845 = vmax.xlane.f32.xlu0 %v2844
      %v2846 = vpop.xlane.xlu0 %2845
      %v2847 = vmax.f32 %v2802, %v2803
      %2848 = vmax.xlane.f32.xlu0 %v2847
      %v2849 = vpop.xlane.xlu0 %2848
      %v2850 = vmax.f32 %v2804, %v2805
      %2851 = vmax.xlane.f32.xlu0 %v2850
      %v2852 = vpop.xlane.xlu0 %2851
      %v2853 = vmax.f32 %v2806, %v2807
      %2854 = vmax.xlane.f32.xlu0 %v2853
      %v2855 = vpop.xlane.xlu0 %2854
      %v2856 = vsub.f32 %v2776, %v2810
      %v2857 = vsub.f32 %v2777, %v2810
      %v2858 = vsub.f32 %v2778, %v2813
      %v2859 = vsub.f32 %v2779, %v2813
      %v2860 = vsub.f32 %v2780, %v2816
      %v2861 = vsub.f32 %v2781, %v2816
      %v2862 = vsub.f32 %v2782, %v2819
      %v2863 = vsub.f32 %v2783, %v2819
      %v2864 = vsub.f32 %v2784, %v2822
      %v2865 = vsub.f32 %v2785, %v2822
      %v2866 = vsub.f32 %v2786, %v2825
      %v2867 = vsub.f32 %v2787, %v2825
      %v2868 = vsub.f32 %v2788, %v2828
      %v2869 = vsub.f32 %v2789, %v2828
      %v2870 = vsub.f32 %v2790, %v2831
      %v2871 = vsub.f32 %v2791, %v2831
      %v2872 = vsub.f32 %v2792, %v2834
      %v2873 = vsub.f32 %v2793, %v2834
      %v2874 = vsub.f32 %v2794, %v2837
      %v2875 = vsub.f32 %v2795, %v2837
      %v2876 = vsub.f32 %v2796, %v2840
      %v2877 = vsub.f32 %v2797, %v2840
      %v2878 = vsub.f32 %v2798, %v2843
      %v2879 = vsub.f32 %v2799, %v2843
      %v2880 = vsub.f32 %v2800, %v2846
      %v2881 = vsub.f32 %v2801, %v2846
      %v2882 = vsub.f32 %v2802, %v2849
      %v2883 = vsub.f32 %v2803, %v2849
      %v2884 = vsub.f32 %v2804, %v2852
      %v2885 = vsub.f32 %v2805, %v2852
      %v2886 = vsub.f32 %v2806, %v2855
      %v2887 = vsub.f32 %v2807, %v2855
      %v2888 = vmul.f32 %v2856, 1.442695
      %v2889 = vpow.pop %v2888
      %v2890 = vmul.f32 %v2857, 1.442695
      %v2891 = vpow.pop %v2890
      %v2892 = vmul.f32 %v2858, 1.442695
      %v2893 = vpow.pop %v2892
      %v2894 = vmul.f32 %v2859, 1.442695
      %v2895 = vpow.pop %v2894
      %v2896 = vmul.f32 %v2860, 1.442695
      %v2897 = vpow.pop %v2896
      %v2898 = vmul.f32 %v2861, 1.442695
      %v2899 = vpow.pop %v2898
      %v2900 = vmul.f32 %v2862, 1.442695
      %v2901 = vpow.pop %v2900
      %v2902 = vmul.f32 %v2863, 1.442695
      %v2903 = vpow.pop %v2902
      %v2904 = vmul.f32 %v2864, 1.442695
      %v2905 = vpow.pop %v2904
      %v2906 = vmul.f32 %v2865, 1.442695
      %v2907 = vpow.pop %v2906
      %v2908 = vmul.f32 %v2866, 1.442695
      %v2909 = vpow.pop %v2908
      %v2910 = vmul.f32 %v2867, 1.442695
      %v2911 = vpow.pop %v2910
      %v2912 = vmul.f32 %v2868, 1.442695
      %v2913 = vpow.pop %v2912
      %v2914 = vmul.f32 %v2869, 1.442695
      %v2915 = vpow.pop %v2914
      %v2916 = vmul.f32 %v2870, 1.442695
      %v2917 = vpow.pop %v2916
      %v2918 = vmul.f32 %v2871, 1.442695
      %v2919 = vpow.pop %v2918
      %v2920 = vmul.f32 %v2872, 1.442695
      %v2921 = vpow.pop %v2920
      %v2922 = vmul.f32 %v2873, 1.442695
      %v2923 = vpow.pop %v2922
      %v2924 = vmul.f32 %v2874, 1.442695
      %v2925 = vpow.pop %v2924
      %v2926 = vmul.f32 %v2875, 1.442695
      %v2927 = vpow.pop %v2926
      %v2928 = vmul.f32 %v2876, 1.442695
      %v2929 = vpow.pop %v2928
      %v2930 = vmul.f32 %v2877, 1.442695
      %v2931 = vpow.pop %v2930
      %v2932 = vmul.f32 %v2878, 1.442695
      %v2933 = vpow.pop %v2932
      %v2934 = vmul.f32 %v2879, 1.442695
      %v2935 = vpow.pop %v2934
      %v2936 = vmul.f32 %v2880, 1.442695
      %v2937 = vpow.pop %v2936
      %v2938 = vmul.f32 %v2881, 1.442695
      %v2939 = vpow.pop %v2938
      %v2940 = vmul.f32 %v2882, 1.442695
      %v2941 = vpow.pop %v2940
      %v2942 = vmul.f32 %v2883, 1.442695
      %v2943 = vpow.pop %v2942
      %v2944 = vmul.f32 %v2884, 1.442695
      %v2945 = vpow.pop %v2944
      %v2946 = vmul.f32 %v2885, 1.442695
      %v2947 = vpow.pop %v2946
      %v2948 = vmul.f32 %v2886, 1.442695
      %v2949 = vpow.pop %v2948
      %v2950 = vmul.f32 %v2887, 1.442695
      %v2951 = vpow.pop %v2950
      %v2952 = vadd.f32 %v2889, %v2891
      %2953 = vadd.xlane.f32.xlu0 %v2952
      %v2954 = vpop.xlane.xlu0 %2953
      %v2955 = vadd.f32 %v2893, %v2895
      %2956 = vadd.xlane.f32.xlu0 %v2955
      %v2957 = vpop.xlane.xlu0 %2956
      %v2958 = vadd.f32 %v2897, %v2899
      %2959 = vadd.xlane.f32.xlu0 %v2958
      %v2960 = vpop.xlane.xlu0 %2959
      %v2961 = vadd.f32 %v2901, %v2903
      %2962 = vadd.xlane.f32.xlu0 %v2961
      %v2963 = vpop.xlane.xlu0 %2962
      %v2964 = vadd.f32 %v2905, %v2907
      %2965 = vadd.xlane.f32.xlu0 %v2964
      %v2966 = vpop.xlane.xlu0 %2965
      %v2967 = vadd.f32 %v2909, %v2911
      %2968 = vadd.xlane.f32.xlu0 %v2967
      %v2969 = vpop.xlane.xlu0 %2968
      %v2970 = vadd.f32 %v2913, %v2915
      %2971 = vadd.xlane.f32.xlu0 %v2970
      %v2972 = vpop.xlane.xlu0 %2971
      %v2973 = vadd.f32 %v2917, %v2919
      %2974 = vadd.xlane.f32.xlu0 %v2973
      %v2975 = vpop.xlane.xlu0 %2974
      %v2976 = vadd.f32 %v2921, %v2923
      %2977 = vadd.xlane.f32.xlu0 %v2976
      %v2978 = vpop.xlane.xlu0 %2977
      %v2979 = vadd.f32 %v2925, %v2927
      %2980 = vadd.xlane.f32.xlu0 %v2979
      %v2981 = vpop.xlane.xlu0 %2980
      %v2982 = vadd.f32 %v2929, %v2931
      %2983 = vadd.xlane.f32.xlu0 %v2982
      %v2984 = vpop.xlane.xlu0 %2983
      %v2985 = vadd.f32 %v2933, %v2935
      %2986 = vadd.xlane.f32.xlu0 %v2985
      %v2987 = vpop.xlane.xlu0 %2986
      %v2988 = vadd.f32 %v2937, %v2939
      %2989 = vadd.xlane.f32.xlu0 %v2988
      %v2990 = vpop.xlane.xlu0 %2989
      %v2991 = vadd.f32 %v2941, %v2943
      %2992 = vadd.xlane.f32.xlu0 %v2991
      %v2993 = vpop.xlane.xlu0 %2992
      %v2994 = vadd.f32 %v2945, %v2947
      %2995 = vadd.xlane.f32.xlu0 %v2994
      %v2996 = vpop.xlane.xlu0 %2995
      %v2997 = vadd.f32 %v2949, %v2951
      %2998 = vadd.xlane.f32.xlu0 %v2997
      %v2999 = vpop.xlane.xlu0 %2998
      %v3000 = vrcp.pop %v2954
      %v3001 = vrcp.pop %v2957
      %v3002 = vrcp.pop %v2960
      %v3003 = vrcp.pop %v2963
      %v3004 = vrcp.pop %v2966
      %v3005 = vrcp.pop %v2969
      %v3006 = vrcp.pop %v2972
      %v3007 = vrcp.pop %v2975
      %v3008 = vrcp.pop %v2978
      %v3009 = vrcp.pop %v2981
      %v3010 = vrcp.pop %v2984
      %v3011 = vrcp.pop %v2987
      %v3012 = vrcp.pop %v2990
      %v3013 = vrcp.pop %v2993
      %v3014 = vrcp.pop %v2996
      %v3015 = vrcp.pop %v2999
      %v3016 = vmul.f32 %v2889, %v3000
      %v3017 = vmul.f32 %v2891, %v3000
      %v3018 = vmul.f32 %v2893, %v3001
      %v3019 = vmul.f32 %v2895, %v3001
      %v3020 = vmul.f32 %v2897, %v3002
      %v3021 = vmul.f32 %v2899, %v3002
      %v3022 = vmul.f32 %v2901, %v3003
      %v3023 = vmul.f32 %v2903, %v3003
      %v3024 = vmul.f32 %v2905, %v3004
      %v3025 = vmul.f32 %v2907, %v3004
      %v3026 = vmul.f32 %v2909, %v3005
      %v3027 = vmul.f32 %v2911, %v3005
      %v3028 = vmul.f32 %v2913, %v3006
      %v3029 = vmul.f32 %v2915, %v3006
      %v3030 = vmul.f32 %v2917, %v3007
      %v3031 = vmul.f32 %v2919, %v3007
      %v3032 = vmul.f32 %v2921, %v3008
      %v3033 = vmul.f32 %v2923, %v3008
      %v3034 = vmul.f32 %v2925, %v3009
      %v3035 = vmul.f32 %v2927, %v3009
      %v3036 = vmul.f32 %v2929, %v3010
      %v3037 = vmul.f32 %v2931, %v3010
      %v3038 = vmul.f32 %v2933, %v3011
      %v3039 = vmul.f32 %v2935, %v3011
      %v3040 = vmul.f32 %v2937, %v3012
      %v3041 = vmul.f32 %v2939, %v3012
      %v3042 = vmul.f32 %v2941, %v3013
      %v3043 = vmul.f32 %v2943, %v3013
      %v3044 = vmul.f32 %v2945, %v3014
      %v3045 = vmul.f32 %v2947, %v3014
      %v3046 = vmul.f32 %v2949, %v3015
      %v3047 = vmul.f32 %v2951, %v3015
      %v3048 = vpack.c.bf16 %v3018, %v3016
      %v3049 = vpack.c.bf16 %v3019, %v3017
      %v3050 = vpack.c.bf16 %v3022, %v3020
      %v3051 = vpack.c.bf16 %v3023, %v3021
      %v3052 = vpack.c.bf16 %v3026, %v3024
      %v3053 = vpack.c.bf16 %v3027, %v3025
      %v3054 = vpack.c.bf16 %v3030, %v3028
      %v3055 = vpack.c.bf16 %v3031, %v3029
      %v3056 = vpack.c.bf16 %v3034, %v3032
      %v3057 = vpack.c.bf16 %v3035, %v3033
      %v3058 = vpack.c.bf16 %v3038, %v3036
      %v3059 = vpack.c.bf16 %v3039, %v3037
      %v3060 = vpack.c.bf16 %v3042, %v3040
      %v3061 = vpack.c.bf16 %v3043, %v3041
      %v3062 = vpack.c.bf16 %v3046, %v3044
      %v3063 = vpack.c.bf16 %v3047, %v3045
      %s3064 = scalar_lea.vmem %s3, 384
      %v3065 = vld [vmem:[%s3064] sm:$0xf]
      %v3066 = vld [vmem:[%s3064 + $0x4] sm:$0xf]
      %v3067 = vld [vmem:[%s3064 + $0x8] sm:$0xf]
      %v3068 = vld [vmem:[%s3064 + $0xc] sm:$0xf]
      %v3069 = vld [vmem:[%s3064 + $0x10] sm:$0xf]
      %v3070 = vld [vmem:[%s3064 + $0x14] sm:$0xf]
      %v3071 = vld [vmem:[%s3064 + $0x18] sm:$0xf]
      %v3072 = vld [vmem:[%s3064 + $0x1c] sm:$0xf]
      %v3073 = vld [vmem:[%s3064 + $0x20] sm:$0xf]
      %v3074 = vld [vmem:[%s3064 + $0x24] sm:$0xf]
      %v3075 = vld [vmem:[%s3064 + $0x28] sm:$0xf]
      %v3076 = vld [vmem:[%s3064 + $0x2c] sm:$0xf]
      %v3077 = vld [vmem:[%s3064 + $0x30] sm:$0xf]
      %v3078 = vld [vmem:[%s3064 + $0x34] sm:$0xf]
      %v3079 = vld [vmem:[%s3064 + $0x38] sm:$0xf]
      %v3080 = vld [vmem:[%s3064 + $0x3c] sm:$0xf]
      %v3081 = vld [vmem:[%s3064 + $0x40] sm:$0xf]
      %v3082 = vld [vmem:[%s3064 + $0x44] sm:$0xf]
      %v3083 = vld [vmem:[%s3064 + $0x48] sm:$0xf]
      %v3084 = vld [vmem:[%s3064 + $0x4c] sm:$0xf]
      %v3085 = vld [vmem:[%s3064 + $0x50] sm:$0xf]
      %v3086 = vld [vmem:[%s3064 + $0x54] sm:$0xf]
      %v3087 = vld [vmem:[%s3064 + $0x58] sm:$0xf]
      %v3088 = vld [vmem:[%s3064 + $0x5c] sm:$0xf]
      %v3089 = vld [vmem:[%s3064 + $0x60] sm:$0xf]
      %v3090 = vld [vmem:[%s3064 + $0x64] sm:$0xf]
      %v3091 = vld [vmem:[%s3064 + $0x68] sm:$0xf]
      %v3092 = vld [vmem:[%s3064 + $0x6c] sm:$0xf]
      %v3093 = vld [vmem:[%s3064 + $0x70] sm:$0xf]
      %v3094 = vld [vmem:[%s3064 + $0x74] sm:$0xf]
      %v3095 = vld [vmem:[%s3064 + $0x78] sm:$0xf]
      %v3096 = vld [vmem:[%s3064 + $0x7c] sm:$0xf]
      %v3129 = vunpack.c.l.b16 %v3065
      %v3130 = vunpack.c.l.b16 %v3066
      %v3131 = vunpack.c.l.b16 %v3067
      %v3132 = vunpack.c.l.b16 %v3068
      %v3133 = vunpack.c.l.b16 %v3069
      %v3134 = vunpack.c.l.b16 %v3070
      %v3135 = vunpack.c.l.b16 %v3071
      %v3136 = vunpack.c.l.b16 %v3072
      %v3137 = vunpack.c.l.b16 %v3073
      %v3138 = vunpack.c.l.b16 %v3074
      %v3139 = vunpack.c.l.b16 %v3075
      %v3140 = vunpack.c.l.b16 %v3076
      %v3141 = vunpack.c.l.b16 %v3077
      %v3142 = vunpack.c.l.b16 %v3078
      %v3143 = vunpack.c.l.b16 %v3079
      %v3144 = vunpack.c.l.b16 %v3080
      %v3145 = vunpack.c.l.b16 %v3081
      %v3146 = vunpack.c.l.b16 %v3082
      %v3147 = vunpack.c.l.b16 %v3083
      %v3148 = vunpack.c.l.b16 %v3084
      %v3149 = vunpack.c.l.b16 %v3085
      %v3150 = vunpack.c.l.b16 %v3086
      %v3151 = vunpack.c.l.b16 %v3087
      %v3152 = vunpack.c.l.b16 %v3088
      %v3153 = vunpack.c.l.b16 %v3089
      %v3154 = vunpack.c.l.b16 %v3090
      %v3155 = vunpack.c.l.b16 %v3091
      %v3156 = vunpack.c.l.b16 %v3092
      %v3157 = vunpack.c.l.b16 %v3093
      %v3158 = vunpack.c.l.b16 %v3094
      %v3159 = vunpack.c.l.b16 %v3095
      %v3160 = vunpack.c.l.b16 %v3096
      %v3161 = vpack.c.b16 %v3130, %v3129
      %v3162 = vpack.c.b16 %v3132, %v3131
      %v3163 = vpack.c.b16 %v3134, %v3133
      %v3164 = vpack.c.b16 %v3136, %v3135
      %v3165 = vpack.c.b16 %v3138, %v3137
      %v3166 = vpack.c.b16 %v3140, %v3139
      %v3167 = vpack.c.b16 %v3142, %v3141
      %v3168 = vpack.c.b16 %v3144, %v3143
      %v3169 = vpack.c.b16 %v3146, %v3145
      %v3170 = vpack.c.b16 %v3148, %v3147
      %v3171 = vpack.c.b16 %v3150, %v3149
      %v3172 = vpack.c.b16 %v3152, %v3151
      %v3173 = vpack.c.b16 %v3154, %v3153
      %v3174 = vpack.c.b16 %v3156, %v3155
      %v3175 = vpack.c.b16 %v3158, %v3157
      %v3176 = vpack.c.b16 %v3160, %v3159
      %3193 = vmatpush.bf16.msra.mxu0 %v3168
      %3194 = vmatpush.bf16.msra.mxu0 %v3167
      %3195 = vmatpush.bf16.msra.mxu0 %v3166
      %3196 = vmatpush.bf16.msra.mxu0 %v3165
      %3197 = vmatpush.bf16.msra.mxu0 %v3164
      %3198 = vmatpush.bf16.msra.mxu0 %v3163
      %3199 = vmatpush.bf16.msra.mxu0 %v3162
      %3200 = vmatpush.bf16.msra.mxu0 %v3161
      %3201 = vmatmul.bf16.gmra.mxu0 %v3048
      %v3202 = vpop.f32.mrf.mxu0
      %v3203 = vadd.f32 0.0, %v3202
      %v3204 = vpop.f32.mrf.mxu0
      %v3205 = vadd.f32 0.0, %v3204
      %3206 = vmatmul.bf16.gmra.mxu0 %v3050
      %v3207 = vpop.f32.mrf.mxu0
      %v3208 = vadd.f32 0.0, %v3207
      %v3209 = vpop.f32.mrf.mxu0
      %v3210 = vadd.f32 0.0, %v3209
      %3211 = vmatmul.bf16.gmra.mxu0 %v3052
      %v3212 = vpop.f32.mrf.mxu0
      %v3213 = vadd.f32 0.0, %v3212
      %v3214 = vpop.f32.mrf.mxu0
      %v3215 = vadd.f32 0.0, %v3214
      %3216 = vmatmul.bf16.gmra.mxu0 %v3054
      %v3217 = vpop.f32.mrf.mxu0
      %v3218 = vadd.f32 0.0, %v3217
      %v3219 = vpop.f32.mrf.mxu0
      %v3220 = vadd.f32 0.0, %v3219
      %3221 = vmatmul.bf16.gmra.mxu0 %v3056
      %v3222 = vpop.f32.mrf.mxu0
      %v3223 = vadd.f32 0.0, %v3222
      %v3224 = vpop.f32.mrf.mxu0
      %v3225 = vadd.f32 0.0, %v3224
      %3226 = vmatmul.bf16.gmra.mxu0 %v3058
      %v3227 = vpop.f32.mrf.mxu0
      %v3228 = vadd.f32 0.0, %v3227
      %v3229 = vpop.f32.mrf.mxu0
      %v3230 = vadd.f32 0.0, %v3229
      %3231 = vmatmul.bf16.gmra.mxu0 %v3060
      %v3232 = vpop.f32.mrf.mxu0
      %v3233 = vadd.f32 0.0, %v3232
      %v3234 = vpop.f32.mrf.mxu0
      %v3235 = vadd.f32 0.0, %v3234
      %3236 = vmatmul.bf16.gmra.mxu0 %v3062
      %v3237 = vpop.f32.mrf.mxu0
      %v3238 = vadd.f32 0.0, %v3237
      %v3239 = vpop.f32.mrf.mxu0
      %v3240 = vadd.f32 0.0, %v3239
      %3241 = vdwg.mxu0
      %3242 = vmatpush.bf16.msra.mxu0 %v3176
      %3243 = vmatpush.bf16.msra.mxu0 %v3175
      %3244 = vmatpush.bf16.msra.mxu0 %v3174
      %3245 = vmatpush.bf16.msra.mxu0 %v3173
      %3246 = vmatpush.bf16.msra.mxu0 %v3172
      %3247 = vmatpush.bf16.msra.mxu0 %v3171
      %3248 = vmatpush.bf16.msra.mxu0 %v3170
      %3249 = vmatpush.bf16.msra.mxu0 %v3169
      %3250 = vmatmul.bf16.gmra.mxu0 %v3049
      %v3251 = vpop.f32.mrf.mxu0
      %v3252 = vadd.f32 %v3203, %v3251
      %v3253 = vpop.f32.mrf.mxu0
      %v3254 = vadd.f32 %v3205, %v3253
      %3255 = vmatmul.bf16.gmra.mxu0 %v3051
      %v3256 = vpop.f32.mrf.mxu0
      %v3257 = vadd.f32 %v3208, %v3256
      %v3258 = vpop.f32.mrf.mxu0
      %v3259 = vadd.f32 %v3210, %v3258
      %3260 = vmatmul.bf16.gmra.mxu0 %v3053
      %v3261 = vpop.f32.mrf.mxu0
      %v3262 = vadd.f32 %v3213, %v3261
      %v3263 = vpop.f32.mrf.mxu0
      %v3264 = vadd.f32 %v3215, %v3263
      %3265 = vmatmul.bf16.gmra.mxu0 %v3055
      %v3266 = vpop.f32.mrf.mxu0
      %v3267 = vadd.f32 %v3218, %v3266
      %v3268 = vpop.f32.mrf.mxu0
      %v3269 = vadd.f32 %v3220, %v3268
      %3270 = vmatmul.bf16.gmra.mxu0 %v3057
      %v3271 = vpop.f32.mrf.mxu0
      %v3272 = vadd.f32 %v3223, %v3271
      %v3273 = vpop.f32.mrf.mxu0
      %v3274 = vadd.f32 %v3225, %v3273
      %3275 = vmatmul.bf16.gmra.mxu0 %v3059
      %v3276 = vpop.f32.mrf.mxu0
      %v3277 = vadd.f32 %v3228, %v3276
      %v3278 = vpop.f32.mrf.mxu0
      %v3279 = vadd.f32 %v3230, %v3278
      %3280 = vmatmul.bf16.gmra.mxu0 %v3061
      %v3281 = vpop.f32.mrf.mxu0
      %v3282 = vadd.f32 %v3233, %v3281
      %v3283 = vpop.f32.mrf.mxu0
      %v3284 = vadd.f32 %v3235, %v3283
      %3285 = vmatmul.bf16.gmra.mxu0 %v3063
      %v3286 = vpop.f32.mrf.mxu0
      %v3287 = vadd.f32 %v3238, %v3286
      %v3288 = vpop.f32.mrf.mxu0
      %v3289 = vadd.f32 %v3240, %v3288
      %3290 = vdwg.mxu0
      %v3291 = vadd.f32 %v2561, %v3252
      %v3292 = vadd.f32 %v2562, %v3254
      %v3293 = vadd.f32 %v2563, %v3257
      %v3294 = vadd.f32 %v2564, %v3259
      %v3295 = vadd.f32 %v2565, %v3262
      %v3296 = vadd.f32 %v2566, %v3264
      %v3297 = vadd.f32 %v2567, %v3267
      %v3298 = vadd.f32 %v2568, %v3269
      %v3299 = vadd.f32 %v2569, %v3272
      %v3300 = vadd.f32 %v2570, %v3274
      %v3301 = vadd.f32 %v2571, %v3277
      %v3302 = vadd.f32 %v2572, %v3279
      %v3303 = vadd.f32 %v2573, %v3282
      %v3304 = vadd.f32 %v2574, %v3284
      %v3305 = vadd.f32 %v2575, %v3287
      %v3306 = vadd.f32 %v2576, %v3289
      %v3307 = vld [vmem:[%s4] sm:$0x1]
      %v3309 = vperm.slane %v3307, 0
      %v3311 = vadd.f32 %v3291, %v3309
      %v3312 = vadd.f32 %v3292, %v3309
      %v3313 = vadd.f32 %v3293, %v3309
      %v3314 = vadd.f32 %v3294, %v3309
      %v3315 = vadd.f32 %v3295, %v3309
      %v3316 = vadd.f32 %v3296, %v3309
      %v3317 = vadd.f32 %v3297, %v3309
      %v3318 = vadd.f32 %v3298, %v3309
      %v3319 = vadd.f32 %v3299, %v3309
      %v3320 = vadd.f32 %v3300, %v3309
      %v3321 = vadd.f32 %v3301, %v3309
      %v3322 = vadd.f32 %v3302, %v3309
      %v3323 = vadd.f32 %v3303, %v3309
      %v3324 = vadd.f32 %v3304, %v3309
      %v3325 = vadd.f32 %v3305, %v3309
      %v3326 = vadd.f32 %v3306, %v3309
      %v3327 = vpack.c.bf16 %v3311, %v3311
      %v3328 = vpack.c.bf16 %v3312, %v3312
      %v3329 = vpack.c.bf16 %v3313, %v3313
      %v3330 = vpack.c.bf16 %v3314, %v3314
      %v3331 = vpack.c.bf16 %v3315, %v3315
      %v3332 = vpack.c.bf16 %v3316, %v3316
      %v3333 = vpack.c.bf16 %v3317, %v3317
      %v3334 = vpack.c.bf16 %v3318, %v3318
      %v3335 = vpack.c.bf16 %v3319, %v3319
      %v3336 = vpack.c.bf16 %v3320, %v3320
      %v3337 = vpack.c.bf16 %v3321, %v3321
      %v3338 = vpack.c.bf16 %v3322, %v3322
      %v3339 = vpack.c.bf16 %v3323, %v3323
      %v3340 = vpack.c.bf16 %v3324, %v3324
      %v3341 = vpack.c.bf16 %v3325, %v3325
      %v3342 = vpack.c.bf16 %v3326, %v3326
      %vm3343 = vcmask 257024
      %3344 = vst.msk [vmem:[%s251] sm:$0xf] %vm3343, %v3327
      %3345 = vst.msk [vmem:[%s251 + $0x4] sm:$0xf] %vm3343, %v3328
      %3346 = vst.msk [vmem:[%s251 + $0x8] sm:$0xf] %vm3343, %v3329
      %3347 = vst.msk [vmem:[%s251 + $0xc] sm:$0xf] %vm3343, %v3330
      %3348 = vst.msk [vmem:[%s251 + $0x10] sm:$0xf] %vm3343, %v3331
      %3349 = vst.msk [vmem:[%s251 + $0x14] sm:$0xf] %vm3343, %v3332
      %3350 = vst.msk [vmem:[%s251 + $0x18] sm:$0xf] %vm3343, %v3333
      %3351 = vst.msk [vmem:[%s251 + $0x1c] sm:$0xf] %vm3343, %v3334
      %3352 = vst.msk [vmem:[%s251 + $0x20] sm:$0xf] %vm3343, %v3335
      %3353 = vst.msk [vmem:[%s251 + $0x24] sm:$0xf] %vm3343, %v3336
      %3354 = vst.msk [vmem:[%s251 + $0x28] sm:$0xf] %vm3343, %v3337
      %3355 = vst.msk [vmem:[%s251 + $0x2c] sm:$0xf] %vm3343, %v3338
      %3356 = vst.msk [vmem:[%s251 + $0x30] sm:$0xf] %vm3343, %v3339
      %3357 = vst.msk [vmem:[%s251 + $0x34] sm:$0xf] %vm3343, %v3340
      %3358 = vst.msk [vmem:[%s251 + $0x38] sm:$0xf] %vm3343, %v3341
      %3359 = vst.msk [vmem:[%s251 + $0x3c] sm:$0xf] %vm3343, %v3342
      %s3360 = smul.u32 16, %s16
      %p3361 = scmp.lt.s32.totalorder %s3360, 31
      %s3362 = scalar_select %p3361, %s3360, 31
      %s3363 = smul.addr %s3362, 4
      %s3364 = scalar_lea.vmem %s5, %s3363
      // Predicated region
      $region41: #{gat_encoder_pallas.12} parent=39 // pred_check
        %p3365 = pneg %p149
      $region42: #{gat_encoder_pallas.12} parent=39 // pred_check_branch
        %3367 = sbr.rel (%p3365) target = $region44
      $region43: #{gat_encoder_pallas.12} parent=39 // pred_region
        %s3368 = smul.u32 16, %s16
      $region44: #{gat_encoder_pallas.12} parent=39 // pred_fallthru
        _
    $region40: #{gat_encoder_pallas.12} parent=5 // pred_fallthru
      _
    %p3369 = scmp.le.s32.totalorder 2, %s11
    // Predicated region
    $region45: #{gat_encoder_pallas.12} parent=5 // pred_check
      %p3370 = pneg %p3369
    $region46: #{gat_encoder_pallas.12} parent=5 // pred_check_branch
      %3372 = sbr.rel (%p3370) target = $region48
    $region47: #{gat_encoder_pallas.12} parent=5 // pred_region
      %s3373 = ssub.s32 %s11, 2
      // Predicated region
      $region49: #{gat_encoder_pallas.12} parent=47 // pred_check
        %p3374 = pneg %p155
      $region50: #{gat_encoder_pallas.12} parent=47 // pred_check_branch
        %3376 = sbr.rel (%p3374) target = $region52
      $region51: #{gat_encoder_pallas.12} parent=47 // pred_region
        %s3377 = smul.u32 16, %s17
        %p3378 = scmp.lt.s32.totalorder %s3377, 31
        %s3379 = scalar_select %p3378, %s3377, 31
        %s3380 = smul.addr %s3379, 4
        %s3381 = scalar_lea.vmem %s5, %s3380
      $region52: #{gat_encoder_pallas.12} parent=47 // pred_fallthru
        _
    $region48: #{gat_encoder_pallas.12} parent=5 // pred_fallthru
      _
  $region6: #{gat_encoder_pallas.12} parent=0 // loop_footer
    %s15 = sadd.s32 1, %s11
  $region7: #{gat_encoder_pallas.12} parent=0 // loop_footer_branch
    %10 = sbr.rel target = $region3
  $region8: #{gat_encoder_pallas.12} parent=0 // loop_exit
    _

</llo_original>
